<compile_context>
chip_gen: v7x
topology: tpu7x:2x2x1
jax: 0.10.0
libtpu: 0.0.40
codegen_flags: <defaults>
</compile_context>

<pallas_src>
from functools import partial

import jax
import jax.numpy as jnp
from jax.experimental import pallas as pl
from jax.experimental.pallas import tpu as pltpu


def clam_sb_kernel(n_ref, h_ref, w1_ref, b1_ref, wa_ref, ba_ref, wb_ref, bb_ref,
                   wc_ref, bc_ref, wcls_ref, bcls_ref,
                   a_raw_ref, logits_ref, m_out_ref,
                   m_sc, l_sc, acc_sc):
    i = pl.program_id(0)
    nsteps = pl.num_programs(0)

    @pl.when(i == 0)
    def _():
        m_sc[...] = jnp.full_like(m_sc, -jnp.inf)
        l_sc[...] = jnp.zeros_like(l_sc)
        acc_sc[...] = jnp.zeros_like(acc_sc)

    # h streamed as f32 from HBM; cast the tile in VMEM (bf16 MXU inputs).
    hb = h_ref[...].astype(jnp.bfloat16)                      # [TN, L]

    # fc: Linear(L, H) + ReLU  (bf16 MXU, f32 accumulation)
    x = jnp.dot(hb, w1_ref[...],
                preferred_element_type=jnp.float32) + b1_ref[...]
    x = jnp.maximum(x, 0.0)                                   # [TN, H] f32

    # validity of rows in this (possibly ragged, unpadded) tile; zero garbage
    # rows so NaN/Inf from undefined tail data cannot poison the pooling dot.
    tn = x.shape[0]
    row = jax.lax.broadcasted_iota(jnp.int32, (tn, 1), 0)
    row_valid = (i * tn + row) < n_ref[0]
    x = jnp.where(row_valid, x, 0.0)
    xb = x.astype(jnp.bfloat16)                               # [TN, H] bf16

    # Attn_Net_Gated: a = tanh(Wa x), g = sigmoid(Wb x)
    a = jnp.tanh(jnp.dot(xb, wa_ref[...],
                         preferred_element_type=jnp.float32) + ba_ref[...])
    g = jax.nn.sigmoid(jnp.dot(xb, wb_ref[...],
                               preferred_element_type=jnp.float32) + bb_ref[...])
    mb = (a * g).astype(jnp.bfloat16)                         # [TN, D] bf16

    # attention score per instance, produced lane-dense as a [1, TN] row:
    # bf16 transpose (XLU) + pure-bf16 [1,D]x[D,TN] MXU contraction.
    mt = jnp.transpose(mb)                                    # [D, TN]
    s_row = jnp.dot(wc_ref[...], mt,
                    preferred_element_type=jnp.float32) + bc_ref[...]

    # A_raw tile (dense [1, TN] store)
    a_raw_ref[...] = s_row

    # mask padded lanes of the ragged last tile before softmax statistics
    lane = jax.lax.broadcasted_iota(jnp.int32, (1, tn), 1)
    valid = (i * tn + lane) < n_ref[0]
    s_m = jnp.where(valid, s_row, -jnp.inf)

    # online softmax over instances + attention pooling (bf16 MXU)
    tile_max = jnp.max(s_m, axis=-1, keepdims=True)           # [1, 1]
    m_new = jnp.maximum(m_sc[...], tile_max)
    alpha = jnp.exp(m_sc[...] - m_new)
    p = jnp.exp(s_m - m_new)                                  # [1, TN] f32
    l_sc[...] = alpha * l_sc[...] + jnp.sum(p, axis=-1, keepdims=True)
    acc_sc[...] = alpha * acc_sc[...] + jnp.dot(
        p.astype(jnp.bfloat16), xb, preferred_element_type=jnp.float32)  # [1, H]
    m_sc[...] = m_new

    @pl.when(i == nsteps - 1)
    def _():
        inv_l = 1.0 / l_sc[...]                               # exact (runs once)
        Mn = acc_sc[...] * inv_l                              # [1, H]
        m_out_ref[...] = Mn
        logits_ref[...] = jnp.dot(Mn.astype(jnp.bfloat16), wcls_ref[...],
                                  preferred_element_type=jnp.float32) + bcls_ref[...]


@partial(jax.jit, static_argnames=("block_n",))
def clam_sb_forward(h, params, *, block_n=1024):
    N, L = h.shape
    H = params["w1"].shape[1]
    D = params["wa"].shape[1]
    C = params["wcls"].shape[1]

    # Keep block_n a multiple of 128 (lane-dense A_raw tile) and never larger
    # than the largest 128-multiple that fits the bag, so no block exceeds the
    # array extent (the ragged remainder is masked in-kernel).
    if N >= 128:
        block_n = max(128, min(block_n, (N // 128) * 128))
    else:
        block_n = 128  # tiny-bag edge case: single padded tile

    ntiles = pl.cdiv(N, block_n)
    n_pad = ntiles * block_n

    n_valid = jnp.array([N], dtype=jnp.int32)

    # weights as bf16 MXU operands (small, one-time casts; biases stay f32)
    w1 = params["w1"].astype(jnp.bfloat16)
    wa = params["wa"].astype(jnp.bfloat16)
    wb = params["wb"].astype(jnp.bfloat16)
    wcls = params["wcls"].astype(jnp.bfloat16)
    wc_row = params["wc"].reshape(1, D).astype(jnp.bfloat16)

    def const(shape):
        return pl.BlockSpec(shape, lambda i: (0, 0))

    in_specs = [
        pl.BlockSpec(memory_space=pltpu.MemorySpace.SMEM),        # n_valid
        pl.BlockSpec((block_n, L), lambda i: (i, 0)),             # h (f32 row tile)
        const((L, H)), const((1, H)),                             # w1, b1
        const((H, D)), const((1, D)),                             # wa, ba
        const((H, D)), const((1, D)),                             # wb, bb
        const((1, D)), const((1, 1)),                             # wc_row, bc
        const((H, C)), const((1, C)),                             # wcls, bcls
    ]
    out_specs = (
        pl.BlockSpec((1, block_n), lambda i: (0, i)),             # A_raw (lane-dense)
        pl.BlockSpec((1, C), lambda i: (0, 0)),                   # logits
        pl.BlockSpec((1, H), lambda i: (0, 0)),                   # M
    )
    out_shape = (
        jax.ShapeDtypeStruct((1, n_pad), jnp.float32),
        jax.ShapeDtypeStruct((1, C), jnp.float32),
        jax.ShapeDtypeStruct((1, H), jnp.float32),
    )
    scratch_shapes = [
        pltpu.VMEM((1, 1), jnp.float32),      # running max
        pltpu.VMEM((1, 1), jnp.float32),      # running exp-sum
        pltpu.VMEM((1, H), jnp.float32),      # unnormalized pooled features
    ]

    flops = 2 * N * (L * H + 2 * H * D + D + H) + 2 * H * C
    transcendentals = N * (2 * D + 1)
    bytes_accessed = (N * L * 4
                      + (L * H + 2 * H * D + H * C + D) * 2
                      + (H + 2 * D + 1 + C) * 4
                      + (n_pad + C + H) * 4)

    a_raw_pad, logits, M = pl.pallas_call(
        clam_sb_kernel,
        out_shape=out_shape,
        grid=(ntiles,),
        in_specs=in_specs,
        out_specs=out_specs,
        scratch_shapes=scratch_shapes,
        compiler_params=pltpu.CompilerParams(
            dimension_semantics=("arbitrary",),     # N axis is a softmax reduction
            vmem_limit_bytes=32 * 1024 * 1024,
        ),
        cost_estimate=pl.CostEstimate(flops=flops,
                                      transcendentals=transcendentals,
                                      bytes_accessed=bytes_accessed),
    )(n_valid, h, w1, params["b1"], wa, params["ba"], wb, params["bb"],
      wc_row, params["bc"], wcls, params["bcls"])

    A_raw = a_raw_pad[:, :N]                                  # [1, N]
    Y_prob = jax.nn.softmax(logits, axis=1)                   # [1, C]
    Y_hat = jnp.argmax(logits, axis=1, keepdims=True)         # torch.topk(logits, 1)[1]
    results_dict = {"features": M}
    return logits, Y_prob, Y_hat, A_raw, results_dict


def clam_sb_reference(h, params):
    """Pure-JAX f32 reference for correctness checking."""
    x = jnp.maximum(h @ params["w1"] + params["b1"], 0.0)
    a = jnp.tanh(x @ params["wa"] + params["ba"])
    g = jax.nn.sigmoid(x @ params["wb"] + params["bb"])
    s = (a * g) @ params["wc"] + params["bc"]                 # [N, 1]
    A_raw = s.T                                               # [1, N]
    A = jax.nn.softmax(A_raw, axis=1)
    M = A @ x                                                 # [1, H]
    logits = M @ params["wcls"] + params["bcls"]
    return logits, A_raw, M


def _xavier_normal(key, fan_in, fan_out):
    std = (2.0 / (fan_in + fan_out)) ** 0.5
    return std * jax.random.normal(key, (fan_in, fan_out), dtype=jnp.float32)


def init_params(key, L=1024, H=512, D=256, n_classes=2):
    ks = jax.random.split(key, 5)
    return {
        # fc: Linear(L, H); biases zeroed as in initialize_weights
        "w1": _xavier_normal(ks[0], L, H), "b1": jnp.zeros((1, H), jnp.float32),
        # Attn_Net_Gated: attention_a / attention_b Linear(H, D)
        "wa": _xavier_normal(ks[1], H, D), "ba": jnp.zeros((1, D), jnp.float32),
        "wb": _xavier_normal(ks[2], H, D), "bb": jnp.zeros((1, D), jnp.float32),
        # attention_c: Linear(D, 1)
        "wc": _xavier_normal(ks[3], D, 1), "bc": jnp.zeros((1, 1), jnp.float32),
        # classifiers: Linear(H, n_classes)
        "wcls": _xavier_normal(ks[4], H, n_classes),
        "bcls": jnp.zeros((1, n_classes), jnp.float32),
    }


if __name__ == "__main__":
    key = jax.random.PRNGKey(0)
    k_h, k_p = jax.random.split(key)

    # size_dict['small'] = [1024, 512, 256]; bag of N=600 instances
    # (default block_n clamps to 512 -> 2 row tiles with a ragged last tile).
    N, L, H, D, n_classes = 600, 1024, 512, 256, 2
    h = jax.random.normal(k_h, (N, L), dtype=jnp.float32)
    params = init_params(k_p, L=L, H=H, D=D, n_classes=n_classes)

    ref_logits, ref_A_raw, ref_M = clam_sb_reference(h, params)

    # default tile (clamped to 512): 2 tiles, ragged unpadded tail
    logits, Y_prob, Y_hat, A_raw, res = clam_sb_forward(h, params)
    jax.block_until_ready((logits, Y_prob, Y_hat, A_raw, res["features"]))

    assert logits.shape == (1, n_classes)
    assert Y_prob.shape == (1, n_classes)
    assert Y_hat.shape == (1, 1)
    assert A_raw.shape == (1, N)
    assert res["features"].shape == (1, H)

    # loose-tolerance check against the pure-JAX f32 reference (bf16 MXU inputs)
    assert float(jnp.max(jnp.abs(logits - ref_logits))) < 0.2
    assert float(jnp.max(jnp.abs(A_raw - ref_A_raw))) < 0.2
    assert float(jnp.max(jnp.abs(res["features"] - ref_M))) < 0.2

    # smaller tile: 3 tiles, exercises the multi-tile online-softmax path
    logits2, _, _, A_raw2, res2 = clam_sb_forward(h, params, block_n=256)
    jax.block_until_ready((logits2, A_raw2, res2["features"]))
    assert float(jnp.max(jnp.abs(logits2 - ref_logits))) < 0.2
    assert float(jnp.max(jnp.abs(A_raw2 - ref_A_raw))) < 0.2
    assert float(jnp.max(jnp.abs(res2["features"] - ref_M))) < 0.2

    print("KERNEL_OK")
</pallas_src>

<mosaic_0001>
module attributes {stable_mosaic.version = 11 : i64} {
  func.func @clam_sb_kernel(%arg0: i32, %arg1: memref<1xi32, #tpu.memory_space<smem>>, %arg2: memref<512x1024xf32, #tpu.memory_space<vmem>>, %arg3: memref<1024x512xbf16, #tpu.memory_space<vmem>>, %arg4: memref<1x512xf32, #tpu.memory_space<vmem>>, %arg5: memref<512x256xbf16, #tpu.memory_space<vmem>>, %arg6: memref<1x256xf32, #tpu.memory_space<vmem>>, %arg7: memref<512x256xbf16, #tpu.memory_space<vmem>>, %arg8: memref<1x256xf32, #tpu.memory_space<vmem>>, %arg9: memref<1x256xbf16, #tpu.memory_space<vmem>>, %arg10: memref<1x1xf32, #tpu.memory_space<vmem>>, %arg11: memref<512x2xbf16, #tpu.memory_space<vmem>>, %arg12: memref<1x2xf32, #tpu.memory_space<vmem>>, %arg13: memref<1x512xf32, #tpu.memory_space<vmem>>, %arg14: memref<1x2xf32, #tpu.memory_space<vmem>>, %arg15: memref<1x512xf32, #tpu.memory_space<vmem>>, %arg16: memref<1x1xf32, #tpu.memory_space<vmem>>, %arg17: memref<1x1xf32, #tpu.memory_space<vmem>>, %arg18: memref<1x512xf32, #tpu.memory_space<vmem>>) attributes {dimension_semantics = [#tpu.dimension_semantics<arbitrary>], iteration_bounds = array<i64: 2>, scalar_prefetch = 0 : i64, scratch_operands = 3 : i64, tpu.core_type = #tpu.core_type<tc>, window_params = [{transform_indices = @transform_0, window_bounds = array<i64: 1>}, {transform_indices = @transform_1, window_bounds = array<i64: 512, 1024>}, {pipeline_mode = #tpu.pipeline_mode<synchronous>, transform_indices = @transform_2, window_bounds = array<i64: 1024, 512>}, {pipeline_mode = #tpu.pipeline_mode<synchronous>, transform_indices = @transform_3, window_bounds = array<i64: 1, 512>}, {pipeline_mode = #tpu.pipeline_mode<synchronous>, transform_indices = @transform_4, window_bounds = array<i64: 512, 256>}, {pipeline_mode = #tpu.pipeline_mode<synchronous>, transform_indices = @transform_5, window_bounds = array<i64: 1, 256>}, {pipeline_mode = #tpu.pipeline_mode<synchronous>, transform_indices = @transform_6, window_bounds = array<i64: 512, 256>}, {pipeline_mode = #tpu.pipeline_mode<synchronous>, transform_indices = @transform_7, window_bounds = array<i64: 1, 256>}, {pipeline_mode = #tpu.pipeline_mode<synchronous>, transform_indices = @transform_8, window_bounds = array<i64: 1, 256>}, {pipeline_mode = #tpu.pipeline_mode<synchronous>, transform_indices = @transform_9, window_bounds = array<i64: 1, 1>}, {pipeline_mode = #tpu.pipeline_mode<synchronous>, transform_indices = @transform_10, window_bounds = array<i64: 512, 2>}, {pipeline_mode = #tpu.pipeline_mode<synchronous>, transform_indices = @transform_11, window_bounds = array<i64: 1, 2>}, {transform_indices = @transform_12, window_bounds = array<i64: 1, 512>}, {pipeline_mode = #tpu.pipeline_mode<synchronous>, transform_indices = @transform_13, window_bounds = array<i64: 1, 2>}, {pipeline_mode = #tpu.pipeline_mode<synchronous>, transform_indices = @transform_14, window_bounds = array<i64: 1, 512>}]} {
    %c0_i32 = arith.constant 0 : i32
    %0 = arith.cmpi eq, %arg0, %c0_i32 : i32
    %1 = arith.extui %0 : i1 to i32
    %c0_i32_0 = arith.constant 0 : i32
    %2 = arith.cmpi ne, %1, %c0_i32_0 : i32
    scf.if %2 {
      %cst_48 = arith.constant 0xFF800000 : f32
      %85 = vector.broadcast %cst_48 : f32 to vector<1x1xf32>
      %c0_49 = arith.constant 0 : index
      %c0_50 = arith.constant 0 : index
      %86 = vector.load %arg16[%c0_49, %c0_50] : memref<1x1xf32, #tpu.memory_space<vmem>>, vector<1x1xf32>
      tpu.vector_store %arg16[%c0_49, %c0_50], %85 {strides = array<i32>} : memref<1x1xf32, #tpu.memory_space<vmem>>, vector<1x1xf32>,
      %cst_51 = arith.constant 0.000000e+00 : f32
      %87 = vector.broadcast %cst_51 : f32 to vector<1x1xf32>
      %c0_52 = arith.constant 0 : index
      %c0_53 = arith.constant 0 : index
      %88 = vector.load %arg17[%c0_52, %c0_53] : memref<1x1xf32, #tpu.memory_space<vmem>>, vector<1x1xf32>
      tpu.vector_store %arg17[%c0_52, %c0_53], %87 {strides = array<i32>} : memref<1x1xf32, #tpu.memory_space<vmem>>, vector<1x1xf32>,
      %cst_54 = arith.constant 0.000000e+00 : f32
      %89 = vector.broadcast %cst_54 : f32 to vector<1x512xf32>
      %c0_55 = arith.constant 0 : index
      %c0_56 = arith.constant 0 : index
      %90 = vector.load %arg18[%c0_55, %c0_56] : memref<1x512xf32, #tpu.memory_space<vmem>>, vector<1x512xf32>
      tpu.vector_store %arg18[%c0_55, %c0_56], %89 {strides = array<i32>} : memref<1x512xf32, #tpu.memory_space<vmem>>, vector<1x512xf32>,
    } else {
    }
    %c0 = arith.constant 0 : index
    %c0_1 = arith.constant 0 : index
    %3 = vector.load %arg2[%c0, %c0_1] : memref<512x1024xf32, #tpu.memory_space<vmem>>, vector<512x1024xf32>
    %4 = arith.truncf %3 : vector<512x1024xf32> to vector<512x1024xbf16>
    %c0_2 = arith.constant 0 : index
    %c0_3 = arith.constant 0 : index
    %5 = vector.load %arg3[%c0_2, %c0_3] : memref<1024x512xbf16, #tpu.memory_space<vmem>>, vector<1024x512xbf16>
    %cst = arith.constant dense<0.000000e+00> : vector<512x512xf32>
    %6 = tpu.matmul %4, %5, %cst {dimension_numbers = #tpu.dot_dimension_numbers<[1], [0], [0], [1], [0, 0, 1, 1], [], []>} : vector<512x1024xbf16>, vector<1024x512xbf16>, vector<512x512xf32> -> vector<512x512xf32>
    %c0_4 = arith.constant 0 : index
    %c0_5 = arith.constant 0 : index
    %7 = vector.load %arg4[%c0_4, %c0_5] : memref<1x512xf32, #tpu.memory_space<vmem>>, vector<1x512xf32>
    %8 = vector.broadcast %7 : vector<1x512xf32> to vector<512x512xf32>
    %9 = arith.addf %6, %8 : vector<512x512xf32>
    %cst_6 = arith.constant 0.000000e+00 : f32
    %10 = vector.broadcast %cst_6 : f32 to vector<512x512xf32>
    %11 = arith.maximumf %9, %10 : vector<512x512xf32>
    %12 = tpu.iota {dimensions = array<i32: 0>} : vector<512x1xi32>
    %c512_i32 = arith.constant 512 : i32
    %13 = arith.muli %arg0, %c512_i32 : i32
    %14 = vector.broadcast %13 : i32 to vector<512x1xi32>
    %15 = arith.addi %14, %12 : vector<512x1xi32>
    %c0_7 = arith.constant 0 : index
    %16 = memref.load %arg1[%c0_7] : memref<1xi32, #tpu.memory_space<smem>>
    %17 = vector.broadcast %16 : i32 to vector<512x1xi32>
    %18 = arith.cmpi slt, %15, %17 : vector<512x1xi32>
    %cst_8 = arith.constant 0.000000e+00 : f32
    %19 = vector.shape_cast %18 : vector<512x1xi1> to vector<512x1xi1>
    %20 = vector.broadcast %19 : vector<512x1xi1> to vector<512x512xi1>
    %21 = vector.broadcast %cst_8 : f32 to vector<512x512xf32>
    %22 = arith.select %20, %11, %21 : vector<512x512xi1>, vector<512x512xf32>
    %23 = arith.truncf %22 : vector<512x512xf32> to vector<512x512xbf16>
    %c0_9 = arith.constant 0 : index
    %c0_10 = arith.constant 0 : index
    %24 = vector.load %arg5[%c0_9, %c0_10] : memref<512x256xbf16, #tpu.memory_space<vmem>>, vector<512x256xbf16>
    %cst_11 = arith.constant dense<0.000000e+00> : vector<512x256xf32>
    %25 = tpu.matmul %23, %24, %cst_11 {dimension_numbers = #tpu.dot_dimension_numbers<[1], [0], [0], [1], [0, 0, 1, 1], [], []>} : vector<512x512xbf16>, vector<512x256xbf16>, vector<512x256xf32> -> vector<512x256xf32>
    %c0_12 = arith.constant 0 : index
    %c0_13 = arith.constant 0 : index
    %26 = vector.load %arg6[%c0_12, %c0_13] : memref<1x256xf32, #tpu.memory_space<vmem>>, vector<1x256xf32>
    %27 = vector.broadcast %26 : vector<1x256xf32> to vector<512x256xf32>
    %28 = arith.addf %25, %27 : vector<512x256xf32>
    %29 = math.tanh %28 : vector<512x256xf32>
    %c0_14 = arith.constant 0 : index
    %c0_15 = arith.constant 0 : index
    %30 = vector.load %arg7[%c0_14, %c0_15] : memref<512x256xbf16, #tpu.memory_space<vmem>>, vector<512x256xbf16>
    %cst_16 = arith.constant dense<0.000000e+00> : vector<512x256xf32>
    %31 = tpu.matmul %23, %30, %cst_16 {dimension_numbers = #tpu.dot_dimension_numbers<[1], [0], [0], [1], [0, 0, 1, 1], [], []>} : vector<512x512xbf16>, vector<512x256xbf16>, vector<512x256xf32> -> vector<512x256xf32>
    %c0_17 = arith.constant 0 : index
    %c0_18 = arith.constant 0 : index
    %32 = vector.load %arg8[%c0_17, %c0_18] : memref<1x256xf32, #tpu.memory_space<vmem>>, vector<1x256xf32>
    %33 = vector.broadcast %32 : vector<1x256xf32> to vector<512x256xf32>
    %34 = arith.addf %31, %33 : vector<512x256xf32>
    %35 = arith.negf %34 : vector<512x256xf32>
    %36 = math.exp %35 : vector<512x256xf32>
    %cst_19 = arith.constant 1.000000e+00 : f32
    %37 = vector.broadcast %cst_19 : f32 to vector<512x256xf32>
    %38 = arith.addf %37, %36 : vector<512x256xf32>
    %39 = arith.divf %37, %38 : vector<512x256xf32>
    %40 = arith.mulf %29, %39 : vector<512x256xf32>
    %41 = arith.truncf %40 : vector<512x256xf32> to vector<512x256xbf16>
    %42 = tpu.transpose %41, [1, 0] : vector<512x256xbf16> -> vector<256x512xbf16>
    %c0_20 = arith.constant 0 : index
    %c0_21 = arith.constant 0 : index
    %43 = vector.load %arg9[%c0_20, %c0_21] : memref<1x256xbf16, #tpu.memory_space<vmem>>, vector<1x256xbf16>
    %cst_22 = arith.constant dense<0.000000e+00> : vector<1x512xf32>
    %44 = tpu.matmul %43, %42, %cst_22 {dimension_numbers = #tpu.dot_dimension_numbers<[1], [0], [0], [1], [0, 0, 1, 1], [], []>} : vector<1x256xbf16>, vector<256x512xbf16>, vector<1x512xf32> -> vector<1x512xf32>
    %c0_23 = arith.constant 0 : index
    %c0_24 = arith.constant 0 : index
    %45 = vector.load %arg10[%c0_23, %c0_24] : memref<1x1xf32, #tpu.memory_space<vmem>>, vector<1x1xf32>
    %46 = vector.broadcast %45 : vector<1x1xf32> to vector<1x512xf32>
    %47 = arith.addf %44, %46 : vector<1x512xf32>
    %c0_25 = arith.constant 0 : index
    %c0_26 = arith.constant 0 : index
    %48 = vector.load %arg13[%c0_25, %c0_26] : memref<1x512xf32, #tpu.memory_space<vmem>>, vector<1x512xf32>
    tpu.vector_store %arg13[%c0_25, %c0_26], %47 {strides = array<i32>} : memref<1x512xf32, #tpu.memory_space<vmem>>, vector<1x512xf32>,
    %49 = tpu.iota {dimensions = array<i32: 1>} : vector<1x512xi32>
    %c512_i32_27 = arith.constant 512 : i32
    %50 = arith.muli %arg0, %c512_i32_27 : i32
    %51 = vector.broadcast %50 : i32 to vector<1x512xi32>
    %52 = arith.addi %51, %49 : vector<1x512xi32>
    %c0_28 = arith.constant 0 : index
    %53 = memref.load %arg1[%c0_28] : memref<1xi32, #tpu.memory_space<smem>>
    %54 = vector.broadcast %53 : i32 to vector<1x512xi32>
    %55 = arith.cmpi slt, %52, %54 : vector<1x512xi32>
    %cst_29 = arith.constant 0xFF800000 : f32
    %56 = vector.broadcast %cst_29 : f32 to vector<1x512xf32>
    %57 = arith.select %55, %47, %56 : vector<1x512xi1>, vector<1x512xf32>
    %cst_30 = arith.constant dense<0xFF800000> : vector<1xf32>
    %58 = vector.multi_reduction <maximumf>, %57, %cst_30 [1] : vector<1x512xf32> to vector<1xf32>
    %59 = vector.shape_cast %58 : vector<1xf32> to vector<1x1xf32>
    %c0_31 = arith.constant 0 : index
    %c0_32 = arith.constant 0 : index
    %60 = vector.load %arg16[%c0_31, %c0_32] : memref<1x1xf32, #tpu.memory_space<vmem>>, vector<1x1xf32>
    %61 = arith.maximumf %60, %59 : vector<1x1xf32>
    %c0_33 = arith.constant 0 : index
    %c0_34 = arith.constant 0 : index
    %62 = vector.load %arg16[%c0_33, %c0_34] : memref<1x1xf32, #tpu.memory_space<vmem>>, vector<1x1xf32>
    %63 = arith.subf %62, %61 : vector<1x1xf32>
    %64 = math.exp %63 : vector<1x1xf32>
    %65 = vector.broadcast %61 : vector<1x1xf32> to vector<1x512xf32>
    %66 = arith.subf %57, %65 : vector<1x512xf32>
    %67 = math.exp %66 : vector<1x512xf32>
    %c0_35 = arith.constant 0 : index
    %c0_36 = arith.constant 0 : index
    %68 = vector.load %arg17[%c0_35, %c0_36] : memref<1x1xf32, #tpu.memory_space<vmem>>, vector<1x1xf32>
    %69 = arith.mulf %64, %68 : vector<1x1xf32>
    %cst_37 = arith.constant dense<0.000000e+00> : vector<1xf32>
    %70 = vector.multi_reduction <add>, %67, %cst_37 [1] : vector<1x512xf32> to vector<1xf32>
    %71 = vector.shape_cast %70 : vector<1xf32> to vector<1x1xf32>
    %72 = arith.addf %69, %71 : vector<1x1xf32>
    %c0_38 = arith.constant 0 : index
    %c0_39 = arith.constant 0 : index
    %73 = vector.load %arg17[%c0_38, %c0_39] : memref<1x1xf32, #tpu.memory_space<vmem>>, vector<1x1xf32>
    tpu.vector_store %arg17[%c0_38, %c0_39], %72 {strides = array<i32>} : memref<1x1xf32, #tpu.memory_space<vmem>>, vector<1x1xf32>,
    %c0_40 = arith.constant 0 : index
    %c0_41 = arith.constant 0 : index
    %74 = vector.load %arg18[%c0_40, %c0_41] : memref<1x512xf32, #tpu.memory_space<vmem>>, vector<1x512xf32>
    %75 = vector.broadcast %64 : vector<1x1xf32> to vector<1x512xf32>
    %76 = arith.mulf %75, %74 : vector<1x512xf32>
    %77 = arith.truncf %67 : vector<1x512xf32> to vector<1x512xbf16>
    %cst_42 = arith.constant dense<0.000000e+00> : vector<1x512xf32>
    %78 = tpu.matmul %77, %23, %cst_42 {dimension_numbers = #tpu.dot_dimension_numbers<[1], [0], [0], [1], [0, 0, 1, 1], [], []>} : vector<1x512xbf16>, vector<512x512xbf16>, vector<1x512xf32> -> vector<1x512xf32>
    %79 = arith.addf %76, %78 : vector<1x512xf32>
    %c0_43 = arith.constant 0 : index
    %c0_44 = arith.constant 0 : index
    %80 = vector.load %arg18[%c0_43, %c0_44] : memref<1x512xf32, #tpu.memory_space<vmem>>, vector<1x512xf32>
    tpu.vector_store %arg18[%c0_43, %c0_44], %79 {strides = array<i32>} : memref<1x512xf32, #tpu.memory_space<vmem>>, vector<1x512xf32>,
    %c0_45 = arith.constant 0 : index
    %c0_46 = arith.constant 0 : index
    %81 = vector.load %arg16[%c0_45, %c0_46] : memref<1x1xf32, #tpu.memory_space<vmem>>, vector<1x1xf32>
    tpu.vector_store %arg16[%c0_45, %c0_46], %61 {strides = array<i32>} : memref<1x1xf32, #tpu.memory_space<vmem>>, vector<1x1xf32>,
    %c1_i32 = arith.constant 1 : i32
    %82 = arith.cmpi eq, %arg0, %c1_i32 : i32
    %83 = arith.extui %82 : i1 to i32
    %c0_i32_47 = arith.constant 0 : i32
    %84 = arith.cmpi ne, %83, %c0_i32_47 : i32
    scf.if %84 {
      %c0_48 = arith.constant 0 : index
      %c0_49 = arith.constant 0 : index
      %85 = vector.load %arg17[%c0_48, %c0_49] : memref<1x1xf32, #tpu.memory_space<vmem>>, vector<1x1xf32>
      %cst_50 = arith.constant 1.000000e+00 : f32
      %86 = vector.broadcast %cst_50 : f32 to vector<1x1xf32>
      %87 = arith.divf %86, %85 : vector<1x1xf32>
      %c0_51 = arith.constant 0 : index
      %c0_52 = arith.constant 0 : index
      %88 = vector.load %arg18[%c0_51, %c0_52] : memref<1x512xf32, #tpu.memory_space<vmem>>, vector<1x512xf32>
      %89 = vector.broadcast %87 : vector<1x1xf32> to vector<1x512xf32>
      %90 = arith.mulf %88, %89 : vector<1x512xf32>
      %c0_53 = arith.constant 0 : index
      %c0_54 = arith.constant 0 : index
      %91 = vector.load %arg15[%c0_53, %c0_54] : memref<1x512xf32, #tpu.memory_space<vmem>>, vector<1x512xf32>
      tpu.vector_store %arg15[%c0_53, %c0_54], %90 {strides = array<i32>} : memref<1x512xf32, #tpu.memory_space<vmem>>, vector<1x512xf32>,
      %92 = arith.truncf %90 : vector<1x512xf32> to vector<1x512xbf16>
      %c0_55 = arith.constant 0 : index
      %c0_56 = arith.constant 0 : index
      %93 = vector.load %arg11[%c0_55, %c0_56] : memref<512x2xbf16, #tpu.memory_space<vmem>>, vector<512x2xbf16>
      %cst_57 = arith.constant dense<0.000000e+00> : vector<1x2xf32>
      %94 = tpu.matmul %92, %93, %cst_57 {dimension_numbers = #tpu.dot_dimension_numbers<[1], [0], [0], [1], [0, 0, 1, 1], [], []>} : vector<1x512xbf16>, vector<512x2xbf16>, vector<1x2xf32> -> vector<1x2xf32>
      %c0_58 = arith.constant 0 : index
      %c0_59 = arith.constant 0 : index
      %95 = vector.load %arg12[%c0_58, %c0_59] : memref<1x2xf32, #tpu.memory_space<vmem>>, vector<1x2xf32>
      %96 = arith.addf %94, %95 : vector<1x2xf32>
      %c0_60 = arith.constant 0 : index
      %c0_61 = arith.constant 0 : index
      %97 = vector.load %arg14[%c0_60, %c0_61] : memref<1x2xf32, #tpu.memory_space<vmem>>, vector<1x2xf32>
      tpu.vector_store %arg14[%c0_60, %c0_61], %96 {strides = array<i32>} : memref<1x2xf32, #tpu.memory_space<vmem>>, vector<1x2xf32>,
    } else {
    }
    return
  }
  func.func @transform_0(%arg0: i32) -> i32 {
    %c0_i32 = arith.constant 0 : i32
    %c0_i32_0 = arith.constant 0 : i32
    return %c0_i32 : i32
  }
  func.func @transform_1(%arg0: i32) -> (i32, i32) {
    %c0_i32 = arith.constant 0 : i32
    %c0_i32_0 = arith.constant 0 : i32
    return %arg0, %c0_i32 : i32, i32
  }
  func.func @transform_2(%arg0: i32) -> (i32, i32) {
    %c0_i32 = arith.constant 0 : i32
    %c0_i32_0 = arith.constant 0 : i32
    %c0_i32_1 = arith.constant 0 : i32
    return %c0_i32, %c0_i32_0 : i32, i32
  }
  func.func @transform_3(%arg0: i32) -> (i32, i32) {
    %c0_i32 = arith.constant 0 : i32
    %c0_i32_0 = arith.constant 0 : i32
    %c0_i32_1 = arith.constant 0 : i32
    return %c0_i32, %c0_i32_0 : i32, i32
  }
  func.func @transform_4(%arg0: i32) -> (i32, i32) {
    %c0_i32 = arith.constant 0 : i32
    %c0_i32_0 = arith.constant 0 : i32
    %c0_i32_1 = arith.constant 0 : i32
    return %c0_i32, %c0_i32_0 : i32, i32
  }
  func.func @transform_5(%arg0: i32) -> (i32, i32) {
    %c0_i32 = arith.constant 0 : i32
    %c0_i32_0 = arith.constant 0 : i32
    %c0_i32_1 = arith.constant 0 : i32
    return %c0_i32, %c0_i32_0 : i32, i32
  }
  func.func @transform_6(%arg0: i32) -> (i32, i32) {
    %c0_i32 = arith.constant 0 : i32
    %c0_i32_0 = arith.constant 0 : i32
    %c0_i32_1 = arith.constant 0 : i32
    return %c0_i32, %c0_i32_0 : i32, i32
  }
  func.func @transform_7(%arg0: i32) -> (i32, i32) {
    %c0_i32 = arith.constant 0 : i32
    %c0_i32_0 = arith.constant 0 : i32
    %c0_i32_1 = arith.constant 0 : i32
    return %c0_i32, %c0_i32_0 : i32, i32
  }
  func.func @transform_8(%arg0: i32) -> (i32, i32) {
    %c0_i32 = arith.constant 0 : i32
    %c0_i32_0 = arith.constant 0 : i32
    %c0_i32_1 = arith.constant 0 : i32
    return %c0_i32, %c0_i32_0 : i32, i32
  }
  func.func @transform_9(%arg0: i32) -> (i32, i32) {
    %c0_i32 = arith.constant 0 : i32
    %c0_i32_0 = arith.constant 0 : i32
    %c0_i32_1 = arith.constant 0 : i32
    return %c0_i32, %c0_i32_0 : i32, i32
  }
  func.func @transform_10(%arg0: i32) -> (i32, i32) {
    %c0_i32 = arith.constant 0 : i32
    %c0_i32_0 = arith.constant 0 : i32
    %c0_i32_1 = arith.constant 0 : i32
    return %c0_i32, %c0_i32_0 : i32, i32
  }
  func.func @transform_11(%arg0: i32) -> (i32, i32) {
    %c0_i32 = arith.constant 0 : i32
    %c0_i32_0 = arith.constant 0 : i32
    %c0_i32_1 = arith.constant 0 : i32
    return %c0_i32, %c0_i32_0 : i32, i32
  }
  func.func @transform_12(%arg0: i32) -> (i32, i32) {
    %c0_i32 = arith.constant 0 : i32
    %c0_i32_0 = arith.constant 0 : i32
    return %c0_i32, %arg0 : i32, i32
  }
  func.func @transform_13(%arg0: i32) -> (i32, i32) {
    %c0_i32 = arith.constant 0 : i32
    %c0_i32_0 = arith.constant 0 : i32
    %c0_i32_1 = arith.constant 0 : i32
    return %c0_i32, %c0_i32_0 : i32, i32
  }
  func.func @transform_14(%arg0: i32) -> (i32, i32) {
    %c0_i32 = arith.constant 0 : i32
    %c0_i32_0 = arith.constant 0 : i32
    %c0_i32_1 = arith.constant 0 : i32
    return %c0_i32, %c0_i32_0 : i32, i32
  }
}

</mosaic_0001>

<llo_original>
// kernel: clam_sb_forward.1
$region0: #{clam_sb_forward.1}
  #allocation0 [shape = 'u32[]', space=smem, size = 0x4, offset = 0x4, fixed_abs, tag = 'smem constant byte address 0x4 - core index']
  #allocation1 [shape = 'u32[144,128]{1,0:T(1,128)}', space=vmem, size = 0x12000, scoped, tag = 'internal scratch']
  #allocation2 [shape = 'f32[1,1]{1,0:T(1,128)}', space=vmem, size = 0x200, scoped, tag = 'scratch operand']
  #allocation3 [shape = 'f32[1,1]{1,0:T(1,128)}', space=vmem, size = 0x200, scoped, tag = 'scratch operand']
  #allocation4 [shape = 'f32[1,512]{1,0:T(1,128)}', space=vmem, size = 0x800, scoped, tag = 'scratch operand']
  #allocation5 [shape = 's32[1]{0:T(128)S(6)}', space=smem, size = 0x200, scoped, tag = 'scoped memory for clam_sb_forward.1']
  #allocation6 [shape = 'f32[1,1]{1,0:T(1,128)S(1)}', space=vmem, size = 0x200, scoped, tag = 'scoped memory for clam_sb_forward.1']
  %s0 = inlined_call_operand.<no memory space> [shape: s32[1], index: 0, kind: input, shape index: {}]
  %s1 = inlined_call_operand.vmem [shape: f32[600,1024], index: 1, kind: input, shape index: {}]
  %s2 = inlined_call_operand.vmem [shape: bf16[1024,512], index: 2, kind: input, shape index: {}]
  %s3 = inlined_call_operand.vmem [shape: f32[1,512], index: 3, kind: input, shape index: {}]
  %s4 = inlined_call_operand.vmem [shape: bf16[512,256], index: 4, kind: input, shape index: {}]
  %s5 = inlined_call_operand.vmem [shape: f32[1,256], index: 5, kind: input, shape index: {}]
  %s6 = inlined_call_operand.vmem [shape: bf16[512,256], index: 6, kind: input, shape index: {}]
  %s7 = inlined_call_operand.vmem [shape: f32[1,256], index: 7, kind: input, shape index: {}]
  %s8 = inlined_call_operand.vmem [shape: bf16[1,256], index: 8, kind: input, shape index: {}]
  %s9 = inlined_call_operand.<no memory space> [shape: f32[1,1], index: 9, kind: input, shape index: {}]
  %s10 = inlined_call_operand.vmem [shape: bf16[512,2], index: 10, kind: input, shape index: {}]
  %s11 = inlined_call_operand.vmem [shape: f32[1,2], index: 11, kind: input, shape index: {}]
  %s12 = inlined_call_operand.vmem [shape: f32[1,1024], index: 12, kind: output, shape index: {0}]
  %s13 = inlined_call_operand.vmem [shape: f32[1,2], index: 13, kind: output, shape index: {1}]
  %s14 = inlined_call_operand.hbm [shape: f32[1,512], index: 14, kind: output, shape index: {2}]
  %15 = xla_tuple %s12, %s13, %s14
  %s16 = sld [smem:[#allocation0]]
  $region105: #{clam_sb_forward.1} parent=0
    _
  %s18 = ssub.s32 1, %s16
  %s19 = scalar_select 0, %s18, %s16
  %20 = sst [smem:[#allocation5]] %s0
  %v21 = vstv %s9
  %22 = vst [vmem:[#allocation6] sm:$0x1] %v21
  $region1: #{clam_sb_forward.1} parent=0
    #allocation7 [shape = 'u8[2048]{0}', space=vmem, size = 0x800, scoped, tag = 'output window, operand 2, single buffered']
    #allocation8 [shape = 's32[2]{0}', space=sflag, size = 0x8, scoped, tag = 'scoped memory for clam_sb_forward.1']
    %23 = vsyncpa [#allocation8], 0
    loop: start=0, step=1, limit=4
    $region2: #{clam_sb_forward.1} parent=1 // loop_pre_header
      _
    $region3: #{clam_sb_forward.1} parent=1 // loop_header
      %s25 = sphi 0, %s29
      %p26 = scmp.ge.s32.totalorder %s25, 4
      %s33 = sphi 0, %s33
      %s35 = sphi 0, %s33
      %s36 = sphi 0, %s35
      %s50 = sphi 0, %s36
      %s56 = sphi 0, %s58
      %s59 = sphi 0, %s56
      %s60 = sphi 0, %s59
      %s76 = sphi 0, %s60
      %s80 = sphi 0, %s80
      %s82 = sphi 0, %s80
      %s83 = sphi 0, %s82
      %s97 = sphi 0, %s83
      %s101 = sphi 0, %s101
      %s103 = sphi 0, %s101
      %s104 = sphi 0, %s103
      %s118 = sphi 0, %s104
      %s122 = sphi 0, %s122
      %s124 = sphi 0, %s122
      %s125 = sphi 0, %s124
      %s139 = sphi 0, %s125
      %s143 = sphi 0, %s143
      %s145 = sphi 0, %s143
      %s146 = sphi 0, %s145
      %s160 = sphi 0, %s146
      %s164 = sphi 0, %s164
      %s166 = sphi 0, %s164
      %s167 = sphi 0, %s166
      %s181 = sphi 0, %s167
      %s185 = sphi 0, %s185
      %s187 = sphi 0, %s185
      %s188 = sphi 0, %s187
      %s202 = sphi 0, %s188
      %s206 = sphi 0, %s206
      %s208 = sphi 0, %s206
      %s209 = sphi 0, %s208
      %s223 = sphi 0, %s209
      %s227 = sphi 0, %s227
      %s229 = sphi 0, %s227
      %s230 = sphi 0, %s229
      %s244 = sphi 0, %s230
      %s248 = sphi 0, %s248
      %s250 = sphi 0, %s248
      %s251 = sphi 0, %s250
      %s265 = sphi 0, %s251
      %s269 = sphi 0, %s269
      %s271 = sphi 0, %s269
      %s272 = sphi 0, %s271
      %s286 = sphi 0, %s272
      %s292 = sphi 0, %s294
      %s295 = sphi 0, %s292
      %s296 = sphi 0, %s295
      %s312 = sphi 0, %s296
      %s316 = sphi 0, %s316
      %s318 = sphi 0, %s316
      %s319 = sphi 0, %s318
      %s333 = sphi 0, %s319
      %s337 = sphi 0, %s337
      %s339 = sphi 0, %s337
      %s340 = sphi 0, %s339
      %s354 = sphi 0, %s340
    $region4: #{clam_sb_forward.1} parent=1 // loop_header_branch
      %28 = sbr.rel (%p26) target = $region8
    $region5: #{clam_sb_forward.1} parent=1 // loop_body
      %s30 = ssub.s32 %s25, 1
      %s31 = ssub.s32 %s25, 2
      %s32 = sadd.s32 %s25, 1
      %s34 = sadd.s32 %s33, 1
      %p37 = scmp.eq.s32.totalorder %s25, 1
      %p38 = scmp.ne.s32.totalorder %s33, %s35
      %p39 = scmp.eq.s32.totalorder %s25, 0
      %p40 = por %p38, %p39
      %p41 = scmp.ne.s32.totalorder %s33, %s35
      %p42 = scmp.eq.s32.totalorder %s30, 1
      %p43 = por %p41, %p42
      %p44 = scmp.ne.s32.totalorder %s35, %s36
      %p45 = scmp.eq.s32.totalorder %s30, 0
      %p46 = por %p44, %p45
      %p47 = scmp.ne.s32.totalorder %s35, %s36
      %p48 = scmp.eq.s32.totalorder %s31, 1
      %p49 = por %p47, %p48
      %p51 = scmp.ne.s32.totalorder %s36, %s50
      %p52 = scmp.eq.s32.totalorder %s31, 0
      %p53 = por %p51, %p52
      %s54 = ssub.s32 %s25, %s32
      %p55 = scmp.eq.s32.totalorder %s54, 0
      %s57 = sadd.s32 %s56, 1
      %s58 = scalar_select %p55, %s56, %s57
      %p61 = pneg %p55
      %p62 = scmp.eq.s32.totalorder %s25, 1
      %p63 = por %p61, %p62
      %p64 = scmp.ne.s32.totalorder %s56, %s59
      %p65 = scmp.eq.s32.totalorder %s25, 0
      %p66 = por %p64, %p65
      %p67 = scmp.ne.s32.totalorder %s56, %s59
      %p68 = scmp.eq.s32.totalorder %s30, 1
      %p69 = por %p67, %p68
      %p70 = scmp.ne.s32.totalorder %s59, %s60
      %p71 = scmp.eq.s32.totalorder %s30, 0
      %p72 = por %p70, %p71
      %p73 = scmp.ne.s32.totalorder %s59, %s60
      %p74 = scmp.eq.s32.totalorder %s31, 1
      %p75 = por %p73, %p74
      %p77 = scmp.ne.s32.totalorder %s60, %s76
      %p78 = scmp.eq.s32.totalorder %s31, 0
      %p79 = por %p77, %p78
      %s81 = sadd.s32 %s80, 1
      %p84 = scmp.eq.s32.totalorder %s25, 1
      %p85 = scmp.ne.s32.totalorder %s80, %s82
      %p86 = scmp.eq.s32.totalorder %s25, 0
      %p87 = por %p85, %p86
      %p88 = scmp.ne.s32.totalorder %s80, %s82
      %p89 = scmp.eq.s32.totalorder %s30, 1
      %p90 = por %p88, %p89
      %p91 = scmp.ne.s32.totalorder %s82, %s83
      %p92 = scmp.eq.s32.totalorder %s30, 0
      %p93 = por %p91, %p92
      %p94 = scmp.ne.s32.totalorder %s82, %s83
      %p95 = scmp.eq.s32.totalorder %s31, 1
      %p96 = por %p94, %p95
      %p98 = scmp.ne.s32.totalorder %s83, %s97
      %p99 = scmp.eq.s32.totalorder %s31, 0
      %p100 = por %p98, %p99
      %s102 = sadd.s32 %s101, 1
      %p105 = scmp.eq.s32.totalorder %s25, 1
      %p106 = scmp.ne.s32.totalorder %s101, %s103
      %p107 = scmp.eq.s32.totalorder %s25, 0
      %p108 = por %p106, %p107
      %p109 = scmp.ne.s32.totalorder %s101, %s103
      %p110 = scmp.eq.s32.totalorder %s30, 1
      %p111 = por %p109, %p110
      %p112 = scmp.ne.s32.totalorder %s103, %s104
      %p113 = scmp.eq.s32.totalorder %s30, 0
      %p114 = por %p112, %p113
      %p115 = scmp.ne.s32.totalorder %s103, %s104
      %p116 = scmp.eq.s32.totalorder %s31, 1
      %p117 = por %p115, %p116
      %p119 = scmp.ne.s32.totalorder %s104, %s118
      %p120 = scmp.eq.s32.totalorder %s31, 0
      %p121 = por %p119, %p120
      %s123 = sadd.s32 %s122, 1
      %p126 = scmp.eq.s32.totalorder %s25, 1
      %p127 = scmp.ne.s32.totalorder %s122, %s124
      %p128 = scmp.eq.s32.totalorder %s25, 0
      %p129 = por %p127, %p128
      %p130 = scmp.ne.s32.totalorder %s122, %s124
      %p131 = scmp.eq.s32.totalorder %s30, 1
      %p132 = por %p130, %p131
      %p133 = scmp.ne.s32.totalorder %s124, %s125
      %p134 = scmp.eq.s32.totalorder %s30, 0
      %p135 = por %p133, %p134
      %p136 = scmp.ne.s32.totalorder %s124, %s125
      %p137 = scmp.eq.s32.totalorder %s31, 1
      %p138 = por %p136, %p137
      %p140 = scmp.ne.s32.totalorder %s125, %s139
      %p141 = scmp.eq.s32.totalorder %s31, 0
      %p142 = por %p140, %p141
      %s144 = sadd.s32 %s143, 1
      %p147 = scmp.eq.s32.totalorder %s25, 1
      %p148 = scmp.ne.s32.totalorder %s143, %s145
      %p149 = scmp.eq.s32.totalorder %s25, 0
      %p150 = por %p148, %p149
      %p151 = scmp.ne.s32.totalorder %s143, %s145
      %p152 = scmp.eq.s32.totalorder %s30, 1
      %p153 = por %p151, %p152
      %p154 = scmp.ne.s32.totalorder %s145, %s146
      %p155 = scmp.eq.s32.totalorder %s30, 0
      %p156 = por %p154, %p155
      %p157 = scmp.ne.s32.totalorder %s145, %s146
      %p158 = scmp.eq.s32.totalorder %s31, 1
      %p159 = por %p157, %p158
      %p161 = scmp.ne.s32.totalorder %s146, %s160
      %p162 = scmp.eq.s32.totalorder %s31, 0
      %p163 = por %p161, %p162
      %s165 = sadd.s32 %s164, 1
      %p168 = scmp.eq.s32.totalorder %s25, 1
      %p169 = scmp.ne.s32.totalorder %s164, %s166
      %p170 = scmp.eq.s32.totalorder %s25, 0
      %p171 = por %p169, %p170
      %p172 = scmp.ne.s32.totalorder %s164, %s166
      %p173 = scmp.eq.s32.totalorder %s30, 1
      %p174 = por %p172, %p173
      %p175 = scmp.ne.s32.totalorder %s166, %s167
      %p176 = scmp.eq.s32.totalorder %s30, 0
      %p177 = por %p175, %p176
      %p178 = scmp.ne.s32.totalorder %s166, %s167
      %p179 = scmp.eq.s32.totalorder %s31, 1
      %p180 = por %p178, %p179
      %p182 = scmp.ne.s32.totalorder %s167, %s181
      %p183 = scmp.eq.s32.totalorder %s31, 0
      %p184 = por %p182, %p183
      %s186 = sadd.s32 %s185, 1
      %p189 = scmp.eq.s32.totalorder %s25, 1
      %p190 = scmp.ne.s32.totalorder %s185, %s187
      %p191 = scmp.eq.s32.totalorder %s25, 0
      %p192 = por %p190, %p191
      %p193 = scmp.ne.s32.totalorder %s185, %s187
      %p194 = scmp.eq.s32.totalorder %s30, 1
      %p195 = por %p193, %p194
      %p196 = scmp.ne.s32.totalorder %s187, %s188
      %p197 = scmp.eq.s32.totalorder %s30, 0
      %p198 = por %p196, %p197
      %p199 = scmp.ne.s32.totalorder %s187, %s188
      %p200 = scmp.eq.s32.totalorder %s31, 1
      %p201 = por %p199, %p200
      %p203 = scmp.ne.s32.totalorder %s188, %s202
      %p204 = scmp.eq.s32.totalorder %s31, 0
      %p205 = por %p203, %p204
      %s207 = sadd.s32 %s206, 1
      %p210 = scmp.eq.s32.totalorder %s25, 1
      %p211 = scmp.ne.s32.totalorder %s206, %s208
      %p212 = scmp.eq.s32.totalorder %s25, 0
      %p213 = por %p211, %p212
      %p214 = scmp.ne.s32.totalorder %s206, %s208
      %p215 = scmp.eq.s32.totalorder %s30, 1
      %p216 = por %p214, %p215
      %p217 = scmp.ne.s32.totalorder %s208, %s209
      %p218 = scmp.eq.s32.totalorder %s30, 0
      %p219 = por %p217, %p218
      %p220 = scmp.ne.s32.totalorder %s208, %s209
      %p221 = scmp.eq.s32.totalorder %s31, 1
      %p222 = por %p220, %p221
      %p224 = scmp.ne.s32.totalorder %s209, %s223
      %p225 = scmp.eq.s32.totalorder %s31, 0
      %p226 = por %p224, %p225
      %s228 = sadd.s32 %s227, 1
      %p231 = scmp.eq.s32.totalorder %s25, 1
      %p232 = scmp.ne.s32.totalorder %s227, %s229
      %p233 = scmp.eq.s32.totalorder %s25, 0
      %p234 = por %p232, %p233
      %p235 = scmp.ne.s32.totalorder %s227, %s229
      %p236 = scmp.eq.s32.totalorder %s30, 1
      %p237 = por %p235, %p236
      %p238 = scmp.ne.s32.totalorder %s229, %s230
      %p239 = scmp.eq.s32.totalorder %s30, 0
      %p240 = por %p238, %p239
      %p241 = scmp.ne.s32.totalorder %s229, %s230
      %p242 = scmp.eq.s32.totalorder %s31, 1
      %p243 = por %p241, %p242
      %p245 = scmp.ne.s32.totalorder %s230, %s244
      %p246 = scmp.eq.s32.totalorder %s31, 0
      %p247 = por %p245, %p246
      %s249 = sadd.s32 %s248, 1
      %p252 = scmp.eq.s32.totalorder %s25, 1
      %p253 = scmp.ne.s32.totalorder %s248, %s250
      %p254 = scmp.eq.s32.totalorder %s25, 0
      %p255 = por %p253, %p254
      %p256 = scmp.ne.s32.totalorder %s248, %s250
      %p257 = scmp.eq.s32.totalorder %s30, 1
      %p258 = por %p256, %p257
      %p259 = scmp.ne.s32.totalorder %s250, %s251
      %p260 = scmp.eq.s32.totalorder %s30, 0
      %p261 = por %p259, %p260
      %p262 = scmp.ne.s32.totalorder %s250, %s251
      %p263 = scmp.eq.s32.totalorder %s31, 1
      %p264 = por %p262, %p263
      %p266 = scmp.ne.s32.totalorder %s251, %s265
      %p267 = scmp.eq.s32.totalorder %s31, 0
      %p268 = por %p266, %p267
      %s270 = sadd.s32 %s269, 1
      %p273 = scmp.eq.s32.totalorder %s25, 1
      %p274 = scmp.ne.s32.totalorder %s269, %s271
      %p275 = scmp.eq.s32.totalorder %s25, 0
      %p276 = por %p274, %p275
      %p277 = scmp.ne.s32.totalorder %s269, %s271
      %p278 = scmp.eq.s32.totalorder %s30, 1
      %p279 = por %p277, %p278
      %p280 = scmp.ne.s32.totalorder %s271, %s272
      %p281 = scmp.eq.s32.totalorder %s30, 0
      %p282 = por %p280, %p281
      %p283 = scmp.ne.s32.totalorder %s271, %s272
      %p284 = scmp.eq.s32.totalorder %s31, 1
      %p285 = por %p283, %p284
      %p287 = scmp.ne.s32.totalorder %s272, %s286
      %p288 = scmp.eq.s32.totalorder %s31, 0
      %p289 = por %p287, %p288
      %s290 = ssub.s32 %s25, %s32
      %p291 = scmp.eq.s32.totalorder %s290, 0
      %s293 = sadd.s32 %s292, 1
      %s294 = scalar_select %p291, %s292, %s293
      %p297 = pneg %p291
      %p298 = scmp.eq.s32.totalorder %s25, 1
      %p299 = por %p297, %p298
      %p300 = scmp.ne.s32.totalorder %s292, %s295
      %p301 = scmp.eq.s32.totalorder %s25, 0
      %p302 = por %p300, %p301
      %p303 = scmp.ne.s32.totalorder %s292, %s295
      %p304 = scmp.eq.s32.totalorder %s30, 1
      %p305 = por %p303, %p304
      %p306 = scmp.ne.s32.totalorder %s295, %s296
      %p307 = scmp.eq.s32.totalorder %s30, 0
      %p308 = por %p306, %p307
      %p309 = scmp.ne.s32.totalorder %s295, %s296
      %p310 = scmp.eq.s32.totalorder %s31, 1
      %p311 = por %p309, %p310
      %p313 = scmp.ne.s32.totalorder %s296, %s312
      %p314 = scmp.eq.s32.totalorder %s31, 0
      %p315 = por %p313, %p314
      %s317 = sadd.s32 %s316, 1
      %p320 = scmp.eq.s32.totalorder %s25, 1
      %p321 = scmp.ne.s32.totalorder %s316, %s318
      %p322 = scmp.eq.s32.totalorder %s25, 0
      %p323 = por %p321, %p322
      %p324 = scmp.ne.s32.totalorder %s316, %s318
      %p325 = scmp.eq.s32.totalorder %s30, 1
      %p326 = por %p324, %p325
      %p327 = scmp.ne.s32.totalorder %s318, %s319
      %p328 = scmp.eq.s32.totalorder %s30, 0
      %p329 = por %p327, %p328
      %p330 = scmp.ne.s32.totalorder %s318, %s319
      %p331 = scmp.eq.s32.totalorder %s31, 1
      %p332 = por %p330, %p331
      %p334 = scmp.ne.s32.totalorder %s319, %s333
      %p335 = scmp.eq.s32.totalorder %s31, 0
      %p336 = por %p334, %p335
      %s338 = sadd.s32 %s337, 1
      %p341 = scmp.eq.s32.totalorder %s25, 1
      %p342 = scmp.ne.s32.totalorder %s337, %s339
      %p343 = scmp.eq.s32.totalorder %s25, 0
      %p344 = por %p342, %p343
      %p345 = scmp.ne.s32.totalorder %s337, %s339
      %p346 = scmp.eq.s32.totalorder %s30, 1
      %p347 = por %p345, %p346
      %p348 = scmp.ne.s32.totalorder %s339, %s340
      %p349 = scmp.eq.s32.totalorder %s30, 0
      %p350 = por %p348, %p349
      %p351 = scmp.ne.s32.totalorder %s339, %s340
      %p352 = scmp.eq.s32.totalorder %s31, 1
      %p353 = por %p351, %p352
      %p355 = scmp.ne.s32.totalorder %s340, %s354
      %p356 = scmp.eq.s32.totalorder %s31, 0
      %p357 = por %p355, %p356
      %p358 = scmp.le.s32.totalorder 1, %s25
      %p359 = scmp.lt.s32.totalorder %s25, 3
      %p360 = pnand %p358, %p359
      %p361 = pneg %p360
      // Predicated region
      $region9: #{clam_sb_forward.1} parent=5 // pred_check
        _
      $region10: #{clam_sb_forward.1} parent=5 // pred_check_branch
        %363 = sbr.rel (%p360) target = $region12
      $region11: #{clam_sb_forward.1} parent=5 // pred_region
        %s364 = ssub.s32 %s25, 1
        // Predicated region
        $region13: #{clam_sb_forward.1} parent=11 // pred_check
          %p365 = pneg %p46
        $region14: #{clam_sb_forward.1} parent=11 // pred_check_branch
          %367 = sbr.rel (%p365) target = $region16
        $region15: #{clam_sb_forward.1} parent=11 // pred_region
          _
        $region16: #{clam_sb_forward.1} parent=11 // pred_fallthru
          _
        // Predicated region
        $region17: #{clam_sb_forward.1} parent=11 // pred_check
          %p368 = pneg %p93
        $region18: #{clam_sb_forward.1} parent=11 // pred_check_branch
          %370 = sbr.rel (%p368) target = $region20
        $region19: #{clam_sb_forward.1} parent=11 // pred_region
          _
        $region20: #{clam_sb_forward.1} parent=11 // pred_fallthru
          _
        // Predicated region
        $region21: #{clam_sb_forward.1} parent=11 // pred_check
          %p371 = pneg %p114
        $region22: #{clam_sb_forward.1} parent=11 // pred_check_branch
          %373 = sbr.rel (%p371) target = $region24
        $region23: #{clam_sb_forward.1} parent=11 // pred_region
          _
        $region24: #{clam_sb_forward.1} parent=11 // pred_fallthru
          _
        // Predicated region
        $region25: #{clam_sb_forward.1} parent=11 // pred_check
          %p374 = pneg %p135
        $region26: #{clam_sb_forward.1} parent=11 // pred_check_branch
          %376 = sbr.rel (%p374) target = $region28
        $region27: #{clam_sb_forward.1} parent=11 // pred_region
          _
        $region28: #{clam_sb_forward.1} parent=11 // pred_fallthru
          _
        // Predicated region
        $region29: #{clam_sb_forward.1} parent=11 // pred_check
          %p377 = pneg %p156
        $region30: #{clam_sb_forward.1} parent=11 // pred_check_branch
          %379 = sbr.rel (%p377) target = $region32
        $region31: #{clam_sb_forward.1} parent=11 // pred_region
          _
        $region32: #{clam_sb_forward.1} parent=11 // pred_fallthru
          _
        // Predicated region
        $region33: #{clam_sb_forward.1} parent=11 // pred_check
          %p380 = pneg %p177
        $region34: #{clam_sb_forward.1} parent=11 // pred_check_branch
          %382 = sbr.rel (%p380) target = $region36
        $region35: #{clam_sb_forward.1} parent=11 // pred_region
          _
        $region36: #{clam_sb_forward.1} parent=11 // pred_fallthru
          _
        // Predicated region
        $region37: #{clam_sb_forward.1} parent=11 // pred_check
          %p383 = pneg %p198
        $region38: #{clam_sb_forward.1} parent=11 // pred_check_branch
          %385 = sbr.rel (%p383) target = $region40
        $region39: #{clam_sb_forward.1} parent=11 // pred_region
          _
        $region40: #{clam_sb_forward.1} parent=11 // pred_fallthru
          _
        // Predicated region
        $region41: #{clam_sb_forward.1} parent=11 // pred_check
          %p386 = pneg %p219
        $region42: #{clam_sb_forward.1} parent=11 // pred_check_branch
          %388 = sbr.rel (%p386) target = $region44
        $region43: #{clam_sb_forward.1} parent=11 // pred_region
          _
        $region44: #{clam_sb_forward.1} parent=11 // pred_fallthru
          _
        // Predicated region
        $region45: #{clam_sb_forward.1} parent=11 // pred_check
          %p389 = pneg %p240
        $region46: #{clam_sb_forward.1} parent=11 // pred_check_branch
          %391 = sbr.rel (%p389) target = $region48
        $region47: #{clam_sb_forward.1} parent=11 // pred_region
          _
        $region48: #{clam_sb_forward.1} parent=11 // pred_fallthru
          _
        // Predicated region
        $region49: #{clam_sb_forward.1} parent=11 // pred_check
          %p392 = pneg %p261
        $region50: #{clam_sb_forward.1} parent=11 // pred_check_branch
          %394 = sbr.rel (%p392) target = $region52
        $region51: #{clam_sb_forward.1} parent=11 // pred_region
          _
        $region52: #{clam_sb_forward.1} parent=11 // pred_fallthru
          _
        // Predicated region
        $region53: #{clam_sb_forward.1} parent=11 // pred_check
          %p395 = pneg %p282
        $region54: #{clam_sb_forward.1} parent=11 // pred_check_branch
          %397 = sbr.rel (%p395) target = $region56
        $region55: #{clam_sb_forward.1} parent=11 // pred_region
          _
        $region56: #{clam_sb_forward.1} parent=11 // pred_fallthru
          _
      $region12: #{clam_sb_forward.1} parent=5 // pred_fallthru
        _
      %p398 = scmp.lt.s32.totalorder %s25, 2
      // Predicated region
      $region57: #{clam_sb_forward.1} parent=5 // pred_check
        %p399 = pneg %p398
      $region58: #{clam_sb_forward.1} parent=5 // pred_check_branch
        %401 = sbr.rel (%p399) target = $region60
      $region59: #{clam_sb_forward.1} parent=5 // pred_region
        // Predicated region
        $region61: #{clam_sb_forward.1} parent=59 // pred_check
          %p402 = pneg %p66
        $region62: #{clam_sb_forward.1} parent=59 // pred_check_branch
          %404 = sbr.rel (%p402) target = $region64
        $region63: #{clam_sb_forward.1} parent=59 // pred_region
          %s405 = smul.u32 64, %s25
          %s406 = ssub.s32 75, %s405
          %p407 = scmp.lt.s32.totalorder %s406, 64
          %s408 = scalar_select %p407, %s406, 64
          %s409 = smul.u32 128, %s408
          %s410 = smul.u32 %s409, 8
          %p411 = scmp.lt.s32.totalorder %s405, 74
          %s412 = scalar_select %p411, %s405, 74
          %s413 = smul.addr %s412, 8
          %s414 = smul.addr %s413, 8
          %s415 = scalar_lea.vmem %s1, %s414
          %s416 = smul.u32 64, %s25
          %s417 = ssub.s32 75, %s416
          %p418 = scmp.lt.s32.totalorder %s417, 64
          %s419 = scalar_select %p418, %s417, 64
          %s420 = smul.u32 128, %s419
          %s421 = smul.u32 %s420, 8
        $region64: #{clam_sb_forward.1} parent=59 // pred_fallthru
          _
      $region60: #{clam_sb_forward.1} parent=5 // pred_fallthru
        _
      %p422 = scmp.le.s32.totalorder 1, %s25
      %p423 = scmp.lt.s32.totalorder %s25, 3
      %p424 = pnand %p422, %p423
      %p425 = pneg %p424
      // Predicated region
      $region65: #{clam_sb_forward.1} parent=5 // pred_check
        _
      $region66: #{clam_sb_forward.1} parent=5 // pred_check_branch
        %427 = sbr.rel (%p424) target = $region68
      $region67: #{clam_sb_forward.1} parent=5 // pred_region
        %s428 = ssub.s32 %s25, 1
        %p429 = pneg %p46
        %p430 = pneg %p43
        %s431 = smul.u32 64, %s30
        %s432 = ssub.s32 75, %s431
        %p433 = scmp.lt.s32.totalorder %s432, 64
        %s434 = scalar_select %p433, %s432, 64
        %s435 = smul.u32 128, %s434
        %s436 = smul.u32 %s435, 8
        %p437 = scmp.lt.s32.totalorder %s431, 74
        %s438 = scalar_select %p437, %s431, 74
        %s439 = smul.addr %s438, 8
        %s440 = smul.addr %s439, 8
        %s441 = scalar_lea.vmem %s1, %s440
        %p442 = pneg %p72
        %p443 = pneg %p69
        %p444 = pneg %p93
        %p445 = pneg %p90
        %p446 = pneg %p114
        %p447 = pneg %p111
        %p448 = pneg %p135
        %p449 = pneg %p132
        %p450 = pneg %p156
        %p451 = pneg %p153
        %p452 = pneg %p177
        %p453 = pneg %p174
        %p454 = pneg %p198
        %p455 = pneg %p195
        %p456 = pneg %p219
        %p457 = pneg %p216
        %p458 = pneg %p240
        %p459 = pneg %p237
        %p460 = pneg %p261
        %p461 = pneg %p258
        %p462 = pneg %p282
        %p463 = pneg %p279
        %p464 = pneg %p308
        %p465 = pneg %p305
        %s466 = smul.u32 4, %s30
        %p467 = scmp.lt.s32.totalorder %s466, 7
        %s468 = scalar_select %p467, %s466, 7
        %s469 = scalar_lea.vmem %s12, %s468
        %p470 = pneg %p329
        %p471 = pneg %p326
        %p472 = pneg %p350
        %p473 = pneg %p347
        %s474 = smul.u32 64, %s30
        %s475 = ssub.s32 75, %s474
        %p476 = scmp.lt.s32.totalorder %s475, 64
        %s477 = scalar_select %p476, %s475, 64
        %s478 = smul.u32 128, %s477
        %s479 = smul.u32 %s478, 8
        %p480 = scmp.lt.s32.totalorder %s474, 74
        %s481 = scalar_select %p480, %s474, 74
        %s482 = smul.addr %s481, 8
        %s483 = smul.addr %s482, 8
        %s484 = scalar_lea.vmem %s1, %s483
        %s485 = smul.u32 64, %s30
        %s486 = ssub.s32 75, %s485
        %p487 = scmp.lt.s32.totalorder %s486, 64
        %s488 = scalar_select %p487, %s486, 64
        %s489 = smul.u32 128, %s488
        %s490 = smul.u32 %s489, 8
        %s491 = smul.u32 4, %s30
        %p492 = scmp.lt.s32.totalorder %s491, 7
        %s493 = scalar_select %p492, %s491, 7
        %s494 = scalar_lea.vmem %s12, %s493
        %s495 = smul.u32 4, %s30
        %p497 = scmp.eq.s32.totalorder %s30, 0
        // Predicated region
        $region69: #{clam_sb_forward.1} parent=67 // pred_check
          %p498 = pneg %p497
        $region70: #{clam_sb_forward.1} parent=67 // pred_check_branch
          %500 = sbr.rel (%p498) target = $region72
        $region71: #{clam_sb_forward.1} parent=67 // pred_region
          %vm501 = vcmask 0
          %502 = vst.msk [vmem:[#allocation2] sm:$0x1] %vm501, -inf
          %503 = vst.msk [vmem:[#allocation3] sm:$0x1] %vm501, 0.0
          %v504 = vlaneseq
          %vm505 = vcmp.ge.s32.totalorder %v504, 0
          %vm506 = vcmp.lt.s32.totalorder %v504, 512
          %vm507 = vmand %vm505, %vm506
          %508 = vst.msk [vmem:[#allocation4] sm:$0xf] %vm507, 0.0
        $region72: #{clam_sb_forward.1} parent=67 // pred_fallthru
          _
        %v509 = vld [vmem:[%s484] sm:$0xff]
        %v510 = vld [vmem:[%s484 + $0x8] sm:$0xff]
        %v511 = vld [vmem:[%s484 + $0x10] sm:$0xff]
        %v512 = vld [vmem:[%s484 + $0x18] sm:$0xff]
        %v513 = vld [vmem:[%s484 + $0x20] sm:$0xff]
        %v514 = vld [vmem:[%s484 + $0x28] sm:$0xff]
        %v515 = vld [vmem:[%s484 + $0x30] sm:$0xff]
        %v516 = vld [vmem:[%s484 + $0x38] sm:$0xff]
        %v517 = vld [vmem:[%s484 + $0x40] sm:$0xff]
        %v518 = vld [vmem:[%s484 + $0x48] sm:$0xff]
        %v519 = vld [vmem:[%s484 + $0x50] sm:$0xff]
        %v520 = vld [vmem:[%s484 + $0x58] sm:$0xff]
        %v521 = vld [vmem:[%s484 + $0x60] sm:$0xff]
        %v522 = vld [vmem:[%s484 + $0x68] sm:$0xff]
        %v523 = vld [vmem:[%s484 + $0x70] sm:$0xff]
        %v524 = vld [vmem:[%s484 + $0x78] sm:$0xff]
        %v525 = vld [vmem:[%s484 + $0x80] sm:$0xff]
        %v526 = vld [vmem:[%s484 + $0x88] sm:$0xff]
        %v527 = vld [vmem:[%s484 + $0x90] sm:$0xff]
        %v528 = vld [vmem:[%s484 + $0x98] sm:$0xff]
        %v529 = vld [vmem:[%s484 + $0xa0] sm:$0xff]
        %v530 = vld [vmem:[%s484 + $0xa8] sm:$0xff]
        %v531 = vld [vmem:[%s484 + $0xb0] sm:$0xff]
        %v532 = vld [vmem:[%s484 + $0xb8] sm:$0xff]
        %v533 = vld [vmem:[%s484 + $0xc0] sm:$0xff]
        %v534 = vld [vmem:[%s484 + $0xc8] sm:$0xff]
        %v535 = vld [vmem:[%s484 + $0xd0] sm:$0xff]
        %v536 = vld [vmem:[%s484 + $0xd8] sm:$0xff]
        %v537 = vld [vmem:[%s484 + $0xe0] sm:$0xff]
        %v538 = vld [vmem:[%s484 + $0xe8] sm:$0xff]
        %v539 = vld [vmem:[%s484 + $0xf0] sm:$0xff]
        %v540 = vld [vmem:[%s484 + $0xf8] sm:$0xff]
        %v541 = vld [vmem:[%s484 + $0x100] sm:$0xff]
        %v542 = vld [vmem:[%s484 + $0x108] sm:$0xff]
        %v543 = vld [vmem:[%s484 + $0x110] sm:$0xff]
        %v544 = vld [vmem:[%s484 + $0x118] sm:$0xff]
        %v545 = vld [vmem:[%s484 + $0x120] sm:$0xff]
        %v546 = vld [vmem:[%s484 + $0x128] sm:$0xff]
        %v547 = vld [vmem:[%s484 + $0x130] sm:$0xff]
        %v548 = vld [vmem:[%s484 + $0x138] sm:$0xff]
        %v549 = vld [vmem:[%s484 + $0x140] sm:$0xff]
        %v550 = vld [vmem:[%s484 + $0x148] sm:$0xff]
        %v551 = vld [vmem:[%s484 + $0x150] sm:$0xff]
        %v552 = vld [vmem:[%s484 + $0x158] sm:$0xff]
        %v553 = vld [vmem:[%s484 + $0x160] sm:$0xff]
        %v554 = vld [vmem:[%s484 + $0x168] sm:$0xff]
        %v555 = vld [vmem:[%s484 + $0x170] sm:$0xff]
        %v556 = vld [vmem:[%s484 + $0x178] sm:$0xff]
        %v557 = vld [vmem:[%s484 + $0x180] sm:$0xff]
        %v558 = vld [vmem:[%s484 + $0x188] sm:$0xff]
        %v559 = vld [vmem:[%s484 + $0x190] sm:$0xff]
        %v560 = vld [vmem:[%s484 + $0x198] sm:$0xff]
        %v561 = vld [vmem:[%s484 + $0x1a0] sm:$0xff]
        %v562 = vld [vmem:[%s484 + $0x1a8] sm:$0xff]
        %v563 = vld [vmem:[%s484 + $0x1b0] sm:$0xff]
        %v564 = vld [vmem:[%s484 + $0x1b8] sm:$0xff]
        %v565 = vld [vmem:[%s484 + $0x1c0] sm:$0xff]
        %v566 = vld [vmem:[%s484 + $0x1c8] sm:$0xff]
        %v567 = vld [vmem:[%s484 + $0x1d0] sm:$0xff]
        %v568 = vld [vmem:[%s484 + $0x1d8] sm:$0xff]
        %v569 = vld [vmem:[%s484 + $0x1e0] sm:$0xff]
        %v570 = vld [vmem:[%s484 + $0x1e8] sm:$0xff]
        %v571 = vld [vmem:[%s484 + $0x1f0] sm:$0xff]
        %v572 = vld [vmem:[%s484 + $0x1f8] sm:$0xff]
        %v573 = vld [vmem:[%s484 + $0x200] sm:$0xff]
        %v574 = vld [vmem:[%s484 + $0x208] sm:$0xff]
        %v575 = vld [vmem:[%s484 + $0x210] sm:$0xff]
        %v576 = vld [vmem:[%s484 + $0x218] sm:$0xff]
        %v577 = vld [vmem:[%s484 + $0x220] sm:$0xff]
        %v578 = vld [vmem:[%s484 + $0x228] sm:$0xff]
        %v579 = vld [vmem:[%s484 + $0x230] sm:$0xff]
        %v580 = vld [vmem:[%s484 + $0x238] sm:$0xff]
        %v581 = vld [vmem:[%s484 + $0x240] sm:$0xff]
        %v582 = vld [vmem:[%s484 + $0x248] sm:$0xff]
        %v583 = vld [vmem:[%s484 + $0x250] sm:$0xff]
        %v584 = vld [vmem:[%s484 + $0x258] sm:$0xff]
        %v585 = vld [vmem:[%s484 + $0x260] sm:$0xff]
        %v586 = vld [vmem:[%s484 + $0x268] sm:$0xff]
        %v587 = vld [vmem:[%s484 + $0x270] sm:$0xff]
        %v588 = vld [vmem:[%s484 + $0x278] sm:$0xff]
        %v589 = vld [vmem:[%s484 + $0x280] sm:$0xff]
        %v590 = vld [vmem:[%s484 + $0x288] sm:$0xff]
        %v591 = vld [vmem:[%s484 + $0x290] sm:$0xff]
        %v592 = vld [vmem:[%s484 + $0x298] sm:$0xff]
        %v593 = vld [vmem:[%s484 + $0x2a0] sm:$0xff]
        %v594 = vld [vmem:[%s484 + $0x2a8] sm:$0xff]
        %v595 = vld [vmem:[%s484 + $0x2b0] sm:$0xff]
        %v596 = vld [vmem:[%s484 + $0x2b8] sm:$0xff]
        %v597 = vld [vmem:[%s484 + $0x2c0] sm:$0xff]
        %v598 = vld [vmem:[%s484 + $0x2c8] sm:$0xff]
        %v599 = vld [vmem:[%s484 + $0x2d0] sm:$0xff]
        %v600 = vld [vmem:[%s484 + $0x2d8] sm:$0xff]
        %v601 = vld [vmem:[%s484 + $0x2e0] sm:$0xff]
        %v602 = vld [vmem:[%s484 + $0x2e8] sm:$0xff]
        %v603 = vld [vmem:[%s484 + $0x2f0] sm:$0xff]
        %v604 = vld [vmem:[%s484 + $0x2f8] sm:$0xff]
        %v605 = vld [vmem:[%s484 + $0x300] sm:$0xff]
        %v606 = vld [vmem:[%s484 + $0x308] sm:$0xff]
        %v607 = vld [vmem:[%s484 + $0x310] sm:$0xff]
        %v608 = vld [vmem:[%s484 + $0x318] sm:$0xff]
        %v609 = vld [vmem:[%s484 + $0x320] sm:$0xff]
        %v610 = vld [vmem:[%s484 + $0x328] sm:$0xff]
        %v611 = vld [vmem:[%s484 + $0x330] sm:$0xff]
        %v612 = vld [vmem:[%s484 + $0x338] sm:$0xff]
        %v613 = vld [vmem:[%s484 + $0x340] sm:$0xff]
        %v614 = vld [vmem:[%s484 + $0x348] sm:$0xff]
        %v615 = vld [vmem:[%s484 + $0x350] sm:$0xff]
        %v616 = vld [vmem:[%s484 + $0x358] sm:$0xff]
        %v617 = vld [vmem:[%s484 + $0x360] sm:$0xff]
        %v618 = vld [vmem:[%s484 + $0x368] sm:$0xff]
        %v619 = vld [vmem:[%s484 + $0x370] sm:$0xff]
        %v620 = vld [vmem:[%s484 + $0x378] sm:$0xff]
        %v621 = vld [vmem:[%s484 + $0x380] sm:$0xff]
        %v622 = vld [vmem:[%s484 + $0x388] sm:$0xff]
        %v623 = vld [vmem:[%s484 + $0x390] sm:$0xff]
        %v624 = vld [vmem:[%s484 + $0x398] sm:$0xff]
        %v625 = vld [vmem:[%s484 + $0x3a0] sm:$0xff]
        %v626 = vld [vmem:[%s484 + $0x3a8] sm:$0xff]
        %v627 = vld [vmem:[%s484 + $0x3b0] sm:$0xff]
        %v628 = vld [vmem:[%s484 + $0x3b8] sm:$0xff]
        %v629 = vld [vmem:[%s484 + $0x3c0] sm:$0xff]
        %v630 = vld [vmem:[%s484 + $0x3c8] sm:$0xff]
        %v631 = vld [vmem:[%s484 + $0x3d0] sm:$0xff]
        %v632 = vld [vmem:[%s484 + $0x3d8] sm:$0xff]
        %v633 = vld [vmem:[%s484 + $0x3e0] sm:$0xff]
        %v634 = vld [vmem:[%s484 + $0x3e8] sm:$0xff]
        %v635 = vld [vmem:[%s484 + $0x3f0] sm:$0xff]
        %v636 = vld [vmem:[%s484 + $0x3f8] sm:$0xff]
        %v637 = vld [vmem:[%s484 + $0x400] sm:$0xff]
        %v638 = vld [vmem:[%s484 + $0x408] sm:$0xff]
        %v639 = vld [vmem:[%s484 + $0x410] sm:$0xff]
        %v640 = vld [vmem:[%s484 + $0x418] sm:$0xff]
        %v641 = vld [vmem:[%s484 + $0x420] sm:$0xff]
        %v642 = vld [vmem:[%s484 + $0x428] sm:$0xff]
        %v643 = vld [vmem:[%s484 + $0x430] sm:$0xff]
        %v644 = vld [vmem:[%s484 + $0x438] sm:$0xff]
        %v645 = vld [vmem:[%s484 + $0x440] sm:$0xff]
        %v646 = vld [vmem:[%s484 + $0x448] sm:$0xff]
        %v647 = vld [vmem:[%s484 + $0x450] sm:$0xff]
        %v648 = vld [vmem:[%s484 + $0x458] sm:$0xff]
        %v649 = vld [vmem:[%s484 + $0x460] sm:$0xff]
        %v650 = vld [vmem:[%s484 + $0x468] sm:$0xff]
        %v651 = vld [vmem:[%s484 + $0x470] sm:$0xff]
        %v652 = vld [vmem:[%s484 + $0x478] sm:$0xff]
        %v653 = vld [vmem:[%s484 + $0x480] sm:$0xff]
        %v654 = vld [vmem:[%s484 + $0x488] sm:$0xff]
        %v655 = vld [vmem:[%s484 + $0x490] sm:$0xff]
        %v656 = vld [vmem:[%s484 + $0x498] sm:$0xff]
        %v657 = vld [vmem:[%s484 + $0x4a0] sm:$0xff]
        %v658 = vld [vmem:[%s484 + $0x4a8] sm:$0xff]
        %v659 = vld [vmem:[%s484 + $0x4b0] sm:$0xff]
        %v660 = vld [vmem:[%s484 + $0x4b8] sm:$0xff]
        %v661 = vld [vmem:[%s484 + $0x4c0] sm:$0xff]
        %v662 = vld [vmem:[%s484 + $0x4c8] sm:$0xff]
        %v663 = vld [vmem:[%s484 + $0x4d0] sm:$0xff]
        %v664 = vld [vmem:[%s484 + $0x4d8] sm:$0xff]
        %v665 = vld [vmem:[%s484 + $0x4e0] sm:$0xff]
        %v666 = vld [vmem:[%s484 + $0x4e8] sm:$0xff]
        %v667 = vld [vmem:[%s484 + $0x4f0] sm:$0xff]
        %v668 = vld [vmem:[%s484 + $0x4f8] sm:$0xff]
        %v669 = vld [vmem:[%s484 + $0x500] sm:$0xff]
        %v670 = vld [vmem:[%s484 + $0x508] sm:$0xff]
        %v671 = vld [vmem:[%s484 + $0x510] sm:$0xff]
        %v672 = vld [vmem:[%s484 + $0x518] sm:$0xff]
        %v673 = vld [vmem:[%s484 + $0x520] sm:$0xff]
        %v674 = vld [vmem:[%s484 + $0x528] sm:$0xff]
        %v675 = vld [vmem:[%s484 + $0x530] sm:$0xff]
        %v676 = vld [vmem:[%s484 + $0x538] sm:$0xff]
        %v677 = vld [vmem:[%s484 + $0x540] sm:$0xff]
        %v678 = vld [vmem:[%s484 + $0x548] sm:$0xff]
        %v679 = vld [vmem:[%s484 + $0x550] sm:$0xff]
        %v680 = vld [vmem:[%s484 + $0x558] sm:$0xff]
        %v681 = vld [vmem:[%s484 + $0x560] sm:$0xff]
        %v682 = vld [vmem:[%s484 + $0x568] sm:$0xff]
        %v683 = vld [vmem:[%s484 + $0x570] sm:$0xff]
        %v684 = vld [vmem:[%s484 + $0x578] sm:$0xff]
        %v685 = vld [vmem:[%s484 + $0x580] sm:$0xff]
        %v686 = vld [vmem:[%s484 + $0x588] sm:$0xff]
        %v687 = vld [vmem:[%s484 + $0x590] sm:$0xff]
        %v688 = vld [vmem:[%s484 + $0x598] sm:$0xff]
        %v689 = vld [vmem:[%s484 + $0x5a0] sm:$0xff]
        %v690 = vld [vmem:[%s484 + $0x5a8] sm:$0xff]
        %v691 = vld [vmem:[%s484 + $0x5b0] sm:$0xff]
        %v692 = vld [vmem:[%s484 + $0x5b8] sm:$0xff]
        %v693 = vld [vmem:[%s484 + $0x5c0] sm:$0xff]
        %v694 = vld [vmem:[%s484 + $0x5c8] sm:$0xff]
        %v695 = vld [vmem:[%s484 + $0x5d0] sm:$0xff]
        %v696 = vld [vmem:[%s484 + $0x5d8] sm:$0xff]
        %v697 = vld [vmem:[%s484 + $0x5e0] sm:$0xff]
        %v698 = vld [vmem:[%s484 + $0x5e8] sm:$0xff]
        %v699 = vld [vmem:[%s484 + $0x5f0] sm:$0xff]
        %v700 = vld [vmem:[%s484 + $0x5f8] sm:$0xff]
        %v701 = vld [vmem:[%s484 + $0x600] sm:$0xff]
        %v702 = vld [vmem:[%s484 + $0x608] sm:$0xff]
        %v703 = vld [vmem:[%s484 + $0x610] sm:$0xff]
        %v704 = vld [vmem:[%s484 + $0x618] sm:$0xff]
        %v705 = vld [vmem:[%s484 + $0x620] sm:$0xff]
        %v706 = vld [vmem:[%s484 + $0x628] sm:$0xff]
        %v707 = vld [vmem:[%s484 + $0x630] sm:$0xff]
        %v708 = vld [vmem:[%s484 + $0x638] sm:$0xff]
        %v709 = vld [vmem:[%s484 + $0x640] sm:$0xff]
        %v710 = vld [vmem:[%s484 + $0x648] sm:$0xff]
        %v711 = vld [vmem:[%s484 + $0x650] sm:$0xff]
        %v712 = vld [vmem:[%s484 + $0x658] sm:$0xff]
        %v713 = vld [vmem:[%s484 + $0x660] sm:$0xff]
        %v714 = vld [vmem:[%s484 + $0x668] sm:$0xff]
        %v715 = vld [vmem:[%s484 + $0x670] sm:$0xff]
        %v716 = vld [vmem:[%s484 + $0x678] sm:$0xff]
        %v717 = vld [vmem:[%s484 + $0x680] sm:$0xff]
        %v718 = vld [vmem:[%s484 + $0x688] sm:$0xff]
        %v719 = vld [vmem:[%s484 + $0x690] sm:$0xff]
        %v720 = vld [vmem:[%s484 + $0x698] sm:$0xff]
        %v721 = vld [vmem:[%s484 + $0x6a0] sm:$0xff]
        %v722 = vld [vmem:[%s484 + $0x6a8] sm:$0xff]
        %v723 = vld [vmem:[%s484 + $0x6b0] sm:$0xff]
        %v724 = vld [vmem:[%s484 + $0x6b8] sm:$0xff]
        %v725 = vld [vmem:[%s484 + $0x6c0] sm:$0xff]
        %v726 = vld [vmem:[%s484 + $0x6c8] sm:$0xff]
        %v727 = vld [vmem:[%s484 + $0x6d0] sm:$0xff]
        %v728 = vld [vmem:[%s484 + $0x6d8] sm:$0xff]
        %v729 = vld [vmem:[%s484 + $0x6e0] sm:$0xff]
        %v730 = vld [vmem:[%s484 + $0x6e8] sm:$0xff]
        %v731 = vld [vmem:[%s484 + $0x6f0] sm:$0xff]
        %v732 = vld [vmem:[%s484 + $0x6f8] sm:$0xff]
        %v733 = vld [vmem:[%s484 + $0x700] sm:$0xff]
        %v734 = vld [vmem:[%s484 + $0x708] sm:$0xff]
        %v735 = vld [vmem:[%s484 + $0x710] sm:$0xff]
        %v736 = vld [vmem:[%s484 + $0x718] sm:$0xff]
        %v737 = vld [vmem:[%s484 + $0x720] sm:$0xff]
        %v738 = vld [vmem:[%s484 + $0x728] sm:$0xff]
        %v739 = vld [vmem:[%s484 + $0x730] sm:$0xff]
        %v740 = vld [vmem:[%s484 + $0x738] sm:$0xff]
        %v741 = vld [vmem:[%s484 + $0x740] sm:$0xff]
        %v742 = vld [vmem:[%s484 + $0x748] sm:$0xff]
        %v743 = vld [vmem:[%s484 + $0x750] sm:$0xff]
        %v744 = vld [vmem:[%s484 + $0x758] sm:$0xff]
        %v745 = vld [vmem:[%s484 + $0x760] sm:$0xff]
        %v746 = vld [vmem:[%s484 + $0x768] sm:$0xff]
        %v747 = vld [vmem:[%s484 + $0x770] sm:$0xff]
        %v748 = vld [vmem:[%s484 + $0x778] sm:$0xff]
        %v749 = vld [vmem:[%s484 + $0x780] sm:$0xff]
        %v750 = vld [vmem:[%s484 + $0x788] sm:$0xff]
        %v751 = vld [vmem:[%s484 + $0x790] sm:$0xff]
        %v752 = vld [vmem:[%s484 + $0x798] sm:$0xff]
        %v753 = vld [vmem:[%s484 + $0x7a0] sm:$0xff]
        %v754 = vld [vmem:[%s484 + $0x7a8] sm:$0xff]
        %v755 = vld [vmem:[%s484 + $0x7b0] sm:$0xff]
        %v756 = vld [vmem:[%s484 + $0x7b8] sm:$0xff]
        %v757 = vld [vmem:[%s484 + $0x7c0] sm:$0xff]
        %v758 = vld [vmem:[%s484 + $0x7c8] sm:$0xff]
        %v759 = vld [vmem:[%s484 + $0x7d0] sm:$0xff]
        %v760 = vld [vmem:[%s484 + $0x7d8] sm:$0xff]
        %v761 = vld [vmem:[%s484 + $0x7e0] sm:$0xff]
        %v762 = vld [vmem:[%s484 + $0x7e8] sm:$0xff]
        %v763 = vld [vmem:[%s484 + $0x7f0] sm:$0xff]
        %v764 = vld [vmem:[%s484 + $0x7f8] sm:$0xff]
        %v765 = vld [vmem:[%s484 + $0x800] sm:$0xff]
        %v766 = vld [vmem:[%s484 + $0x808] sm:$0xff]
        %v767 = vld [vmem:[%s484 + $0x810] sm:$0xff]
        %v768 = vld [vmem:[%s484 + $0x818] sm:$0xff]
        %v769 = vld [vmem:[%s484 + $0x820] sm:$0xff]
        %v770 = vld [vmem:[%s484 + $0x828] sm:$0xff]
        %v771 = vld [vmem:[%s484 + $0x830] sm:$0xff]
        %v772 = vld [vmem:[%s484 + $0x838] sm:$0xff]
        %v773 = vld [vmem:[%s484 + $0x840] sm:$0xff]
        %v774 = vld [vmem:[%s484 + $0x848] sm:$0xff]
        %v775 = vld [vmem:[%s484 + $0x850] sm:$0xff]
        %v776 = vld [vmem:[%s484 + $0x858] sm:$0xff]
        %v777 = vld [vmem:[%s484 + $0x860] sm:$0xff]
        %v778 = vld [vmem:[%s484 + $0x868] sm:$0xff]
        %v779 = vld [vmem:[%s484 + $0x870] sm:$0xff]
        %v780 = vld [vmem:[%s484 + $0x878] sm:$0xff]
        %v781 = vld [vmem:[%s484 + $0x880] sm:$0xff]
        %v782 = vld [vmem:[%s484 + $0x888] sm:$0xff]
        %v783 = vld [vmem:[%s484 + $0x890] sm:$0xff]
        %v784 = vld [vmem:[%s484 + $0x898] sm:$0xff]
        %v785 = vld [vmem:[%s484 + $0x8a0] sm:$0xff]
        %v786 = vld [vmem:[%s484 + $0x8a8] sm:$0xff]
        %v787 = vld [vmem:[%s484 + $0x8b0] sm:$0xff]
        %v788 = vld [vmem:[%s484 + $0x8b8] sm:$0xff]
        %v789 = vld [vmem:[%s484 + $0x8c0] sm:$0xff]
        %v790 = vld [vmem:[%s484 + $0x8c8] sm:$0xff]
        %v791 = vld [vmem:[%s484 + $0x8d0] sm:$0xff]
        %v792 = vld [vmem:[%s484 + $0x8d8] sm:$0xff]
        %v793 = vld [vmem:[%s484 + $0x8e0] sm:$0xff]
        %v794 = vld [vmem:[%s484 + $0x8e8] sm:$0xff]
        %v795 = vld [vmem:[%s484 + $0x8f0] sm:$0xff]
        %v796 = vld [vmem:[%s484 + $0x8f8] sm:$0xff]
        %v797 = vld [vmem:[%s484 + $0x900] sm:$0xff]
        %v798 = vld [vmem:[%s484 + $0x908] sm:$0xff]
        %v799 = vld [vmem:[%s484 + $0x910] sm:$0xff]
        %v800 = vld [vmem:[%s484 + $0x918] sm:$0xff]
        %v801 = vld [vmem:[%s484 + $0x920] sm:$0xff]
        %v802 = vld [vmem:[%s484 + $0x928] sm:$0xff]
        %v803 = vld [vmem:[%s484 + $0x930] sm:$0xff]
        %v804 = vld [vmem:[%s484 + $0x938] sm:$0xff]
        %v805 = vld [vmem:[%s484 + $0x940] sm:$0xff]
        %v806 = vld [vmem:[%s484 + $0x948] sm:$0xff]
        %v807 = vld [vmem:[%s484 + $0x950] sm:$0xff]
        %v808 = vld [vmem:[%s484 + $0x958] sm:$0xff]
        %v809 = vld [vmem:[%s484 + $0x960] sm:$0xff]
        %v810 = vld [vmem:[%s484 + $0x968] sm:$0xff]
        %v811 = vld [vmem:[%s484 + $0x970] sm:$0xff]
        %v812 = vld [vmem:[%s484 + $0x978] sm:$0xff]
        %v813 = vld [vmem:[%s484 + $0x980] sm:$0xff]
        %v814 = vld [vmem:[%s484 + $0x988] sm:$0xff]
        %v815 = vld [vmem:[%s484 + $0x990] sm:$0xff]
        %v816 = vld [vmem:[%s484 + $0x998] sm:$0xff]
        %v817 = vld [vmem:[%s484 + $0x9a0] sm:$0xff]
        %v818 = vld [vmem:[%s484 + $0x9a8] sm:$0xff]
        %v819 = vld [vmem:[%s484 + $0x9b0] sm:$0xff]
        %v820 = vld [vmem:[%s484 + $0x9b8] sm:$0xff]
        %v821 = vld [vmem:[%s484 + $0x9c0] sm:$0xff]
        %v822 = vld [vmem:[%s484 + $0x9c8] sm:$0xff]
        %v823 = vld [vmem:[%s484 + $0x9d0] sm:$0xff]
        %v824 = vld [vmem:[%s484 + $0x9d8] sm:$0xff]
        %v825 = vld [vmem:[%s484 + $0x9e0] sm:$0xff]
        %v826 = vld [vmem:[%s484 + $0x9e8] sm:$0xff]
        %v827 = vld [vmem:[%s484 + $0x9f0] sm:$0xff]
        %v828 = vld [vmem:[%s484 + $0x9f8] sm:$0xff]
        %v829 = vld [vmem:[%s484 + $0xa00] sm:$0xff]
        %v830 = vld [vmem:[%s484 + $0xa08] sm:$0xff]
        %v831 = vld [vmem:[%s484 + $0xa10] sm:$0xff]
        %v832 = vld [vmem:[%s484 + $0xa18] sm:$0xff]
        %v833 = vld [vmem:[%s484 + $0xa20] sm:$0xff]
        %v834 = vld [vmem:[%s484 + $0xa28] sm:$0xff]
        %v835 = vld [vmem:[%s484 + $0xa30] sm:$0xff]
        %v836 = vld [vmem:[%s484 + $0xa38] sm:$0xff]
        %v837 = vld [vmem:[%s484 + $0xa40] sm:$0xff]
        %v838 = vld [vmem:[%s484 + $0xa48] sm:$0xff]
        %v839 = vld [vmem:[%s484 + $0xa50] sm:$0xff]
        %v840 = vld [vmem:[%s484 + $0xa58] sm:$0xff]
        %v841 = vld [vmem:[%s484 + $0xa60] sm:$0xff]
        %v842 = vld [vmem:[%s484 + $0xa68] sm:$0xff]
        %v843 = vld [vmem:[%s484 + $0xa70] sm:$0xff]
        %v844 = vld [vmem:[%s484 + $0xa78] sm:$0xff]
        %v845 = vld [vmem:[%s484 + $0xa80] sm:$0xff]
        %v846 = vld [vmem:[%s484 + $0xa88] sm:$0xff]
        %v847 = vld [vmem:[%s484 + $0xa90] sm:$0xff]
        %v848 = vld [vmem:[%s484 + $0xa98] sm:$0xff]
        %v849 = vld [vmem:[%s484 + $0xaa0] sm:$0xff]
        %v850 = vld [vmem:[%s484 + $0xaa8] sm:$0xff]
        %v851 = vld [vmem:[%s484 + $0xab0] sm:$0xff]
        %v852 = vld [vmem:[%s484 + $0xab8] sm:$0xff]
        %v853 = vld [vmem:[%s484 + $0xac0] sm:$0xff]
        %v854 = vld [vmem:[%s484 + $0xac8] sm:$0xff]
        %v855 = vld [vmem:[%s484 + $0xad0] sm:$0xff]
        %v856 = vld [vmem:[%s484 + $0xad8] sm:$0xff]
        %v857 = vld [vmem:[%s484 + $0xae0] sm:$0xff]
        %v858 = vld [vmem:[%s484 + $0xae8] sm:$0xff]
        %v859 = vld [vmem:[%s484 + $0xaf0] sm:$0xff]
        %v860 = vld [vmem:[%s484 + $0xaf8] sm:$0xff]
        %v861 = vld [vmem:[%s484 + $0xb00] sm:$0xff]
        %v862 = vld [vmem:[%s484 + $0xb08] sm:$0xff]
        %v863 = vld [vmem:[%s484 + $0xb10] sm:$0xff]
        %v864 = vld [vmem:[%s484 + $0xb18] sm:$0xff]
        %v865 = vld [vmem:[%s484 + $0xb20] sm:$0xff]
        %v866 = vld [vmem:[%s484 + $0xb28] sm:$0xff]
        %v867 = vld [vmem:[%s484 + $0xb30] sm:$0xff]
        %v868 = vld [vmem:[%s484 + $0xb38] sm:$0xff]
        %v869 = vld [vmem:[%s484 + $0xb40] sm:$0xff]
        %v870 = vld [vmem:[%s484 + $0xb48] sm:$0xff]
        %v871 = vld [vmem:[%s484 + $0xb50] sm:$0xff]
        %v872 = vld [vmem:[%s484 + $0xb58] sm:$0xff]
        %v873 = vld [vmem:[%s484 + $0xb60] sm:$0xff]
        %v874 = vld [vmem:[%s484 + $0xb68] sm:$0xff]
        %v875 = vld [vmem:[%s484 + $0xb70] sm:$0xff]
        %v876 = vld [vmem:[%s484 + $0xb78] sm:$0xff]
        %v877 = vld [vmem:[%s484 + $0xb80] sm:$0xff]
        %v878 = vld [vmem:[%s484 + $0xb88] sm:$0xff]
        %v879 = vld [vmem:[%s484 + $0xb90] sm:$0xff]
        %v880 = vld [vmem:[%s484 + $0xb98] sm:$0xff]
        %v881 = vld [vmem:[%s484 + $0xba0] sm:$0xff]
        %v882 = vld [vmem:[%s484 + $0xba8] sm:$0xff]
        %v883 = vld [vmem:[%s484 + $0xbb0] sm:$0xff]
        %v884 = vld [vmem:[%s484 + $0xbb8] sm:$0xff]
        %v885 = vld [vmem:[%s484 + $0xbc0] sm:$0xff]
        %v886 = vld [vmem:[%s484 + $0xbc8] sm:$0xff]
        %v887 = vld [vmem:[%s484 + $0xbd0] sm:$0xff]
        %v888 = vld [vmem:[%s484 + $0xbd8] sm:$0xff]
        %v889 = vld [vmem:[%s484 + $0xbe0] sm:$0xff]
        %v890 = vld [vmem:[%s484 + $0xbe8] sm:$0xff]
        %v891 = vld [vmem:[%s484 + $0xbf0] sm:$0xff]
        %v892 = vld [vmem:[%s484 + $0xbf8] sm:$0xff]
        %v893 = vld [vmem:[%s484 + $0xc00] sm:$0xff]
        %v894 = vld [vmem:[%s484 + $0xc08] sm:$0xff]
        %v895 = vld [vmem:[%s484 + $0xc10] sm:$0xff]
        %v896 = vld [vmem:[%s484 + $0xc18] sm:$0xff]
        %v897 = vld [vmem:[%s484 + $0xc20] sm:$0xff]
        %v898 = vld [vmem:[%s484 + $0xc28] sm:$0xff]
        %v899 = vld [vmem:[%s484 + $0xc30] sm:$0xff]
        %v900 = vld [vmem:[%s484 + $0xc38] sm:$0xff]
        %v901 = vld [vmem:[%s484 + $0xc40] sm:$0xff]
        %v902 = vld [vmem:[%s484 + $0xc48] sm:$0xff]
        %v903 = vld [vmem:[%s484 + $0xc50] sm:$0xff]
        %v904 = vld [vmem:[%s484 + $0xc58] sm:$0xff]
        %v905 = vld [vmem:[%s484 + $0xc60] sm:$0xff]
        %v906 = vld [vmem:[%s484 + $0xc68] sm:$0xff]
        %v907 = vld [vmem:[%s484 + $0xc70] sm:$0xff]
        %v908 = vld [vmem:[%s484 + $0xc78] sm:$0xff]
        %v909 = vld [vmem:[%s484 + $0xc80] sm:$0xff]
        %v910 = vld [vmem:[%s484 + $0xc88] sm:$0xff]
        %v911 = vld [vmem:[%s484 + $0xc90] sm:$0xff]
        %v912 = vld [vmem:[%s484 + $0xc98] sm:$0xff]
        %v913 = vld [vmem:[%s484 + $0xca0] sm:$0xff]
        %v914 = vld [vmem:[%s484 + $0xca8] sm:$0xff]
        %v915 = vld [vmem:[%s484 + $0xcb0] sm:$0xff]
        %v916 = vld [vmem:[%s484 + $0xcb8] sm:$0xff]
        %v917 = vld [vmem:[%s484 + $0xcc0] sm:$0xff]
        %v918 = vld [vmem:[%s484 + $0xcc8] sm:$0xff]
        %v919 = vld [vmem:[%s484 + $0xcd0] sm:$0xff]
        %v920 = vld [vmem:[%s484 + $0xcd8] sm:$0xff]
        %v921 = vld [vmem:[%s484 + $0xce0] sm:$0xff]
        %v922 = vld [vmem:[%s484 + $0xce8] sm:$0xff]
        %v923 = vld [vmem:[%s484 + $0xcf0] sm:$0xff]
        %v924 = vld [vmem:[%s484 + $0xcf8] sm:$0xff]
        %v925 = vld [vmem:[%s484 + $0xd00] sm:$0xff]
        %v926 = vld [vmem:[%s484 + $0xd08] sm:$0xff]
        %v927 = vld [vmem:[%s484 + $0xd10] sm:$0xff]
        %v928 = vld [vmem:[%s484 + $0xd18] sm:$0xff]
        %v929 = vld [vmem:[%s484 + $0xd20] sm:$0xff]
        %v930 = vld [vmem:[%s484 + $0xd28] sm:$0xff]
        %v931 = vld [vmem:[%s484 + $0xd30] sm:$0xff]
        %v932 = vld [vmem:[%s484 + $0xd38] sm:$0xff]
        %v933 = vld [vmem:[%s484 + $0xd40] sm:$0xff]
        %v934 = vld [vmem:[%s484 + $0xd48] sm:$0xff]
        %v935 = vld [vmem:[%s484 + $0xd50] sm:$0xff]
        %v936 = vld [vmem:[%s484 + $0xd58] sm:$0xff]
        %v937 = vld [vmem:[%s484 + $0xd60] sm:$0xff]
        %v938 = vld [vmem:[%s484 + $0xd68] sm:$0xff]
        %v939 = vld [vmem:[%s484 + $0xd70] sm:$0xff]
        %v940 = vld [vmem:[%s484 + $0xd78] sm:$0xff]
        %v941 = vld [vmem:[%s484 + $0xd80] sm:$0xff]
        %v942 = vld [vmem:[%s484 + $0xd88] sm:$0xff]
        %v943 = vld [vmem:[%s484 + $0xd90] sm:$0xff]
        %v944 = vld [vmem:[%s484 + $0xd98] sm:$0xff]
        %v945 = vld [vmem:[%s484 + $0xda0] sm:$0xff]
        %v946 = vld [vmem:[%s484 + $0xda8] sm:$0xff]
        %v947 = vld [vmem:[%s484 + $0xdb0] sm:$0xff]
        %v948 = vld [vmem:[%s484 + $0xdb8] sm:$0xff]
        %v949 = vld [vmem:[%s484 + $0xdc0] sm:$0xff]
        %v950 = vld [vmem:[%s484 + $0xdc8] sm:$0xff]
        %v951 = vld [vmem:[%s484 + $0xdd0] sm:$0xff]
        %v952 = vld [vmem:[%s484 + $0xdd8] sm:$0xff]
        %v953 = vld [vmem:[%s484 + $0xde0] sm:$0xff]
        %v954 = vld [vmem:[%s484 + $0xde8] sm:$0xff]
        %v955 = vld [vmem:[%s484 + $0xdf0] sm:$0xff]
        %v956 = vld [vmem:[%s484 + $0xdf8] sm:$0xff]
        %v957 = vld [vmem:[%s484 + $0xe00] sm:$0xff]
        %v958 = vld [vmem:[%s484 + $0xe08] sm:$0xff]
        %v959 = vld [vmem:[%s484 + $0xe10] sm:$0xff]
        %v960 = vld [vmem:[%s484 + $0xe18] sm:$0xff]
        %v961 = vld [vmem:[%s484 + $0xe20] sm:$0xff]
        %v962 = vld [vmem:[%s484 + $0xe28] sm:$0xff]
        %v963 = vld [vmem:[%s484 + $0xe30] sm:$0xff]
        %v964 = vld [vmem:[%s484 + $0xe38] sm:$0xff]
        %v965 = vld [vmem:[%s484 + $0xe40] sm:$0xff]
        %v966 = vld [vmem:[%s484 + $0xe48] sm:$0xff]
        %v967 = vld [vmem:[%s484 + $0xe50] sm:$0xff]
        %v968 = vld [vmem:[%s484 + $0xe58] sm:$0xff]
        %v969 = vld [vmem:[%s484 + $0xe60] sm:$0xff]
        %v970 = vld [vmem:[%s484 + $0xe68] sm:$0xff]
        %v971 = vld [vmem:[%s484 + $0xe70] sm:$0xff]
        %v972 = vld [vmem:[%s484 + $0xe78] sm:$0xff]
        %v973 = vld [vmem:[%s484 + $0xe80] sm:$0xff]
        %v974 = vld [vmem:[%s484 + $0xe88] sm:$0xff]
        %v975 = vld [vmem:[%s484 + $0xe90] sm:$0xff]
        %v976 = vld [vmem:[%s484 + $0xe98] sm:$0xff]
        %v977 = vld [vmem:[%s484 + $0xea0] sm:$0xff]
        %v978 = vld [vmem:[%s484 + $0xea8] sm:$0xff]
        %v979 = vld [vmem:[%s484 + $0xeb0] sm:$0xff]
        %v980 = vld [vmem:[%s484 + $0xeb8] sm:$0xff]
        %v981 = vld [vmem:[%s484 + $0xec0] sm:$0xff]
        %v982 = vld [vmem:[%s484 + $0xec8] sm:$0xff]
        %v983 = vld [vmem:[%s484 + $0xed0] sm:$0xff]
        %v984 = vld [vmem:[%s484 + $0xed8] sm:$0xff]
        %v985 = vld [vmem:[%s484 + $0xee0] sm:$0xff]
        %v986 = vld [vmem:[%s484 + $0xee8] sm:$0xff]
        %v987 = vld [vmem:[%s484 + $0xef0] sm:$0xff]
        %v988 = vld [vmem:[%s484 + $0xef8] sm:$0xff]
        %v989 = vld [vmem:[%s484 + $0xf00] sm:$0xff]
        %v990 = vld [vmem:[%s484 + $0xf08] sm:$0xff]
        %v991 = vld [vmem:[%s484 + $0xf10] sm:$0xff]
        %v992 = vld [vmem:[%s484 + $0xf18] sm:$0xff]
        %v993 = vld [vmem:[%s484 + $0xf20] sm:$0xff]
        %v994 = vld [vmem:[%s484 + $0xf28] sm:$0xff]
        %v995 = vld [vmem:[%s484 + $0xf30] sm:$0xff]
        %v996 = vld [vmem:[%s484 + $0xf38] sm:$0xff]
        %v997 = vld [vmem:[%s484 + $0xf40] sm:$0xff]
        %v998 = vld [vmem:[%s484 + $0xf48] sm:$0xff]
        %v999 = vld [vmem:[%s484 + $0xf50] sm:$0xff]
        %v1000 = vld [vmem:[%s484 + $0xf58] sm:$0xff]
        %v1001 = vld [vmem:[%s484 + $0xf60] sm:$0xff]
        %v1002 = vld [vmem:[%s484 + $0xf68] sm:$0xff]
        %v1003 = vld [vmem:[%s484 + $0xf70] sm:$0xff]
        %v1004 = vld [vmem:[%s484 + $0xf78] sm:$0xff]
        %v1005 = vld [vmem:[%s484 + $0xf80] sm:$0xff]
        %v1006 = vld [vmem:[%s484 + $0xf88] sm:$0xff]
        %v1007 = vld [vmem:[%s484 + $0xf90] sm:$0xff]
        %v1008 = vld [vmem:[%s484 + $0xf98] sm:$0xff]
        %v1009 = vld [vmem:[%s484 + $0xfa0] sm:$0xff]
        %v1010 = vld [vmem:[%s484 + $0xfa8] sm:$0xff]
        %v1011 = vld [vmem:[%s484 + $0xfb0] sm:$0xff]
        %v1012 = vld [vmem:[%s484 + $0xfb8] sm:$0xff]
        %v1013 = vld [vmem:[%s484 + $0xfc0] sm:$0xff]
        %v1014 = vld [vmem:[%s484 + $0xfc8] sm:$0xff]
        %v1015 = vld [vmem:[%s484 + $0xfd0] sm:$0xff]
        %v1016 = vld [vmem:[%s484 + $0xfd8] sm:$0xff]
        %v1017 = vld [vmem:[%s484 + $0xfe0] sm:$0xff]
        %v1018 = vld [vmem:[%s484 + $0xfe8] sm:$0xff]
        %v1019 = vld [vmem:[%s484 + $0xff0] sm:$0xff]
        %v1020 = vld [vmem:[%s484 + $0xff8] sm:$0xff]
        %v1021 = vpack.c.bf16 %v517, %v509
        %v1022 = vpack.c.bf16 %v518, %v510
        %v1023 = vpack.c.bf16 %v519, %v511
        %v1024 = vpack.c.bf16 %v520, %v512
        %v1025 = vpack.c.bf16 %v521, %v513
        %v1026 = vpack.c.bf16 %v522, %v514
        %v1027 = vpack.c.bf16 %v523, %v515
        %v1028 = vpack.c.bf16 %v524, %v516
        %v1029 = vpack.c.bf16 %v533, %v525
        %v1030 = vpack.c.bf16 %v534, %v526
        %v1031 = vpack.c.bf16 %v535, %v527
        %v1032 = vpack.c.bf16 %v536, %v528
        %v1033 = vpack.c.bf16 %v537, %v529
        %v1034 = vpack.c.bf16 %v538, %v530
        %v1035 = vpack.c.bf16 %v539, %v531
        %v1036 = vpack.c.bf16 %v540, %v532
        %v1037 = vpack.c.bf16 %v549, %v541
        %v1038 = vpack.c.bf16 %v550, %v542
        %v1039 = vpack.c.bf16 %v551, %v543
        %v1040 = vpack.c.bf16 %v552, %v544
        %v1041 = vpack.c.bf16 %v553, %v545
        %v1042 = vpack.c.bf16 %v554, %v546
        %v1043 = vpack.c.bf16 %v555, %v547
        %v1044 = vpack.c.bf16 %v556, %v548
        %v1045 = vpack.c.bf16 %v565, %v557
        %v1046 = vpack.c.bf16 %v566, %v558
        %v1047 = vpack.c.bf16 %v567, %v559
        %v1048 = vpack.c.bf16 %v568, %v560
        %v1049 = vpack.c.bf16 %v569, %v561
        %v1050 = vpack.c.bf16 %v570, %v562
        %v1051 = vpack.c.bf16 %v571, %v563
        %v1052 = vpack.c.bf16 %v572, %v564
        %v1053 = vpack.c.bf16 %v581, %v573
        %v1054 = vpack.c.bf16 %v582, %v574
        %v1055 = vpack.c.bf16 %v583, %v575
        %v1056 = vpack.c.bf16 %v584, %v576
        %v1057 = vpack.c.bf16 %v585, %v577
        %v1058 = vpack.c.bf16 %v586, %v578
        %v1059 = vpack.c.bf16 %v587, %v579
        %v1060 = vpack.c.bf16 %v588, %v580
        %v1061 = vpack.c.bf16 %v597, %v589
        %v1062 = vpack.c.bf16 %v598, %v590
        %v1063 = vpack.c.bf16 %v599, %v591
        %v1064 = vpack.c.bf16 %v600, %v592
        %v1065 = vpack.c.bf16 %v601, %v593
        %v1066 = vpack.c.bf16 %v602, %v594
        %v1067 = vpack.c.bf16 %v603, %v595
        %v1068 = vpack.c.bf16 %v604, %v596
        %v1069 = vpack.c.bf16 %v613, %v605
        %v1070 = vpack.c.bf16 %v614, %v606
        %v1071 = vpack.c.bf16 %v615, %v607
        %v1072 = vpack.c.bf16 %v616, %v608
        %v1073 = vpack.c.bf16 %v617, %v609
        %v1074 = vpack.c.bf16 %v618, %v610
        %v1075 = vpack.c.bf16 %v619, %v611
        %v1076 = vpack.c.bf16 %v620, %v612
        %v1077 = vpack.c.bf16 %v629, %v621
        %v1078 = vpack.c.bf16 %v630, %v622
        %v1079 = vpack.c.bf16 %v631, %v623
        %v1080 = vpack.c.bf16 %v632, %v624
        %v1081 = vpack.c.bf16 %v633, %v625
        %v1082 = vpack.c.bf16 %v634, %v626
        %v1083 = vpack.c.bf16 %v635, %v627
        %v1084 = vpack.c.bf16 %v636, %v628
        %v1085 = vpack.c.bf16 %v645, %v637
        %v1086 = vpack.c.bf16 %v646, %v638
        %v1087 = vpack.c.bf16 %v647, %v639
        %v1088 = vpack.c.bf16 %v648, %v640
        %v1089 = vpack.c.bf16 %v649, %v641
        %v1090 = vpack.c.bf16 %v650, %v642
        %v1091 = vpack.c.bf16 %v651, %v643
        %v1092 = vpack.c.bf16 %v652, %v644
        %v1093 = vpack.c.bf16 %v661, %v653
        %v1094 = vpack.c.bf16 %v662, %v654
        %v1095 = vpack.c.bf16 %v663, %v655
        %v1096 = vpack.c.bf16 %v664, %v656
        %v1097 = vpack.c.bf16 %v665, %v657
        %v1098 = vpack.c.bf16 %v666, %v658
        %v1099 = vpack.c.bf16 %v667, %v659
        %v1100 = vpack.c.bf16 %v668, %v660
        %v1101 = vpack.c.bf16 %v677, %v669
        %v1102 = vpack.c.bf16 %v678, %v670
        %v1103 = vpack.c.bf16 %v679, %v671
        %v1104 = vpack.c.bf16 %v680, %v672
        %v1105 = vpack.c.bf16 %v681, %v673
        %v1106 = vpack.c.bf16 %v682, %v674
        %v1107 = vpack.c.bf16 %v683, %v675
        %v1108 = vpack.c.bf16 %v684, %v676
        %v1109 = vpack.c.bf16 %v693, %v685
        %v1110 = vpack.c.bf16 %v694, %v686
        %v1111 = vpack.c.bf16 %v695, %v687
        %v1112 = vpack.c.bf16 %v696, %v688
        %v1113 = vpack.c.bf16 %v697, %v689
        %v1114 = vpack.c.bf16 %v698, %v690
        %v1115 = vpack.c.bf16 %v699, %v691
        %v1116 = vpack.c.bf16 %v700, %v692
        %v1117 = vpack.c.bf16 %v709, %v701
        %v1118 = vpack.c.bf16 %v710, %v702
        %v1119 = vpack.c.bf16 %v711, %v703
        %v1120 = vpack.c.bf16 %v712, %v704
        %v1121 = vpack.c.bf16 %v713, %v705
        %v1122 = vpack.c.bf16 %v714, %v706
        %v1123 = vpack.c.bf16 %v715, %v707
        %v1124 = vpack.c.bf16 %v716, %v708
        %v1125 = vpack.c.bf16 %v725, %v717
        %v1126 = vpack.c.bf16 %v726, %v718
        %v1127 = vpack.c.bf16 %v727, %v719
        %v1128 = vpack.c.bf16 %v728, %v720
        %v1129 = vpack.c.bf16 %v729, %v721
        %v1130 = vpack.c.bf16 %v730, %v722
        %v1131 = vpack.c.bf16 %v731, %v723
        %v1132 = vpack.c.bf16 %v732, %v724
        %v1133 = vpack.c.bf16 %v741, %v733
        %v1134 = vpack.c.bf16 %v742, %v734
        %v1135 = vpack.c.bf16 %v743, %v735
        %v1136 = vpack.c.bf16 %v744, %v736
        %v1137 = vpack.c.bf16 %v745, %v737
        %v1138 = vpack.c.bf16 %v746, %v738
        %v1139 = vpack.c.bf16 %v747, %v739
        %v1140 = vpack.c.bf16 %v748, %v740
        %v1141 = vpack.c.bf16 %v757, %v749
        %v1142 = vpack.c.bf16 %v758, %v750
        %v1143 = vpack.c.bf16 %v759, %v751
        %v1144 = vpack.c.bf16 %v760, %v752
        %v1145 = vpack.c.bf16 %v761, %v753
        %v1146 = vpack.c.bf16 %v762, %v754
        %v1147 = vpack.c.bf16 %v763, %v755
        %v1148 = vpack.c.bf16 %v764, %v756
        %v1149 = vpack.c.bf16 %v773, %v765
        %v1150 = vpack.c.bf16 %v774, %v766
        %v1151 = vpack.c.bf16 %v775, %v767
        %v1152 = vpack.c.bf16 %v776, %v768
        %v1153 = vpack.c.bf16 %v777, %v769
        %v1154 = vpack.c.bf16 %v778, %v770
        %v1155 = vpack.c.bf16 %v779, %v771
        %v1156 = vpack.c.bf16 %v780, %v772
        %v1157 = vpack.c.bf16 %v789, %v781
        %v1158 = vpack.c.bf16 %v790, %v782
        %v1159 = vpack.c.bf16 %v791, %v783
        %v1160 = vpack.c.bf16 %v792, %v784
        %v1161 = vpack.c.bf16 %v793, %v785
        %v1162 = vpack.c.bf16 %v794, %v786
        %v1163 = vpack.c.bf16 %v795, %v787
        %v1164 = vpack.c.bf16 %v796, %v788
        %v1165 = vpack.c.bf16 %v805, %v797
        %v1166 = vpack.c.bf16 %v806, %v798
        %v1167 = vpack.c.bf16 %v807, %v799
        %v1168 = vpack.c.bf16 %v808, %v800
        %v1169 = vpack.c.bf16 %v809, %v801
        %v1170 = vpack.c.bf16 %v810, %v802
        %v1171 = vpack.c.bf16 %v811, %v803
        %v1172 = vpack.c.bf16 %v812, %v804
        %v1173 = vpack.c.bf16 %v821, %v813
        %v1174 = vpack.c.bf16 %v822, %v814
        %v1175 = vpack.c.bf16 %v823, %v815
        %v1176 = vpack.c.bf16 %v824, %v816
        %v1177 = vpack.c.bf16 %v825, %v817
        %v1178 = vpack.c.bf16 %v826, %v818
        %v1179 = vpack.c.bf16 %v827, %v819
        %v1180 = vpack.c.bf16 %v828, %v820
        %v1181 = vpack.c.bf16 %v837, %v829
        %v1182 = vpack.c.bf16 %v838, %v830
        %v1183 = vpack.c.bf16 %v839, %v831
        %v1184 = vpack.c.bf16 %v840, %v832
        %v1185 = vpack.c.bf16 %v841, %v833
        %v1186 = vpack.c.bf16 %v842, %v834
        %v1187 = vpack.c.bf16 %v843, %v835
        %v1188 = vpack.c.bf16 %v844, %v836
        %v1189 = vpack.c.bf16 %v853, %v845
        %v1190 = vpack.c.bf16 %v854, %v846
        %v1191 = vpack.c.bf16 %v855, %v847
        %v1192 = vpack.c.bf16 %v856, %v848
        %v1193 = vpack.c.bf16 %v857, %v849
        %v1194 = vpack.c.bf16 %v858, %v850
        %v1195 = vpack.c.bf16 %v859, %v851
        %v1196 = vpack.c.bf16 %v860, %v852
        %v1197 = vpack.c.bf16 %v869, %v861
        %v1198 = vpack.c.bf16 %v870, %v862
        %v1199 = vpack.c.bf16 %v871, %v863
        %v1200 = vpack.c.bf16 %v872, %v864
        %v1201 = vpack.c.bf16 %v873, %v865
        %v1202 = vpack.c.bf16 %v874, %v866
        %v1203 = vpack.c.bf16 %v875, %v867
        %v1204 = vpack.c.bf16 %v876, %v868
        %v1205 = vpack.c.bf16 %v885, %v877
        %v1206 = vpack.c.bf16 %v886, %v878
        %v1207 = vpack.c.bf16 %v887, %v879
        %v1208 = vpack.c.bf16 %v888, %v880
        %v1209 = vpack.c.bf16 %v889, %v881
        %v1210 = vpack.c.bf16 %v890, %v882
        %v1211 = vpack.c.bf16 %v891, %v883
        %v1212 = vpack.c.bf16 %v892, %v884
        %v1213 = vpack.c.bf16 %v901, %v893
        %v1214 = vpack.c.bf16 %v902, %v894
        %v1215 = vpack.c.bf16 %v903, %v895
        %v1216 = vpack.c.bf16 %v904, %v896
        %v1217 = vpack.c.bf16 %v905, %v897
        %v1218 = vpack.c.bf16 %v906, %v898
        %v1219 = vpack.c.bf16 %v907, %v899
        %v1220 = vpack.c.bf16 %v908, %v900
        %v1221 = vpack.c.bf16 %v917, %v909
        %v1222 = vpack.c.bf16 %v918, %v910
        %v1223 = vpack.c.bf16 %v919, %v911
        %v1224 = vpack.c.bf16 %v920, %v912
        %v1225 = vpack.c.bf16 %v921, %v913
        %v1226 = vpack.c.bf16 %v922, %v914
        %v1227 = vpack.c.bf16 %v923, %v915
        %v1228 = vpack.c.bf16 %v924, %v916
        %v1229 = vpack.c.bf16 %v933, %v925
        %v1230 = vpack.c.bf16 %v934, %v926
        %v1231 = vpack.c.bf16 %v935, %v927
        %v1232 = vpack.c.bf16 %v936, %v928
        %v1233 = vpack.c.bf16 %v937, %v929
        %v1234 = vpack.c.bf16 %v938, %v930
        %v1235 = vpack.c.bf16 %v939, %v931
        %v1236 = vpack.c.bf16 %v940, %v932
        %v1237 = vpack.c.bf16 %v949, %v941
        %v1238 = vpack.c.bf16 %v950, %v942
        %v1239 = vpack.c.bf16 %v951, %v943
        %v1240 = vpack.c.bf16 %v952, %v944
        %v1241 = vpack.c.bf16 %v953, %v945
        %v1242 = vpack.c.bf16 %v954, %v946
        %v1243 = vpack.c.bf16 %v955, %v947
        %v1244 = vpack.c.bf16 %v956, %v948
        %v1245 = vpack.c.bf16 %v965, %v957
        %v1246 = vpack.c.bf16 %v966, %v958
        %v1247 = vpack.c.bf16 %v967, %v959
        %v1248 = vpack.c.bf16 %v968, %v960
        %v1249 = vpack.c.bf16 %v969, %v961
        %v1250 = vpack.c.bf16 %v970, %v962
        %v1251 = vpack.c.bf16 %v971, %v963
        %v1252 = vpack.c.bf16 %v972, %v964
        %v1253 = vpack.c.bf16 %v981, %v973
        %v1254 = vpack.c.bf16 %v982, %v974
        %v1255 = vpack.c.bf16 %v983, %v975
        %v1256 = vpack.c.bf16 %v984, %v976
        %v1257 = vpack.c.bf16 %v985, %v977
        %v1258 = vpack.c.bf16 %v986, %v978
        %v1259 = vpack.c.bf16 %v987, %v979
        %v1260 = vpack.c.bf16 %v988, %v980
        %v1261 = vpack.c.bf16 %v997, %v989
        %v1262 = vpack.c.bf16 %v998, %v990
        %v1263 = vpack.c.bf16 %v999, %v991
        %v1264 = vpack.c.bf16 %v1000, %v992
        %v1265 = vpack.c.bf16 %v1001, %v993
        %v1266 = vpack.c.bf16 %v1002, %v994
        %v1267 = vpack.c.bf16 %v1003, %v995
        %v1268 = vpack.c.bf16 %v1004, %v996
        %v1269 = vpack.c.bf16 %v1013, %v1005
        %v1270 = vpack.c.bf16 %v1014, %v1006
        %v1271 = vpack.c.bf16 %v1015, %v1007
        %v1272 = vpack.c.bf16 %v1016, %v1008
        %v1273 = vpack.c.bf16 %v1017, %v1009
        %v1274 = vpack.c.bf16 %v1018, %v1010
        %v1275 = vpack.c.bf16 %v1019, %v1011
        %v1276 = vpack.c.bf16 %v1020, %v1012
        %v1277 = vld [vmem:[%s2] sm:$0xff]
        %v1278 = vld [vmem:[%s2 + $0x8] sm:$0xff]
        %v1279 = vld [vmem:[%s2 + $0x10] sm:$0xff]
        %v1280 = vld [vmem:[%s2 + $0x18] sm:$0xff]
        %v1281 = vld [vmem:[%s2 + $0x20] sm:$0xff]
        %v1282 = vld [vmem:[%s2 + $0x28] sm:$0xff]
        %v1283 = vld [vmem:[%s2 + $0x30] sm:$0xff]
        %v1284 = vld [vmem:[%s2 + $0x38] sm:$0xff]
        %v1285 = vld [vmem:[%s2 + $0x40] sm:$0xff]
        %v1286 = vld [vmem:[%s2 + $0x48] sm:$0xff]
        %v1287 = vld [vmem:[%s2 + $0x50] sm:$0xff]
        %v1288 = vld [vmem:[%s2 + $0x58] sm:$0xff]
        %v1289 = vld [vmem:[%s2 + $0x60] sm:$0xff]
        %v1290 = vld [vmem:[%s2 + $0x68] sm:$0xff]
        %v1291 = vld [vmem:[%s2 + $0x70] sm:$0xff]
        %v1292 = vld [vmem:[%s2 + $0x78] sm:$0xff]
        %v1293 = vld [vmem:[%s2 + $0x80] sm:$0xff]
        %v1294 = vld [vmem:[%s2 + $0x88] sm:$0xff]
        %v1295 = vld [vmem:[%s2 + $0x90] sm:$0xff]
        %v1296 = vld [vmem:[%s2 + $0x98] sm:$0xff]
        %v1297 = vld [vmem:[%s2 + $0xa0] sm:$0xff]
        %v1298 = vld [vmem:[%s2 + $0xa8] sm:$0xff]
        %v1299 = vld [vmem:[%s2 + $0xb0] sm:$0xff]
        %v1300 = vld [vmem:[%s2 + $0xb8] sm:$0xff]
        %v1301 = vld [vmem:[%s2 + $0xc0] sm:$0xff]
        %v1302 = vld [vmem:[%s2 + $0xc8] sm:$0xff]
        %v1303 = vld [vmem:[%s2 + $0xd0] sm:$0xff]
        %v1304 = vld [vmem:[%s2 + $0xd8] sm:$0xff]
        %v1305 = vld [vmem:[%s2 + $0xe0] sm:$0xff]
        %v1306 = vld [vmem:[%s2 + $0xe8] sm:$0xff]
        %v1307 = vld [vmem:[%s2 + $0xf0] sm:$0xff]
        %v1308 = vld [vmem:[%s2 + $0xf8] sm:$0xff]
        %v1309 = vld [vmem:[%s2 + $0x100] sm:$0xff]
        %v1310 = vld [vmem:[%s2 + $0x108] sm:$0xff]
        %v1311 = vld [vmem:[%s2 + $0x110] sm:$0xff]
        %v1312 = vld [vmem:[%s2 + $0x118] sm:$0xff]
        %v1313 = vld [vmem:[%s2 + $0x120] sm:$0xff]
        %v1314 = vld [vmem:[%s2 + $0x128] sm:$0xff]
        %v1315 = vld [vmem:[%s2 + $0x130] sm:$0xff]
        %v1316 = vld [vmem:[%s2 + $0x138] sm:$0xff]
        %v1317 = vld [vmem:[%s2 + $0x140] sm:$0xff]
        %v1318 = vld [vmem:[%s2 + $0x148] sm:$0xff]
        %v1319 = vld [vmem:[%s2 + $0x150] sm:$0xff]
        %v1320 = vld [vmem:[%s2 + $0x158] sm:$0xff]
        %v1321 = vld [vmem:[%s2 + $0x160] sm:$0xff]
        %v1322 = vld [vmem:[%s2 + $0x168] sm:$0xff]
        %v1323 = vld [vmem:[%s2 + $0x170] sm:$0xff]
        %v1324 = vld [vmem:[%s2 + $0x178] sm:$0xff]
        %v1325 = vld [vmem:[%s2 + $0x180] sm:$0xff]
        %v1326 = vld [vmem:[%s2 + $0x188] sm:$0xff]
        %v1327 = vld [vmem:[%s2 + $0x190] sm:$0xff]
        %v1328 = vld [vmem:[%s2 + $0x198] sm:$0xff]
        %v1329 = vld [vmem:[%s2 + $0x1a0] sm:$0xff]
        %v1330 = vld [vmem:[%s2 + $0x1a8] sm:$0xff]
        %v1331 = vld [vmem:[%s2 + $0x1b0] sm:$0xff]
        %v1332 = vld [vmem:[%s2 + $0x1b8] sm:$0xff]
        %v1333 = vld [vmem:[%s2 + $0x1c0] sm:$0xff]
        %v1334 = vld [vmem:[%s2 + $0x1c8] sm:$0xff]
        %v1335 = vld [vmem:[%s2 + $0x1d0] sm:$0xff]
        %v1336 = vld [vmem:[%s2 + $0x1d8] sm:$0xff]
        %v1337 = vld [vmem:[%s2 + $0x1e0] sm:$0xff]
        %v1338 = vld [vmem:[%s2 + $0x1e8] sm:$0xff]
        %v1339 = vld [vmem:[%s2 + $0x1f0] sm:$0xff]
        %v1340 = vld [vmem:[%s2 + $0x1f8] sm:$0xff]
        %v1341 = vld [vmem:[%s2 + $0x200] sm:$0xff]
        %v1342 = vld [vmem:[%s2 + $0x208] sm:$0xff]
        %v1343 = vld [vmem:[%s2 + $0x210] sm:$0xff]
        %v1344 = vld [vmem:[%s2 + $0x218] sm:$0xff]
        %v1345 = vld [vmem:[%s2 + $0x220] sm:$0xff]
        %v1346 = vld [vmem:[%s2 + $0x228] sm:$0xff]
        %v1347 = vld [vmem:[%s2 + $0x230] sm:$0xff]
        %v1348 = vld [vmem:[%s2 + $0x238] sm:$0xff]
        %v1349 = vld [vmem:[%s2 + $0x240] sm:$0xff]
        %v1350 = vld [vmem:[%s2 + $0x248] sm:$0xff]
        %v1351 = vld [vmem:[%s2 + $0x250] sm:$0xff]
        %v1352 = vld [vmem:[%s2 + $0x258] sm:$0xff]
        %v1353 = vld [vmem:[%s2 + $0x260] sm:$0xff]
        %v1354 = vld [vmem:[%s2 + $0x268] sm:$0xff]
        %v1355 = vld [vmem:[%s2 + $0x270] sm:$0xff]
        %v1356 = vld [vmem:[%s2 + $0x278] sm:$0xff]
        %v1357 = vld [vmem:[%s2 + $0x280] sm:$0xff]
        %v1358 = vld [vmem:[%s2 + $0x288] sm:$0xff]
        %v1359 = vld [vmem:[%s2 + $0x290] sm:$0xff]
        %v1360 = vld [vmem:[%s2 + $0x298] sm:$0xff]
        %v1361 = vld [vmem:[%s2 + $0x2a0] sm:$0xff]
        %v1362 = vld [vmem:[%s2 + $0x2a8] sm:$0xff]
        %v1363 = vld [vmem:[%s2 + $0x2b0] sm:$0xff]
        %v1364 = vld [vmem:[%s2 + $0x2b8] sm:$0xff]
        %v1365 = vld [vmem:[%s2 + $0x2c0] sm:$0xff]
        %v1366 = vld [vmem:[%s2 + $0x2c8] sm:$0xff]
        %v1367 = vld [vmem:[%s2 + $0x2d0] sm:$0xff]
        %v1368 = vld [vmem:[%s2 + $0x2d8] sm:$0xff]
        %v1369 = vld [vmem:[%s2 + $0x2e0] sm:$0xff]
        %v1370 = vld [vmem:[%s2 + $0x2e8] sm:$0xff]
        %v1371 = vld [vmem:[%s2 + $0x2f0] sm:$0xff]
        %v1372 = vld [vmem:[%s2 + $0x2f8] sm:$0xff]
        %v1373 = vld [vmem:[%s2 + $0x300] sm:$0xff]
        %v1374 = vld [vmem:[%s2 + $0x308] sm:$0xff]
        %v1375 = vld [vmem:[%s2 + $0x310] sm:$0xff]
        %v1376 = vld [vmem:[%s2 + $0x318] sm:$0xff]
        %v1377 = vld [vmem:[%s2 + $0x320] sm:$0xff]
        %v1378 = vld [vmem:[%s2 + $0x328] sm:$0xff]
        %v1379 = vld [vmem:[%s2 + $0x330] sm:$0xff]
        %v1380 = vld [vmem:[%s2 + $0x338] sm:$0xff]
        %v1381 = vld [vmem:[%s2 + $0x340] sm:$0xff]
        %v1382 = vld [vmem:[%s2 + $0x348] sm:$0xff]
        %v1383 = vld [vmem:[%s2 + $0x350] sm:$0xff]
        %v1384 = vld [vmem:[%s2 + $0x358] sm:$0xff]
        %v1385 = vld [vmem:[%s2 + $0x360] sm:$0xff]
        %v1386 = vld [vmem:[%s2 + $0x368] sm:$0xff]
        %v1387 = vld [vmem:[%s2 + $0x370] sm:$0xff]
        %v1388 = vld [vmem:[%s2 + $0x378] sm:$0xff]
        %v1389 = vld [vmem:[%s2 + $0x380] sm:$0xff]
        %v1390 = vld [vmem:[%s2 + $0x388] sm:$0xff]
        %v1391 = vld [vmem:[%s2 + $0x390] sm:$0xff]
        %v1392 = vld [vmem:[%s2 + $0x398] sm:$0xff]
        %v1393 = vld [vmem:[%s2 + $0x3a0] sm:$0xff]
        %v1394 = vld [vmem:[%s2 + $0x3a8] sm:$0xff]
        %v1395 = vld [vmem:[%s2 + $0x3b0] sm:$0xff]
        %v1396 = vld [vmem:[%s2 + $0x3b8] sm:$0xff]
        %v1397 = vld [vmem:[%s2 + $0x3c0] sm:$0xff]
        %v1398 = vld [vmem:[%s2 + $0x3c8] sm:$0xff]
        %v1399 = vld [vmem:[%s2 + $0x3d0] sm:$0xff]
        %v1400 = vld [vmem:[%s2 + $0x3d8] sm:$0xff]
        %v1401 = vld [vmem:[%s2 + $0x3e0] sm:$0xff]
        %v1402 = vld [vmem:[%s2 + $0x3e8] sm:$0xff]
        %v1403 = vld [vmem:[%s2 + $0x3f0] sm:$0xff]
        %v1404 = vld [vmem:[%s2 + $0x3f8] sm:$0xff]
        %v1405 = vld [vmem:[%s2 + $0x400] sm:$0xff]
        %v1406 = vld [vmem:[%s2 + $0x408] sm:$0xff]
        %v1407 = vld [vmem:[%s2 + $0x410] sm:$0xff]
        %v1408 = vld [vmem:[%s2 + $0x418] sm:$0xff]
        %v1409 = vld [vmem:[%s2 + $0x420] sm:$0xff]
        %v1410 = vld [vmem:[%s2 + $0x428] sm:$0xff]
        %v1411 = vld [vmem:[%s2 + $0x430] sm:$0xff]
        %v1412 = vld [vmem:[%s2 + $0x438] sm:$0xff]
        %v1413 = vld [vmem:[%s2 + $0x440] sm:$0xff]
        %v1414 = vld [vmem:[%s2 + $0x448] sm:$0xff]
        %v1415 = vld [vmem:[%s2 + $0x450] sm:$0xff]
        %v1416 = vld [vmem:[%s2 + $0x458] sm:$0xff]
        %v1417 = vld [vmem:[%s2 + $0x460] sm:$0xff]
        %v1418 = vld [vmem:[%s2 + $0x468] sm:$0xff]
        %v1419 = vld [vmem:[%s2 + $0x470] sm:$0xff]
        %v1420 = vld [vmem:[%s2 + $0x478] sm:$0xff]
        %v1421 = vld [vmem:[%s2 + $0x480] sm:$0xff]
        %v1422 = vld [vmem:[%s2 + $0x488] sm:$0xff]
        %v1423 = vld [vmem:[%s2 + $0x490] sm:$0xff]
        %v1424 = vld [vmem:[%s2 + $0x498] sm:$0xff]
        %v1425 = vld [vmem:[%s2 + $0x4a0] sm:$0xff]
        %v1426 = vld [vmem:[%s2 + $0x4a8] sm:$0xff]
        %v1427 = vld [vmem:[%s2 + $0x4b0] sm:$0xff]
        %v1428 = vld [vmem:[%s2 + $0x4b8] sm:$0xff]
        %v1429 = vld [vmem:[%s2 + $0x4c0] sm:$0xff]
        %v1430 = vld [vmem:[%s2 + $0x4c8] sm:$0xff]
        %v1431 = vld [vmem:[%s2 + $0x4d0] sm:$0xff]
        %v1432 = vld [vmem:[%s2 + $0x4d8] sm:$0xff]
        %v1433 = vld [vmem:[%s2 + $0x4e0] sm:$0xff]
        %v1434 = vld [vmem:[%s2 + $0x4e8] sm:$0xff]
        %v1435 = vld [vmem:[%s2 + $0x4f0] sm:$0xff]
        %v1436 = vld [vmem:[%s2 + $0x4f8] sm:$0xff]
        %v1437 = vld [vmem:[%s2 + $0x500] sm:$0xff]
        %v1438 = vld [vmem:[%s2 + $0x508] sm:$0xff]
        %v1439 = vld [vmem:[%s2 + $0x510] sm:$0xff]
        %v1440 = vld [vmem:[%s2 + $0x518] sm:$0xff]
        %v1441 = vld [vmem:[%s2 + $0x520] sm:$0xff]
        %v1442 = vld [vmem:[%s2 + $0x528] sm:$0xff]
        %v1443 = vld [vmem:[%s2 + $0x530] sm:$0xff]
        %v1444 = vld [vmem:[%s2 + $0x538] sm:$0xff]
        %v1445 = vld [vmem:[%s2 + $0x540] sm:$0xff]
        %v1446 = vld [vmem:[%s2 + $0x548] sm:$0xff]
        %v1447 = vld [vmem:[%s2 + $0x550] sm:$0xff]
        %v1448 = vld [vmem:[%s2 + $0x558] sm:$0xff]
        %v1449 = vld [vmem:[%s2 + $0x560] sm:$0xff]
        %v1450 = vld [vmem:[%s2 + $0x568] sm:$0xff]
        %v1451 = vld [vmem:[%s2 + $0x570] sm:$0xff]
        %v1452 = vld [vmem:[%s2 + $0x578] sm:$0xff]
        %v1453 = vld [vmem:[%s2 + $0x580] sm:$0xff]
        %v1454 = vld [vmem:[%s2 + $0x588] sm:$0xff]
        %v1455 = vld [vmem:[%s2 + $0x590] sm:$0xff]
        %v1456 = vld [vmem:[%s2 + $0x598] sm:$0xff]
        %v1457 = vld [vmem:[%s2 + $0x5a0] sm:$0xff]
        %v1458 = vld [vmem:[%s2 + $0x5a8] sm:$0xff]
        %v1459 = vld [vmem:[%s2 + $0x5b0] sm:$0xff]
        %v1460 = vld [vmem:[%s2 + $0x5b8] sm:$0xff]
        %v1461 = vld [vmem:[%s2 + $0x5c0] sm:$0xff]
        %v1462 = vld [vmem:[%s2 + $0x5c8] sm:$0xff]
        %v1463 = vld [vmem:[%s2 + $0x5d0] sm:$0xff]
        %v1464 = vld [vmem:[%s2 + $0x5d8] sm:$0xff]
        %v1465 = vld [vmem:[%s2 + $0x5e0] sm:$0xff]
        %v1466 = vld [vmem:[%s2 + $0x5e8] sm:$0xff]
        %v1467 = vld [vmem:[%s2 + $0x5f0] sm:$0xff]
        %v1468 = vld [vmem:[%s2 + $0x5f8] sm:$0xff]
        %v1469 = vld [vmem:[%s2 + $0x600] sm:$0xff]
        %v1470 = vld [vmem:[%s2 + $0x608] sm:$0xff]
        %v1471 = vld [vmem:[%s2 + $0x610] sm:$0xff]
        %v1472 = vld [vmem:[%s2 + $0x618] sm:$0xff]
        %v1473 = vld [vmem:[%s2 + $0x620] sm:$0xff]
        %v1474 = vld [vmem:[%s2 + $0x628] sm:$0xff]
        %v1475 = vld [vmem:[%s2 + $0x630] sm:$0xff]
        %v1476 = vld [vmem:[%s2 + $0x638] sm:$0xff]
        %v1477 = vld [vmem:[%s2 + $0x640] sm:$0xff]
        %v1478 = vld [vmem:[%s2 + $0x648] sm:$0xff]
        %v1479 = vld [vmem:[%s2 + $0x650] sm:$0xff]
        %v1480 = vld [vmem:[%s2 + $0x658] sm:$0xff]
        %v1481 = vld [vmem:[%s2 + $0x660] sm:$0xff]
        %v1482 = vld [vmem:[%s2 + $0x668] sm:$0xff]
        %v1483 = vld [vmem:[%s2 + $0x670] sm:$0xff]
        %v1484 = vld [vmem:[%s2 + $0x678] sm:$0xff]
        %v1485 = vld [vmem:[%s2 + $0x680] sm:$0xff]
        %v1486 = vld [vmem:[%s2 + $0x688] sm:$0xff]
        %v1487 = vld [vmem:[%s2 + $0x690] sm:$0xff]
        %v1488 = vld [vmem:[%s2 + $0x698] sm:$0xff]
        %v1489 = vld [vmem:[%s2 + $0x6a0] sm:$0xff]
        %v1490 = vld [vmem:[%s2 + $0x6a8] sm:$0xff]
        %v1491 = vld [vmem:[%s2 + $0x6b0] sm:$0xff]
        %v1492 = vld [vmem:[%s2 + $0x6b8] sm:$0xff]
        %v1493 = vld [vmem:[%s2 + $0x6c0] sm:$0xff]
        %v1494 = vld [vmem:[%s2 + $0x6c8] sm:$0xff]
        %v1495 = vld [vmem:[%s2 + $0x6d0] sm:$0xff]
        %v1496 = vld [vmem:[%s2 + $0x6d8] sm:$0xff]
        %v1497 = vld [vmem:[%s2 + $0x6e0] sm:$0xff]
        %v1498 = vld [vmem:[%s2 + $0x6e8] sm:$0xff]
        %v1499 = vld [vmem:[%s2 + $0x6f0] sm:$0xff]
        %v1500 = vld [vmem:[%s2 + $0x6f8] sm:$0xff]
        %v1501 = vld [vmem:[%s2 + $0x700] sm:$0xff]
        %v1502 = vld [vmem:[%s2 + $0x708] sm:$0xff]
        %v1503 = vld [vmem:[%s2 + $0x710] sm:$0xff]
        %v1504 = vld [vmem:[%s2 + $0x718] sm:$0xff]
        %v1505 = vld [vmem:[%s2 + $0x720] sm:$0xff]
        %v1506 = vld [vmem:[%s2 + $0x728] sm:$0xff]
        %v1507 = vld [vmem:[%s2 + $0x730] sm:$0xff]
        %v1508 = vld [vmem:[%s2 + $0x738] sm:$0xff]
        %v1509 = vld [vmem:[%s2 + $0x740] sm:$0xff]
        %v1510 = vld [vmem:[%s2 + $0x748] sm:$0xff]
        %v1511 = vld [vmem:[%s2 + $0x750] sm:$0xff]
        %v1512 = vld [vmem:[%s2 + $0x758] sm:$0xff]
        %v1513 = vld [vmem:[%s2 + $0x760] sm:$0xff]
        %v1514 = vld [vmem:[%s2 + $0x768] sm:$0xff]
        %v1515 = vld [vmem:[%s2 + $0x770] sm:$0xff]
        %v1516 = vld [vmem:[%s2 + $0x778] sm:$0xff]
        %v1517 = vld [vmem:[%s2 + $0x780] sm:$0xff]
        %v1518 = vld [vmem:[%s2 + $0x788] sm:$0xff]
        %v1519 = vld [vmem:[%s2 + $0x790] sm:$0xff]
        %v1520 = vld [vmem:[%s2 + $0x798] sm:$0xff]
        %v1521 = vld [vmem:[%s2 + $0x7a0] sm:$0xff]
        %v1522 = vld [vmem:[%s2 + $0x7a8] sm:$0xff]
        %v1523 = vld [vmem:[%s2 + $0x7b0] sm:$0xff]
        %v1524 = vld [vmem:[%s2 + $0x7b8] sm:$0xff]
        %v1525 = vld [vmem:[%s2 + $0x7c0] sm:$0xff]
        %v1526 = vld [vmem:[%s2 + $0x7c8] sm:$0xff]
        %v1527 = vld [vmem:[%s2 + $0x7d0] sm:$0xff]
        %v1528 = vld [vmem:[%s2 + $0x7d8] sm:$0xff]
        %v1529 = vld [vmem:[%s2 + $0x7e0] sm:$0xff]
        %v1530 = vld [vmem:[%s2 + $0x7e8] sm:$0xff]
        %v1531 = vld [vmem:[%s2 + $0x7f0] sm:$0xff]
        %v1532 = vld [vmem:[%s2 + $0x7f8] sm:$0xff]
        %v1533 = vld [vmem:[%s3] sm:$0xf]
        %v1535 = vlaneseq
        %v1536 = vshrl.u32 %v1535, 7
        %v1537 = vsub.s32 0, %v1536
        %v1538 = vrot.slane %v1533, %v1537
        %v1539 = vlaneseq
        %v1540 = vshrl.u32 %v1539, 7
        %v1541 = vsub.s32 1, %v1540
        %v1542 = vrot.slane %v1533, %v1541
        %v1543 = vlaneseq
        %v1544 = vshrl.u32 %v1543, 7
        %v1545 = vsub.s32 2, %v1544
        %v1546 = vrot.slane %v1533, %v1545
        %v1547 = vlaneseq
        %v1548 = vshrl.u32 %v1547, 7
        %v1549 = vsub.s32 3, %v1548
        %v1550 = vrot.slane %v1533, %v1549
        %v1811 = vunpack.c.l.b16 %v1277
        %v1812 = vunpack.c.h.b16 %v1277
        %v1813 = vunpack.c.l.b16 %v1278
        %v1814 = vunpack.c.h.b16 %v1278
        %v1815 = vunpack.c.l.b16 %v1279
        %v1816 = vunpack.c.h.b16 %v1279
        %v1817 = vunpack.c.l.b16 %v1280
        %v1818 = vunpack.c.h.b16 %v1280
        %v1819 = vunpack.c.l.b16 %v1281
        %v1820 = vunpack.c.h.b16 %v1281
        %v1821 = vunpack.c.l.b16 %v1282
        %v1822 = vunpack.c.h.b16 %v1282
        %v1823 = vunpack.c.l.b16 %v1283
        %v1824 = vunpack.c.h.b16 %v1283
        %v1825 = vunpack.c.l.b16 %v1284
        %v1826 = vunpack.c.h.b16 %v1284
        %v1827 = vunpack.c.l.b16 %v1285
        %v1828 = vunpack.c.h.b16 %v1285
        %v1829 = vunpack.c.l.b16 %v1286
        %v1830 = vunpack.c.h.b16 %v1286
        %v1831 = vunpack.c.l.b16 %v1287
        %v1832 = vunpack.c.h.b16 %v1287
        %v1833 = vunpack.c.l.b16 %v1288
        %v1834 = vunpack.c.h.b16 %v1288
        %v1835 = vunpack.c.l.b16 %v1289
        %v1836 = vunpack.c.h.b16 %v1289
        %v1837 = vunpack.c.l.b16 %v1290
        %v1838 = vunpack.c.h.b16 %v1290
        %v1839 = vunpack.c.l.b16 %v1291
        %v1840 = vunpack.c.h.b16 %v1291
        %v1841 = vunpack.c.l.b16 %v1292
        %v1842 = vunpack.c.h.b16 %v1292
        %v1843 = vunpack.c.l.b16 %v1293
        %v1844 = vunpack.c.h.b16 %v1293
        %v1845 = vunpack.c.l.b16 %v1294
        %v1846 = vunpack.c.h.b16 %v1294
        %v1847 = vunpack.c.l.b16 %v1295
        %v1848 = vunpack.c.h.b16 %v1295
        %v1849 = vunpack.c.l.b16 %v1296
        %v1850 = vunpack.c.h.b16 %v1296
        %v1851 = vunpack.c.l.b16 %v1297
        %v1852 = vunpack.c.h.b16 %v1297
        %v1853 = vunpack.c.l.b16 %v1298
        %v1854 = vunpack.c.h.b16 %v1298
        %v1855 = vunpack.c.l.b16 %v1299
        %v1856 = vunpack.c.h.b16 %v1299
        %v1857 = vunpack.c.l.b16 %v1300
        %v1858 = vunpack.c.h.b16 %v1300
        %v1859 = vunpack.c.l.b16 %v1301
        %v1860 = vunpack.c.h.b16 %v1301
        %v1861 = vunpack.c.l.b16 %v1302
        %v1862 = vunpack.c.h.b16 %v1302
        %v1863 = vunpack.c.l.b16 %v1303
        %v1864 = vunpack.c.h.b16 %v1303
        %v1865 = vunpack.c.l.b16 %v1304
        %v1866 = vunpack.c.h.b16 %v1304
        %v1867 = vunpack.c.l.b16 %v1305
        %v1868 = vunpack.c.h.b16 %v1305
        %v1869 = vunpack.c.l.b16 %v1306
        %v1870 = vunpack.c.h.b16 %v1306
        %v1871 = vunpack.c.l.b16 %v1307
        %v1872 = vunpack.c.h.b16 %v1307
        %v1873 = vunpack.c.l.b16 %v1308
        %v1874 = vunpack.c.h.b16 %v1308
        %v1875 = vunpack.c.l.b16 %v1309
        %v1876 = vunpack.c.h.b16 %v1309
        %v1877 = vunpack.c.l.b16 %v1310
        %v1878 = vunpack.c.h.b16 %v1310
        %v1879 = vunpack.c.l.b16 %v1311
        %v1880 = vunpack.c.h.b16 %v1311
        %v1881 = vunpack.c.l.b16 %v1312
        %v1882 = vunpack.c.h.b16 %v1312
        %v1883 = vunpack.c.l.b16 %v1313
        %v1884 = vunpack.c.h.b16 %v1313
        %v1885 = vunpack.c.l.b16 %v1314
        %v1886 = vunpack.c.h.b16 %v1314
        %v1887 = vunpack.c.l.b16 %v1315
        %v1888 = vunpack.c.h.b16 %v1315
        %v1889 = vunpack.c.l.b16 %v1316
        %v1890 = vunpack.c.h.b16 %v1316
        %v1891 = vunpack.c.l.b16 %v1317
        %v1892 = vunpack.c.h.b16 %v1317
        %v1893 = vunpack.c.l.b16 %v1318
        %v1894 = vunpack.c.h.b16 %v1318
        %v1895 = vunpack.c.l.b16 %v1319
        %v1896 = vunpack.c.h.b16 %v1319
        %v1897 = vunpack.c.l.b16 %v1320
        %v1898 = vunpack.c.h.b16 %v1320
        %v1899 = vunpack.c.l.b16 %v1321
        %v1900 = vunpack.c.h.b16 %v1321
        %v1901 = vunpack.c.l.b16 %v1322
        %v1902 = vunpack.c.h.b16 %v1322
        %v1903 = vunpack.c.l.b16 %v1323
        %v1904 = vunpack.c.h.b16 %v1323
        %v1905 = vunpack.c.l.b16 %v1324
        %v1906 = vunpack.c.h.b16 %v1324
        %v1907 = vunpack.c.l.b16 %v1325
        %v1908 = vunpack.c.h.b16 %v1325
        %v1909 = vunpack.c.l.b16 %v1326
        %v1910 = vunpack.c.h.b16 %v1326
        %v1911 = vunpack.c.l.b16 %v1327
        %v1912 = vunpack.c.h.b16 %v1327
        %v1913 = vunpack.c.l.b16 %v1328
        %v1914 = vunpack.c.h.b16 %v1328
        %v1915 = vunpack.c.l.b16 %v1329
        %v1916 = vunpack.c.h.b16 %v1329
        %v1917 = vunpack.c.l.b16 %v1330
        %v1918 = vunpack.c.h.b16 %v1330
        %v1919 = vunpack.c.l.b16 %v1331
        %v1920 = vunpack.c.h.b16 %v1331
        %v1921 = vunpack.c.l.b16 %v1332
        %v1922 = vunpack.c.h.b16 %v1332
        %v1923 = vunpack.c.l.b16 %v1333
        %v1924 = vunpack.c.h.b16 %v1333
        %v1925 = vunpack.c.l.b16 %v1334
        %v1926 = vunpack.c.h.b16 %v1334
        %v1927 = vunpack.c.l.b16 %v1335
        %v1928 = vunpack.c.h.b16 %v1335
        %v1929 = vunpack.c.l.b16 %v1336
        %v1930 = vunpack.c.h.b16 %v1336
        %v1931 = vunpack.c.l.b16 %v1337
        %v1932 = vunpack.c.h.b16 %v1337
        %v1933 = vunpack.c.l.b16 %v1338
        %v1934 = vunpack.c.h.b16 %v1338
        %v1935 = vunpack.c.l.b16 %v1339
        %v1936 = vunpack.c.h.b16 %v1339
        %v1937 = vunpack.c.l.b16 %v1340
        %v1938 = vunpack.c.h.b16 %v1340
        %v1939 = vunpack.c.l.b16 %v1341
        %v1940 = vunpack.c.h.b16 %v1341
        %v1941 = vunpack.c.l.b16 %v1342
        %v1942 = vunpack.c.h.b16 %v1342
        %v1943 = vunpack.c.l.b16 %v1343
        %v1944 = vunpack.c.h.b16 %v1343
        %v1945 = vunpack.c.l.b16 %v1344
        %v1946 = vunpack.c.h.b16 %v1344
        %v1947 = vunpack.c.l.b16 %v1345
        %v1948 = vunpack.c.h.b16 %v1345
        %v1949 = vunpack.c.l.b16 %v1346
        %v1950 = vunpack.c.h.b16 %v1346
        %v1951 = vunpack.c.l.b16 %v1347
        %v1952 = vunpack.c.h.b16 %v1347
        %v1953 = vunpack.c.l.b16 %v1348
        %v1954 = vunpack.c.h.b16 %v1348
        %v1955 = vunpack.c.l.b16 %v1349
        %v1956 = vunpack.c.h.b16 %v1349
        %v1957 = vunpack.c.l.b16 %v1350
        %v1958 = vunpack.c.h.b16 %v1350
        %v1959 = vunpack.c.l.b16 %v1351
        %v1960 = vunpack.c.h.b16 %v1351
        %v1961 = vunpack.c.l.b16 %v1352
        %v1962 = vunpack.c.h.b16 %v1352
        %v1963 = vunpack.c.l.b16 %v1353
        %v1964 = vunpack.c.h.b16 %v1353
        %v1965 = vunpack.c.l.b16 %v1354
        %v1966 = vunpack.c.h.b16 %v1354
        %v1967 = vunpack.c.l.b16 %v1355
        %v1968 = vunpack.c.h.b16 %v1355
        %v1969 = vunpack.c.l.b16 %v1356
        %v1970 = vunpack.c.h.b16 %v1356
        %v1971 = vunpack.c.l.b16 %v1357
        %v1972 = vunpack.c.h.b16 %v1357
        %v1973 = vunpack.c.l.b16 %v1358
        %v1974 = vunpack.c.h.b16 %v1358
        %v1975 = vunpack.c.l.b16 %v1359
        %v1976 = vunpack.c.h.b16 %v1359
        %v1977 = vunpack.c.l.b16 %v1360
        %v1978 = vunpack.c.h.b16 %v1360
        %v1979 = vunpack.c.l.b16 %v1361
        %v1980 = vunpack.c.h.b16 %v1361
        %v1981 = vunpack.c.l.b16 %v1362
        %v1982 = vunpack.c.h.b16 %v1362
        %v1983 = vunpack.c.l.b16 %v1363
        %v1984 = vunpack.c.h.b16 %v1363
        %v1985 = vunpack.c.l.b16 %v1364
        %v1986 = vunpack.c.h.b16 %v1364
        %v1987 = vunpack.c.l.b16 %v1365
        %v1988 = vunpack.c.h.b16 %v1365
        %v1989 = vunpack.c.l.b16 %v1366
        %v1990 = vunpack.c.h.b16 %v1366
        %v1991 = vunpack.c.l.b16 %v1367
        %v1992 = vunpack.c.h.b16 %v1367
        %v1993 = vunpack.c.l.b16 %v1368
        %v1994 = vunpack.c.h.b16 %v1368
        %v1995 = vunpack.c.l.b16 %v1369
        %v1996 = vunpack.c.h.b16 %v1369
        %v1997 = vunpack.c.l.b16 %v1370
        %v1998 = vunpack.c.h.b16 %v1370
        %v1999 = vunpack.c.l.b16 %v1371
        %v2000 = vunpack.c.h.b16 %v1371
        %v2001 = vunpack.c.l.b16 %v1372
        %v2002 = vunpack.c.h.b16 %v1372
        %v2003 = vunpack.c.l.b16 %v1373
        %v2004 = vunpack.c.h.b16 %v1373
        %v2005 = vunpack.c.l.b16 %v1374
        %v2006 = vunpack.c.h.b16 %v1374
        %v2007 = vunpack.c.l.b16 %v1375
        %v2008 = vunpack.c.h.b16 %v1375
        %v2009 = vunpack.c.l.b16 %v1376
        %v2010 = vunpack.c.h.b16 %v1376
        %v2011 = vunpack.c.l.b16 %v1377
        %v2012 = vunpack.c.h.b16 %v1377
        %v2013 = vunpack.c.l.b16 %v1378
        %v2014 = vunpack.c.h.b16 %v1378
        %v2015 = vunpack.c.l.b16 %v1379
        %v2016 = vunpack.c.h.b16 %v1379
        %v2017 = vunpack.c.l.b16 %v1380
        %v2018 = vunpack.c.h.b16 %v1380
        %v2019 = vunpack.c.l.b16 %v1381
        %v2020 = vunpack.c.h.b16 %v1381
        %v2021 = vunpack.c.l.b16 %v1382
        %v2022 = vunpack.c.h.b16 %v1382
        %v2023 = vunpack.c.l.b16 %v1383
        %v2024 = vunpack.c.h.b16 %v1383
        %v2025 = vunpack.c.l.b16 %v1384
        %v2026 = vunpack.c.h.b16 %v1384
        %v2027 = vunpack.c.l.b16 %v1385
        %v2028 = vunpack.c.h.b16 %v1385
        %v2029 = vunpack.c.l.b16 %v1386
        %v2030 = vunpack.c.h.b16 %v1386
        %v2031 = vunpack.c.l.b16 %v1387
        %v2032 = vunpack.c.h.b16 %v1387
        %v2033 = vunpack.c.l.b16 %v1388
        %v2034 = vunpack.c.h.b16 %v1388
        %v2035 = vunpack.c.l.b16 %v1389
        %v2036 = vunpack.c.h.b16 %v1389
        %v2037 = vunpack.c.l.b16 %v1390
        %v2038 = vunpack.c.h.b16 %v1390
        %v2039 = vunpack.c.l.b16 %v1391
        %v2040 = vunpack.c.h.b16 %v1391
        %v2041 = vunpack.c.l.b16 %v1392
        %v2042 = vunpack.c.h.b16 %v1392
        %v2043 = vunpack.c.l.b16 %v1393
        %v2044 = vunpack.c.h.b16 %v1393
        %v2045 = vunpack.c.l.b16 %v1394
        %v2046 = vunpack.c.h.b16 %v1394
        %v2047 = vunpack.c.l.b16 %v1395
        %v2048 = vunpack.c.h.b16 %v1395
        %v2049 = vunpack.c.l.b16 %v1396
        %v2050 = vunpack.c.h.b16 %v1396
        %v2051 = vunpack.c.l.b16 %v1397
        %v2052 = vunpack.c.h.b16 %v1397
        %v2053 = vunpack.c.l.b16 %v1398
        %v2054 = vunpack.c.h.b16 %v1398
        %v2055 = vunpack.c.l.b16 %v1399
        %v2056 = vunpack.c.h.b16 %v1399
        %v2057 = vunpack.c.l.b16 %v1400
        %v2058 = vunpack.c.h.b16 %v1400
        %v2059 = vunpack.c.l.b16 %v1401
        %v2060 = vunpack.c.h.b16 %v1401
        %v2061 = vunpack.c.l.b16 %v1402
        %v2062 = vunpack.c.h.b16 %v1402
        %v2063 = vunpack.c.l.b16 %v1403
        %v2064 = vunpack.c.h.b16 %v1403
        %v2065 = vunpack.c.l.b16 %v1404
        %v2066 = vunpack.c.h.b16 %v1404
        %v2067 = vunpack.c.l.b16 %v1405
        %v2068 = vunpack.c.h.b16 %v1405
        %v2069 = vunpack.c.l.b16 %v1406
        %v2070 = vunpack.c.h.b16 %v1406
        %v2071 = vunpack.c.l.b16 %v1407
        %v2072 = vunpack.c.h.b16 %v1407
        %v2073 = vunpack.c.l.b16 %v1408
        %v2074 = vunpack.c.h.b16 %v1408
        %v2075 = vunpack.c.l.b16 %v1409
        %v2076 = vunpack.c.h.b16 %v1409
        %v2077 = vunpack.c.l.b16 %v1410
        %v2078 = vunpack.c.h.b16 %v1410
        %v2079 = vunpack.c.l.b16 %v1411
        %v2080 = vunpack.c.h.b16 %v1411
        %v2081 = vunpack.c.l.b16 %v1412
        %v2082 = vunpack.c.h.b16 %v1412
        %v2083 = vunpack.c.l.b16 %v1413
        %v2084 = vunpack.c.h.b16 %v1413
        %v2085 = vunpack.c.l.b16 %v1414
        %v2086 = vunpack.c.h.b16 %v1414
        %v2087 = vunpack.c.l.b16 %v1415
        %v2088 = vunpack.c.h.b16 %v1415
        %v2089 = vunpack.c.l.b16 %v1416
        %v2090 = vunpack.c.h.b16 %v1416
        %v2091 = vunpack.c.l.b16 %v1417
        %v2092 = vunpack.c.h.b16 %v1417
        %v2093 = vunpack.c.l.b16 %v1418
        %v2094 = vunpack.c.h.b16 %v1418
        %v2095 = vunpack.c.l.b16 %v1419
        %v2096 = vunpack.c.h.b16 %v1419
        %v2097 = vunpack.c.l.b16 %v1420
        %v2098 = vunpack.c.h.b16 %v1420
        %v2099 = vunpack.c.l.b16 %v1421
        %v2100 = vunpack.c.h.b16 %v1421
        %v2101 = vunpack.c.l.b16 %v1422
        %v2102 = vunpack.c.h.b16 %v1422
        %v2103 = vunpack.c.l.b16 %v1423
        %v2104 = vunpack.c.h.b16 %v1423
        %v2105 = vunpack.c.l.b16 %v1424
        %v2106 = vunpack.c.h.b16 %v1424
        %v2107 = vunpack.c.l.b16 %v1425
        %v2108 = vunpack.c.h.b16 %v1425
        %v2109 = vunpack.c.l.b16 %v1426
        %v2110 = vunpack.c.h.b16 %v1426
        %v2111 = vunpack.c.l.b16 %v1427
        %v2112 = vunpack.c.h.b16 %v1427
        %v2113 = vunpack.c.l.b16 %v1428
        %v2114 = vunpack.c.h.b16 %v1428
        %v2115 = vunpack.c.l.b16 %v1429
        %v2116 = vunpack.c.h.b16 %v1429
        %v2117 = vunpack.c.l.b16 %v1430
        %v2118 = vunpack.c.h.b16 %v1430
        %v2119 = vunpack.c.l.b16 %v1431
        %v2120 = vunpack.c.h.b16 %v1431
        %v2121 = vunpack.c.l.b16 %v1432
        %v2122 = vunpack.c.h.b16 %v1432
        %v2123 = vunpack.c.l.b16 %v1433
        %v2124 = vunpack.c.h.b16 %v1433
        %v2125 = vunpack.c.l.b16 %v1434
        %v2126 = vunpack.c.h.b16 %v1434
        %v2127 = vunpack.c.l.b16 %v1435
        %v2128 = vunpack.c.h.b16 %v1435
        %v2129 = vunpack.c.l.b16 %v1436
        %v2130 = vunpack.c.h.b16 %v1436
        %v2131 = vunpack.c.l.b16 %v1437
        %v2132 = vunpack.c.h.b16 %v1437
        %v2133 = vunpack.c.l.b16 %v1438
        %v2134 = vunpack.c.h.b16 %v1438
        %v2135 = vunpack.c.l.b16 %v1439
        %v2136 = vunpack.c.h.b16 %v1439
        %v2137 = vunpack.c.l.b16 %v1440
        %v2138 = vunpack.c.h.b16 %v1440
        %v2139 = vunpack.c.l.b16 %v1441
        %v2140 = vunpack.c.h.b16 %v1441
        %v2141 = vunpack.c.l.b16 %v1442
        %v2142 = vunpack.c.h.b16 %v1442
        %v2143 = vunpack.c.l.b16 %v1443
        %v2144 = vunpack.c.h.b16 %v1443
        %v2145 = vunpack.c.l.b16 %v1444
        %v2146 = vunpack.c.h.b16 %v1444
        %v2147 = vunpack.c.l.b16 %v1445
        %v2148 = vunpack.c.h.b16 %v1445
        %v2149 = vunpack.c.l.b16 %v1446
        %v2150 = vunpack.c.h.b16 %v1446
        %v2151 = vunpack.c.l.b16 %v1447
        %v2152 = vunpack.c.h.b16 %v1447
        %v2153 = vunpack.c.l.b16 %v1448
        %v2154 = vunpack.c.h.b16 %v1448
        %v2155 = vunpack.c.l.b16 %v1449
        %v2156 = vunpack.c.h.b16 %v1449
        %v2157 = vunpack.c.l.b16 %v1450
        %v2158 = vunpack.c.h.b16 %v1450
        %v2159 = vunpack.c.l.b16 %v1451
        %v2160 = vunpack.c.h.b16 %v1451
        %v2161 = vunpack.c.l.b16 %v1452
        %v2162 = vunpack.c.h.b16 %v1452
        %v2163 = vunpack.c.l.b16 %v1453
        %v2164 = vunpack.c.h.b16 %v1453
        %v2165 = vunpack.c.l.b16 %v1454
        %v2166 = vunpack.c.h.b16 %v1454
        %v2167 = vunpack.c.l.b16 %v1455
        %v2168 = vunpack.c.h.b16 %v1455
        %v2169 = vunpack.c.l.b16 %v1456
        %v2170 = vunpack.c.h.b16 %v1456
        %v2171 = vunpack.c.l.b16 %v1457
        %v2172 = vunpack.c.h.b16 %v1457
        %v2173 = vunpack.c.l.b16 %v1458
        %v2174 = vunpack.c.h.b16 %v1458
        %v2175 = vunpack.c.l.b16 %v1459
        %v2176 = vunpack.c.h.b16 %v1459
        %v2177 = vunpack.c.l.b16 %v1460
        %v2178 = vunpack.c.h.b16 %v1460
        %v2179 = vunpack.c.l.b16 %v1461
        %v2180 = vunpack.c.h.b16 %v1461
        %v2181 = vunpack.c.l.b16 %v1462
        %v2182 = vunpack.c.h.b16 %v1462
        %v2183 = vunpack.c.l.b16 %v1463
        %v2184 = vunpack.c.h.b16 %v1463
        %v2185 = vunpack.c.l.b16 %v1464
        %v2186 = vunpack.c.h.b16 %v1464
        %v2187 = vunpack.c.l.b16 %v1465
        %v2188 = vunpack.c.h.b16 %v1465
        %v2189 = vunpack.c.l.b16 %v1466
        %v2190 = vunpack.c.h.b16 %v1466
        %v2191 = vunpack.c.l.b16 %v1467
        %v2192 = vunpack.c.h.b16 %v1467
        %v2193 = vunpack.c.l.b16 %v1468
        %v2194 = vunpack.c.h.b16 %v1468
        %v2195 = vunpack.c.l.b16 %v1469
        %v2196 = vunpack.c.h.b16 %v1469
        %v2197 = vunpack.c.l.b16 %v1470
        %v2198 = vunpack.c.h.b16 %v1470
        %v2199 = vunpack.c.l.b16 %v1471
        %v2200 = vunpack.c.h.b16 %v1471
        %v2201 = vunpack.c.l.b16 %v1472
        %v2202 = vunpack.c.h.b16 %v1472
        %v2203 = vunpack.c.l.b16 %v1473
        %v2204 = vunpack.c.h.b16 %v1473
        %v2205 = vunpack.c.l.b16 %v1474
        %v2206 = vunpack.c.h.b16 %v1474
        %v2207 = vunpack.c.l.b16 %v1475
        %v2208 = vunpack.c.h.b16 %v1475
        %v2209 = vunpack.c.l.b16 %v1476
        %v2210 = vunpack.c.h.b16 %v1476
        %v2211 = vunpack.c.l.b16 %v1477
        %v2212 = vunpack.c.h.b16 %v1477
        %v2213 = vunpack.c.l.b16 %v1478
        %v2214 = vunpack.c.h.b16 %v1478
        %v2215 = vunpack.c.l.b16 %v1479
        %v2216 = vunpack.c.h.b16 %v1479
        %v2217 = vunpack.c.l.b16 %v1480
        %v2218 = vunpack.c.h.b16 %v1480
        %v2219 = vunpack.c.l.b16 %v1481
        %v2220 = vunpack.c.h.b16 %v1481
        %v2221 = vunpack.c.l.b16 %v1482
        %v2222 = vunpack.c.h.b16 %v1482
        %v2223 = vunpack.c.l.b16 %v1483
        %v2224 = vunpack.c.h.b16 %v1483
        %v2225 = vunpack.c.l.b16 %v1484
        %v2226 = vunpack.c.h.b16 %v1484
        %v2227 = vunpack.c.l.b16 %v1485
        %v2228 = vunpack.c.h.b16 %v1485
        %v2229 = vunpack.c.l.b16 %v1486
        %v2230 = vunpack.c.h.b16 %v1486
        %v2231 = vunpack.c.l.b16 %v1487
        %v2232 = vunpack.c.h.b16 %v1487
        %v2233 = vunpack.c.l.b16 %v1488
        %v2234 = vunpack.c.h.b16 %v1488
        %v2235 = vunpack.c.l.b16 %v1489
        %v2236 = vunpack.c.h.b16 %v1489
        %v2237 = vunpack.c.l.b16 %v1490
        %v2238 = vunpack.c.h.b16 %v1490
        %v2239 = vunpack.c.l.b16 %v1491
        %v2240 = vunpack.c.h.b16 %v1491
        %v2241 = vunpack.c.l.b16 %v1492
        %v2242 = vunpack.c.h.b16 %v1492
        %v2243 = vunpack.c.l.b16 %v1493
        %v2244 = vunpack.c.h.b16 %v1493
        %v2245 = vunpack.c.l.b16 %v1494
        %v2246 = vunpack.c.h.b16 %v1494
        %v2247 = vunpack.c.l.b16 %v1495
        %v2248 = vunpack.c.h.b16 %v1495
        %v2249 = vunpack.c.l.b16 %v1496
        %v2250 = vunpack.c.h.b16 %v1496
        %v2251 = vunpack.c.l.b16 %v1497
        %v2252 = vunpack.c.h.b16 %v1497
        %v2253 = vunpack.c.l.b16 %v1498
        %v2254 = vunpack.c.h.b16 %v1498
        %v2255 = vunpack.c.l.b16 %v1499
        %v2256 = vunpack.c.h.b16 %v1499
        %v2257 = vunpack.c.l.b16 %v1500
        %v2258 = vunpack.c.h.b16 %v1500
        %v2259 = vunpack.c.l.b16 %v1501
        %v2260 = vunpack.c.h.b16 %v1501
        %v2261 = vunpack.c.l.b16 %v1502
        %v2262 = vunpack.c.h.b16 %v1502
        %v2263 = vunpack.c.l.b16 %v1503
        %v2264 = vunpack.c.h.b16 %v1503
        %v2265 = vunpack.c.l.b16 %v1504
        %v2266 = vunpack.c.h.b16 %v1504
        %v2267 = vunpack.c.l.b16 %v1505
        %v2268 = vunpack.c.h.b16 %v1505
        %v2269 = vunpack.c.l.b16 %v1506
        %v2270 = vunpack.c.h.b16 %v1506
        %v2271 = vunpack.c.l.b16 %v1507
        %v2272 = vunpack.c.h.b16 %v1507
        %v2273 = vunpack.c.l.b16 %v1508
        %v2274 = vunpack.c.h.b16 %v1508
        %v2275 = vunpack.c.l.b16 %v1509
        %v2276 = vunpack.c.h.b16 %v1509
        %v2277 = vunpack.c.l.b16 %v1510
        %v2278 = vunpack.c.h.b16 %v1510
        %v2279 = vunpack.c.l.b16 %v1511
        %v2280 = vunpack.c.h.b16 %v1511
        %v2281 = vunpack.c.l.b16 %v1512
        %v2282 = vunpack.c.h.b16 %v1512
        %v2283 = vunpack.c.l.b16 %v1513
        %v2284 = vunpack.c.h.b16 %v1513
        %v2285 = vunpack.c.l.b16 %v1514
        %v2286 = vunpack.c.h.b16 %v1514
        %v2287 = vunpack.c.l.b16 %v1515
        %v2288 = vunpack.c.h.b16 %v1515
        %v2289 = vunpack.c.l.b16 %v1516
        %v2290 = vunpack.c.h.b16 %v1516
        %v2291 = vunpack.c.l.b16 %v1517
        %v2292 = vunpack.c.h.b16 %v1517
        %v2293 = vunpack.c.l.b16 %v1518
        %v2294 = vunpack.c.h.b16 %v1518
        %v2295 = vunpack.c.l.b16 %v1519
        %v2296 = vunpack.c.h.b16 %v1519
        %v2297 = vunpack.c.l.b16 %v1520
        %v2298 = vunpack.c.h.b16 %v1520
        %v2299 = vunpack.c.l.b16 %v1521
        %v2300 = vunpack.c.h.b16 %v1521
        %v2301 = vunpack.c.l.b16 %v1522
        %v2302 = vunpack.c.h.b16 %v1522
        %v2303 = vunpack.c.l.b16 %v1523
        %v2304 = vunpack.c.h.b16 %v1523
        %v2305 = vunpack.c.l.b16 %v1524
        %v2306 = vunpack.c.h.b16 %v1524
        %v2307 = vunpack.c.l.b16 %v1525
        %v2308 = vunpack.c.h.b16 %v1525
        %v2309 = vunpack.c.l.b16 %v1526
        %v2310 = vunpack.c.h.b16 %v1526
        %v2311 = vunpack.c.l.b16 %v1527
        %v2312 = vunpack.c.h.b16 %v1527
        %v2313 = vunpack.c.l.b16 %v1528
        %v2314 = vunpack.c.h.b16 %v1528
        %v2315 = vunpack.c.l.b16 %v1529
        %v2316 = vunpack.c.h.b16 %v1529
        %v2317 = vunpack.c.l.b16 %v1530
        %v2318 = vunpack.c.h.b16 %v1530
        %v2319 = vunpack.c.l.b16 %v1531
        %v2320 = vunpack.c.h.b16 %v1531
        %v2321 = vunpack.c.l.b16 %v1532
        %v2322 = vunpack.c.h.b16 %v1532
        %v2323 = vpack.c.b16 %v1815, %v1811
        %v2324 = vpack.c.b16 %v1816, %v1812
        %v2325 = vpack.c.b16 %v1817, %v1813
        %v2326 = vpack.c.b16 %v1818, %v1814
        %v2327 = vpack.c.b16 %v1823, %v1819
        %v2328 = vpack.c.b16 %v1824, %v1820
        %v2329 = vpack.c.b16 %v1825, %v1821
        %v2330 = vpack.c.b16 %v1826, %v1822
        %v2331 = vpack.c.b16 %v1831, %v1827
        %v2332 = vpack.c.b16 %v1832, %v1828
        %v2333 = vpack.c.b16 %v1833, %v1829
        %v2334 = vpack.c.b16 %v1834, %v1830
        %v2335 = vpack.c.b16 %v1839, %v1835
        %v2336 = vpack.c.b16 %v1840, %v1836
        %v2337 = vpack.c.b16 %v1841, %v1837
        %v2338 = vpack.c.b16 %v1842, %v1838
        %v2339 = vpack.c.b16 %v1847, %v1843
        %v2340 = vpack.c.b16 %v1848, %v1844
        %v2341 = vpack.c.b16 %v1849, %v1845
        %v2342 = vpack.c.b16 %v1850, %v1846
        %v2343 = vpack.c.b16 %v1855, %v1851
        %v2344 = vpack.c.b16 %v1856, %v1852
        %v2345 = vpack.c.b16 %v1857, %v1853
        %v2346 = vpack.c.b16 %v1858, %v1854
        %v2347 = vpack.c.b16 %v1863, %v1859
        %v2348 = vpack.c.b16 %v1864, %v1860
        %v2349 = vpack.c.b16 %v1865, %v1861
        %v2350 = vpack.c.b16 %v1866, %v1862
        %v2351 = vpack.c.b16 %v1871, %v1867
        %v2352 = vpack.c.b16 %v1872, %v1868
        %v2353 = vpack.c.b16 %v1873, %v1869
        %v2354 = vpack.c.b16 %v1874, %v1870
        %v2355 = vpack.c.b16 %v1879, %v1875
        %v2356 = vpack.c.b16 %v1880, %v1876
        %v2357 = vpack.c.b16 %v1881, %v1877
        %v2358 = vpack.c.b16 %v1882, %v1878
        %v2359 = vpack.c.b16 %v1887, %v1883
        %v2360 = vpack.c.b16 %v1888, %v1884
        %v2361 = vpack.c.b16 %v1889, %v1885
        %v2362 = vpack.c.b16 %v1890, %v1886
        %v2363 = vpack.c.b16 %v1895, %v1891
        %v2364 = vpack.c.b16 %v1896, %v1892
        %v2365 = vpack.c.b16 %v1897, %v1893
        %v2366 = vpack.c.b16 %v1898, %v1894
        %v2367 = vpack.c.b16 %v1903, %v1899
        %v2368 = vpack.c.b16 %v1904, %v1900
        %v2369 = vpack.c.b16 %v1905, %v1901
        %v2370 = vpack.c.b16 %v1906, %v1902
        %v2371 = vpack.c.b16 %v1911, %v1907
        %v2372 = vpack.c.b16 %v1912, %v1908
        %v2373 = vpack.c.b16 %v1913, %v1909
        %v2374 = vpack.c.b16 %v1914, %v1910
        %v2375 = vpack.c.b16 %v1919, %v1915
        %v2376 = vpack.c.b16 %v1920, %v1916
        %v2377 = vpack.c.b16 %v1921, %v1917
        %v2378 = vpack.c.b16 %v1922, %v1918
        %v2379 = vpack.c.b16 %v1927, %v1923
        %v2380 = vpack.c.b16 %v1928, %v1924
        %v2381 = vpack.c.b16 %v1929, %v1925
        %v2382 = vpack.c.b16 %v1930, %v1926
        %v2383 = vpack.c.b16 %v1935, %v1931
        %v2384 = vpack.c.b16 %v1936, %v1932
        %v2385 = vpack.c.b16 %v1937, %v1933
        %v2386 = vpack.c.b16 %v1938, %v1934
        %v2387 = vpack.c.b16 %v1943, %v1939
        %v2388 = vpack.c.b16 %v1944, %v1940
        %v2389 = vpack.c.b16 %v1945, %v1941
        %v2390 = vpack.c.b16 %v1946, %v1942
        %v2391 = vpack.c.b16 %v1951, %v1947
        %v2392 = vpack.c.b16 %v1952, %v1948
        %v2393 = vpack.c.b16 %v1953, %v1949
        %v2394 = vpack.c.b16 %v1954, %v1950
        %v2395 = vpack.c.b16 %v1959, %v1955
        %v2396 = vpack.c.b16 %v1960, %v1956
        %v2397 = vpack.c.b16 %v1961, %v1957
        %v2398 = vpack.c.b16 %v1962, %v1958
        %v2399 = vpack.c.b16 %v1967, %v1963
        %v2400 = vpack.c.b16 %v1968, %v1964
        %v2401 = vpack.c.b16 %v1969, %v1965
        %v2402 = vpack.c.b16 %v1970, %v1966
        %v2403 = vpack.c.b16 %v1975, %v1971
        %v2404 = vpack.c.b16 %v1976, %v1972
        %v2405 = vpack.c.b16 %v1977, %v1973
        %v2406 = vpack.c.b16 %v1978, %v1974
        %v2407 = vpack.c.b16 %v1983, %v1979
        %v2408 = vpack.c.b16 %v1984, %v1980
        %v2409 = vpack.c.b16 %v1985, %v1981
        %v2410 = vpack.c.b16 %v1986, %v1982
        %v2411 = vpack.c.b16 %v1991, %v1987
        %v2412 = vpack.c.b16 %v1992, %v1988
        %v2413 = vpack.c.b16 %v1993, %v1989
        %v2414 = vpack.c.b16 %v1994, %v1990
        %v2415 = vpack.c.b16 %v1999, %v1995
        %v2416 = vpack.c.b16 %v2000, %v1996
        %v2417 = vpack.c.b16 %v2001, %v1997
        %v2418 = vpack.c.b16 %v2002, %v1998
        %v2419 = vpack.c.b16 %v2007, %v2003
        %v2420 = vpack.c.b16 %v2008, %v2004
        %v2421 = vpack.c.b16 %v2009, %v2005
        %v2422 = vpack.c.b16 %v2010, %v2006
        %v2423 = vpack.c.b16 %v2015, %v2011
        %v2424 = vpack.c.b16 %v2016, %v2012
        %v2425 = vpack.c.b16 %v2017, %v2013
        %v2426 = vpack.c.b16 %v2018, %v2014
        %v2427 = vpack.c.b16 %v2023, %v2019
        %v2428 = vpack.c.b16 %v2024, %v2020
        %v2429 = vpack.c.b16 %v2025, %v2021
        %v2430 = vpack.c.b16 %v2026, %v2022
        %v2431 = vpack.c.b16 %v2031, %v2027
        %v2432 = vpack.c.b16 %v2032, %v2028
        %v2433 = vpack.c.b16 %v2033, %v2029
        %v2434 = vpack.c.b16 %v2034, %v2030
        %v2435 = vpack.c.b16 %v2039, %v2035
        %v2436 = vpack.c.b16 %v2040, %v2036
        %v2437 = vpack.c.b16 %v2041, %v2037
        %v2438 = vpack.c.b16 %v2042, %v2038
        %v2439 = vpack.c.b16 %v2047, %v2043
        %v2440 = vpack.c.b16 %v2048, %v2044
        %v2441 = vpack.c.b16 %v2049, %v2045
        %v2442 = vpack.c.b16 %v2050, %v2046
        %v2443 = vpack.c.b16 %v2055, %v2051
        %v2444 = vpack.c.b16 %v2056, %v2052
        %v2445 = vpack.c.b16 %v2057, %v2053
        %v2446 = vpack.c.b16 %v2058, %v2054
        %v2447 = vpack.c.b16 %v2063, %v2059
        %v2448 = vpack.c.b16 %v2064, %v2060
        %v2449 = vpack.c.b16 %v2065, %v2061
        %v2450 = vpack.c.b16 %v2066, %v2062
        %v2451 = vpack.c.b16 %v2071, %v2067
        %v2452 = vpack.c.b16 %v2072, %v2068
        %v2453 = vpack.c.b16 %v2073, %v2069
        %v2454 = vpack.c.b16 %v2074, %v2070
        %v2455 = vpack.c.b16 %v2079, %v2075
        %v2456 = vpack.c.b16 %v2080, %v2076
        %v2457 = vpack.c.b16 %v2081, %v2077
        %v2458 = vpack.c.b16 %v2082, %v2078
        %v2459 = vpack.c.b16 %v2087, %v2083
        %v2460 = vpack.c.b16 %v2088, %v2084
        %v2461 = vpack.c.b16 %v2089, %v2085
        %v2462 = vpack.c.b16 %v2090, %v2086
        %v2463 = vpack.c.b16 %v2095, %v2091
        %v2464 = vpack.c.b16 %v2096, %v2092
        %v2465 = vpack.c.b16 %v2097, %v2093
        %v2466 = vpack.c.b16 %v2098, %v2094
        %v2467 = vpack.c.b16 %v2103, %v2099
        %v2468 = vpack.c.b16 %v2104, %v2100
        %v2469 = vpack.c.b16 %v2105, %v2101
        %v2470 = vpack.c.b16 %v2106, %v2102
        %v2471 = vpack.c.b16 %v2111, %v2107
        %v2472 = vpack.c.b16 %v2112, %v2108
        %v2473 = vpack.c.b16 %v2113, %v2109
        %v2474 = vpack.c.b16 %v2114, %v2110
        %v2475 = vpack.c.b16 %v2119, %v2115
        %v2476 = vpack.c.b16 %v2120, %v2116
        %v2477 = vpack.c.b16 %v2121, %v2117
        %v2478 = vpack.c.b16 %v2122, %v2118
        %v2479 = vpack.c.b16 %v2127, %v2123
        %v2480 = vpack.c.b16 %v2128, %v2124
        %v2481 = vpack.c.b16 %v2129, %v2125
        %v2482 = vpack.c.b16 %v2130, %v2126
        %v2483 = vpack.c.b16 %v2135, %v2131
        %v2484 = vpack.c.b16 %v2136, %v2132
        %v2485 = vpack.c.b16 %v2137, %v2133
        %v2486 = vpack.c.b16 %v2138, %v2134
        %v2487 = vpack.c.b16 %v2143, %v2139
        %v2488 = vpack.c.b16 %v2144, %v2140
        %v2489 = vpack.c.b16 %v2145, %v2141
        %v2490 = vpack.c.b16 %v2146, %v2142
        %v2491 = vpack.c.b16 %v2151, %v2147
        %v2492 = vpack.c.b16 %v2152, %v2148
        %v2493 = vpack.c.b16 %v2153, %v2149
        %v2494 = vpack.c.b16 %v2154, %v2150
        %v2495 = vpack.c.b16 %v2159, %v2155
        %v2496 = vpack.c.b16 %v2160, %v2156
        %v2497 = vpack.c.b16 %v2161, %v2157
        %v2498 = vpack.c.b16 %v2162, %v2158
        %v2499 = vpack.c.b16 %v2167, %v2163
        %v2500 = vpack.c.b16 %v2168, %v2164
        %v2501 = vpack.c.b16 %v2169, %v2165
        %v2502 = vpack.c.b16 %v2170, %v2166
        %v2503 = vpack.c.b16 %v2175, %v2171
        %v2504 = vpack.c.b16 %v2176, %v2172
        %v2505 = vpack.c.b16 %v2177, %v2173
        %v2506 = vpack.c.b16 %v2178, %v2174
        %v2507 = vpack.c.b16 %v2183, %v2179
        %v2508 = vpack.c.b16 %v2184, %v2180
        %v2509 = vpack.c.b16 %v2185, %v2181
        %v2510 = vpack.c.b16 %v2186, %v2182
        %v2511 = vpack.c.b16 %v2191, %v2187
        %v2512 = vpack.c.b16 %v2192, %v2188
        %v2513 = vpack.c.b16 %v2193, %v2189
        %v2514 = vpack.c.b16 %v2194, %v2190
        %v2515 = vpack.c.b16 %v2199, %v2195
        %v2516 = vpack.c.b16 %v2200, %v2196
        %v2517 = vpack.c.b16 %v2201, %v2197
        %v2518 = vpack.c.b16 %v2202, %v2198
        %v2519 = vpack.c.b16 %v2207, %v2203
        %v2520 = vpack.c.b16 %v2208, %v2204
        %v2521 = vpack.c.b16 %v2209, %v2205
        %v2522 = vpack.c.b16 %v2210, %v2206
        %v2523 = vpack.c.b16 %v2215, %v2211
        %v2524 = vpack.c.b16 %v2216, %v2212
        %v2525 = vpack.c.b16 %v2217, %v2213
        %v2526 = vpack.c.b16 %v2218, %v2214
        %v2527 = vpack.c.b16 %v2223, %v2219
        %v2528 = vpack.c.b16 %v2224, %v2220
        %v2529 = vpack.c.b16 %v2225, %v2221
        %v2530 = vpack.c.b16 %v2226, %v2222
        %v2531 = vpack.c.b16 %v2231, %v2227
        %v2532 = vpack.c.b16 %v2232, %v2228
        %v2533 = vpack.c.b16 %v2233, %v2229
        %v2534 = vpack.c.b16 %v2234, %v2230
        %v2535 = vpack.c.b16 %v2239, %v2235
        %v2536 = vpack.c.b16 %v2240, %v2236
        %v2537 = vpack.c.b16 %v2241, %v2237
        %v2538 = vpack.c.b16 %v2242, %v2238
        %v2539 = vpack.c.b16 %v2247, %v2243
        %v2540 = vpack.c.b16 %v2248, %v2244
        %v2541 = vpack.c.b16 %v2249, %v2245
        %v2542 = vpack.c.b16 %v2250, %v2246
        %v2543 = vpack.c.b16 %v2255, %v2251
        %v2544 = vpack.c.b16 %v2256, %v2252
        %v2545 = vpack.c.b16 %v2257, %v2253
        %v2546 = vpack.c.b16 %v2258, %v2254
        %v2547 = vpack.c.b16 %v2263, %v2259
        %v2548 = vpack.c.b16 %v2264, %v2260
        %v2549 = vpack.c.b16 %v2265, %v2261
        %v2550 = vpack.c.b16 %v2266, %v2262
        %v2551 = vpack.c.b16 %v2271, %v2267
        %v2552 = vpack.c.b16 %v2272, %v2268
        %v2553 = vpack.c.b16 %v2273, %v2269
        %v2554 = vpack.c.b16 %v2274, %v2270
        %v2555 = vpack.c.b16 %v2279, %v2275
        %v2556 = vpack.c.b16 %v2280, %v2276
        %v2557 = vpack.c.b16 %v2281, %v2277
        %v2558 = vpack.c.b16 %v2282, %v2278
        %v2559 = vpack.c.b16 %v2287, %v2283
        %v2560 = vpack.c.b16 %v2288, %v2284
        %v2561 = vpack.c.b16 %v2289, %v2285
        %v2562 = vpack.c.b16 %v2290, %v2286
        %v2563 = vpack.c.b16 %v2295, %v2291
        %v2564 = vpack.c.b16 %v2296, %v2292
        %v2565 = vpack.c.b16 %v2297, %v2293
        %v2566 = vpack.c.b16 %v2298, %v2294
        %v2567 = vpack.c.b16 %v2303, %v2299
        %v2568 = vpack.c.b16 %v2304, %v2300
        %v2569 = vpack.c.b16 %v2305, %v2301
        %v2570 = vpack.c.b16 %v2306, %v2302
        %v2571 = vpack.c.b16 %v2311, %v2307
        %v2572 = vpack.c.b16 %v2312, %v2308
        %v2573 = vpack.c.b16 %v2313, %v2309
        %v2574 = vpack.c.b16 %v2314, %v2310
        %v2575 = vpack.c.b16 %v2319, %v2315
        %v2576 = vpack.c.b16 %v2320, %v2316
        %v2577 = vpack.c.b16 %v2321, %v2317
        %v2578 = vpack.c.b16 %v2322, %v2318
        %2835 = vmatprep.subr.bf16.mxu0 %v2324
        %2836 = vmatpush1.bf16.msra.mxu0 %v2323
        %2837 = vmatprep.subr.bf16.mxu0 %v2328
        %2838 = vmatpush1.bf16.msra.mxu0 %v2327
        %2839 = vmatprep.subr.bf16.mxu0 %v2332
        %2840 = vmatpush1.bf16.msra.mxu0 %v2331
        %2841 = vmatprep.subr.bf16.mxu0 %v2336
        %2842 = vmatpush1.bf16.msra.mxu0 %v2335
        %2843 = vmatprep.subr.bf16.mxu0 %v2340
        %2844 = vmatpush1.bf16.msra.mxu0 %v2339
        %2845 = vmatprep.subr.bf16.mxu0 %v2344
        %2846 = vmatpush1.bf16.msra.mxu0 %v2343
        %2847 = vmatprep.subr.bf16.mxu0 %v2348
        %2848 = vmatpush1.bf16.msra.mxu0 %v2347
        %2849 = vmatprep.subr.bf16.mxu0 %v2352
        %2850 = vmatpush1.bf16.msra.mxu0 %v2351
        %2851 = vmatprep.subr.bf16.mxu0 %v2356
        %2852 = vmatpush1.bf16.msra.mxu0 %v2355
        %2853 = vmatprep.subr.bf16.mxu0 %v2360
        %2854 = vmatpush1.bf16.msra.mxu0 %v2359
        %2855 = vmatprep.subr.bf16.mxu0 %v2364
        %2856 = vmatpush1.bf16.msra.mxu0 %v2363
        %2857 = vmatprep.subr.bf16.mxu0 %v2368
        %2858 = vmatpush1.bf16.msra.mxu0 %v2367
        %2859 = vmatprep.subr.bf16.mxu0 %v2372
        %2860 = vmatpush1.bf16.msra.mxu0 %v2371
        %2861 = vmatprep.subr.bf16.mxu0 %v2376
        %2862 = vmatpush1.bf16.msra.mxu0 %v2375
        %2863 = vmatprep.subr.bf16.mxu0 %v2380
        %2864 = vmatpush1.bf16.msra.mxu0 %v2379
        %2865 = vmatprep.subr.bf16.mxu0 %v2384
        %2866 = vmatpush1.bf16.msra.mxu0 %v2383
        %2867 = vmatprep.mubr.bf16.mxu0 %v1022
        %2868 = vmatmul.mubr.bf16.gmra.mrb[0].mxu0 %v1021
        %v2869 = vpop.f32.mrb[0].mxu0
        %v2870 = vadd.f32 %v1538, %v2869
        %v2871 = vpop.f32.mrb[0].mxu0
        %v2872 = vadd.f32 %v1542, %v2871
        %v2873 = vpop.f32.mrb[0].mxu0
        %v2874 = vadd.f32 %v1538, %v2873
        %v2875 = vpop.f32.mrb[0].mxu0
        %v2876 = vadd.f32 %v1542, %v2875
        %2877 = vmatprep.mubr.bf16.mxu0 %v1030
        %2878 = vmatmul.mubr.bf16.gmra.mrb[0].mxu0 %v1029
        %v2879 = vpop.f32.mrb[0].mxu0
        %v2880 = vadd.f32 %v1538, %v2879
        %v2881 = vpop.f32.mrb[0].mxu0
        %v2882 = vadd.f32 %v1542, %v2881
        %v2883 = vpop.f32.mrb[0].mxu0
        %v2884 = vadd.f32 %v1538, %v2883
        %v2885 = vpop.f32.mrb[0].mxu0
        %v2886 = vadd.f32 %v1542, %v2885
        %2887 = vmatprep.mubr.bf16.mxu0 %v1038
        %2888 = vmatmul.mubr.bf16.gmra.mrb[0].mxu0 %v1037
        %v2889 = vpop.f32.mrb[0].mxu0
        %v2890 = vadd.f32 %v1538, %v2889
        %v2891 = vpop.f32.mrb[0].mxu0
        %v2892 = vadd.f32 %v1542, %v2891
        %v2893 = vpop.f32.mrb[0].mxu0
        %v2894 = vadd.f32 %v1538, %v2893
        %v2895 = vpop.f32.mrb[0].mxu0
        %v2896 = vadd.f32 %v1542, %v2895
        %2897 = vmatprep.mubr.bf16.mxu0 %v1046
        %2898 = vmatmul.mubr.bf16.gmra.mrb[0].mxu0 %v1045
        %v2899 = vpop.f32.mrb[0].mxu0
        %v2900 = vadd.f32 %v1538, %v2899
        %v2901 = vpop.f32.mrb[0].mxu0
        %v2902 = vadd.f32 %v1542, %v2901
        %v2903 = vpop.f32.mrb[0].mxu0
        %v2904 = vadd.f32 %v1538, %v2903
        %v2905 = vpop.f32.mrb[0].mxu0
        %v2906 = vadd.f32 %v1542, %v2905
        %2907 = vmatprep.mubr.bf16.mxu0 %v1054
        %2908 = vmatmul.mubr.bf16.gmra.mrb[0].mxu0 %v1053
        %v2909 = vpop.f32.mrb[0].mxu0
        %v2910 = vadd.f32 %v1538, %v2909
        %v2911 = vpop.f32.mrb[0].mxu0
        %v2912 = vadd.f32 %v1542, %v2911
        %v2913 = vpop.f32.mrb[0].mxu0
        %v2914 = vadd.f32 %v1538, %v2913
        %v2915 = vpop.f32.mrb[0].mxu0
        %v2916 = vadd.f32 %v1542, %v2915
        %2917 = vmatprep.mubr.bf16.mxu0 %v1062
        %2918 = vmatmul.mubr.bf16.gmra.mrb[0].mxu0 %v1061
        %v2919 = vpop.f32.mrb[0].mxu0
        %v2920 = vadd.f32 %v1538, %v2919
        %v2921 = vpop.f32.mrb[0].mxu0
        %v2922 = vadd.f32 %v1542, %v2921
        %v2923 = vpop.f32.mrb[0].mxu0
        %v2924 = vadd.f32 %v1538, %v2923
        %v2925 = vpop.f32.mrb[0].mxu0
        %v2926 = vadd.f32 %v1542, %v2925
        %2927 = vmatprep.mubr.bf16.mxu0 %v1070
        %2928 = vmatmul.mubr.bf16.gmra.mrb[0].mxu0 %v1069
        %v2929 = vpop.f32.mrb[0].mxu0
        %v2930 = vadd.f32 %v1538, %v2929
        %v2931 = vpop.f32.mrb[0].mxu0
        %v2932 = vadd.f32 %v1542, %v2931
        %v2933 = vpop.f32.mrb[0].mxu0
        %v2934 = vadd.f32 %v1538, %v2933
        %v2935 = vpop.f32.mrb[0].mxu0
        %v2936 = vadd.f32 %v1542, %v2935
        %2937 = vmatprep.mubr.bf16.mxu0 %v1078
        %2938 = vmatmul.mubr.bf16.gmra.mrb[0].mxu0 %v1077
        %v2939 = vpop.f32.mrb[0].mxu0
        %v2940 = vadd.f32 %v1538, %v2939
        %v2941 = vpop.f32.mrb[0].mxu0
        %v2942 = vadd.f32 %v1542, %v2941
        %v2943 = vpop.f32.mrb[0].mxu0
        %v2944 = vadd.f32 %v1538, %v2943
        %v2945 = vpop.f32.mrb[0].mxu0
        %v2946 = vadd.f32 %v1542, %v2945
        %2947 = vmatprep.mubr.bf16.mxu0 %v1086
        %2948 = vmatmul.mubr.bf16.gmra.mrb[0].mxu0 %v1085
        %v2949 = vpop.f32.mrb[0].mxu0
        %v2950 = vadd.f32 %v1538, %v2949
        %v2951 = vpop.f32.mrb[0].mxu0
        %v2952 = vadd.f32 %v1542, %v2951
        %v2953 = vpop.f32.mrb[0].mxu0
        %v2954 = vadd.f32 %v1538, %v2953
        %v2955 = vpop.f32.mrb[0].mxu0
        %v2956 = vadd.f32 %v1542, %v2955
        %2957 = vmatprep.mubr.bf16.mxu0 %v1094
        %2958 = vmatmul.mubr.bf16.gmra.mrb[0].mxu0 %v1093
        %v2959 = vpop.f32.mrb[0].mxu0
        %v2960 = vadd.f32 %v1538, %v2959
        %v2961 = vpop.f32.mrb[0].mxu0
        %v2962 = vadd.f32 %v1542, %v2961
        %v2963 = vpop.f32.mrb[0].mxu0
        %v2964 = vadd.f32 %v1538, %v2963
        %v2965 = vpop.f32.mrb[0].mxu0
        %v2966 = vadd.f32 %v1542, %v2965
        %2967 = vmatprep.mubr.bf16.mxu0 %v1102
        %2968 = vmatmul.mubr.bf16.gmra.mrb[0].mxu0 %v1101
        %v2969 = vpop.f32.mrb[0].mxu0
        %v2970 = vadd.f32 %v1538, %v2969
        %v2971 = vpop.f32.mrb[0].mxu0
        %v2972 = vadd.f32 %v1542, %v2971
        %v2973 = vpop.f32.mrb[0].mxu0
        %v2974 = vadd.f32 %v1538, %v2973
        %v2975 = vpop.f32.mrb[0].mxu0
        %v2976 = vadd.f32 %v1542, %v2975
        %2977 = vmatprep.mubr.bf16.mxu0 %v1110
        %2978 = vmatmul.mubr.bf16.gmra.mrb[0].mxu0 %v1109
        %v2979 = vpop.f32.mrb[0].mxu0
        %v2980 = vadd.f32 %v1538, %v2979
        %v2981 = vpop.f32.mrb[0].mxu0
        %v2982 = vadd.f32 %v1542, %v2981
        %v2983 = vpop.f32.mrb[0].mxu0
        %v2984 = vadd.f32 %v1538, %v2983
        %v2985 = vpop.f32.mrb[0].mxu0
        %v2986 = vadd.f32 %v1542, %v2985
        %2987 = vmatprep.mubr.bf16.mxu0 %v1118
        %2988 = vmatmul.mubr.bf16.gmra.mrb[0].mxu0 %v1117
        %v2989 = vpop.f32.mrb[0].mxu0
        %v2990 = vadd.f32 %v1538, %v2989
        %v2991 = vpop.f32.mrb[0].mxu0
        %v2992 = vadd.f32 %v1542, %v2991
        %v2993 = vpop.f32.mrb[0].mxu0
        %v2994 = vadd.f32 %v1538, %v2993
        %v2995 = vpop.f32.mrb[0].mxu0
        %v2996 = vadd.f32 %v1542, %v2995
        %2997 = vmatprep.mubr.bf16.mxu0 %v1126
        %2998 = vmatmul.mubr.bf16.gmra.mrb[0].mxu0 %v1125
        %v2999 = vpop.f32.mrb[0].mxu0
        %v3000 = vadd.f32 %v1538, %v2999
        %v3001 = vpop.f32.mrb[0].mxu0
        %v3002 = vadd.f32 %v1542, %v3001
        %v3003 = vpop.f32.mrb[0].mxu0
        %v3004 = vadd.f32 %v1538, %v3003
        %v3005 = vpop.f32.mrb[0].mxu0
        %v3006 = vadd.f32 %v1542, %v3005
        %3007 = vmatprep.mubr.bf16.mxu0 %v1134
        %3008 = vmatmul.mubr.bf16.gmra.mrb[0].mxu0 %v1133
        %v3009 = vpop.f32.mrb[0].mxu0
        %v3010 = vadd.f32 %v1538, %v3009
        %v3011 = vpop.f32.mrb[0].mxu0
        %v3012 = vadd.f32 %v1542, %v3011
        %v3013 = vpop.f32.mrb[0].mxu0
        %v3014 = vadd.f32 %v1538, %v3013
        %v3015 = vpop.f32.mrb[0].mxu0
        %v3016 = vadd.f32 %v1542, %v3015
        %3017 = vmatprep.mubr.bf16.mxu0 %v1142
        %3018 = vmatmul.mubr.bf16.gmra.mrb[0].mxu0 %v1141
        %v3019 = vpop.f32.mrb[0].mxu0
        %v3020 = vadd.f32 %v1538, %v3019
        %v3021 = vpop.f32.mrb[0].mxu0
        %v3022 = vadd.f32 %v1542, %v3021
        %v3023 = vpop.f32.mrb[0].mxu0
        %v3024 = vadd.f32 %v1538, %v3023
        %v3025 = vpop.f32.mrb[0].mxu0
        %v3026 = vadd.f32 %v1542, %v3025
        %3027 = vmatprep.mubr.bf16.mxu0 %v1150
        %3028 = vmatmul.mubr.bf16.gmra.mrb[0].mxu0 %v1149
        %v3029 = vpop.f32.mrb[0].mxu0
        %v3030 = vadd.f32 %v1538, %v3029
        %v3031 = vpop.f32.mrb[0].mxu0
        %v3032 = vadd.f32 %v1542, %v3031
        %v3033 = vpop.f32.mrb[0].mxu0
        %v3034 = vadd.f32 %v1538, %v3033
        %v3035 = vpop.f32.mrb[0].mxu0
        %v3036 = vadd.f32 %v1542, %v3035
        %3037 = vmatprep.mubr.bf16.mxu0 %v1158
        %3038 = vmatmul.mubr.bf16.gmra.mrb[0].mxu0 %v1157
        %v3039 = vpop.f32.mrb[0].mxu0
        %v3040 = vadd.f32 %v1538, %v3039
        %v3041 = vpop.f32.mrb[0].mxu0
        %v3042 = vadd.f32 %v1542, %v3041
        %v3043 = vpop.f32.mrb[0].mxu0
        %v3044 = vadd.f32 %v1538, %v3043
        %v3045 = vpop.f32.mrb[0].mxu0
        %v3046 = vadd.f32 %v1542, %v3045
        %3047 = vmatprep.mubr.bf16.mxu0 %v1166
        %3048 = vmatmul.mubr.bf16.gmra.mrb[0].mxu0 %v1165
        %v3049 = vpop.f32.mrb[0].mxu0
        %v3050 = vadd.f32 %v1538, %v3049
        %v3051 = vpop.f32.mrb[0].mxu0
        %v3052 = vadd.f32 %v1542, %v3051
        %v3053 = vpop.f32.mrb[0].mxu0
        %v3054 = vadd.f32 %v1538, %v3053
        %v3055 = vpop.f32.mrb[0].mxu0
        %v3056 = vadd.f32 %v1542, %v3055
        %3057 = vmatprep.mubr.bf16.mxu0 %v1174
        %3058 = vmatmul.mubr.bf16.gmra.mrb[0].mxu0 %v1173
        %v3059 = vpop.f32.mrb[0].mxu0
        %v3060 = vadd.f32 %v1538, %v3059
        %v3061 = vpop.f32.mrb[0].mxu0
        %v3062 = vadd.f32 %v1542, %v3061
        %v3063 = vpop.f32.mrb[0].mxu0
        %v3064 = vadd.f32 %v1538, %v3063
        %v3065 = vpop.f32.mrb[0].mxu0
        %v3066 = vadd.f32 %v1542, %v3065
        %3067 = vmatprep.mubr.bf16.mxu0 %v1182
        %3068 = vmatmul.mubr.bf16.gmra.mrb[0].mxu0 %v1181
        %v3069 = vpop.f32.mrb[0].mxu0
        %v3070 = vadd.f32 %v1538, %v3069
        %v3071 = vpop.f32.mrb[0].mxu0
        %v3072 = vadd.f32 %v1542, %v3071
        %v3073 = vpop.f32.mrb[0].mxu0
        %v3074 = vadd.f32 %v1538, %v3073
        %v3075 = vpop.f32.mrb[0].mxu0
        %v3076 = vadd.f32 %v1542, %v3075
        %3077 = vmatprep.mubr.bf16.mxu0 %v1190
        %3078 = vmatmul.mubr.bf16.gmra.mrb[0].mxu0 %v1189
        %v3079 = vpop.f32.mrb[0].mxu0
        %v3080 = vadd.f32 %v1538, %v3079
        %v3081 = vpop.f32.mrb[0].mxu0
        %v3082 = vadd.f32 %v1542, %v3081
        %v3083 = vpop.f32.mrb[0].mxu0
        %v3084 = vadd.f32 %v1538, %v3083
        %v3085 = vpop.f32.mrb[0].mxu0
        %v3086 = vadd.f32 %v1542, %v3085
        %3087 = vmatprep.mubr.bf16.mxu0 %v1198
        %3088 = vmatmul.mubr.bf16.gmra.mrb[0].mxu0 %v1197
        %v3089 = vpop.f32.mrb[0].mxu0
        %v3090 = vadd.f32 %v1538, %v3089
        %v3091 = vpop.f32.mrb[0].mxu0
        %v3092 = vadd.f32 %v1542, %v3091
        %v3093 = vpop.f32.mrb[0].mxu0
        %v3094 = vadd.f32 %v1538, %v3093
        %v3095 = vpop.f32.mrb[0].mxu0
        %v3096 = vadd.f32 %v1542, %v3095
        %3097 = vmatprep.mubr.bf16.mxu0 %v1206
        %3098 = vmatmul.mubr.bf16.gmra.mrb[0].mxu0 %v1205
        %v3099 = vpop.f32.mrb[0].mxu0
        %v3100 = vadd.f32 %v1538, %v3099
        %v3101 = vpop.f32.mrb[0].mxu0
        %v3102 = vadd.f32 %v1542, %v3101
        %v3103 = vpop.f32.mrb[0].mxu0
        %v3104 = vadd.f32 %v1538, %v3103
        %v3105 = vpop.f32.mrb[0].mxu0
        %v3106 = vadd.f32 %v1542, %v3105
        %3107 = vmatprep.mubr.bf16.mxu0 %v1214
        %3108 = vmatmul.mubr.bf16.gmra.mrb[0].mxu0 %v1213
        %v3109 = vpop.f32.mrb[0].mxu0
        %v3110 = vadd.f32 %v1538, %v3109
        %v3111 = vpop.f32.mrb[0].mxu0
        %v3112 = vadd.f32 %v1542, %v3111
        %v3113 = vpop.f32.mrb[0].mxu0
        %v3114 = vadd.f32 %v1538, %v3113
        %v3115 = vpop.f32.mrb[0].mxu0
        %v3116 = vadd.f32 %v1542, %v3115
        %3117 = vmatprep.mubr.bf16.mxu0 %v1222
        %3118 = vmatmul.mubr.bf16.gmra.mrb[0].mxu0 %v1221
        %v3119 = vpop.f32.mrb[0].mxu0
        %v3120 = vadd.f32 %v1538, %v3119
        %v3121 = vpop.f32.mrb[0].mxu0
        %v3122 = vadd.f32 %v1542, %v3121
        %v3123 = vpop.f32.mrb[0].mxu0
        %v3124 = vadd.f32 %v1538, %v3123
        %v3125 = vpop.f32.mrb[0].mxu0
        %v3126 = vadd.f32 %v1542, %v3125
        %3127 = vmatprep.mubr.bf16.mxu0 %v1230
        %3128 = vmatmul.mubr.bf16.gmra.mrb[0].mxu0 %v1229
        %v3129 = vpop.f32.mrb[0].mxu0
        %v3130 = vadd.f32 %v1538, %v3129
        %v3131 = vpop.f32.mrb[0].mxu0
        %v3132 = vadd.f32 %v1542, %v3131
        %v3133 = vpop.f32.mrb[0].mxu0
        %v3134 = vadd.f32 %v1538, %v3133
        %v3135 = vpop.f32.mrb[0].mxu0
        %v3136 = vadd.f32 %v1542, %v3135
        %3137 = vmatprep.mubr.bf16.mxu0 %v1238
        %3138 = vmatmul.mubr.bf16.gmra.mrb[0].mxu0 %v1237
        %v3139 = vpop.f32.mrb[0].mxu0
        %v3140 = vadd.f32 %v1538, %v3139
        %v3141 = vpop.f32.mrb[0].mxu0
        %v3142 = vadd.f32 %v1542, %v3141
        %v3143 = vpop.f32.mrb[0].mxu0
        %v3144 = vadd.f32 %v1538, %v3143
        %v3145 = vpop.f32.mrb[0].mxu0
        %v3146 = vadd.f32 %v1542, %v3145
        %3147 = vmatprep.mubr.bf16.mxu0 %v1246
        %3148 = vmatmul.mubr.bf16.gmra.mrb[0].mxu0 %v1245
        %v3149 = vpop.f32.mrb[0].mxu0
        %v3150 = vadd.f32 %v1538, %v3149
        %v3151 = vpop.f32.mrb[0].mxu0
        %v3152 = vadd.f32 %v1542, %v3151
        %v3153 = vpop.f32.mrb[0].mxu0
        %v3154 = vadd.f32 %v1538, %v3153
        %v3155 = vpop.f32.mrb[0].mxu0
        %v3156 = vadd.f32 %v1542, %v3155
        %3157 = vmatprep.mubr.bf16.mxu0 %v1254
        %3158 = vmatmul.mubr.bf16.gmra.mrb[0].mxu0 %v1253
        %v3159 = vpop.f32.mrb[0].mxu0
        %v3160 = vadd.f32 %v1538, %v3159
        %v3161 = vpop.f32.mrb[0].mxu0
        %v3162 = vadd.f32 %v1542, %v3161
        %v3163 = vpop.f32.mrb[0].mxu0
        %v3164 = vadd.f32 %v1538, %v3163
        %v3165 = vpop.f32.mrb[0].mxu0
        %v3166 = vadd.f32 %v1542, %v3165
        %3167 = vmatprep.mubr.bf16.mxu0 %v1262
        %3168 = vmatmul.mubr.bf16.gmra.mrb[0].mxu0 %v1261
        %v3169 = vpop.f32.mrb[0].mxu0
        %v3170 = vadd.f32 %v1538, %v3169
        %v3171 = vpop.f32.mrb[0].mxu0
        %v3172 = vadd.f32 %v1542, %v3171
        %v3173 = vpop.f32.mrb[0].mxu0
        %v3174 = vadd.f32 %v1538, %v3173
        %v3175 = vpop.f32.mrb[0].mxu0
        %v3176 = vadd.f32 %v1542, %v3175
        %3177 = vmatprep.mubr.bf16.mxu0 %v1270
        %3178 = vmatmul.mubr.bf16.gmra.mrb[0].mxu0 %v1269
        %v3179 = vpop.f32.mrb[0].mxu0
        %v3180 = vadd.f32 %v1538, %v3179
        %v3181 = vpop.f32.mrb[0].mxu0
        %v3182 = vadd.f32 %v1542, %v3181
        %v3183 = vpop.f32.mrb[0].mxu0
        %v3184 = vadd.f32 %v1538, %v3183
        %v3185 = vpop.f32.mrb[0].mxu0
        %v3186 = vadd.f32 %v1542, %v3185
        %3187 = vdwg.mxu0
        %3188 = vmatprep.subr.bf16.mxu0 %v2388
        %3189 = vmatpush1.bf16.msra.mxu0 %v2387
        %3190 = vmatprep.subr.bf16.mxu0 %v2392
        %3191 = vmatpush1.bf16.msra.mxu0 %v2391
        %3192 = vmatprep.subr.bf16.mxu0 %v2396
        %3193 = vmatpush1.bf16.msra.mxu0 %v2395
        %3194 = vmatprep.subr.bf16.mxu0 %v2400
        %3195 = vmatpush1.bf16.msra.mxu0 %v2399
        %3196 = vmatprep.subr.bf16.mxu0 %v2404
        %3197 = vmatpush1.bf16.msra.mxu0 %v2403
        %3198 = vmatprep.subr.bf16.mxu0 %v2408
        %3199 = vmatpush1.bf16.msra.mxu0 %v2407
        %3200 = vmatprep.subr.bf16.mxu0 %v2412
        %3201 = vmatpush1.bf16.msra.mxu0 %v2411
        %3202 = vmatprep.subr.bf16.mxu0 %v2416
        %3203 = vmatpush1.bf16.msra.mxu0 %v2415
        %3204 = vmatprep.subr.bf16.mxu0 %v2420
        %3205 = vmatpush1.bf16.msra.mxu0 %v2419
        %3206 = vmatprep.subr.bf16.mxu0 %v2424
        %3207 = vmatpush1.bf16.msra.mxu0 %v2423
        %3208 = vmatprep.subr.bf16.mxu0 %v2428
        %3209 = vmatpush1.bf16.msra.mxu0 %v2427
        %3210 = vmatprep.subr.bf16.mxu0 %v2432
        %3211 = vmatpush1.bf16.msra.mxu0 %v2431
        %3212 = vmatprep.subr.bf16.mxu0 %v2436
        %3213 = vmatpush1.bf16.msra.mxu0 %v2435
        %3214 = vmatprep.subr.bf16.mxu0 %v2440
        %3215 = vmatpush1.bf16.msra.mxu0 %v2439
        %3216 = vmatprep.subr.bf16.mxu0 %v2444
        %3217 = vmatpush1.bf16.msra.mxu0 %v2443
        %3218 = vmatprep.subr.bf16.mxu0 %v2448
        %3219 = vmatpush1.bf16.msra.mxu0 %v2447
        %3220 = vmatprep.mubr.bf16.mxu0 %v1024
        %3221 = vmatmul.mubr.bf16.gmra.mrb[0].mxu0 %v1023
        %v3222 = vpop.f32.mrb[0].mxu0
        %v3223 = vadd.f32 %v2870, %v3222
        %v3224 = vpop.f32.mrb[0].mxu0
        %v3225 = vadd.f32 %v2872, %v3224
        %v3226 = vpop.f32.mrb[0].mxu0
        %v3227 = vadd.f32 %v2874, %v3226
        %v3228 = vpop.f32.mrb[0].mxu0
        %v3229 = vadd.f32 %v2876, %v3228
        %3230 = vmatprep.mubr.bf16.mxu0 %v1032
        %3231 = vmatmul.mubr.bf16.gmra.mrb[0].mxu0 %v1031
        %v3232 = vpop.f32.mrb[0].mxu0
        %v3233 = vadd.f32 %v2880, %v3232
        %v3234 = vpop.f32.mrb[0].mxu0
        %v3235 = vadd.f32 %v2882, %v3234
        %v3236 = vpop.f32.mrb[0].mxu0
        %v3237 = vadd.f32 %v2884, %v3236
        %v3238 = vpop.f32.mrb[0].mxu0
        %v3239 = vadd.f32 %v2886, %v3238
        %3240 = vmatprep.mubr.bf16.mxu0 %v1040
        %3241 = vmatmul.mubr.bf16.gmra.mrb[0].mxu0 %v1039
        %v3242 = vpop.f32.mrb[0].mxu0
        %v3243 = vadd.f32 %v2890, %v3242
        %v3244 = vpop.f32.mrb[0].mxu0
        %v3245 = vadd.f32 %v2892, %v3244
        %v3246 = vpop.f32.mrb[0].mxu0
        %v3247 = vadd.f32 %v2894, %v3246
        %v3248 = vpop.f32.mrb[0].mxu0
        %v3249 = vadd.f32 %v2896, %v3248
        %3250 = vmatprep.mubr.bf16.mxu0 %v1048
        %3251 = vmatmul.mubr.bf16.gmra.mrb[0].mxu0 %v1047
        %v3252 = vpop.f32.mrb[0].mxu0
        %v3253 = vadd.f32 %v2900, %v3252
        %v3254 = vpop.f32.mrb[0].mxu0
        %v3255 = vadd.f32 %v2902, %v3254
        %v3256 = vpop.f32.mrb[0].mxu0
        %v3257 = vadd.f32 %v2904, %v3256
        %v3258 = vpop.f32.mrb[0].mxu0
        %v3259 = vadd.f32 %v2906, %v3258
        %3260 = vmatprep.mubr.bf16.mxu0 %v1056
        %3261 = vmatmul.mubr.bf16.gmra.mrb[0].mxu0 %v1055
        %v3262 = vpop.f32.mrb[0].mxu0
        %v3263 = vadd.f32 %v2910, %v3262
        %v3264 = vpop.f32.mrb[0].mxu0
        %v3265 = vadd.f32 %v2912, %v3264
        %v3266 = vpop.f32.mrb[0].mxu0
        %v3267 = vadd.f32 %v2914, %v3266
        %v3268 = vpop.f32.mrb[0].mxu0
        %v3269 = vadd.f32 %v2916, %v3268
        %3270 = vmatprep.mubr.bf16.mxu0 %v1064
        %3271 = vmatmul.mubr.bf16.gmra.mrb[0].mxu0 %v1063
        %v3272 = vpop.f32.mrb[0].mxu0
        %v3273 = vadd.f32 %v2920, %v3272
        %v3274 = vpop.f32.mrb[0].mxu0
        %v3275 = vadd.f32 %v2922, %v3274
        %v3276 = vpop.f32.mrb[0].mxu0
        %v3277 = vadd.f32 %v2924, %v3276
        %v3278 = vpop.f32.mrb[0].mxu0
        %v3279 = vadd.f32 %v2926, %v3278
        %3280 = vmatprep.mubr.bf16.mxu0 %v1072
        %3281 = vmatmul.mubr.bf16.gmra.mrb[0].mxu0 %v1071
        %v3282 = vpop.f32.mrb[0].mxu0
        %v3283 = vadd.f32 %v2930, %v3282
        %v3284 = vpop.f32.mrb[0].mxu0
        %v3285 = vadd.f32 %v2932, %v3284
        %v3286 = vpop.f32.mrb[0].mxu0
        %v3287 = vadd.f32 %v2934, %v3286
        %v3288 = vpop.f32.mrb[0].mxu0
        %v3289 = vadd.f32 %v2936, %v3288
        %3290 = vmatprep.mubr.bf16.mxu0 %v1080
        %3291 = vmatmul.mubr.bf16.gmra.mrb[0].mxu0 %v1079
        %v3292 = vpop.f32.mrb[0].mxu0
        %v3293 = vadd.f32 %v2940, %v3292
        %v3294 = vpop.f32.mrb[0].mxu0
        %v3295 = vadd.f32 %v2942, %v3294
        %v3296 = vpop.f32.mrb[0].mxu0
        %v3297 = vadd.f32 %v2944, %v3296
        %v3298 = vpop.f32.mrb[0].mxu0
        %v3299 = vadd.f32 %v2946, %v3298
        %3300 = vmatprep.mubr.bf16.mxu0 %v1088
        %3301 = vmatmul.mubr.bf16.gmra.mrb[0].mxu0 %v1087
        %v3302 = vpop.f32.mrb[0].mxu0
        %v3303 = vadd.f32 %v2950, %v3302
        %v3304 = vpop.f32.mrb[0].mxu0
        %v3305 = vadd.f32 %v2952, %v3304
        %v3306 = vpop.f32.mrb[0].mxu0
        %v3307 = vadd.f32 %v2954, %v3306
        %v3308 = vpop.f32.mrb[0].mxu0
        %v3309 = vadd.f32 %v2956, %v3308
        %3310 = vmatprep.mubr.bf16.mxu0 %v1096
        %3311 = vmatmul.mubr.bf16.gmra.mrb[0].mxu0 %v1095
        %v3312 = vpop.f32.mrb[0].mxu0
        %v3313 = vadd.f32 %v2960, %v3312
        %v3314 = vpop.f32.mrb[0].mxu0
        %v3315 = vadd.f32 %v2962, %v3314
        %v3316 = vpop.f32.mrb[0].mxu0
        %v3317 = vadd.f32 %v2964, %v3316
        %v3318 = vpop.f32.mrb[0].mxu0
        %v3319 = vadd.f32 %v2966, %v3318
        %3320 = vmatprep.mubr.bf16.mxu0 %v1104
        %3321 = vmatmul.mubr.bf16.gmra.mrb[0].mxu0 %v1103
        %v3322 = vpop.f32.mrb[0].mxu0
        %v3323 = vadd.f32 %v2970, %v3322
        %v3324 = vpop.f32.mrb[0].mxu0
        %v3325 = vadd.f32 %v2972, %v3324
        %v3326 = vpop.f32.mrb[0].mxu0
        %v3327 = vadd.f32 %v2974, %v3326
        %v3328 = vpop.f32.mrb[0].mxu0
        %v3329 = vadd.f32 %v2976, %v3328
        %3330 = vmatprep.mubr.bf16.mxu0 %v1112
        %3331 = vmatmul.mubr.bf16.gmra.mrb[0].mxu0 %v1111
        %v3332 = vpop.f32.mrb[0].mxu0
        %v3333 = vadd.f32 %v2980, %v3332
        %v3334 = vpop.f32.mrb[0].mxu0
        %v3335 = vadd.f32 %v2982, %v3334
        %v3336 = vpop.f32.mrb[0].mxu0
        %v3337 = vadd.f32 %v2984, %v3336
        %v3338 = vpop.f32.mrb[0].mxu0
        %v3339 = vadd.f32 %v2986, %v3338
        %3340 = vmatprep.mubr.bf16.mxu0 %v1120
        %3341 = vmatmul.mubr.bf16.gmra.mrb[0].mxu0 %v1119
        %v3342 = vpop.f32.mrb[0].mxu0
        %v3343 = vadd.f32 %v2990, %v3342
        %v3344 = vpop.f32.mrb[0].mxu0
        %v3345 = vadd.f32 %v2992, %v3344
        %v3346 = vpop.f32.mrb[0].mxu0
        %v3347 = vadd.f32 %v2994, %v3346
        %v3348 = vpop.f32.mrb[0].mxu0
        %v3349 = vadd.f32 %v2996, %v3348
        %3350 = vmatprep.mubr.bf16.mxu0 %v1128
        %3351 = vmatmul.mubr.bf16.gmra.mrb[0].mxu0 %v1127
        %v3352 = vpop.f32.mrb[0].mxu0
        %v3353 = vadd.f32 %v3000, %v3352
        %v3354 = vpop.f32.mrb[0].mxu0
        %v3355 = vadd.f32 %v3002, %v3354
        %v3356 = vpop.f32.mrb[0].mxu0
        %v3357 = vadd.f32 %v3004, %v3356
        %v3358 = vpop.f32.mrb[0].mxu0
        %v3359 = vadd.f32 %v3006, %v3358
        %3360 = vmatprep.mubr.bf16.mxu0 %v1136
        %3361 = vmatmul.mubr.bf16.gmra.mrb[0].mxu0 %v1135
        %v3362 = vpop.f32.mrb[0].mxu0
        %v3363 = vadd.f32 %v3010, %v3362
        %v3364 = vpop.f32.mrb[0].mxu0
        %v3365 = vadd.f32 %v3012, %v3364
        %v3366 = vpop.f32.mrb[0].mxu0
        %v3367 = vadd.f32 %v3014, %v3366
        %v3368 = vpop.f32.mrb[0].mxu0
        %v3369 = vadd.f32 %v3016, %v3368
        %3370 = vmatprep.mubr.bf16.mxu0 %v1144
        %3371 = vmatmul.mubr.bf16.gmra.mrb[0].mxu0 %v1143
        %v3372 = vpop.f32.mrb[0].mxu0
        %v3373 = vadd.f32 %v3020, %v3372
        %v3374 = vpop.f32.mrb[0].mxu0
        %v3375 = vadd.f32 %v3022, %v3374
        %v3376 = vpop.f32.mrb[0].mxu0
        %v3377 = vadd.f32 %v3024, %v3376
        %v3378 = vpop.f32.mrb[0].mxu0
        %v3379 = vadd.f32 %v3026, %v3378
        %3380 = vmatprep.mubr.bf16.mxu0 %v1152
        %3381 = vmatmul.mubr.bf16.gmra.mrb[0].mxu0 %v1151
        %v3382 = vpop.f32.mrb[0].mxu0
        %v3383 = vadd.f32 %v3030, %v3382
        %v3384 = vpop.f32.mrb[0].mxu0
        %v3385 = vadd.f32 %v3032, %v3384
        %v3386 = vpop.f32.mrb[0].mxu0
        %v3387 = vadd.f32 %v3034, %v3386
        %v3388 = vpop.f32.mrb[0].mxu0
        %v3389 = vadd.f32 %v3036, %v3388
        %3390 = vmatprep.mubr.bf16.mxu0 %v1160
        %3391 = vmatmul.mubr.bf16.gmra.mrb[0].mxu0 %v1159
        %v3392 = vpop.f32.mrb[0].mxu0
        %v3393 = vadd.f32 %v3040, %v3392
        %v3394 = vpop.f32.mrb[0].mxu0
        %v3395 = vadd.f32 %v3042, %v3394
        %v3396 = vpop.f32.mrb[0].mxu0
        %v3397 = vadd.f32 %v3044, %v3396
        %v3398 = vpop.f32.mrb[0].mxu0
        %v3399 = vadd.f32 %v3046, %v3398
        %3400 = vmatprep.mubr.bf16.mxu0 %v1168
        %3401 = vmatmul.mubr.bf16.gmra.mrb[0].mxu0 %v1167
        %v3402 = vpop.f32.mrb[0].mxu0
        %v3403 = vadd.f32 %v3050, %v3402
        %v3404 = vpop.f32.mrb[0].mxu0
        %v3405 = vadd.f32 %v3052, %v3404
        %v3406 = vpop.f32.mrb[0].mxu0
        %v3407 = vadd.f32 %v3054, %v3406
        %v3408 = vpop.f32.mrb[0].mxu0
        %v3409 = vadd.f32 %v3056, %v3408
        %3410 = vmatprep.mubr.bf16.mxu0 %v1176
        %3411 = vmatmul.mubr.bf16.gmra.mrb[0].mxu0 %v1175
        %v3412 = vpop.f32.mrb[0].mxu0
        %v3413 = vadd.f32 %v3060, %v3412
        %v3414 = vpop.f32.mrb[0].mxu0
        %v3415 = vadd.f32 %v3062, %v3414
        %v3416 = vpop.f32.mrb[0].mxu0
        %v3417 = vadd.f32 %v3064, %v3416
        %v3418 = vpop.f32.mrb[0].mxu0
        %v3419 = vadd.f32 %v3066, %v3418
        %3420 = vmatprep.mubr.bf16.mxu0 %v1184
        %3421 = vmatmul.mubr.bf16.gmra.mrb[0].mxu0 %v1183
        %v3422 = vpop.f32.mrb[0].mxu0
        %v3423 = vadd.f32 %v3070, %v3422
        %v3424 = vpop.f32.mrb[0].mxu0
        %v3425 = vadd.f32 %v3072, %v3424
        %v3426 = vpop.f32.mrb[0].mxu0
        %v3427 = vadd.f32 %v3074, %v3426
        %v3428 = vpop.f32.mrb[0].mxu0
        %v3429 = vadd.f32 %v3076, %v3428
        %3430 = vmatprep.mubr.bf16.mxu0 %v1192
        %3431 = vmatmul.mubr.bf16.gmra.mrb[0].mxu0 %v1191
        %v3432 = vpop.f32.mrb[0].mxu0
        %v3433 = vadd.f32 %v3080, %v3432
        %v3434 = vpop.f32.mrb[0].mxu0
        %v3435 = vadd.f32 %v3082, %v3434
        %v3436 = vpop.f32.mrb[0].mxu0
        %v3437 = vadd.f32 %v3084, %v3436
        %v3438 = vpop.f32.mrb[0].mxu0
        %v3439 = vadd.f32 %v3086, %v3438
        %3440 = vmatprep.mubr.bf16.mxu0 %v1200
        %3441 = vmatmul.mubr.bf16.gmra.mrb[0].mxu0 %v1199
        %v3442 = vpop.f32.mrb[0].mxu0
        %v3443 = vadd.f32 %v3090, %v3442
        %v3444 = vpop.f32.mrb[0].mxu0
        %v3445 = vadd.f32 %v3092, %v3444
        %v3446 = vpop.f32.mrb[0].mxu0
        %v3447 = vadd.f32 %v3094, %v3446
        %v3448 = vpop.f32.mrb[0].mxu0
        %v3449 = vadd.f32 %v3096, %v3448
        %3450 = vmatprep.mubr.bf16.mxu0 %v1208
        %3451 = vmatmul.mubr.bf16.gmra.mrb[0].mxu0 %v1207
        %v3452 = vpop.f32.mrb[0].mxu0
        %v3453 = vadd.f32 %v3100, %v3452
        %v3454 = vpop.f32.mrb[0].mxu0
        %v3455 = vadd.f32 %v3102, %v3454
        %v3456 = vpop.f32.mrb[0].mxu0
        %v3457 = vadd.f32 %v3104, %v3456
        %v3458 = vpop.f32.mrb[0].mxu0
        %v3459 = vadd.f32 %v3106, %v3458
        %3460 = vmatprep.mubr.bf16.mxu0 %v1216
        %3461 = vmatmul.mubr.bf16.gmra.mrb[0].mxu0 %v1215
        %v3462 = vpop.f32.mrb[0].mxu0
        %v3463 = vadd.f32 %v3110, %v3462
        %v3464 = vpop.f32.mrb[0].mxu0
        %v3465 = vadd.f32 %v3112, %v3464
        %v3466 = vpop.f32.mrb[0].mxu0
        %v3467 = vadd.f32 %v3114, %v3466
        %v3468 = vpop.f32.mrb[0].mxu0
        %v3469 = vadd.f32 %v3116, %v3468
        %3470 = vmatprep.mubr.bf16.mxu0 %v1224
        %3471 = vmatmul.mubr.bf16.gmra.mrb[0].mxu0 %v1223
        %v3472 = vpop.f32.mrb[0].mxu0
        %v3473 = vadd.f32 %v3120, %v3472
        %v3474 = vpop.f32.mrb[0].mxu0
        %v3475 = vadd.f32 %v3122, %v3474
        %v3476 = vpop.f32.mrb[0].mxu0
        %v3477 = vadd.f32 %v3124, %v3476
        %v3478 = vpop.f32.mrb[0].mxu0
        %v3479 = vadd.f32 %v3126, %v3478
        %3480 = vmatprep.mubr.bf16.mxu0 %v1232
        %3481 = vmatmul.mubr.bf16.gmra.mrb[0].mxu0 %v1231
        %v3482 = vpop.f32.mrb[0].mxu0
        %v3483 = vadd.f32 %v3130, %v3482
        %v3484 = vpop.f32.mrb[0].mxu0
        %v3485 = vadd.f32 %v3132, %v3484
        %v3486 = vpop.f32.mrb[0].mxu0
        %v3487 = vadd.f32 %v3134, %v3486
        %v3488 = vpop.f32.mrb[0].mxu0
        %v3489 = vadd.f32 %v3136, %v3488
        %3490 = vmatprep.mubr.bf16.mxu0 %v1240
        %3491 = vmatmul.mubr.bf16.gmra.mrb[0].mxu0 %v1239
        %v3492 = vpop.f32.mrb[0].mxu0
        %v3493 = vadd.f32 %v3140, %v3492
        %v3494 = vpop.f32.mrb[0].mxu0
        %v3495 = vadd.f32 %v3142, %v3494
        %v3496 = vpop.f32.mrb[0].mxu0
        %v3497 = vadd.f32 %v3144, %v3496
        %v3498 = vpop.f32.mrb[0].mxu0
        %v3499 = vadd.f32 %v3146, %v3498
        %3500 = vmatprep.mubr.bf16.mxu0 %v1248
        %3501 = vmatmul.mubr.bf16.gmra.mrb[0].mxu0 %v1247
        %v3502 = vpop.f32.mrb[0].mxu0
        %v3503 = vadd.f32 %v3150, %v3502
        %v3504 = vpop.f32.mrb[0].mxu0
        %v3505 = vadd.f32 %v3152, %v3504
        %v3506 = vpop.f32.mrb[0].mxu0
        %v3507 = vadd.f32 %v3154, %v3506
        %v3508 = vpop.f32.mrb[0].mxu0
        %v3509 = vadd.f32 %v3156, %v3508
        %3510 = vmatprep.mubr.bf16.mxu0 %v1256
        %3511 = vmatmul.mubr.bf16.gmra.mrb[0].mxu0 %v1255
        %v3512 = vpop.f32.mrb[0].mxu0
        %v3513 = vadd.f32 %v3160, %v3512
        %v3514 = vpop.f32.mrb[0].mxu0
        %v3515 = vadd.f32 %v3162, %v3514
        %v3516 = vpop.f32.mrb[0].mxu0
        %v3517 = vadd.f32 %v3164, %v3516
        %v3518 = vpop.f32.mrb[0].mxu0
        %v3519 = vadd.f32 %v3166, %v3518
        %3520 = vmatprep.mubr.bf16.mxu0 %v1264
        %3521 = vmatmul.mubr.bf16.gmra.mrb[0].mxu0 %v1263
        %v3522 = vpop.f32.mrb[0].mxu0
        %v3523 = vadd.f32 %v3170, %v3522
        %v3524 = vpop.f32.mrb[0].mxu0
        %v3525 = vadd.f32 %v3172, %v3524
        %v3526 = vpop.f32.mrb[0].mxu0
        %v3527 = vadd.f32 %v3174, %v3526
        %v3528 = vpop.f32.mrb[0].mxu0
        %v3529 = vadd.f32 %v3176, %v3528
        %3530 = vmatprep.mubr.bf16.mxu0 %v1272
        %3531 = vmatmul.mubr.bf16.gmra.mrb[0].mxu0 %v1271
        %v3532 = vpop.f32.mrb[0].mxu0
        %v3533 = vadd.f32 %v3180, %v3532
        %v3534 = vpop.f32.mrb[0].mxu0
        %v3535 = vadd.f32 %v3182, %v3534
        %v3536 = vpop.f32.mrb[0].mxu0
        %v3537 = vadd.f32 %v3184, %v3536
        %v3538 = vpop.f32.mrb[0].mxu0
        %v3539 = vadd.f32 %v3186, %v3538
        %3540 = vdwg.mxu0
        %3541 = vmatprep.subr.bf16.mxu0 %v2452
        %3542 = vmatpush1.bf16.msra.mxu0 %v2451
        %3543 = vmatprep.subr.bf16.mxu0 %v2456
        %3544 = vmatpush1.bf16.msra.mxu0 %v2455
        %3545 = vmatprep.subr.bf16.mxu0 %v2460
        %3546 = vmatpush1.bf16.msra.mxu0 %v2459
        %3547 = vmatprep.subr.bf16.mxu0 %v2464
        %3548 = vmatpush1.bf16.msra.mxu0 %v2463
        %3549 = vmatprep.subr.bf16.mxu0 %v2468
        %3550 = vmatpush1.bf16.msra.mxu0 %v2467
        %3551 = vmatprep.subr.bf16.mxu0 %v2472
        %3552 = vmatpush1.bf16.msra.mxu0 %v2471
        %3553 = vmatprep.subr.bf16.mxu0 %v2476
        %3554 = vmatpush1.bf16.msra.mxu0 %v2475
        %3555 = vmatprep.subr.bf16.mxu0 %v2480
        %3556 = vmatpush1.bf16.msra.mxu0 %v2479
        %3557 = vmatprep.subr.bf16.mxu0 %v2484
        %3558 = vmatpush1.bf16.msra.mxu0 %v2483
        %3559 = vmatprep.subr.bf16.mxu0 %v2488
        %3560 = vmatpush1.bf16.msra.mxu0 %v2487
        %3561 = vmatprep.subr.bf16.mxu0 %v2492
        %3562 = vmatpush1.bf16.msra.mxu0 %v2491
        %3563 = vmatprep.subr.bf16.mxu0 %v2496
        %3564 = vmatpush1.bf16.msra.mxu0 %v2495
        %3565 = vmatprep.subr.bf16.mxu0 %v2500
        %3566 = vmatpush1.bf16.msra.mxu0 %v2499
        %3567 = vmatprep.subr.bf16.mxu0 %v2504
        %3568 = vmatpush1.bf16.msra.mxu0 %v2503
        %3569 = vmatprep.subr.bf16.mxu0 %v2508
        %3570 = vmatpush1.bf16.msra.mxu0 %v2507
        %3571 = vmatprep.subr.bf16.mxu0 %v2512
        %3572 = vmatpush1.bf16.msra.mxu0 %v2511
        %3573 = vmatprep.mubr.bf16.mxu0 %v1026
        %3574 = vmatmul.mubr.bf16.gmra.mrb[0].mxu0 %v1025
        %v3575 = vpop.f32.mrb[0].mxu0
        %v3576 = vadd.f32 %v3223, %v3575
        %v3577 = vpop.f32.mrb[0].mxu0
        %v3578 = vadd.f32 %v3225, %v3577
        %v3579 = vpop.f32.mrb[0].mxu0
        %v3580 = vadd.f32 %v3227, %v3579
        %v3581 = vpop.f32.mrb[0].mxu0
        %v3582 = vadd.f32 %v3229, %v3581
        %3583 = vmatprep.mubr.bf16.mxu0 %v1034
        %3584 = vmatmul.mubr.bf16.gmra.mrb[0].mxu0 %v1033
        %v3585 = vpop.f32.mrb[0].mxu0
        %v3586 = vadd.f32 %v3233, %v3585
        %v3587 = vpop.f32.mrb[0].mxu0
        %v3588 = vadd.f32 %v3235, %v3587
        %v3589 = vpop.f32.mrb[0].mxu0
        %v3590 = vadd.f32 %v3237, %v3589
        %v3591 = vpop.f32.mrb[0].mxu0
        %v3592 = vadd.f32 %v3239, %v3591
        %3593 = vmatprep.mubr.bf16.mxu0 %v1042
        %3594 = vmatmul.mubr.bf16.gmra.mrb[0].mxu0 %v1041
        %v3595 = vpop.f32.mrb[0].mxu0
        %v3596 = vadd.f32 %v3243, %v3595
        %v3597 = vpop.f32.mrb[0].mxu0
        %v3598 = vadd.f32 %v3245, %v3597
        %v3599 = vpop.f32.mrb[0].mxu0
        %v3600 = vadd.f32 %v3247, %v3599
        %v3601 = vpop.f32.mrb[0].mxu0
        %v3602 = vadd.f32 %v3249, %v3601
        %3603 = vmatprep.mubr.bf16.mxu0 %v1050
        %3604 = vmatmul.mubr.bf16.gmra.mrb[0].mxu0 %v1049
        %v3605 = vpop.f32.mrb[0].mxu0
        %v3606 = vadd.f32 %v3253, %v3605
        %v3607 = vpop.f32.mrb[0].mxu0
        %v3608 = vadd.f32 %v3255, %v3607
        %v3609 = vpop.f32.mrb[0].mxu0
        %v3610 = vadd.f32 %v3257, %v3609
        %v3611 = vpop.f32.mrb[0].mxu0
        %v3612 = vadd.f32 %v3259, %v3611
        %3613 = vmatprep.mubr.bf16.mxu0 %v1058
        %3614 = vmatmul.mubr.bf16.gmra.mrb[0].mxu0 %v1057
        %v3615 = vpop.f32.mrb[0].mxu0
        %v3616 = vadd.f32 %v3263, %v3615
        %v3617 = vpop.f32.mrb[0].mxu0
        %v3618 = vadd.f32 %v3265, %v3617
        %v3619 = vpop.f32.mrb[0].mxu0
        %v3620 = vadd.f32 %v3267, %v3619
        %v3621 = vpop.f32.mrb[0].mxu0
        %v3622 = vadd.f32 %v3269, %v3621
        %3623 = vmatprep.mubr.bf16.mxu0 %v1066
        %3624 = vmatmul.mubr.bf16.gmra.mrb[0].mxu0 %v1065
        %v3625 = vpop.f32.mrb[0].mxu0
        %v3626 = vadd.f32 %v3273, %v3625
        %v3627 = vpop.f32.mrb[0].mxu0
        %v3628 = vadd.f32 %v3275, %v3627
        %v3629 = vpop.f32.mrb[0].mxu0
        %v3630 = vadd.f32 %v3277, %v3629
        %v3631 = vpop.f32.mrb[0].mxu0
        %v3632 = vadd.f32 %v3279, %v3631
        %3633 = vmatprep.mubr.bf16.mxu0 %v1074
        %3634 = vmatmul.mubr.bf16.gmra.mrb[0].mxu0 %v1073
        %v3635 = vpop.f32.mrb[0].mxu0
        %v3636 = vadd.f32 %v3283, %v3635
        %v3637 = vpop.f32.mrb[0].mxu0
        %v3638 = vadd.f32 %v3285, %v3637
        %v3639 = vpop.f32.mrb[0].mxu0
        %v3640 = vadd.f32 %v3287, %v3639
        %v3641 = vpop.f32.mrb[0].mxu0
        %v3642 = vadd.f32 %v3289, %v3641
        %3643 = vmatprep.mubr.bf16.mxu0 %v1082
        %3644 = vmatmul.mubr.bf16.gmra.mrb[0].mxu0 %v1081
        %v3645 = vpop.f32.mrb[0].mxu0
        %v3646 = vadd.f32 %v3293, %v3645
        %v3647 = vpop.f32.mrb[0].mxu0
        %v3648 = vadd.f32 %v3295, %v3647
        %v3649 = vpop.f32.mrb[0].mxu0
        %v3650 = vadd.f32 %v3297, %v3649
        %v3651 = vpop.f32.mrb[0].mxu0
        %v3652 = vadd.f32 %v3299, %v3651
        %3653 = vmatprep.mubr.bf16.mxu0 %v1090
        %3654 = vmatmul.mubr.bf16.gmra.mrb[0].mxu0 %v1089
        %v3655 = vpop.f32.mrb[0].mxu0
        %v3656 = vadd.f32 %v3303, %v3655
        %v3657 = vpop.f32.mrb[0].mxu0
        %v3658 = vadd.f32 %v3305, %v3657
        %v3659 = vpop.f32.mrb[0].mxu0
        %v3660 = vadd.f32 %v3307, %v3659
        %v3661 = vpop.f32.mrb[0].mxu0
        %v3662 = vadd.f32 %v3309, %v3661
        %3663 = vmatprep.mubr.bf16.mxu0 %v1098
        %3664 = vmatmul.mubr.bf16.gmra.mrb[0].mxu0 %v1097
        %v3665 = vpop.f32.mrb[0].mxu0
        %v3666 = vadd.f32 %v3313, %v3665
        %v3667 = vpop.f32.mrb[0].mxu0
        %v3668 = vadd.f32 %v3315, %v3667
        %v3669 = vpop.f32.mrb[0].mxu0
        %v3670 = vadd.f32 %v3317, %v3669
        %v3671 = vpop.f32.mrb[0].mxu0
        %v3672 = vadd.f32 %v3319, %v3671
        %3673 = vmatprep.mubr.bf16.mxu0 %v1106
        %3674 = vmatmul.mubr.bf16.gmra.mrb[0].mxu0 %v1105
        %v3675 = vpop.f32.mrb[0].mxu0
        %v3676 = vadd.f32 %v3323, %v3675
        %v3677 = vpop.f32.mrb[0].mxu0
        %v3678 = vadd.f32 %v3325, %v3677
        %v3679 = vpop.f32.mrb[0].mxu0
        %v3680 = vadd.f32 %v3327, %v3679
        %v3681 = vpop.f32.mrb[0].mxu0
        %v3682 = vadd.f32 %v3329, %v3681
        %3683 = vmatprep.mubr.bf16.mxu0 %v1114
        %3684 = vmatmul.mubr.bf16.gmra.mrb[0].mxu0 %v1113
        %v3685 = vpop.f32.mrb[0].mxu0
        %v3686 = vadd.f32 %v3333, %v3685
        %v3687 = vpop.f32.mrb[0].mxu0
        %v3688 = vadd.f32 %v3335, %v3687
        %v3689 = vpop.f32.mrb[0].mxu0
        %v3690 = vadd.f32 %v3337, %v3689
        %v3691 = vpop.f32.mrb[0].mxu0
        %v3692 = vadd.f32 %v3339, %v3691
        %3693 = vmatprep.mubr.bf16.mxu0 %v1122
        %3694 = vmatmul.mubr.bf16.gmra.mrb[0].mxu0 %v1121
        %v3695 = vpop.f32.mrb[0].mxu0
        %v3696 = vadd.f32 %v3343, %v3695
        %v3697 = vpop.f32.mrb[0].mxu0
        %v3698 = vadd.f32 %v3345, %v3697
        %v3699 = vpop.f32.mrb[0].mxu0
        %v3700 = vadd.f32 %v3347, %v3699
        %v3701 = vpop.f32.mrb[0].mxu0
        %v3702 = vadd.f32 %v3349, %v3701
        %3703 = vmatprep.mubr.bf16.mxu0 %v1130
        %3704 = vmatmul.mubr.bf16.gmra.mrb[0].mxu0 %v1129
        %v3705 = vpop.f32.mrb[0].mxu0
        %v3706 = vadd.f32 %v3353, %v3705
        %v3707 = vpop.f32.mrb[0].mxu0
        %v3708 = vadd.f32 %v3355, %v3707
        %v3709 = vpop.f32.mrb[0].mxu0
        %v3710 = vadd.f32 %v3357, %v3709
        %v3711 = vpop.f32.mrb[0].mxu0
        %v3712 = vadd.f32 %v3359, %v3711
        %3713 = vmatprep.mubr.bf16.mxu0 %v1138
        %3714 = vmatmul.mubr.bf16.gmra.mrb[0].mxu0 %v1137
        %v3715 = vpop.f32.mrb[0].mxu0
        %v3716 = vadd.f32 %v3363, %v3715
        %v3717 = vpop.f32.mrb[0].mxu0
        %v3718 = vadd.f32 %v3365, %v3717
        %v3719 = vpop.f32.mrb[0].mxu0
        %v3720 = vadd.f32 %v3367, %v3719
        %v3721 = vpop.f32.mrb[0].mxu0
        %v3722 = vadd.f32 %v3369, %v3721
        %3723 = vmatprep.mubr.bf16.mxu0 %v1146
        %3724 = vmatmul.mubr.bf16.gmra.mrb[0].mxu0 %v1145
        %v3725 = vpop.f32.mrb[0].mxu0
        %v3726 = vadd.f32 %v3373, %v3725
        %v3727 = vpop.f32.mrb[0].mxu0
        %v3728 = vadd.f32 %v3375, %v3727
        %v3729 = vpop.f32.mrb[0].mxu0
        %v3730 = vadd.f32 %v3377, %v3729
        %v3731 = vpop.f32.mrb[0].mxu0
        %v3732 = vadd.f32 %v3379, %v3731
        %3733 = vmatprep.mubr.bf16.mxu0 %v1154
        %3734 = vmatmul.mubr.bf16.gmra.mrb[0].mxu0 %v1153
        %v3735 = vpop.f32.mrb[0].mxu0
        %v3736 = vadd.f32 %v3383, %v3735
        %v3737 = vpop.f32.mrb[0].mxu0
        %v3738 = vadd.f32 %v3385, %v3737
        %v3739 = vpop.f32.mrb[0].mxu0
        %v3740 = vadd.f32 %v3387, %v3739
        %v3741 = vpop.f32.mrb[0].mxu0
        %v3742 = vadd.f32 %v3389, %v3741
        %3743 = vmatprep.mubr.bf16.mxu0 %v1162
        %3744 = vmatmul.mubr.bf16.gmra.mrb[0].mxu0 %v1161
        %v3745 = vpop.f32.mrb[0].mxu0
        %v3746 = vadd.f32 %v3393, %v3745
        %v3747 = vpop.f32.mrb[0].mxu0
        %v3748 = vadd.f32 %v3395, %v3747
        %v3749 = vpop.f32.mrb[0].mxu0
        %v3750 = vadd.f32 %v3397, %v3749
        %v3751 = vpop.f32.mrb[0].mxu0
        %v3752 = vadd.f32 %v3399, %v3751
        %3753 = vmatprep.mubr.bf16.mxu0 %v1170
        %3754 = vmatmul.mubr.bf16.gmra.mrb[0].mxu0 %v1169
        %v3755 = vpop.f32.mrb[0].mxu0
        %v3756 = vadd.f32 %v3403, %v3755
        %v3757 = vpop.f32.mrb[0].mxu0
        %v3758 = vadd.f32 %v3405, %v3757
        %v3759 = vpop.f32.mrb[0].mxu0
        %v3760 = vadd.f32 %v3407, %v3759
        %v3761 = vpop.f32.mrb[0].mxu0
        %v3762 = vadd.f32 %v3409, %v3761
        %3763 = vmatprep.mubr.bf16.mxu0 %v1178
        %3764 = vmatmul.mubr.bf16.gmra.mrb[0].mxu0 %v1177
        %v3765 = vpop.f32.mrb[0].mxu0
        %v3766 = vadd.f32 %v3413, %v3765
        %v3767 = vpop.f32.mrb[0].mxu0
        %v3768 = vadd.f32 %v3415, %v3767
        %v3769 = vpop.f32.mrb[0].mxu0
        %v3770 = vadd.f32 %v3417, %v3769
        %v3771 = vpop.f32.mrb[0].mxu0
        %v3772 = vadd.f32 %v3419, %v3771
        %3773 = vmatprep.mubr.bf16.mxu0 %v1186
        %3774 = vmatmul.mubr.bf16.gmra.mrb[0].mxu0 %v1185
        %v3775 = vpop.f32.mrb[0].mxu0
        %v3776 = vadd.f32 %v3423, %v3775
        %v3777 = vpop.f32.mrb[0].mxu0
        %v3778 = vadd.f32 %v3425, %v3777
        %v3779 = vpop.f32.mrb[0].mxu0
        %v3780 = vadd.f32 %v3427, %v3779
        %v3781 = vpop.f32.mrb[0].mxu0
        %v3782 = vadd.f32 %v3429, %v3781
        %3783 = vmatprep.mubr.bf16.mxu0 %v1194
        %3784 = vmatmul.mubr.bf16.gmra.mrb[0].mxu0 %v1193
        %v3785 = vpop.f32.mrb[0].mxu0
        %v3786 = vadd.f32 %v3433, %v3785
        %v3787 = vpop.f32.mrb[0].mxu0
        %v3788 = vadd.f32 %v3435, %v3787
        %v3789 = vpop.f32.mrb[0].mxu0
        %v3790 = vadd.f32 %v3437, %v3789
        %v3791 = vpop.f32.mrb[0].mxu0
        %v3792 = vadd.f32 %v3439, %v3791
        %3793 = vmatprep.mubr.bf16.mxu0 %v1202
        %3794 = vmatmul.mubr.bf16.gmra.mrb[0].mxu0 %v1201
        %v3795 = vpop.f32.mrb[0].mxu0
        %v3796 = vadd.f32 %v3443, %v3795
        %v3797 = vpop.f32.mrb[0].mxu0
        %v3798 = vadd.f32 %v3445, %v3797
        %v3799 = vpop.f32.mrb[0].mxu0
        %v3800 = vadd.f32 %v3447, %v3799
        %v3801 = vpop.f32.mrb[0].mxu0
        %v3802 = vadd.f32 %v3449, %v3801
        %3803 = vmatprep.mubr.bf16.mxu0 %v1210
        %3804 = vmatmul.mubr.bf16.gmra.mrb[0].mxu0 %v1209
        %v3805 = vpop.f32.mrb[0].mxu0
        %v3806 = vadd.f32 %v3453, %v3805
        %v3807 = vpop.f32.mrb[0].mxu0
        %v3808 = vadd.f32 %v3455, %v3807
        %v3809 = vpop.f32.mrb[0].mxu0
        %v3810 = vadd.f32 %v3457, %v3809
        %v3811 = vpop.f32.mrb[0].mxu0
        %v3812 = vadd.f32 %v3459, %v3811
        %3813 = vmatprep.mubr.bf16.mxu0 %v1218
        %3814 = vmatmul.mubr.bf16.gmra.mrb[0].mxu0 %v1217
        %v3815 = vpop.f32.mrb[0].mxu0
        %v3816 = vadd.f32 %v3463, %v3815
        %v3817 = vpop.f32.mrb[0].mxu0
        %v3818 = vadd.f32 %v3465, %v3817
        %v3819 = vpop.f32.mrb[0].mxu0
        %v3820 = vadd.f32 %v3467, %v3819
        %v3821 = vpop.f32.mrb[0].mxu0
        %v3822 = vadd.f32 %v3469, %v3821
        %3823 = vmatprep.mubr.bf16.mxu0 %v1226
        %3824 = vmatmul.mubr.bf16.gmra.mrb[0].mxu0 %v1225
        %v3825 = vpop.f32.mrb[0].mxu0
        %v3826 = vadd.f32 %v3473, %v3825
        %v3827 = vpop.f32.mrb[0].mxu0
        %v3828 = vadd.f32 %v3475, %v3827
        %v3829 = vpop.f32.mrb[0].mxu0
        %v3830 = vadd.f32 %v3477, %v3829
        %v3831 = vpop.f32.mrb[0].mxu0
        %v3832 = vadd.f32 %v3479, %v3831
        %3833 = vmatprep.mubr.bf16.mxu0 %v1234
        %3834 = vmatmul.mubr.bf16.gmra.mrb[0].mxu0 %v1233
        %v3835 = vpop.f32.mrb[0].mxu0
        %v3836 = vadd.f32 %v3483, %v3835
        %v3837 = vpop.f32.mrb[0].mxu0
        %v3838 = vadd.f32 %v3485, %v3837
        %v3839 = vpop.f32.mrb[0].mxu0
        %v3840 = vadd.f32 %v3487, %v3839
        %v3841 = vpop.f32.mrb[0].mxu0
        %v3842 = vadd.f32 %v3489, %v3841
        %3843 = vmatprep.mubr.bf16.mxu0 %v1242
        %3844 = vmatmul.mubr.bf16.gmra.mrb[0].mxu0 %v1241
        %v3845 = vpop.f32.mrb[0].mxu0
        %v3846 = vadd.f32 %v3493, %v3845
        %v3847 = vpop.f32.mrb[0].mxu0
        %v3848 = vadd.f32 %v3495, %v3847
        %v3849 = vpop.f32.mrb[0].mxu0
        %v3850 = vadd.f32 %v3497, %v3849
        %v3851 = vpop.f32.mrb[0].mxu0
        %v3852 = vadd.f32 %v3499, %v3851
        %3853 = vmatprep.mubr.bf16.mxu0 %v1250
        %3854 = vmatmul.mubr.bf16.gmra.mrb[0].mxu0 %v1249
        %v3855 = vpop.f32.mrb[0].mxu0
        %v3856 = vadd.f32 %v3503, %v3855
        %v3857 = vpop.f32.mrb[0].mxu0
        %v3858 = vadd.f32 %v3505, %v3857
        %v3859 = vpop.f32.mrb[0].mxu0
        %v3860 = vadd.f32 %v3507, %v3859
        %v3861 = vpop.f32.mrb[0].mxu0
        %v3862 = vadd.f32 %v3509, %v3861
        %3863 = vmatprep.mubr.bf16.mxu0 %v1258
        %3864 = vmatmul.mubr.bf16.gmra.mrb[0].mxu0 %v1257
        %v3865 = vpop.f32.mrb[0].mxu0
        %v3866 = vadd.f32 %v3513, %v3865
        %v3867 = vpop.f32.mrb[0].mxu0
        %v3868 = vadd.f32 %v3515, %v3867
        %v3869 = vpop.f32.mrb[0].mxu0
        %v3870 = vadd.f32 %v3517, %v3869
        %v3871 = vpop.f32.mrb[0].mxu0
        %v3872 = vadd.f32 %v3519, %v3871
        %3873 = vmatprep.mubr.bf16.mxu0 %v1266
        %3874 = vmatmul.mubr.bf16.gmra.mrb[0].mxu0 %v1265
        %v3875 = vpop.f32.mrb[0].mxu0
        %v3876 = vadd.f32 %v3523, %v3875
        %v3877 = vpop.f32.mrb[0].mxu0
        %v3878 = vadd.f32 %v3525, %v3877
        %v3879 = vpop.f32.mrb[0].mxu0
        %v3880 = vadd.f32 %v3527, %v3879
        %v3881 = vpop.f32.mrb[0].mxu0
        %v3882 = vadd.f32 %v3529, %v3881
        %3883 = vmatprep.mubr.bf16.mxu0 %v1274
        %3884 = vmatmul.mubr.bf16.gmra.mrb[0].mxu0 %v1273
        %v3885 = vpop.f32.mrb[0].mxu0
        %v3886 = vadd.f32 %v3533, %v3885
        %v3887 = vpop.f32.mrb[0].mxu0
        %v3888 = vadd.f32 %v3535, %v3887
        %v3889 = vpop.f32.mrb[0].mxu0
        %v3890 = vadd.f32 %v3537, %v3889
        %v3891 = vpop.f32.mrb[0].mxu0
        %v3892 = vadd.f32 %v3539, %v3891
        %3893 = vdwg.mxu0
        %3894 = vmatprep.subr.bf16.mxu0 %v2516
        %3895 = vmatpush1.bf16.msra.mxu0 %v2515
        %3896 = vmatprep.subr.bf16.mxu0 %v2520
        %3897 = vmatpush1.bf16.msra.mxu0 %v2519
        %3898 = vmatprep.subr.bf16.mxu0 %v2524
        %3899 = vmatpush1.bf16.msra.mxu0 %v2523
        %3900 = vmatprep.subr.bf16.mxu0 %v2528
        %3901 = vmatpush1.bf16.msra.mxu0 %v2527
        %3902 = vmatprep.subr.bf16.mxu0 %v2532
        %3903 = vmatpush1.bf16.msra.mxu0 %v2531
        %3904 = vmatprep.subr.bf16.mxu0 %v2536
        %3905 = vmatpush1.bf16.msra.mxu0 %v2535
        %3906 = vmatprep.subr.bf16.mxu0 %v2540
        %3907 = vmatpush1.bf16.msra.mxu0 %v2539
        %3908 = vmatprep.subr.bf16.mxu0 %v2544
        %3909 = vmatpush1.bf16.msra.mxu0 %v2543
        %3910 = vmatprep.subr.bf16.mxu0 %v2548
        %3911 = vmatpush1.bf16.msra.mxu0 %v2547
        %3912 = vmatprep.subr.bf16.mxu0 %v2552
        %3913 = vmatpush1.bf16.msra.mxu0 %v2551
        %3914 = vmatprep.subr.bf16.mxu0 %v2556
        %3915 = vmatpush1.bf16.msra.mxu0 %v2555
        %3916 = vmatprep.subr.bf16.mxu0 %v2560
        %3917 = vmatpush1.bf16.msra.mxu0 %v2559
        %3918 = vmatprep.subr.bf16.mxu0 %v2564
        %3919 = vmatpush1.bf16.msra.mxu0 %v2563
        %3920 = vmatprep.subr.bf16.mxu0 %v2568
        %3921 = vmatpush1.bf16.msra.mxu0 %v2567
        %3922 = vmatprep.subr.bf16.mxu0 %v2572
        %3923 = vmatpush1.bf16.msra.mxu0 %v2571
        %3924 = vmatprep.subr.bf16.mxu0 %v2576
        %3925 = vmatpush1.bf16.msra.mxu0 %v2575
        %3926 = vmatprep.mubr.bf16.mxu0 %v1028
        %3927 = vmatmul.mubr.bf16.gmra.mrb[0].mxu0 %v1027
        %v3928 = vpop.f32.mrb[0].mxu0
        %v3929 = vadd.f32 %v3576, %v3928
        %v3930 = vpop.f32.mrb[0].mxu0
        %v3931 = vadd.f32 %v3578, %v3930
        %v3932 = vpop.f32.mrb[0].mxu0
        %v3933 = vadd.f32 %v3580, %v3932
        %v3934 = vpop.f32.mrb[0].mxu0
        %v3935 = vadd.f32 %v3582, %v3934
        %3936 = vmatprep.mubr.bf16.mxu0 %v1036
        %3937 = vmatmul.mubr.bf16.gmra.mrb[0].mxu0 %v1035
        %v3938 = vpop.f32.mrb[0].mxu0
        %v3939 = vadd.f32 %v3586, %v3938
        %v3940 = vpop.f32.mrb[0].mxu0
        %v3941 = vadd.f32 %v3588, %v3940
        %v3942 = vpop.f32.mrb[0].mxu0
        %v3943 = vadd.f32 %v3590, %v3942
        %v3944 = vpop.f32.mrb[0].mxu0
        %v3945 = vadd.f32 %v3592, %v3944
        %3946 = vmatprep.mubr.bf16.mxu0 %v1044
        %3947 = vmatmul.mubr.bf16.gmra.mrb[0].mxu0 %v1043
        %v3948 = vpop.f32.mrb[0].mxu0
        %v3949 = vadd.f32 %v3596, %v3948
        %v3950 = vpop.f32.mrb[0].mxu0
        %v3951 = vadd.f32 %v3598, %v3950
        %v3952 = vpop.f32.mrb[0].mxu0
        %v3953 = vadd.f32 %v3600, %v3952
        %v3954 = vpop.f32.mrb[0].mxu0
        %v3955 = vadd.f32 %v3602, %v3954
        %3956 = vmatprep.mubr.bf16.mxu0 %v1052
        %3957 = vmatmul.mubr.bf16.gmra.mrb[0].mxu0 %v1051
        %v3958 = vpop.f32.mrb[0].mxu0
        %v3959 = vadd.f32 %v3606, %v3958
        %v3960 = vpop.f32.mrb[0].mxu0
        %v3961 = vadd.f32 %v3608, %v3960
        %v3962 = vpop.f32.mrb[0].mxu0
        %v3963 = vadd.f32 %v3610, %v3962
        %v3964 = vpop.f32.mrb[0].mxu0
        %v3965 = vadd.f32 %v3612, %v3964
        %3966 = vmatprep.mubr.bf16.mxu0 %v1060
        %3967 = vmatmul.mubr.bf16.gmra.mrb[0].mxu0 %v1059
        %v3968 = vpop.f32.mrb[0].mxu0
        %v3969 = vadd.f32 %v3616, %v3968
        %v3970 = vpop.f32.mrb[0].mxu0
        %v3971 = vadd.f32 %v3618, %v3970
        %v3972 = vpop.f32.mrb[0].mxu0
        %v3973 = vadd.f32 %v3620, %v3972
        %v3974 = vpop.f32.mrb[0].mxu0
        %v3975 = vadd.f32 %v3622, %v3974
        %3976 = vmatprep.mubr.bf16.mxu0 %v1068
        %3977 = vmatmul.mubr.bf16.gmra.mrb[0].mxu0 %v1067
        %v3978 = vpop.f32.mrb[0].mxu0
        %v3979 = vadd.f32 %v3626, %v3978
        %v3980 = vpop.f32.mrb[0].mxu0
        %v3981 = vadd.f32 %v3628, %v3980
        %v3982 = vpop.f32.mrb[0].mxu0
        %v3983 = vadd.f32 %v3630, %v3982
        %v3984 = vpop.f32.mrb[0].mxu0
        %v3985 = vadd.f32 %v3632, %v3984
        %3986 = vmatprep.mubr.bf16.mxu0 %v1076
        %3987 = vmatmul.mubr.bf16.gmra.mrb[0].mxu0 %v1075
        %v3988 = vpop.f32.mrb[0].mxu0
        %v3989 = vadd.f32 %v3636, %v3988
        %v3990 = vpop.f32.mrb[0].mxu0
        %v3991 = vadd.f32 %v3638, %v3990
        %v3992 = vpop.f32.mrb[0].mxu0
        %v3993 = vadd.f32 %v3640, %v3992
        %v3994 = vpop.f32.mrb[0].mxu0
        %v3995 = vadd.f32 %v3642, %v3994
        %3996 = vmatprep.mubr.bf16.mxu0 %v1084
        %3997 = vmatmul.mubr.bf16.gmra.mrb[0].mxu0 %v1083
        %v3998 = vpop.f32.mrb[0].mxu0
        %v3999 = vadd.f32 %v3646, %v3998
        %v4000 = vpop.f32.mrb[0].mxu0
        %v4001 = vadd.f32 %v3648, %v4000
        %v4002 = vpop.f32.mrb[0].mxu0
        %v4003 = vadd.f32 %v3650, %v4002
        %v4004 = vpop.f32.mrb[0].mxu0
        %v4005 = vadd.f32 %v3652, %v4004
        %4006 = vmatprep.mubr.bf16.mxu0 %v1092
        %4007 = vmatmul.mubr.bf16.gmra.mrb[0].mxu0 %v1091
        %v4008 = vpop.f32.mrb[0].mxu0
        %v4009 = vadd.f32 %v3656, %v4008
        %v4010 = vpop.f32.mrb[0].mxu0
        %v4011 = vadd.f32 %v3658, %v4010
        %v4012 = vpop.f32.mrb[0].mxu0
        %v4013 = vadd.f32 %v3660, %v4012
        %v4014 = vpop.f32.mrb[0].mxu0
        %v4015 = vadd.f32 %v3662, %v4014
        %4016 = vmatprep.mubr.bf16.mxu0 %v1100
        %4017 = vmatmul.mubr.bf16.gmra.mrb[0].mxu0 %v1099
        %v4018 = vpop.f32.mrb[0].mxu0
        %v4019 = vadd.f32 %v3666, %v4018
        %v4020 = vpop.f32.mrb[0].mxu0
        %v4021 = vadd.f32 %v3668, %v4020
        %v4022 = vpop.f32.mrb[0].mxu0
        %v4023 = vadd.f32 %v3670, %v4022
        %v4024 = vpop.f32.mrb[0].mxu0
        %v4025 = vadd.f32 %v3672, %v4024
        %4026 = vmatprep.mubr.bf16.mxu0 %v1108
        %4027 = vmatmul.mubr.bf16.gmra.mrb[0].mxu0 %v1107
        %v4028 = vpop.f32.mrb[0].mxu0
        %v4029 = vadd.f32 %v3676, %v4028
        %v4030 = vpop.f32.mrb[0].mxu0
        %v4031 = vadd.f32 %v3678, %v4030
        %v4032 = vpop.f32.mrb[0].mxu0
        %v4033 = vadd.f32 %v3680, %v4032
        %v4034 = vpop.f32.mrb[0].mxu0
        %v4035 = vadd.f32 %v3682, %v4034
        %4036 = vmatprep.mubr.bf16.mxu0 %v1116
        %4037 = vmatmul.mubr.bf16.gmra.mrb[0].mxu0 %v1115
        %v4038 = vpop.f32.mrb[0].mxu0
        %v4039 = vadd.f32 %v3686, %v4038
        %v4040 = vpop.f32.mrb[0].mxu0
        %v4041 = vadd.f32 %v3688, %v4040
        %v4042 = vpop.f32.mrb[0].mxu0
        %v4043 = vadd.f32 %v3690, %v4042
        %v4044 = vpop.f32.mrb[0].mxu0
        %v4045 = vadd.f32 %v3692, %v4044
        %4046 = vmatprep.mubr.bf16.mxu0 %v1124
        %4047 = vmatmul.mubr.bf16.gmra.mrb[0].mxu0 %v1123
        %v4048 = vpop.f32.mrb[0].mxu0
        %v4049 = vadd.f32 %v3696, %v4048
        %v4050 = vpop.f32.mrb[0].mxu0
        %v4051 = vadd.f32 %v3698, %v4050
        %v4052 = vpop.f32.mrb[0].mxu0
        %v4053 = vadd.f32 %v3700, %v4052
        %v4054 = vpop.f32.mrb[0].mxu0
        %v4055 = vadd.f32 %v3702, %v4054
        %4056 = vmatprep.mubr.bf16.mxu0 %v1132
        %4057 = vmatmul.mubr.bf16.gmra.mrb[0].mxu0 %v1131
        %v4058 = vpop.f32.mrb[0].mxu0
        %v4059 = vadd.f32 %v3706, %v4058
        %v4060 = vpop.f32.mrb[0].mxu0
        %v4061 = vadd.f32 %v3708, %v4060
        %v4062 = vpop.f32.mrb[0].mxu0
        %v4063 = vadd.f32 %v3710, %v4062
        %v4064 = vpop.f32.mrb[0].mxu0
        %v4065 = vadd.f32 %v3712, %v4064
        %4066 = vmatprep.mubr.bf16.mxu0 %v1140
        %4067 = vmatmul.mubr.bf16.gmra.mrb[0].mxu0 %v1139
        %v4068 = vpop.f32.mrb[0].mxu0
        %v4069 = vadd.f32 %v3716, %v4068
        %v4070 = vpop.f32.mrb[0].mxu0
        %v4071 = vadd.f32 %v3718, %v4070
        %v4072 = vpop.f32.mrb[0].mxu0
        %v4073 = vadd.f32 %v3720, %v4072
        %v4074 = vpop.f32.mrb[0].mxu0
        %v4075 = vadd.f32 %v3722, %v4074
        %4076 = vmatprep.mubr.bf16.mxu0 %v1148
        %4077 = vmatmul.mubr.bf16.gmra.mrb[0].mxu0 %v1147
        %v4078 = vpop.f32.mrb[0].mxu0
        %v4079 = vadd.f32 %v3726, %v4078
        %v4080 = vpop.f32.mrb[0].mxu0
        %v4081 = vadd.f32 %v3728, %v4080
        %v4082 = vpop.f32.mrb[0].mxu0
        %v4083 = vadd.f32 %v3730, %v4082
        %v4084 = vpop.f32.mrb[0].mxu0
        %v4085 = vadd.f32 %v3732, %v4084
        %4086 = vmatprep.mubr.bf16.mxu0 %v1156
        %4087 = vmatmul.mubr.bf16.gmra.mrb[0].mxu0 %v1155
        %v4088 = vpop.f32.mrb[0].mxu0
        %v4089 = vadd.f32 %v3736, %v4088
        %v4090 = vpop.f32.mrb[0].mxu0
        %v4091 = vadd.f32 %v3738, %v4090
        %v4092 = vpop.f32.mrb[0].mxu0
        %v4093 = vadd.f32 %v3740, %v4092
        %v4094 = vpop.f32.mrb[0].mxu0
        %v4095 = vadd.f32 %v3742, %v4094
        %4096 = vmatprep.mubr.bf16.mxu0 %v1164
        %4097 = vmatmul.mubr.bf16.gmra.mrb[0].mxu0 %v1163
        %v4098 = vpop.f32.mrb[0].mxu0
        %v4099 = vadd.f32 %v3746, %v4098
        %v4100 = vpop.f32.mrb[0].mxu0
        %v4101 = vadd.f32 %v3748, %v4100
        %v4102 = vpop.f32.mrb[0].mxu0
        %v4103 = vadd.f32 %v3750, %v4102
        %v4104 = vpop.f32.mrb[0].mxu0
        %v4105 = vadd.f32 %v3752, %v4104
        %4106 = vmatprep.mubr.bf16.mxu0 %v1172
        %4107 = vmatmul.mubr.bf16.gmra.mrb[0].mxu0 %v1171
        %v4108 = vpop.f32.mrb[0].mxu0
        %v4109 = vadd.f32 %v3756, %v4108
        %v4110 = vpop.f32.mrb[0].mxu0
        %v4111 = vadd.f32 %v3758, %v4110
        %v4112 = vpop.f32.mrb[0].mxu0
        %v4113 = vadd.f32 %v3760, %v4112
        %v4114 = vpop.f32.mrb[0].mxu0
        %v4115 = vadd.f32 %v3762, %v4114
        %4116 = vmatprep.mubr.bf16.mxu0 %v1180
        %4117 = vmatmul.mubr.bf16.gmra.mrb[0].mxu0 %v1179
        %v4118 = vpop.f32.mrb[0].mxu0
        %v4119 = vadd.f32 %v3766, %v4118
        %v4120 = vpop.f32.mrb[0].mxu0
        %v4121 = vadd.f32 %v3768, %v4120
        %v4122 = vpop.f32.mrb[0].mxu0
        %v4123 = vadd.f32 %v3770, %v4122
        %v4124 = vpop.f32.mrb[0].mxu0
        %v4125 = vadd.f32 %v3772, %v4124
        %4126 = vmatprep.mubr.bf16.mxu0 %v1188
        %4127 = vmatmul.mubr.bf16.gmra.mrb[0].mxu0 %v1187
        %v4128 = vpop.f32.mrb[0].mxu0
        %v4129 = vadd.f32 %v3776, %v4128
        %v4130 = vpop.f32.mrb[0].mxu0
        %v4131 = vadd.f32 %v3778, %v4130
        %v4132 = vpop.f32.mrb[0].mxu0
        %v4133 = vadd.f32 %v3780, %v4132
        %v4134 = vpop.f32.mrb[0].mxu0
        %v4135 = vadd.f32 %v3782, %v4134
        %4136 = vmatprep.mubr.bf16.mxu0 %v1196
        %4137 = vmatmul.mubr.bf16.gmra.mrb[0].mxu0 %v1195
        %v4138 = vpop.f32.mrb[0].mxu0
        %v4139 = vadd.f32 %v3786, %v4138
        %v4140 = vpop.f32.mrb[0].mxu0
        %v4141 = vadd.f32 %v3788, %v4140
        %v4142 = vpop.f32.mrb[0].mxu0
        %v4143 = vadd.f32 %v3790, %v4142
        %v4144 = vpop.f32.mrb[0].mxu0
        %v4145 = vadd.f32 %v3792, %v4144
        %4146 = vmatprep.mubr.bf16.mxu0 %v1204
        %4147 = vmatmul.mubr.bf16.gmra.mrb[0].mxu0 %v1203
        %v4148 = vpop.f32.mrb[0].mxu0
        %v4149 = vadd.f32 %v3796, %v4148
        %v4150 = vpop.f32.mrb[0].mxu0
        %v4151 = vadd.f32 %v3798, %v4150
        %v4152 = vpop.f32.mrb[0].mxu0
        %v4153 = vadd.f32 %v3800, %v4152
        %v4154 = vpop.f32.mrb[0].mxu0
        %v4155 = vadd.f32 %v3802, %v4154
        %4156 = vmatprep.mubr.bf16.mxu0 %v1212
        %4157 = vmatmul.mubr.bf16.gmra.mrb[0].mxu0 %v1211
        %v4158 = vpop.f32.mrb[0].mxu0
        %v4159 = vadd.f32 %v3806, %v4158
        %v4160 = vpop.f32.mrb[0].mxu0
        %v4161 = vadd.f32 %v3808, %v4160
        %v4162 = vpop.f32.mrb[0].mxu0
        %v4163 = vadd.f32 %v3810, %v4162
        %v4164 = vpop.f32.mrb[0].mxu0
        %v4165 = vadd.f32 %v3812, %v4164
        %4166 = vmatprep.mubr.bf16.mxu0 %v1220
        %4167 = vmatmul.mubr.bf16.gmra.mrb[0].mxu0 %v1219
        %v4168 = vpop.f32.mrb[0].mxu0
        %v4169 = vadd.f32 %v3816, %v4168
        %v4170 = vpop.f32.mrb[0].mxu0
        %v4171 = vadd.f32 %v3818, %v4170
        %v4172 = vpop.f32.mrb[0].mxu0
        %v4173 = vadd.f32 %v3820, %v4172
        %v4174 = vpop.f32.mrb[0].mxu0
        %v4175 = vadd.f32 %v3822, %v4174
        %4176 = vmatprep.mubr.bf16.mxu0 %v1228
        %4177 = vmatmul.mubr.bf16.gmra.mrb[0].mxu0 %v1227
        %v4178 = vpop.f32.mrb[0].mxu0
        %v4179 = vadd.f32 %v3826, %v4178
        %v4180 = vpop.f32.mrb[0].mxu0
        %v4181 = vadd.f32 %v3828, %v4180
        %v4182 = vpop.f32.mrb[0].mxu0
        %v4183 = vadd.f32 %v3830, %v4182
        %v4184 = vpop.f32.mrb[0].mxu0
        %v4185 = vadd.f32 %v3832, %v4184
        %4186 = vmatprep.mubr.bf16.mxu0 %v1236
        %4187 = vmatmul.mubr.bf16.gmra.mrb[0].mxu0 %v1235
        %v4188 = vpop.f32.mrb[0].mxu0
        %v4189 = vadd.f32 %v3836, %v4188
        %v4190 = vpop.f32.mrb[0].mxu0
        %v4191 = vadd.f32 %v3838, %v4190
        %v4192 = vpop.f32.mrb[0].mxu0
        %v4193 = vadd.f32 %v3840, %v4192
        %v4194 = vpop.f32.mrb[0].mxu0
        %v4195 = vadd.f32 %v3842, %v4194
        %4196 = vmatprep.mubr.bf16.mxu0 %v1244
        %4197 = vmatmul.mubr.bf16.gmra.mrb[0].mxu0 %v1243
        %v4198 = vpop.f32.mrb[0].mxu0
        %v4199 = vadd.f32 %v3846, %v4198
        %v4200 = vpop.f32.mrb[0].mxu0
        %v4201 = vadd.f32 %v3848, %v4200
        %v4202 = vpop.f32.mrb[0].mxu0
        %v4203 = vadd.f32 %v3850, %v4202
        %v4204 = vpop.f32.mrb[0].mxu0
        %v4205 = vadd.f32 %v3852, %v4204
        %4206 = vmatprep.mubr.bf16.mxu0 %v1252
        %4207 = vmatmul.mubr.bf16.gmra.mrb[0].mxu0 %v1251
        %v4208 = vpop.f32.mrb[0].mxu0
        %v4209 = vadd.f32 %v3856, %v4208
        %v4210 = vpop.f32.mrb[0].mxu0
        %v4211 = vadd.f32 %v3858, %v4210
        %v4212 = vpop.f32.mrb[0].mxu0
        %v4213 = vadd.f32 %v3860, %v4212
        %v4214 = vpop.f32.mrb[0].mxu0
        %v4215 = vadd.f32 %v3862, %v4214
        %4216 = vmatprep.mubr.bf16.mxu0 %v1260
        %4217 = vmatmul.mubr.bf16.gmra.mrb[0].mxu0 %v1259
        %v4218 = vpop.f32.mrb[0].mxu0
        %v4219 = vadd.f32 %v3866, %v4218
        %v4220 = vpop.f32.mrb[0].mxu0
        %v4221 = vadd.f32 %v3868, %v4220
        %v4222 = vpop.f32.mrb[0].mxu0
        %v4223 = vadd.f32 %v3870, %v4222
        %v4224 = vpop.f32.mrb[0].mxu0
        %v4225 = vadd.f32 %v3872, %v4224
        %4226 = vmatprep.mubr.bf16.mxu0 %v1268
        %4227 = vmatmul.mubr.bf16.gmra.mrb[0].mxu0 %v1267
        %v4228 = vpop.f32.mrb[0].mxu0
        %v4229 = vadd.f32 %v3876, %v4228
        %v4230 = vpop.f32.mrb[0].mxu0
        %v4231 = vadd.f32 %v3878, %v4230
        %v4232 = vpop.f32.mrb[0].mxu0
        %v4233 = vadd.f32 %v3880, %v4232
        %v4234 = vpop.f32.mrb[0].mxu0
        %v4235 = vadd.f32 %v3882, %v4234
        %4236 = vmatprep.mubr.bf16.mxu0 %v1276
        %4237 = vmatmul.mubr.bf16.gmra.mrb[0].mxu0 %v1275
        %v4238 = vpop.f32.mrb[0].mxu0
        %v4239 = vadd.f32 %v3886, %v4238
        %v4240 = vpop.f32.mrb[0].mxu0
        %v4241 = vadd.f32 %v3888, %v4240
        %v4242 = vpop.f32.mrb[0].mxu0
        %v4243 = vadd.f32 %v3890, %v4242
        %v4244 = vpop.f32.mrb[0].mxu0
        %v4245 = vadd.f32 %v3892, %v4244
        %4246 = vdwg.mxu0
        %4247 = vmatprep.subr.bf16.mxu0 %v2326
        %4248 = vmatpush1.bf16.msra.mxu0 %v2325
        %4249 = vmatprep.subr.bf16.mxu0 %v2330
        %4250 = vmatpush1.bf16.msra.mxu0 %v2329
        %4251 = vmatprep.subr.bf16.mxu0 %v2334
        %4252 = vmatpush1.bf16.msra.mxu0 %v2333
        %4253 = vmatprep.subr.bf16.mxu0 %v2338
        %4254 = vmatpush1.bf16.msra.mxu0 %v2337
        %4255 = vmatprep.subr.bf16.mxu0 %v2342
        %4256 = vmatpush1.bf16.msra.mxu0 %v2341
        %4257 = vmatprep.subr.bf16.mxu0 %v2346
        %4258 = vmatpush1.bf16.msra.mxu0 %v2345
        %4259 = vmatprep.subr.bf16.mxu0 %v2350
        %4260 = vmatpush1.bf16.msra.mxu0 %v2349
        %4261 = vmatprep.subr.bf16.mxu0 %v2354
        %4262 = vmatpush1.bf16.msra.mxu0 %v2353
        %4263 = vmatprep.subr.bf16.mxu0 %v2358
        %4264 = vmatpush1.bf16.msra.mxu0 %v2357
        %4265 = vmatprep.subr.bf16.mxu0 %v2362
        %4266 = vmatpush1.bf16.msra.mxu0 %v2361
        %4267 = vmatprep.subr.bf16.mxu0 %v2366
        %4268 = vmatpush1.bf16.msra.mxu0 %v2365
        %4269 = vmatprep.subr.bf16.mxu0 %v2370
        %4270 = vmatpush1.bf16.msra.mxu0 %v2369
        %4271 = vmatprep.subr.bf16.mxu0 %v2374
        %4272 = vmatpush1.bf16.msra.mxu0 %v2373
        %4273 = vmatprep.subr.bf16.mxu0 %v2378
        %4274 = vmatpush1.bf16.msra.mxu0 %v2377
        %4275 = vmatprep.subr.bf16.mxu0 %v2382
        %4276 = vmatpush1.bf16.msra.mxu0 %v2381
        %4277 = vmatprep.subr.bf16.mxu0 %v2386
        %4278 = vmatpush1.bf16.msra.mxu0 %v2385
        %4279 = vmatprep.mubr.bf16.mxu0 %v1022
        %4280 = vmatmul.mubr.bf16.gmra.mrb[0].mxu0 %v1021
        %v4281 = vpop.f32.mrb[0].mxu0
        %v4282 = vadd.f32 %v1546, %v4281
        %v4283 = vpop.f32.mrb[0].mxu0
        %v4284 = vadd.f32 %v1550, %v4283
        %v4285 = vpop.f32.mrb[0].mxu0
        %v4286 = vadd.f32 %v1546, %v4285
        %v4287 = vpop.f32.mrb[0].mxu0
        %v4288 = vadd.f32 %v1550, %v4287
        %4289 = vmatprep.mubr.bf16.mxu0 %v1030
        %4290 = vmatmul.mubr.bf16.gmra.mrb[0].mxu0 %v1029
        %v4291 = vpop.f32.mrb[0].mxu0
        %v4292 = vadd.f32 %v1546, %v4291
        %v4293 = vpop.f32.mrb[0].mxu0
        %v4294 = vadd.f32 %v1550, %v4293
        %v4295 = vpop.f32.mrb[0].mxu0
        %v4296 = vadd.f32 %v1546, %v4295
        %v4297 = vpop.f32.mrb[0].mxu0
        %v4298 = vadd.f32 %v1550, %v4297
        %4299 = vmatprep.mubr.bf16.mxu0 %v1038
        %4300 = vmatmul.mubr.bf16.gmra.mrb[0].mxu0 %v1037
        %v4301 = vpop.f32.mrb[0].mxu0
        %v4302 = vadd.f32 %v1546, %v4301
        %v4303 = vpop.f32.mrb[0].mxu0
        %v4304 = vadd.f32 %v1550, %v4303
        %v4305 = vpop.f32.mrb[0].mxu0
        %v4306 = vadd.f32 %v1546, %v4305
        %v4307 = vpop.f32.mrb[0].mxu0
        %v4308 = vadd.f32 %v1550, %v4307
        %4309 = vmatprep.mubr.bf16.mxu0 %v1046
        %4310 = vmatmul.mubr.bf16.gmra.mrb[0].mxu0 %v1045
        %v4311 = vpop.f32.mrb[0].mxu0
        %v4312 = vadd.f32 %v1546, %v4311
        %v4313 = vpop.f32.mrb[0].mxu0
        %v4314 = vadd.f32 %v1550, %v4313
        %v4315 = vpop.f32.mrb[0].mxu0
        %v4316 = vadd.f32 %v1546, %v4315
        %v4317 = vpop.f32.mrb[0].mxu0
        %v4318 = vadd.f32 %v1550, %v4317
        %4319 = vmatprep.mubr.bf16.mxu0 %v1054
        %4320 = vmatmul.mubr.bf16.gmra.mrb[0].mxu0 %v1053
        %v4321 = vpop.f32.mrb[0].mxu0
        %v4322 = vadd.f32 %v1546, %v4321
        %v4323 = vpop.f32.mrb[0].mxu0
        %v4324 = vadd.f32 %v1550, %v4323
        %v4325 = vpop.f32.mrb[0].mxu0
        %v4326 = vadd.f32 %v1546, %v4325
        %v4327 = vpop.f32.mrb[0].mxu0
        %v4328 = vadd.f32 %v1550, %v4327
        %4329 = vmatprep.mubr.bf16.mxu0 %v1062
        %4330 = vmatmul.mubr.bf16.gmra.mrb[0].mxu0 %v1061
        %v4331 = vpop.f32.mrb[0].mxu0
        %v4332 = vadd.f32 %v1546, %v4331
        %v4333 = vpop.f32.mrb[0].mxu0
        %v4334 = vadd.f32 %v1550, %v4333
        %v4335 = vpop.f32.mrb[0].mxu0
        %v4336 = vadd.f32 %v1546, %v4335
        %v4337 = vpop.f32.mrb[0].mxu0
        %v4338 = vadd.f32 %v1550, %v4337
        %4339 = vmatprep.mubr.bf16.mxu0 %v1070
        %4340 = vmatmul.mubr.bf16.gmra.mrb[0].mxu0 %v1069
        %v4341 = vpop.f32.mrb[0].mxu0
        %v4342 = vadd.f32 %v1546, %v4341
        %v4343 = vpop.f32.mrb[0].mxu0
        %v4344 = vadd.f32 %v1550, %v4343
        %v4345 = vpop.f32.mrb[0].mxu0
        %v4346 = vadd.f32 %v1546, %v4345
        %v4347 = vpop.f32.mrb[0].mxu0
        %v4348 = vadd.f32 %v1550, %v4347
        %4349 = vmatprep.mubr.bf16.mxu0 %v1078
        %4350 = vmatmul.mubr.bf16.gmra.mrb[0].mxu0 %v1077
        %v4351 = vpop.f32.mrb[0].mxu0
        %v4352 = vadd.f32 %v1546, %v4351
        %v4353 = vpop.f32.mrb[0].mxu0
        %v4354 = vadd.f32 %v1550, %v4353
        %v4355 = vpop.f32.mrb[0].mxu0
        %v4356 = vadd.f32 %v1546, %v4355
        %v4357 = vpop.f32.mrb[0].mxu0
        %v4358 = vadd.f32 %v1550, %v4357
        %4359 = vmatprep.mubr.bf16.mxu0 %v1086
        %4360 = vmatmul.mubr.bf16.gmra.mrb[0].mxu0 %v1085
        %v4361 = vpop.f32.mrb[0].mxu0
        %v4362 = vadd.f32 %v1546, %v4361
        %v4363 = vpop.f32.mrb[0].mxu0
        %v4364 = vadd.f32 %v1550, %v4363
        %v4365 = vpop.f32.mrb[0].mxu0
        %v4366 = vadd.f32 %v1546, %v4365
        %v4367 = vpop.f32.mrb[0].mxu0
        %v4368 = vadd.f32 %v1550, %v4367
        %4369 = vmatprep.mubr.bf16.mxu0 %v1094
        %4370 = vmatmul.mubr.bf16.gmra.mrb[0].mxu0 %v1093
        %v4371 = vpop.f32.mrb[0].mxu0
        %v4372 = vadd.f32 %v1546, %v4371
        %v4373 = vpop.f32.mrb[0].mxu0
        %v4374 = vadd.f32 %v1550, %v4373
        %v4375 = vpop.f32.mrb[0].mxu0
        %v4376 = vadd.f32 %v1546, %v4375
        %v4377 = vpop.f32.mrb[0].mxu0
        %v4378 = vadd.f32 %v1550, %v4377
        %4379 = vmatprep.mubr.bf16.mxu0 %v1102
        %4380 = vmatmul.mubr.bf16.gmra.mrb[0].mxu0 %v1101
        %v4381 = vpop.f32.mrb[0].mxu0
        %v4382 = vadd.f32 %v1546, %v4381
        %v4383 = vpop.f32.mrb[0].mxu0
        %v4384 = vadd.f32 %v1550, %v4383
        %v4385 = vpop.f32.mrb[0].mxu0
        %v4386 = vadd.f32 %v1546, %v4385
        %v4387 = vpop.f32.mrb[0].mxu0
        %v4388 = vadd.f32 %v1550, %v4387
        %4389 = vmatprep.mubr.bf16.mxu0 %v1110
        %4390 = vmatmul.mubr.bf16.gmra.mrb[0].mxu0 %v1109
        %v4391 = vpop.f32.mrb[0].mxu0
        %v4392 = vadd.f32 %v1546, %v4391
        %v4393 = vpop.f32.mrb[0].mxu0
        %v4394 = vadd.f32 %v1550, %v4393
        %v4395 = vpop.f32.mrb[0].mxu0
        %v4396 = vadd.f32 %v1546, %v4395
        %v4397 = vpop.f32.mrb[0].mxu0
        %v4398 = vadd.f32 %v1550, %v4397
        %4399 = vmatprep.mubr.bf16.mxu0 %v1118
        %4400 = vmatmul.mubr.bf16.gmra.mrb[0].mxu0 %v1117
        %v4401 = vpop.f32.mrb[0].mxu0
        %v4402 = vadd.f32 %v1546, %v4401
        %v4403 = vpop.f32.mrb[0].mxu0
        %v4404 = vadd.f32 %v1550, %v4403
        %v4405 = vpop.f32.mrb[0].mxu0
        %v4406 = vadd.f32 %v1546, %v4405
        %v4407 = vpop.f32.mrb[0].mxu0
        %v4408 = vadd.f32 %v1550, %v4407
        %4409 = vmatprep.mubr.bf16.mxu0 %v1126
        %4410 = vmatmul.mubr.bf16.gmra.mrb[0].mxu0 %v1125
        %v4411 = vpop.f32.mrb[0].mxu0
        %v4412 = vadd.f32 %v1546, %v4411
        %v4413 = vpop.f32.mrb[0].mxu0
        %v4414 = vadd.f32 %v1550, %v4413
        %v4415 = vpop.f32.mrb[0].mxu0
        %v4416 = vadd.f32 %v1546, %v4415
        %v4417 = vpop.f32.mrb[0].mxu0
        %v4418 = vadd.f32 %v1550, %v4417
        %4419 = vmatprep.mubr.bf16.mxu0 %v1134
        %4420 = vmatmul.mubr.bf16.gmra.mrb[0].mxu0 %v1133
        %v4421 = vpop.f32.mrb[0].mxu0
        %v4422 = vadd.f32 %v1546, %v4421
        %v4423 = vpop.f32.mrb[0].mxu0
        %v4424 = vadd.f32 %v1550, %v4423
        %v4425 = vpop.f32.mrb[0].mxu0
        %v4426 = vadd.f32 %v1546, %v4425
        %v4427 = vpop.f32.mrb[0].mxu0
        %v4428 = vadd.f32 %v1550, %v4427
        %4429 = vmatprep.mubr.bf16.mxu0 %v1142
        %4430 = vmatmul.mubr.bf16.gmra.mrb[0].mxu0 %v1141
        %v4431 = vpop.f32.mrb[0].mxu0
        %v4432 = vadd.f32 %v1546, %v4431
        %v4433 = vpop.f32.mrb[0].mxu0
        %v4434 = vadd.f32 %v1550, %v4433
        %v4435 = vpop.f32.mrb[0].mxu0
        %v4436 = vadd.f32 %v1546, %v4435
        %v4437 = vpop.f32.mrb[0].mxu0
        %v4438 = vadd.f32 %v1550, %v4437
        %4439 = vmatprep.mubr.bf16.mxu0 %v1150
        %4440 = vmatmul.mubr.bf16.gmra.mrb[0].mxu0 %v1149
        %v4441 = vpop.f32.mrb[0].mxu0
        %v4442 = vadd.f32 %v1546, %v4441
        %v4443 = vpop.f32.mrb[0].mxu0
        %v4444 = vadd.f32 %v1550, %v4443
        %v4445 = vpop.f32.mrb[0].mxu0
        %v4446 = vadd.f32 %v1546, %v4445
        %v4447 = vpop.f32.mrb[0].mxu0
        %v4448 = vadd.f32 %v1550, %v4447
        %4449 = vmatprep.mubr.bf16.mxu0 %v1158
        %4450 = vmatmul.mubr.bf16.gmra.mrb[0].mxu0 %v1157
        %v4451 = vpop.f32.mrb[0].mxu0
        %v4452 = vadd.f32 %v1546, %v4451
        %v4453 = vpop.f32.mrb[0].mxu0
        %v4454 = vadd.f32 %v1550, %v4453
        %v4455 = vpop.f32.mrb[0].mxu0
        %v4456 = vadd.f32 %v1546, %v4455
        %v4457 = vpop.f32.mrb[0].mxu0
        %v4458 = vadd.f32 %v1550, %v4457
        %4459 = vmatprep.mubr.bf16.mxu0 %v1166
        %4460 = vmatmul.mubr.bf16.gmra.mrb[0].mxu0 %v1165
        %v4461 = vpop.f32.mrb[0].mxu0
        %v4462 = vadd.f32 %v1546, %v4461
        %v4463 = vpop.f32.mrb[0].mxu0
        %v4464 = vadd.f32 %v1550, %v4463
        %v4465 = vpop.f32.mrb[0].mxu0
        %v4466 = vadd.f32 %v1546, %v4465
        %v4467 = vpop.f32.mrb[0].mxu0
        %v4468 = vadd.f32 %v1550, %v4467
        %4469 = vmatprep.mubr.bf16.mxu0 %v1174
        %4470 = vmatmul.mubr.bf16.gmra.mrb[0].mxu0 %v1173
        %v4471 = vpop.f32.mrb[0].mxu0
        %v4472 = vadd.f32 %v1546, %v4471
        %v4473 = vpop.f32.mrb[0].mxu0
        %v4474 = vadd.f32 %v1550, %v4473
        %v4475 = vpop.f32.mrb[0].mxu0
        %v4476 = vadd.f32 %v1546, %v4475
        %v4477 = vpop.f32.mrb[0].mxu0
        %v4478 = vadd.f32 %v1550, %v4477
        %4479 = vmatprep.mubr.bf16.mxu0 %v1182
        %4480 = vmatmul.mubr.bf16.gmra.mrb[0].mxu0 %v1181
        %v4481 = vpop.f32.mrb[0].mxu0
        %v4482 = vadd.f32 %v1546, %v4481
        %v4483 = vpop.f32.mrb[0].mxu0
        %v4484 = vadd.f32 %v1550, %v4483
        %v4485 = vpop.f32.mrb[0].mxu0
        %v4486 = vadd.f32 %v1546, %v4485
        %v4487 = vpop.f32.mrb[0].mxu0
        %v4488 = vadd.f32 %v1550, %v4487
        %4489 = vmatprep.mubr.bf16.mxu0 %v1190
        %4490 = vmatmul.mubr.bf16.gmra.mrb[0].mxu0 %v1189
        %v4491 = vpop.f32.mrb[0].mxu0
        %v4492 = vadd.f32 %v1546, %v4491
        %v4493 = vpop.f32.mrb[0].mxu0
        %v4494 = vadd.f32 %v1550, %v4493
        %v4495 = vpop.f32.mrb[0].mxu0
        %v4496 = vadd.f32 %v1546, %v4495
        %v4497 = vpop.f32.mrb[0].mxu0
        %v4498 = vadd.f32 %v1550, %v4497
        %4499 = vmatprep.mubr.bf16.mxu0 %v1198
        %4500 = vmatmul.mubr.bf16.gmra.mrb[0].mxu0 %v1197
        %v4501 = vpop.f32.mrb[0].mxu0
        %v4502 = vadd.f32 %v1546, %v4501
        %v4503 = vpop.f32.mrb[0].mxu0
        %v4504 = vadd.f32 %v1550, %v4503
        %v4505 = vpop.f32.mrb[0].mxu0
        %v4506 = vadd.f32 %v1546, %v4505
        %v4507 = vpop.f32.mrb[0].mxu0
        %v4508 = vadd.f32 %v1550, %v4507
        %4509 = vmatprep.mubr.bf16.mxu0 %v1206
        %4510 = vmatmul.mubr.bf16.gmra.mrb[0].mxu0 %v1205
        %v4511 = vpop.f32.mrb[0].mxu0
        %v4512 = vadd.f32 %v1546, %v4511
        %v4513 = vpop.f32.mrb[0].mxu0
        %v4514 = vadd.f32 %v1550, %v4513
        %v4515 = vpop.f32.mrb[0].mxu0
        %v4516 = vadd.f32 %v1546, %v4515
        %v4517 = vpop.f32.mrb[0].mxu0
        %v4518 = vadd.f32 %v1550, %v4517
        %4519 = vmatprep.mubr.bf16.mxu0 %v1214
        %4520 = vmatmul.mubr.bf16.gmra.mrb[0].mxu0 %v1213
        %v4521 = vpop.f32.mrb[0].mxu0
        %v4522 = vadd.f32 %v1546, %v4521
        %v4523 = vpop.f32.mrb[0].mxu0
        %v4524 = vadd.f32 %v1550, %v4523
        %v4525 = vpop.f32.mrb[0].mxu0
        %v4526 = vadd.f32 %v1546, %v4525
        %v4527 = vpop.f32.mrb[0].mxu0
        %v4528 = vadd.f32 %v1550, %v4527
        %4529 = vmatprep.mubr.bf16.mxu0 %v1222
        %4530 = vmatmul.mubr.bf16.gmra.mrb[0].mxu0 %v1221
        %v4531 = vpop.f32.mrb[0].mxu0
        %v4532 = vadd.f32 %v1546, %v4531
        %v4533 = vpop.f32.mrb[0].mxu0
        %v4534 = vadd.f32 %v1550, %v4533
        %v4535 = vpop.f32.mrb[0].mxu0
        %v4536 = vadd.f32 %v1546, %v4535
        %v4537 = vpop.f32.mrb[0].mxu0
        %v4538 = vadd.f32 %v1550, %v4537
        %4539 = vmatprep.mubr.bf16.mxu0 %v1230
        %4540 = vmatmul.mubr.bf16.gmra.mrb[0].mxu0 %v1229
        %v4541 = vpop.f32.mrb[0].mxu0
        %v4542 = vadd.f32 %v1546, %v4541
        %v4543 = vpop.f32.mrb[0].mxu0
        %v4544 = vadd.f32 %v1550, %v4543
        %v4545 = vpop.f32.mrb[0].mxu0
        %v4546 = vadd.f32 %v1546, %v4545
        %v4547 = vpop.f32.mrb[0].mxu0
        %v4548 = vadd.f32 %v1550, %v4547
        %4549 = vmatprep.mubr.bf16.mxu0 %v1238
        %4550 = vmatmul.mubr.bf16.gmra.mrb[0].mxu0 %v1237
        %v4551 = vpop.f32.mrb[0].mxu0
        %v4552 = vadd.f32 %v1546, %v4551
        %v4553 = vpop.f32.mrb[0].mxu0
        %v4554 = vadd.f32 %v1550, %v4553
        %v4555 = vpop.f32.mrb[0].mxu0
        %v4556 = vadd.f32 %v1546, %v4555
        %v4557 = vpop.f32.mrb[0].mxu0
        %v4558 = vadd.f32 %v1550, %v4557
        %4559 = vmatprep.mubr.bf16.mxu0 %v1246
        %4560 = vmatmul.mubr.bf16.gmra.mrb[0].mxu0 %v1245
        %v4561 = vpop.f32.mrb[0].mxu0
        %v4562 = vadd.f32 %v1546, %v4561
        %v4563 = vpop.f32.mrb[0].mxu0
        %v4564 = vadd.f32 %v1550, %v4563
        %v4565 = vpop.f32.mrb[0].mxu0
        %v4566 = vadd.f32 %v1546, %v4565
        %v4567 = vpop.f32.mrb[0].mxu0
        %v4568 = vadd.f32 %v1550, %v4567
        %4569 = vmatprep.mubr.bf16.mxu0 %v1254
        %4570 = vmatmul.mubr.bf16.gmra.mrb[0].mxu0 %v1253
        %v4571 = vpop.f32.mrb[0].mxu0
        %v4572 = vadd.f32 %v1546, %v4571
        %v4573 = vpop.f32.mrb[0].mxu0
        %v4574 = vadd.f32 %v1550, %v4573
        %v4575 = vpop.f32.mrb[0].mxu0
        %v4576 = vadd.f32 %v1546, %v4575
        %v4577 = vpop.f32.mrb[0].mxu0
        %v4578 = vadd.f32 %v1550, %v4577
        %4579 = vmatprep.mubr.bf16.mxu0 %v1262
        %4580 = vmatmul.mubr.bf16.gmra.mrb[0].mxu0 %v1261
        %v4581 = vpop.f32.mrb[0].mxu0
        %v4582 = vadd.f32 %v1546, %v4581
        %v4583 = vpop.f32.mrb[0].mxu0
        %v4584 = vadd.f32 %v1550, %v4583
        %v4585 = vpop.f32.mrb[0].mxu0
        %v4586 = vadd.f32 %v1546, %v4585
        %v4587 = vpop.f32.mrb[0].mxu0
        %v4588 = vadd.f32 %v1550, %v4587
        %4589 = vmatprep.mubr.bf16.mxu0 %v1270
        %4590 = vmatmul.mubr.bf16.gmra.mrb[0].mxu0 %v1269
        %v4591 = vpop.f32.mrb[0].mxu0
        %v4592 = vadd.f32 %v1546, %v4591
        %v4593 = vpop.f32.mrb[0].mxu0
        %v4594 = vadd.f32 %v1550, %v4593
        %v4595 = vpop.f32.mrb[0].mxu0
        %v4596 = vadd.f32 %v1546, %v4595
        %v4597 = vpop.f32.mrb[0].mxu0
        %v4598 = vadd.f32 %v1550, %v4597
        %4599 = vdwg.mxu0
        %4600 = vmatprep.subr.bf16.mxu0 %v2390
        %4601 = vmatpush1.bf16.msra.mxu0 %v2389
        %4602 = vmatprep.subr.bf16.mxu0 %v2394
        %4603 = vmatpush1.bf16.msra.mxu0 %v2393
        %4604 = vmatprep.subr.bf16.mxu0 %v2398
        %4605 = vmatpush1.bf16.msra.mxu0 %v2397
        %4606 = vmatprep.subr.bf16.mxu0 %v2402
        %4607 = vmatpush1.bf16.msra.mxu0 %v2401
        %4608 = vmatprep.subr.bf16.mxu0 %v2406
        %4609 = vmatpush1.bf16.msra.mxu0 %v2405
        %4610 = vmatprep.subr.bf16.mxu0 %v2410
        %4611 = vmatpush1.bf16.msra.mxu0 %v2409
        %4612 = vmatprep.subr.bf16.mxu0 %v2414
        %4613 = vmatpush1.bf16.msra.mxu0 %v2413
        %4614 = vmatprep.subr.bf16.mxu0 %v2418
        %4615 = vmatpush1.bf16.msra.mxu0 %v2417
        %4616 = vmatprep.subr.bf16.mxu0 %v2422
        %4617 = vmatpush1.bf16.msra.mxu0 %v2421
        %4618 = vmatprep.subr.bf16.mxu0 %v2426
        %4619 = vmatpush1.bf16.msra.mxu0 %v2425
        %4620 = vmatprep.subr.bf16.mxu0 %v2430
        %4621 = vmatpush1.bf16.msra.mxu0 %v2429
        %4622 = vmatprep.subr.bf16.mxu0 %v2434
        %4623 = vmatpush1.bf16.msra.mxu0 %v2433
        %4624 = vmatprep.subr.bf16.mxu0 %v2438
        %4625 = vmatpush1.bf16.msra.mxu0 %v2437
        %4626 = vmatprep.subr.bf16.mxu0 %v2442
        %4627 = vmatpush1.bf16.msra.mxu0 %v2441
        %4628 = vmatprep.subr.bf16.mxu0 %v2446
        %4629 = vmatpush1.bf16.msra.mxu0 %v2445
        %4630 = vmatprep.subr.bf16.mxu0 %v2450
        %4631 = vmatpush1.bf16.msra.mxu0 %v2449
        %4632 = vmatprep.mubr.bf16.mxu0 %v1024
        %4633 = vmatmul.mubr.bf16.gmra.mrb[0].mxu0 %v1023
        %v4634 = vpop.f32.mrb[0].mxu0
        %v4635 = vadd.f32 %v4282, %v4634
        %v4636 = vpop.f32.mrb[0].mxu0
        %v4637 = vadd.f32 %v4284, %v4636
        %v4638 = vpop.f32.mrb[0].mxu0
        %v4639 = vadd.f32 %v4286, %v4638
        %v4640 = vpop.f32.mrb[0].mxu0
        %v4641 = vadd.f32 %v4288, %v4640
        %4642 = vmatprep.mubr.bf16.mxu0 %v1032
        %4643 = vmatmul.mubr.bf16.gmra.mrb[0].mxu0 %v1031
        %v4644 = vpop.f32.mrb[0].mxu0
        %v4645 = vadd.f32 %v4292, %v4644
        %v4646 = vpop.f32.mrb[0].mxu0
        %v4647 = vadd.f32 %v4294, %v4646
        %v4648 = vpop.f32.mrb[0].mxu0
        %v4649 = vadd.f32 %v4296, %v4648
        %v4650 = vpop.f32.mrb[0].mxu0
        %v4651 = vadd.f32 %v4298, %v4650
        %4652 = vmatprep.mubr.bf16.mxu0 %v1040
        %4653 = vmatmul.mubr.bf16.gmra.mrb[0].mxu0 %v1039
        %v4654 = vpop.f32.mrb[0].mxu0
        %v4655 = vadd.f32 %v4302, %v4654
        %v4656 = vpop.f32.mrb[0].mxu0
        %v4657 = vadd.f32 %v4304, %v4656
        %v4658 = vpop.f32.mrb[0].mxu0
        %v4659 = vadd.f32 %v4306, %v4658
        %v4660 = vpop.f32.mrb[0].mxu0
        %v4661 = vadd.f32 %v4308, %v4660
        %4662 = vmatprep.mubr.bf16.mxu0 %v1048
        %4663 = vmatmul.mubr.bf16.gmra.mrb[0].mxu0 %v1047
        %v4664 = vpop.f32.mrb[0].mxu0
        %v4665 = vadd.f32 %v4312, %v4664
        %v4666 = vpop.f32.mrb[0].mxu0
        %v4667 = vadd.f32 %v4314, %v4666
        %v4668 = vpop.f32.mrb[0].mxu0
        %v4669 = vadd.f32 %v4316, %v4668
        %v4670 = vpop.f32.mrb[0].mxu0
        %v4671 = vadd.f32 %v4318, %v4670
        %4672 = vmatprep.mubr.bf16.mxu0 %v1056
        %4673 = vmatmul.mubr.bf16.gmra.mrb[0].mxu0 %v1055
        %v4674 = vpop.f32.mrb[0].mxu0
        %v4675 = vadd.f32 %v4322, %v4674
        %v4676 = vpop.f32.mrb[0].mxu0
        %v4677 = vadd.f32 %v4324, %v4676
        %v4678 = vpop.f32.mrb[0].mxu0
        %v4679 = vadd.f32 %v4326, %v4678
        %v4680 = vpop.f32.mrb[0].mxu0
        %v4681 = vadd.f32 %v4328, %v4680
        %4682 = vmatprep.mubr.bf16.mxu0 %v1064
        %4683 = vmatmul.mubr.bf16.gmra.mrb[0].mxu0 %v1063
        %v4684 = vpop.f32.mrb[0].mxu0
        %v4685 = vadd.f32 %v4332, %v4684
        %v4686 = vpop.f32.mrb[0].mxu0
        %v4687 = vadd.f32 %v4334, %v4686
        %v4688 = vpop.f32.mrb[0].mxu0
        %v4689 = vadd.f32 %v4336, %v4688
        %v4690 = vpop.f32.mrb[0].mxu0
        %v4691 = vadd.f32 %v4338, %v4690
        %4692 = vmatprep.mubr.bf16.mxu0 %v1072
        %4693 = vmatmul.mubr.bf16.gmra.mrb[0].mxu0 %v1071
        %v4694 = vpop.f32.mrb[0].mxu0
        %v4695 = vadd.f32 %v4342, %v4694
        %v4696 = vpop.f32.mrb[0].mxu0
        %v4697 = vadd.f32 %v4344, %v4696
        %v4698 = vpop.f32.mrb[0].mxu0
        %v4699 = vadd.f32 %v4346, %v4698
        %v4700 = vpop.f32.mrb[0].mxu0
        %v4701 = vadd.f32 %v4348, %v4700
        %4702 = vmatprep.mubr.bf16.mxu0 %v1080
        %4703 = vmatmul.mubr.bf16.gmra.mrb[0].mxu0 %v1079
        %v4704 = vpop.f32.mrb[0].mxu0
        %v4705 = vadd.f32 %v4352, %v4704
        %v4706 = vpop.f32.mrb[0].mxu0
        %v4707 = vadd.f32 %v4354, %v4706
        %v4708 = vpop.f32.mrb[0].mxu0
        %v4709 = vadd.f32 %v4356, %v4708
        %v4710 = vpop.f32.mrb[0].mxu0
        %v4711 = vadd.f32 %v4358, %v4710
        %4712 = vmatprep.mubr.bf16.mxu0 %v1088
        %4713 = vmatmul.mubr.bf16.gmra.mrb[0].mxu0 %v1087
        %v4714 = vpop.f32.mrb[0].mxu0
        %v4715 = vadd.f32 %v4362, %v4714
        %v4716 = vpop.f32.mrb[0].mxu0
        %v4717 = vadd.f32 %v4364, %v4716
        %v4718 = vpop.f32.mrb[0].mxu0
        %v4719 = vadd.f32 %v4366, %v4718
        %v4720 = vpop.f32.mrb[0].mxu0
        %v4721 = vadd.f32 %v4368, %v4720
        %4722 = vmatprep.mubr.bf16.mxu0 %v1096
        %4723 = vmatmul.mubr.bf16.gmra.mrb[0].mxu0 %v1095
        %v4724 = vpop.f32.mrb[0].mxu0
        %v4725 = vadd.f32 %v4372, %v4724
        %v4726 = vpop.f32.mrb[0].mxu0
        %v4727 = vadd.f32 %v4374, %v4726
        %v4728 = vpop.f32.mrb[0].mxu0
        %v4729 = vadd.f32 %v4376, %v4728
        %v4730 = vpop.f32.mrb[0].mxu0
        %v4731 = vadd.f32 %v4378, %v4730
        %4732 = vmatprep.mubr.bf16.mxu0 %v1104
        %4733 = vmatmul.mubr.bf16.gmra.mrb[0].mxu0 %v1103
        %v4734 = vpop.f32.mrb[0].mxu0
        %v4735 = vadd.f32 %v4382, %v4734
        %v4736 = vpop.f32.mrb[0].mxu0
        %v4737 = vadd.f32 %v4384, %v4736
        %v4738 = vpop.f32.mrb[0].mxu0
        %v4739 = vadd.f32 %v4386, %v4738
        %v4740 = vpop.f32.mrb[0].mxu0
        %v4741 = vadd.f32 %v4388, %v4740
        %4742 = vmatprep.mubr.bf16.mxu0 %v1112
        %4743 = vmatmul.mubr.bf16.gmra.mrb[0].mxu0 %v1111
        %v4744 = vpop.f32.mrb[0].mxu0
        %v4745 = vadd.f32 %v4392, %v4744
        %v4746 = vpop.f32.mrb[0].mxu0
        %v4747 = vadd.f32 %v4394, %v4746
        %v4748 = vpop.f32.mrb[0].mxu0
        %v4749 = vadd.f32 %v4396, %v4748
        %v4750 = vpop.f32.mrb[0].mxu0
        %v4751 = vadd.f32 %v4398, %v4750
        %4752 = vmatprep.mubr.bf16.mxu0 %v1120
        %4753 = vmatmul.mubr.bf16.gmra.mrb[0].mxu0 %v1119
        %v4754 = vpop.f32.mrb[0].mxu0
        %v4755 = vadd.f32 %v4402, %v4754
        %v4756 = vpop.f32.mrb[0].mxu0
        %v4757 = vadd.f32 %v4404, %v4756
        %v4758 = vpop.f32.mrb[0].mxu0
        %v4759 = vadd.f32 %v4406, %v4758
        %v4760 = vpop.f32.mrb[0].mxu0
        %v4761 = vadd.f32 %v4408, %v4760
        %4762 = vmatprep.mubr.bf16.mxu0 %v1128
        %4763 = vmatmul.mubr.bf16.gmra.mrb[0].mxu0 %v1127
        %v4764 = vpop.f32.mrb[0].mxu0
        %v4765 = vadd.f32 %v4412, %v4764
        %v4766 = vpop.f32.mrb[0].mxu0
        %v4767 = vadd.f32 %v4414, %v4766
        %v4768 = vpop.f32.mrb[0].mxu0
        %v4769 = vadd.f32 %v4416, %v4768
        %v4770 = vpop.f32.mrb[0].mxu0
        %v4771 = vadd.f32 %v4418, %v4770
        %4772 = vmatprep.mubr.bf16.mxu0 %v1136
        %4773 = vmatmul.mubr.bf16.gmra.mrb[0].mxu0 %v1135
        %v4774 = vpop.f32.mrb[0].mxu0
        %v4775 = vadd.f32 %v4422, %v4774
        %v4776 = vpop.f32.mrb[0].mxu0
        %v4777 = vadd.f32 %v4424, %v4776
        %v4778 = vpop.f32.mrb[0].mxu0
        %v4779 = vadd.f32 %v4426, %v4778
        %v4780 = vpop.f32.mrb[0].mxu0
        %v4781 = vadd.f32 %v4428, %v4780
        %4782 = vmatprep.mubr.bf16.mxu0 %v1144
        %4783 = vmatmul.mubr.bf16.gmra.mrb[0].mxu0 %v1143
        %v4784 = vpop.f32.mrb[0].mxu0
        %v4785 = vadd.f32 %v4432, %v4784
        %v4786 = vpop.f32.mrb[0].mxu0
        %v4787 = vadd.f32 %v4434, %v4786
        %v4788 = vpop.f32.mrb[0].mxu0
        %v4789 = vadd.f32 %v4436, %v4788
        %v4790 = vpop.f32.mrb[0].mxu0
        %v4791 = vadd.f32 %v4438, %v4790
        %4792 = vmatprep.mubr.bf16.mxu0 %v1152
        %4793 = vmatmul.mubr.bf16.gmra.mrb[0].mxu0 %v1151
        %v4794 = vpop.f32.mrb[0].mxu0
        %v4795 = vadd.f32 %v4442, %v4794
        %v4796 = vpop.f32.mrb[0].mxu0
        %v4797 = vadd.f32 %v4444, %v4796
        %v4798 = vpop.f32.mrb[0].mxu0
        %v4799 = vadd.f32 %v4446, %v4798
        %v4800 = vpop.f32.mrb[0].mxu0
        %v4801 = vadd.f32 %v4448, %v4800
        %4802 = vmatprep.mubr.bf16.mxu0 %v1160
        %4803 = vmatmul.mubr.bf16.gmra.mrb[0].mxu0 %v1159
        %v4804 = vpop.f32.mrb[0].mxu0
        %v4805 = vadd.f32 %v4452, %v4804
        %v4806 = vpop.f32.mrb[0].mxu0
        %v4807 = vadd.f32 %v4454, %v4806
        %v4808 = vpop.f32.mrb[0].mxu0
        %v4809 = vadd.f32 %v4456, %v4808
        %v4810 = vpop.f32.mrb[0].mxu0
        %v4811 = vadd.f32 %v4458, %v4810
        %4812 = vmatprep.mubr.bf16.mxu0 %v1168
        %4813 = vmatmul.mubr.bf16.gmra.mrb[0].mxu0 %v1167
        %v4814 = vpop.f32.mrb[0].mxu0
        %v4815 = vadd.f32 %v4462, %v4814
        %v4816 = vpop.f32.mrb[0].mxu0
        %v4817 = vadd.f32 %v4464, %v4816
        %v4818 = vpop.f32.mrb[0].mxu0
        %v4819 = vadd.f32 %v4466, %v4818
        %v4820 = vpop.f32.mrb[0].mxu0
        %v4821 = vadd.f32 %v4468, %v4820
        %4822 = vmatprep.mubr.bf16.mxu0 %v1176
        %4823 = vmatmul.mubr.bf16.gmra.mrb[0].mxu0 %v1175
        %v4824 = vpop.f32.mrb[0].mxu0
        %v4825 = vadd.f32 %v4472, %v4824
        %v4826 = vpop.f32.mrb[0].mxu0
        %v4827 = vadd.f32 %v4474, %v4826
        %v4828 = vpop.f32.mrb[0].mxu0
        %v4829 = vadd.f32 %v4476, %v4828
        %v4830 = vpop.f32.mrb[0].mxu0
        %v4831 = vadd.f32 %v4478, %v4830
        %4832 = vmatprep.mubr.bf16.mxu0 %v1184
        %4833 = vmatmul.mubr.bf16.gmra.mrb[0].mxu0 %v1183
        %v4834 = vpop.f32.mrb[0].mxu0
        %v4835 = vadd.f32 %v4482, %v4834
        %v4836 = vpop.f32.mrb[0].mxu0
        %v4837 = vadd.f32 %v4484, %v4836
        %v4838 = vpop.f32.mrb[0].mxu0
        %v4839 = vadd.f32 %v4486, %v4838
        %v4840 = vpop.f32.mrb[0].mxu0
        %v4841 = vadd.f32 %v4488, %v4840
        %4842 = vmatprep.mubr.bf16.mxu0 %v1192
        %4843 = vmatmul.mubr.bf16.gmra.mrb[0].mxu0 %v1191
        %v4844 = vpop.f32.mrb[0].mxu0
        %v4845 = vadd.f32 %v4492, %v4844
        %v4846 = vpop.f32.mrb[0].mxu0
        %v4847 = vadd.f32 %v4494, %v4846
        %v4848 = vpop.f32.mrb[0].mxu0
        %v4849 = vadd.f32 %v4496, %v4848
        %v4850 = vpop.f32.mrb[0].mxu0
        %v4851 = vadd.f32 %v4498, %v4850
        %4852 = vmatprep.mubr.bf16.mxu0 %v1200
        %4853 = vmatmul.mubr.bf16.gmra.mrb[0].mxu0 %v1199
        %v4854 = vpop.f32.mrb[0].mxu0
        %v4855 = vadd.f32 %v4502, %v4854
        %v4856 = vpop.f32.mrb[0].mxu0
        %v4857 = vadd.f32 %v4504, %v4856
        %v4858 = vpop.f32.mrb[0].mxu0
        %v4859 = vadd.f32 %v4506, %v4858
        %v4860 = vpop.f32.mrb[0].mxu0
        %v4861 = vadd.f32 %v4508, %v4860
        %4862 = vmatprep.mubr.bf16.mxu0 %v1208
        %4863 = vmatmul.mubr.bf16.gmra.mrb[0].mxu0 %v1207
        %v4864 = vpop.f32.mrb[0].mxu0
        %v4865 = vadd.f32 %v4512, %v4864
        %v4866 = vpop.f32.mrb[0].mxu0
        %v4867 = vadd.f32 %v4514, %v4866
        %v4868 = vpop.f32.mrb[0].mxu0
        %v4869 = vadd.f32 %v4516, %v4868
        %v4870 = vpop.f32.mrb[0].mxu0
        %v4871 = vadd.f32 %v4518, %v4870
        %4872 = vmatprep.mubr.bf16.mxu0 %v1216
        %4873 = vmatmul.mubr.bf16.gmra.mrb[0].mxu0 %v1215
        %v4874 = vpop.f32.mrb[0].mxu0
        %v4875 = vadd.f32 %v4522, %v4874
        %v4876 = vpop.f32.mrb[0].mxu0
        %v4877 = vadd.f32 %v4524, %v4876
        %v4878 = vpop.f32.mrb[0].mxu0
        %v4879 = vadd.f32 %v4526, %v4878
        %v4880 = vpop.f32.mrb[0].mxu0
        %v4881 = vadd.f32 %v4528, %v4880
        %4882 = vmatprep.mubr.bf16.mxu0 %v1224
        %4883 = vmatmul.mubr.bf16.gmra.mrb[0].mxu0 %v1223
        %v4884 = vpop.f32.mrb[0].mxu0
        %v4885 = vadd.f32 %v4532, %v4884
        %v4886 = vpop.f32.mrb[0].mxu0
        %v4887 = vadd.f32 %v4534, %v4886
        %v4888 = vpop.f32.mrb[0].mxu0
        %v4889 = vadd.f32 %v4536, %v4888
        %v4890 = vpop.f32.mrb[0].mxu0
        %v4891 = vadd.f32 %v4538, %v4890
        %4892 = vmatprep.mubr.bf16.mxu0 %v1232
        %4893 = vmatmul.mubr.bf16.gmra.mrb[0].mxu0 %v1231
        %v4894 = vpop.f32.mrb[0].mxu0
        %v4895 = vadd.f32 %v4542, %v4894
        %v4896 = vpop.f32.mrb[0].mxu0
        %v4897 = vadd.f32 %v4544, %v4896
        %v4898 = vpop.f32.mrb[0].mxu0
        %v4899 = vadd.f32 %v4546, %v4898
        %v4900 = vpop.f32.mrb[0].mxu0
        %v4901 = vadd.f32 %v4548, %v4900
        %4902 = vmatprep.mubr.bf16.mxu0 %v1240
        %4903 = vmatmul.mubr.bf16.gmra.mrb[0].mxu0 %v1239
        %v4904 = vpop.f32.mrb[0].mxu0
        %v4905 = vadd.f32 %v4552, %v4904
        %v4906 = vpop.f32.mrb[0].mxu0
        %v4907 = vadd.f32 %v4554, %v4906
        %v4908 = vpop.f32.mrb[0].mxu0
        %v4909 = vadd.f32 %v4556, %v4908
        %v4910 = vpop.f32.mrb[0].mxu0
        %v4911 = vadd.f32 %v4558, %v4910
        %4912 = vmatprep.mubr.bf16.mxu0 %v1248
        %4913 = vmatmul.mubr.bf16.gmra.mrb[0].mxu0 %v1247
        %v4914 = vpop.f32.mrb[0].mxu0
        %v4915 = vadd.f32 %v4562, %v4914
        %v4916 = vpop.f32.mrb[0].mxu0
        %v4917 = vadd.f32 %v4564, %v4916
        %v4918 = vpop.f32.mrb[0].mxu0
        %v4919 = vadd.f32 %v4566, %v4918
        %v4920 = vpop.f32.mrb[0].mxu0
        %v4921 = vadd.f32 %v4568, %v4920
        %4922 = vmatprep.mubr.bf16.mxu0 %v1256
        %4923 = vmatmul.mubr.bf16.gmra.mrb[0].mxu0 %v1255
        %v4924 = vpop.f32.mrb[0].mxu0
        %v4925 = vadd.f32 %v4572, %v4924
        %v4926 = vpop.f32.mrb[0].mxu0
        %v4927 = vadd.f32 %v4574, %v4926
        %v4928 = vpop.f32.mrb[0].mxu0
        %v4929 = vadd.f32 %v4576, %v4928
        %v4930 = vpop.f32.mrb[0].mxu0
        %v4931 = vadd.f32 %v4578, %v4930
        %4932 = vmatprep.mubr.bf16.mxu0 %v1264
        %4933 = vmatmul.mubr.bf16.gmra.mrb[0].mxu0 %v1263
        %v4934 = vpop.f32.mrb[0].mxu0
        %v4935 = vadd.f32 %v4582, %v4934
        %v4936 = vpop.f32.mrb[0].mxu0
        %v4937 = vadd.f32 %v4584, %v4936
        %v4938 = vpop.f32.mrb[0].mxu0
        %v4939 = vadd.f32 %v4586, %v4938
        %v4940 = vpop.f32.mrb[0].mxu0
        %v4941 = vadd.f32 %v4588, %v4940
        %4942 = vmatprep.mubr.bf16.mxu0 %v1272
        %4943 = vmatmul.mubr.bf16.gmra.mrb[0].mxu0 %v1271
        %v4944 = vpop.f32.mrb[0].mxu0
        %v4945 = vadd.f32 %v4592, %v4944
        %v4946 = vpop.f32.mrb[0].mxu0
        %v4947 = vadd.f32 %v4594, %v4946
        %v4948 = vpop.f32.mrb[0].mxu0
        %v4949 = vadd.f32 %v4596, %v4948
        %v4950 = vpop.f32.mrb[0].mxu0
        %v4951 = vadd.f32 %v4598, %v4950
        %4952 = vdwg.mxu0
        %4953 = vmatprep.subr.bf16.mxu0 %v2454
        %4954 = vmatpush1.bf16.msra.mxu0 %v2453
        %4955 = vmatprep.subr.bf16.mxu0 %v2458
        %4956 = vmatpush1.bf16.msra.mxu0 %v2457
        %4957 = vmatprep.subr.bf16.mxu0 %v2462
        %4958 = vmatpush1.bf16.msra.mxu0 %v2461
        %4959 = vmatprep.subr.bf16.mxu0 %v2466
        %4960 = vmatpush1.bf16.msra.mxu0 %v2465
        %4961 = vmatprep.subr.bf16.mxu0 %v2470
        %4962 = vmatpush1.bf16.msra.mxu0 %v2469
        %4963 = vmatprep.subr.bf16.mxu0 %v2474
        %4964 = vmatpush1.bf16.msra.mxu0 %v2473
        %4965 = vmatprep.subr.bf16.mxu0 %v2478
        %4966 = vmatpush1.bf16.msra.mxu0 %v2477
        %4967 = vmatprep.subr.bf16.mxu0 %v2482
        %4968 = vmatpush1.bf16.msra.mxu0 %v2481
        %4969 = vmatprep.subr.bf16.mxu0 %v2486
        %4970 = vmatpush1.bf16.msra.mxu0 %v2485
        %4971 = vmatprep.subr.bf16.mxu0 %v2490
        %4972 = vmatpush1.bf16.msra.mxu0 %v2489
        %4973 = vmatprep.subr.bf16.mxu0 %v2494
        %4974 = vmatpush1.bf16.msra.mxu0 %v2493
        %4975 = vmatprep.subr.bf16.mxu0 %v2498
        %4976 = vmatpush1.bf16.msra.mxu0 %v2497
        %4977 = vmatprep.subr.bf16.mxu0 %v2502
        %4978 = vmatpush1.bf16.msra.mxu0 %v2501
        %4979 = vmatprep.subr.bf16.mxu0 %v2506
        %4980 = vmatpush1.bf16.msra.mxu0 %v2505
        %4981 = vmatprep.subr.bf16.mxu0 %v2510
        %4982 = vmatpush1.bf16.msra.mxu0 %v2509
        %4983 = vmatprep.subr.bf16.mxu0 %v2514
        %4984 = vmatpush1.bf16.msra.mxu0 %v2513
        %4985 = vmatprep.mubr.bf16.mxu0 %v1026
        %4986 = vmatmul.mubr.bf16.gmra.mrb[0].mxu0 %v1025
        %v4987 = vpop.f32.mrb[0].mxu0
        %v4988 = vadd.f32 %v4635, %v4987
        %v4989 = vpop.f32.mrb[0].mxu0
        %v4990 = vadd.f32 %v4637, %v4989
        %v4991 = vpop.f32.mrb[0].mxu0
        %v4992 = vadd.f32 %v4639, %v4991
        %v4993 = vpop.f32.mrb[0].mxu0
        %v4994 = vadd.f32 %v4641, %v4993
        %4995 = vmatprep.mubr.bf16.mxu0 %v1034
        %4996 = vmatmul.mubr.bf16.gmra.mrb[0].mxu0 %v1033
        %v4997 = vpop.f32.mrb[0].mxu0
        %v4998 = vadd.f32 %v4645, %v4997
        %v4999 = vpop.f32.mrb[0].mxu0
        %v5000 = vadd.f32 %v4647, %v4999
        %v5001 = vpop.f32.mrb[0].mxu0
        %v5002 = vadd.f32 %v4649, %v5001
        %v5003 = vpop.f32.mrb[0].mxu0
        %v5004 = vadd.f32 %v4651, %v5003
        %5005 = vmatprep.mubr.bf16.mxu0 %v1042
        %5006 = vmatmul.mubr.bf16.gmra.mrb[0].mxu0 %v1041
        %v5007 = vpop.f32.mrb[0].mxu0
        %v5008 = vadd.f32 %v4655, %v5007
        %v5009 = vpop.f32.mrb[0].mxu0
        %v5010 = vadd.f32 %v4657, %v5009
        %v5011 = vpop.f32.mrb[0].mxu0
        %v5012 = vadd.f32 %v4659, %v5011
        %v5013 = vpop.f32.mrb[0].mxu0
        %v5014 = vadd.f32 %v4661, %v5013
        %5015 = vmatprep.mubr.bf16.mxu0 %v1050
        %5016 = vmatmul.mubr.bf16.gmra.mrb[0].mxu0 %v1049
        %v5017 = vpop.f32.mrb[0].mxu0
        %v5018 = vadd.f32 %v4665, %v5017
        %v5019 = vpop.f32.mrb[0].mxu0
        %v5020 = vadd.f32 %v4667, %v5019
        %v5021 = vpop.f32.mrb[0].mxu0
        %v5022 = vadd.f32 %v4669, %v5021
        %v5023 = vpop.f32.mrb[0].mxu0
        %v5024 = vadd.f32 %v4671, %v5023
        %5025 = vmatprep.mubr.bf16.mxu0 %v1058
        %5026 = vmatmul.mubr.bf16.gmra.mrb[0].mxu0 %v1057
        %v5027 = vpop.f32.mrb[0].mxu0
        %v5028 = vadd.f32 %v4675, %v5027
        %v5029 = vpop.f32.mrb[0].mxu0
        %v5030 = vadd.f32 %v4677, %v5029
        %v5031 = vpop.f32.mrb[0].mxu0
        %v5032 = vadd.f32 %v4679, %v5031
        %v5033 = vpop.f32.mrb[0].mxu0
        %v5034 = vadd.f32 %v4681, %v5033
        %5035 = vmatprep.mubr.bf16.mxu0 %v1066
        %5036 = vmatmul.mubr.bf16.gmra.mrb[0].mxu0 %v1065
        %v5037 = vpop.f32.mrb[0].mxu0
        %v5038 = vadd.f32 %v4685, %v5037
        %v5039 = vpop.f32.mrb[0].mxu0
        %v5040 = vadd.f32 %v4687, %v5039
        %v5041 = vpop.f32.mrb[0].mxu0
        %v5042 = vadd.f32 %v4689, %v5041
        %v5043 = vpop.f32.mrb[0].mxu0
        %v5044 = vadd.f32 %v4691, %v5043
        %5045 = vmatprep.mubr.bf16.mxu0 %v1074
        %5046 = vmatmul.mubr.bf16.gmra.mrb[0].mxu0 %v1073
        %v5047 = vpop.f32.mrb[0].mxu0
        %v5048 = vadd.f32 %v4695, %v5047
        %v5049 = vpop.f32.mrb[0].mxu0
        %v5050 = vadd.f32 %v4697, %v5049
        %v5051 = vpop.f32.mrb[0].mxu0
        %v5052 = vadd.f32 %v4699, %v5051
        %v5053 = vpop.f32.mrb[0].mxu0
        %v5054 = vadd.f32 %v4701, %v5053
        %5055 = vmatprep.mubr.bf16.mxu0 %v1082
        %5056 = vmatmul.mubr.bf16.gmra.mrb[0].mxu0 %v1081
        %v5057 = vpop.f32.mrb[0].mxu0
        %v5058 = vadd.f32 %v4705, %v5057
        %v5059 = vpop.f32.mrb[0].mxu0
        %v5060 = vadd.f32 %v4707, %v5059
        %v5061 = vpop.f32.mrb[0].mxu0
        %v5062 = vadd.f32 %v4709, %v5061
        %v5063 = vpop.f32.mrb[0].mxu0
        %v5064 = vadd.f32 %v4711, %v5063
        %5065 = vmatprep.mubr.bf16.mxu0 %v1090
        %5066 = vmatmul.mubr.bf16.gmra.mrb[0].mxu0 %v1089
        %v5067 = vpop.f32.mrb[0].mxu0
        %v5068 = vadd.f32 %v4715, %v5067
        %v5069 = vpop.f32.mrb[0].mxu0
        %v5070 = vadd.f32 %v4717, %v5069
        %v5071 = vpop.f32.mrb[0].mxu0
        %v5072 = vadd.f32 %v4719, %v5071
        %v5073 = vpop.f32.mrb[0].mxu0
        %v5074 = vadd.f32 %v4721, %v5073
        %5075 = vmatprep.mubr.bf16.mxu0 %v1098
        %5076 = vmatmul.mubr.bf16.gmra.mrb[0].mxu0 %v1097
        %v5077 = vpop.f32.mrb[0].mxu0
        %v5078 = vadd.f32 %v4725, %v5077
        %v5079 = vpop.f32.mrb[0].mxu0
        %v5080 = vadd.f32 %v4727, %v5079
        %v5081 = vpop.f32.mrb[0].mxu0
        %v5082 = vadd.f32 %v4729, %v5081
        %v5083 = vpop.f32.mrb[0].mxu0
        %v5084 = vadd.f32 %v4731, %v5083
        %5085 = vmatprep.mubr.bf16.mxu0 %v1106
        %5086 = vmatmul.mubr.bf16.gmra.mrb[0].mxu0 %v1105
        %v5087 = vpop.f32.mrb[0].mxu0
        %v5088 = vadd.f32 %v4735, %v5087
        %v5089 = vpop.f32.mrb[0].mxu0
        %v5090 = vadd.f32 %v4737, %v5089
        %v5091 = vpop.f32.mrb[0].mxu0
        %v5092 = vadd.f32 %v4739, %v5091
        %v5093 = vpop.f32.mrb[0].mxu0
        %v5094 = vadd.f32 %v4741, %v5093
        %5095 = vmatprep.mubr.bf16.mxu0 %v1114
        %5096 = vmatmul.mubr.bf16.gmra.mrb[0].mxu0 %v1113
        %v5097 = vpop.f32.mrb[0].mxu0
        %v5098 = vadd.f32 %v4745, %v5097
        %v5099 = vpop.f32.mrb[0].mxu0
        %v5100 = vadd.f32 %v4747, %v5099
        %v5101 = vpop.f32.mrb[0].mxu0
        %v5102 = vadd.f32 %v4749, %v5101
        %v5103 = vpop.f32.mrb[0].mxu0
        %v5104 = vadd.f32 %v4751, %v5103
        %5105 = vmatprep.mubr.bf16.mxu0 %v1122
        %5106 = vmatmul.mubr.bf16.gmra.mrb[0].mxu0 %v1121
        %v5107 = vpop.f32.mrb[0].mxu0
        %v5108 = vadd.f32 %v4755, %v5107
        %v5109 = vpop.f32.mrb[0].mxu0
        %v5110 = vadd.f32 %v4757, %v5109
        %v5111 = vpop.f32.mrb[0].mxu0
        %v5112 = vadd.f32 %v4759, %v5111
        %v5113 = vpop.f32.mrb[0].mxu0
        %v5114 = vadd.f32 %v4761, %v5113
        %5115 = vmatprep.mubr.bf16.mxu0 %v1130
        %5116 = vmatmul.mubr.bf16.gmra.mrb[0].mxu0 %v1129
        %v5117 = vpop.f32.mrb[0].mxu0
        %v5118 = vadd.f32 %v4765, %v5117
        %v5119 = vpop.f32.mrb[0].mxu0
        %v5120 = vadd.f32 %v4767, %v5119
        %v5121 = vpop.f32.mrb[0].mxu0
        %v5122 = vadd.f32 %v4769, %v5121
        %v5123 = vpop.f32.mrb[0].mxu0
        %v5124 = vadd.f32 %v4771, %v5123
        %5125 = vmatprep.mubr.bf16.mxu0 %v1138
        %5126 = vmatmul.mubr.bf16.gmra.mrb[0].mxu0 %v1137
        %v5127 = vpop.f32.mrb[0].mxu0
        %v5128 = vadd.f32 %v4775, %v5127
        %v5129 = vpop.f32.mrb[0].mxu0
        %v5130 = vadd.f32 %v4777, %v5129
        %v5131 = vpop.f32.mrb[0].mxu0
        %v5132 = vadd.f32 %v4779, %v5131
        %v5133 = vpop.f32.mrb[0].mxu0
        %v5134 = vadd.f32 %v4781, %v5133
        %5135 = vmatprep.mubr.bf16.mxu0 %v1146
        %5136 = vmatmul.mubr.bf16.gmra.mrb[0].mxu0 %v1145
        %v5137 = vpop.f32.mrb[0].mxu0
        %v5138 = vadd.f32 %v4785, %v5137
        %v5139 = vpop.f32.mrb[0].mxu0
        %v5140 = vadd.f32 %v4787, %v5139
        %v5141 = vpop.f32.mrb[0].mxu0
        %v5142 = vadd.f32 %v4789, %v5141
        %v5143 = vpop.f32.mrb[0].mxu0
        %v5144 = vadd.f32 %v4791, %v5143
        %5145 = vmatprep.mubr.bf16.mxu0 %v1154
        %5146 = vmatmul.mubr.bf16.gmra.mrb[0].mxu0 %v1153
        %v5147 = vpop.f32.mrb[0].mxu0
        %v5148 = vadd.f32 %v4795, %v5147
        %v5149 = vpop.f32.mrb[0].mxu0
        %v5150 = vadd.f32 %v4797, %v5149
        %v5151 = vpop.f32.mrb[0].mxu0
        %v5152 = vadd.f32 %v4799, %v5151
        %v5153 = vpop.f32.mrb[0].mxu0
        %v5154 = vadd.f32 %v4801, %v5153
        %5155 = vmatprep.mubr.bf16.mxu0 %v1162
        %5156 = vmatmul.mubr.bf16.gmra.mrb[0].mxu0 %v1161
        %v5157 = vpop.f32.mrb[0].mxu0
        %v5158 = vadd.f32 %v4805, %v5157
        %v5159 = vpop.f32.mrb[0].mxu0
        %v5160 = vadd.f32 %v4807, %v5159
        %v5161 = vpop.f32.mrb[0].mxu0
        %v5162 = vadd.f32 %v4809, %v5161
        %v5163 = vpop.f32.mrb[0].mxu0
        %v5164 = vadd.f32 %v4811, %v5163
        %5165 = vmatprep.mubr.bf16.mxu0 %v1170
        %5166 = vmatmul.mubr.bf16.gmra.mrb[0].mxu0 %v1169
        %v5167 = vpop.f32.mrb[0].mxu0
        %v5168 = vadd.f32 %v4815, %v5167
        %v5169 = vpop.f32.mrb[0].mxu0
        %v5170 = vadd.f32 %v4817, %v5169
        %v5171 = vpop.f32.mrb[0].mxu0
        %v5172 = vadd.f32 %v4819, %v5171
        %v5173 = vpop.f32.mrb[0].mxu0
        %v5174 = vadd.f32 %v4821, %v5173
        %5175 = vmatprep.mubr.bf16.mxu0 %v1178
        %5176 = vmatmul.mubr.bf16.gmra.mrb[0].mxu0 %v1177
        %v5177 = vpop.f32.mrb[0].mxu0
        %v5178 = vadd.f32 %v4825, %v5177
        %v5179 = vpop.f32.mrb[0].mxu0
        %v5180 = vadd.f32 %v4827, %v5179
        %v5181 = vpop.f32.mrb[0].mxu0
        %v5182 = vadd.f32 %v4829, %v5181
        %v5183 = vpop.f32.mrb[0].mxu0
        %v5184 = vadd.f32 %v4831, %v5183
        %5185 = vmatprep.mubr.bf16.mxu0 %v1186
        %5186 = vmatmul.mubr.bf16.gmra.mrb[0].mxu0 %v1185
        %v5187 = vpop.f32.mrb[0].mxu0
        %v5188 = vadd.f32 %v4835, %v5187
        %v5189 = vpop.f32.mrb[0].mxu0
        %v5190 = vadd.f32 %v4837, %v5189
        %v5191 = vpop.f32.mrb[0].mxu0
        %v5192 = vadd.f32 %v4839, %v5191
        %v5193 = vpop.f32.mrb[0].mxu0
        %v5194 = vadd.f32 %v4841, %v5193
        %5195 = vmatprep.mubr.bf16.mxu0 %v1194
        %5196 = vmatmul.mubr.bf16.gmra.mrb[0].mxu0 %v1193
        %v5197 = vpop.f32.mrb[0].mxu0
        %v5198 = vadd.f32 %v4845, %v5197
        %v5199 = vpop.f32.mrb[0].mxu0
        %v5200 = vadd.f32 %v4847, %v5199
        %v5201 = vpop.f32.mrb[0].mxu0
        %v5202 = vadd.f32 %v4849, %v5201
        %v5203 = vpop.f32.mrb[0].mxu0
        %v5204 = vadd.f32 %v4851, %v5203
        %5205 = vmatprep.mubr.bf16.mxu0 %v1202
        %5206 = vmatmul.mubr.bf16.gmra.mrb[0].mxu0 %v1201
        %v5207 = vpop.f32.mrb[0].mxu0
        %v5208 = vadd.f32 %v4855, %v5207
        %v5209 = vpop.f32.mrb[0].mxu0
        %v5210 = vadd.f32 %v4857, %v5209
        %v5211 = vpop.f32.mrb[0].mxu0
        %v5212 = vadd.f32 %v4859, %v5211
        %v5213 = vpop.f32.mrb[0].mxu0
        %v5214 = vadd.f32 %v4861, %v5213
        %5215 = vmatprep.mubr.bf16.mxu0 %v1210
        %5216 = vmatmul.mubr.bf16.gmra.mrb[0].mxu0 %v1209
        %v5217 = vpop.f32.mrb[0].mxu0
        %v5218 = vadd.f32 %v4865, %v5217
        %v5219 = vpop.f32.mrb[0].mxu0
        %v5220 = vadd.f32 %v4867, %v5219
        %v5221 = vpop.f32.mrb[0].mxu0
        %v5222 = vadd.f32 %v4869, %v5221
        %v5223 = vpop.f32.mrb[0].mxu0
        %v5224 = vadd.f32 %v4871, %v5223
        %5225 = vmatprep.mubr.bf16.mxu0 %v1218
        %5226 = vmatmul.mubr.bf16.gmra.mrb[0].mxu0 %v1217
        %v5227 = vpop.f32.mrb[0].mxu0
        %v5228 = vadd.f32 %v4875, %v5227
        %v5229 = vpop.f32.mrb[0].mxu0
        %v5230 = vadd.f32 %v4877, %v5229
        %v5231 = vpop.f32.mrb[0].mxu0
        %v5232 = vadd.f32 %v4879, %v5231
        %v5233 = vpop.f32.mrb[0].mxu0
        %v5234 = vadd.f32 %v4881, %v5233
        %5235 = vmatprep.mubr.bf16.mxu0 %v1226
        %5236 = vmatmul.mubr.bf16.gmra.mrb[0].mxu0 %v1225
        %v5237 = vpop.f32.mrb[0].mxu0
        %v5238 = vadd.f32 %v4885, %v5237
        %v5239 = vpop.f32.mrb[0].mxu0
        %v5240 = vadd.f32 %v4887, %v5239
        %v5241 = vpop.f32.mrb[0].mxu0
        %v5242 = vadd.f32 %v4889, %v5241
        %v5243 = vpop.f32.mrb[0].mxu0
        %v5244 = vadd.f32 %v4891, %v5243
        %5245 = vmatprep.mubr.bf16.mxu0 %v1234
        %5246 = vmatmul.mubr.bf16.gmra.mrb[0].mxu0 %v1233
        %v5247 = vpop.f32.mrb[0].mxu0
        %v5248 = vadd.f32 %v4895, %v5247
        %v5249 = vpop.f32.mrb[0].mxu0
        %v5250 = vadd.f32 %v4897, %v5249
        %v5251 = vpop.f32.mrb[0].mxu0
        %v5252 = vadd.f32 %v4899, %v5251
        %v5253 = vpop.f32.mrb[0].mxu0
        %v5254 = vadd.f32 %v4901, %v5253
        %5255 = vmatprep.mubr.bf16.mxu0 %v1242
        %5256 = vmatmul.mubr.bf16.gmra.mrb[0].mxu0 %v1241
        %v5257 = vpop.f32.mrb[0].mxu0
        %v5258 = vadd.f32 %v4905, %v5257
        %v5259 = vpop.f32.mrb[0].mxu0
        %v5260 = vadd.f32 %v4907, %v5259
        %v5261 = vpop.f32.mrb[0].mxu0
        %v5262 = vadd.f32 %v4909, %v5261
        %v5263 = vpop.f32.mrb[0].mxu0
        %v5264 = vadd.f32 %v4911, %v5263
        %5265 = vmatprep.mubr.bf16.mxu0 %v1250
        %5266 = vmatmul.mubr.bf16.gmra.mrb[0].mxu0 %v1249
        %v5267 = vpop.f32.mrb[0].mxu0
        %v5268 = vadd.f32 %v4915, %v5267
        %v5269 = vpop.f32.mrb[0].mxu0
        %v5270 = vadd.f32 %v4917, %v5269
        %v5271 = vpop.f32.mrb[0].mxu0
        %v5272 = vadd.f32 %v4919, %v5271
        %v5273 = vpop.f32.mrb[0].mxu0
        %v5274 = vadd.f32 %v4921, %v5273
        %5275 = vmatprep.mubr.bf16.mxu0 %v1258
        %5276 = vmatmul.mubr.bf16.gmra.mrb[0].mxu0 %v1257
        %v5277 = vpop.f32.mrb[0].mxu0
        %v5278 = vadd.f32 %v4925, %v5277
        %v5279 = vpop.f32.mrb[0].mxu0
        %v5280 = vadd.f32 %v4927, %v5279
        %v5281 = vpop.f32.mrb[0].mxu0
        %v5282 = vadd.f32 %v4929, %v5281
        %v5283 = vpop.f32.mrb[0].mxu0
        %v5284 = vadd.f32 %v4931, %v5283
        %5285 = vmatprep.mubr.bf16.mxu0 %v1266
        %5286 = vmatmul.mubr.bf16.gmra.mrb[0].mxu0 %v1265
        %v5287 = vpop.f32.mrb[0].mxu0
        %v5288 = vadd.f32 %v4935, %v5287
        %v5289 = vpop.f32.mrb[0].mxu0
        %v5290 = vadd.f32 %v4937, %v5289
        %v5291 = vpop.f32.mrb[0].mxu0
        %v5292 = vadd.f32 %v4939, %v5291
        %v5293 = vpop.f32.mrb[0].mxu0
        %v5294 = vadd.f32 %v4941, %v5293
        %5295 = vmatprep.mubr.bf16.mxu0 %v1274
        %5296 = vmatmul.mubr.bf16.gmra.mrb[0].mxu0 %v1273
        %v5297 = vpop.f32.mrb[0].mxu0
        %v5298 = vadd.f32 %v4945, %v5297
        %v5299 = vpop.f32.mrb[0].mxu0
        %v5300 = vadd.f32 %v4947, %v5299
        %v5301 = vpop.f32.mrb[0].mxu0
        %v5302 = vadd.f32 %v4949, %v5301
        %v5303 = vpop.f32.mrb[0].mxu0
        %v5304 = vadd.f32 %v4951, %v5303
        %5305 = vdwg.mxu0
        %5306 = vmatprep.subr.bf16.mxu0 %v2518
        %5307 = vmatpush1.bf16.msra.mxu0 %v2517
        %5308 = vmatprep.subr.bf16.mxu0 %v2522
        %5309 = vmatpush1.bf16.msra.mxu0 %v2521
        %5310 = vmatprep.subr.bf16.mxu0 %v2526
        %5311 = vmatpush1.bf16.msra.mxu0 %v2525
        %5312 = vmatprep.subr.bf16.mxu0 %v2530
        %5313 = vmatpush1.bf16.msra.mxu0 %v2529
        %5314 = vmatprep.subr.bf16.mxu0 %v2534
        %5315 = vmatpush1.bf16.msra.mxu0 %v2533
        %5316 = vmatprep.subr.bf16.mxu0 %v2538
        %5317 = vmatpush1.bf16.msra.mxu0 %v2537
        %5318 = vmatprep.subr.bf16.mxu0 %v2542
        %5319 = vmatpush1.bf16.msra.mxu0 %v2541
        %5320 = vmatprep.subr.bf16.mxu0 %v2546
        %5321 = vmatpush1.bf16.msra.mxu0 %v2545
        %5322 = vmatprep.subr.bf16.mxu0 %v2550
        %5323 = vmatpush1.bf16.msra.mxu0 %v2549
        %5324 = vmatprep.subr.bf16.mxu0 %v2554
        %5325 = vmatpush1.bf16.msra.mxu0 %v2553
        %5326 = vmatprep.subr.bf16.mxu0 %v2558
        %5327 = vmatpush1.bf16.msra.mxu0 %v2557
        %5328 = vmatprep.subr.bf16.mxu0 %v2562
        %5329 = vmatpush1.bf16.msra.mxu0 %v2561
        %5330 = vmatprep.subr.bf16.mxu0 %v2566
        %5331 = vmatpush1.bf16.msra.mxu0 %v2565
        %5332 = vmatprep.subr.bf16.mxu0 %v2570
        %5333 = vmatpush1.bf16.msra.mxu0 %v2569
        %5334 = vmatprep.subr.bf16.mxu0 %v2574
        %5335 = vmatpush1.bf16.msra.mxu0 %v2573
        %5336 = vmatprep.subr.bf16.mxu0 %v2578
        %5337 = vmatpush1.bf16.msra.mxu0 %v2577
        %5338 = vmatprep.mubr.bf16.mxu0 %v1028
        %5339 = vmatmul.mubr.bf16.gmra.mrb[0].mxu0 %v1027
        %v5340 = vpop.f32.mrb[0].mxu0
        %v5341 = vadd.f32 %v4988, %v5340
        %v5342 = vpop.f32.mrb[0].mxu0
        %v5343 = vadd.f32 %v4990, %v5342
        %v5344 = vpop.f32.mrb[0].mxu0
        %v5345 = vadd.f32 %v4992, %v5344
        %v5346 = vpop.f32.mrb[0].mxu0
        %v5347 = vadd.f32 %v4994, %v5346
        %5348 = vmatprep.mubr.bf16.mxu0 %v1036
        %5349 = vmatmul.mubr.bf16.gmra.mrb[0].mxu0 %v1035
        %v5350 = vpop.f32.mrb[0].mxu0
        %v5351 = vadd.f32 %v4998, %v5350
        %v5352 = vpop.f32.mrb[0].mxu0
        %v5353 = vadd.f32 %v5000, %v5352
        %v5354 = vpop.f32.mrb[0].mxu0
        %v5355 = vadd.f32 %v5002, %v5354
        %v5356 = vpop.f32.mrb[0].mxu0
        %v5357 = vadd.f32 %v5004, %v5356
        %5358 = vmatprep.mubr.bf16.mxu0 %v1044
        %5359 = vmatmul.mubr.bf16.gmra.mrb[0].mxu0 %v1043
        %v5360 = vpop.f32.mrb[0].mxu0
        %v5361 = vadd.f32 %v5008, %v5360
        %v5362 = vpop.f32.mrb[0].mxu0
        %v5363 = vadd.f32 %v5010, %v5362
        %v5364 = vpop.f32.mrb[0].mxu0
        %v5365 = vadd.f32 %v5012, %v5364
        %v5366 = vpop.f32.mrb[0].mxu0
        %v5367 = vadd.f32 %v5014, %v5366
        %5368 = vmatprep.mubr.bf16.mxu0 %v1052
        %5369 = vmatmul.mubr.bf16.gmra.mrb[0].mxu0 %v1051
        %v5370 = vpop.f32.mrb[0].mxu0
        %v5371 = vadd.f32 %v5018, %v5370
        %v5372 = vpop.f32.mrb[0].mxu0
        %v5373 = vadd.f32 %v5020, %v5372
        %v5374 = vpop.f32.mrb[0].mxu0
        %v5375 = vadd.f32 %v5022, %v5374
        %v5376 = vpop.f32.mrb[0].mxu0
        %v5377 = vadd.f32 %v5024, %v5376
        %5378 = vmatprep.mubr.bf16.mxu0 %v1060
        %5379 = vmatmul.mubr.bf16.gmra.mrb[0].mxu0 %v1059
        %v5380 = vpop.f32.mrb[0].mxu0
        %v5381 = vadd.f32 %v5028, %v5380
        %v5382 = vpop.f32.mrb[0].mxu0
        %v5383 = vadd.f32 %v5030, %v5382
        %v5384 = vpop.f32.mrb[0].mxu0
        %v5385 = vadd.f32 %v5032, %v5384
        %v5386 = vpop.f32.mrb[0].mxu0
        %v5387 = vadd.f32 %v5034, %v5386
        %5388 = vmatprep.mubr.bf16.mxu0 %v1068
        %5389 = vmatmul.mubr.bf16.gmra.mrb[0].mxu0 %v1067
        %v5390 = vpop.f32.mrb[0].mxu0
        %v5391 = vadd.f32 %v5038, %v5390
        %v5392 = vpop.f32.mrb[0].mxu0
        %v5393 = vadd.f32 %v5040, %v5392
        %v5394 = vpop.f32.mrb[0].mxu0
        %v5395 = vadd.f32 %v5042, %v5394
        %v5396 = vpop.f32.mrb[0].mxu0
        %v5397 = vadd.f32 %v5044, %v5396
        %5398 = vmatprep.mubr.bf16.mxu0 %v1076
        %5399 = vmatmul.mubr.bf16.gmra.mrb[0].mxu0 %v1075
        %v5400 = vpop.f32.mrb[0].mxu0
        %v5401 = vadd.f32 %v5048, %v5400
        %v5402 = vpop.f32.mrb[0].mxu0
        %v5403 = vadd.f32 %v5050, %v5402
        %v5404 = vpop.f32.mrb[0].mxu0
        %v5405 = vadd.f32 %v5052, %v5404
        %v5406 = vpop.f32.mrb[0].mxu0
        %v5407 = vadd.f32 %v5054, %v5406
        %5408 = vmatprep.mubr.bf16.mxu0 %v1084
        %5409 = vmatmul.mubr.bf16.gmra.mrb[0].mxu0 %v1083
        %v5410 = vpop.f32.mrb[0].mxu0
        %v5411 = vadd.f32 %v5058, %v5410
        %v5412 = vpop.f32.mrb[0].mxu0
        %v5413 = vadd.f32 %v5060, %v5412
        %v5414 = vpop.f32.mrb[0].mxu0
        %v5415 = vadd.f32 %v5062, %v5414
        %v5416 = vpop.f32.mrb[0].mxu0
        %v5417 = vadd.f32 %v5064, %v5416
        %5418 = vmatprep.mubr.bf16.mxu0 %v1092
        %5419 = vmatmul.mubr.bf16.gmra.mrb[0].mxu0 %v1091
        %v5420 = vpop.f32.mrb[0].mxu0
        %v5421 = vadd.f32 %v5068, %v5420
        %v5422 = vpop.f32.mrb[0].mxu0
        %v5423 = vadd.f32 %v5070, %v5422
        %v5424 = vpop.f32.mrb[0].mxu0
        %v5425 = vadd.f32 %v5072, %v5424
        %v5426 = vpop.f32.mrb[0].mxu0
        %v5427 = vadd.f32 %v5074, %v5426
        %5428 = vmatprep.mubr.bf16.mxu0 %v1100
        %5429 = vmatmul.mubr.bf16.gmra.mrb[0].mxu0 %v1099
        %v5430 = vpop.f32.mrb[0].mxu0
        %v5431 = vadd.f32 %v5078, %v5430
        %v5432 = vpop.f32.mrb[0].mxu0
        %v5433 = vadd.f32 %v5080, %v5432
        %v5434 = vpop.f32.mrb[0].mxu0
        %v5435 = vadd.f32 %v5082, %v5434
        %v5436 = vpop.f32.mrb[0].mxu0
        %v5437 = vadd.f32 %v5084, %v5436
        %5438 = vmatprep.mubr.bf16.mxu0 %v1108
        %5439 = vmatmul.mubr.bf16.gmra.mrb[0].mxu0 %v1107
        %v5440 = vpop.f32.mrb[0].mxu0
        %v5441 = vadd.f32 %v5088, %v5440
        %v5442 = vpop.f32.mrb[0].mxu0
        %v5443 = vadd.f32 %v5090, %v5442
        %v5444 = vpop.f32.mrb[0].mxu0
        %v5445 = vadd.f32 %v5092, %v5444
        %v5446 = vpop.f32.mrb[0].mxu0
        %v5447 = vadd.f32 %v5094, %v5446
        %5448 = vmatprep.mubr.bf16.mxu0 %v1116
        %5449 = vmatmul.mubr.bf16.gmra.mrb[0].mxu0 %v1115
        %v5450 = vpop.f32.mrb[0].mxu0
        %v5451 = vadd.f32 %v5098, %v5450
        %v5452 = vpop.f32.mrb[0].mxu0
        %v5453 = vadd.f32 %v5100, %v5452
        %v5454 = vpop.f32.mrb[0].mxu0
        %v5455 = vadd.f32 %v5102, %v5454
        %v5456 = vpop.f32.mrb[0].mxu0
        %v5457 = vadd.f32 %v5104, %v5456
        %5458 = vmatprep.mubr.bf16.mxu0 %v1124
        %5459 = vmatmul.mubr.bf16.gmra.mrb[0].mxu0 %v1123
        %v5460 = vpop.f32.mrb[0].mxu0
        %v5461 = vadd.f32 %v5108, %v5460
        %v5462 = vpop.f32.mrb[0].mxu0
        %v5463 = vadd.f32 %v5110, %v5462
        %v5464 = vpop.f32.mrb[0].mxu0
        %v5465 = vadd.f32 %v5112, %v5464
        %v5466 = vpop.f32.mrb[0].mxu0
        %v5467 = vadd.f32 %v5114, %v5466
        %5468 = vmatprep.mubr.bf16.mxu0 %v1132
        %5469 = vmatmul.mubr.bf16.gmra.mrb[0].mxu0 %v1131
        %v5470 = vpop.f32.mrb[0].mxu0
        %v5471 = vadd.f32 %v5118, %v5470
        %v5472 = vpop.f32.mrb[0].mxu0
        %v5473 = vadd.f32 %v5120, %v5472
        %v5474 = vpop.f32.mrb[0].mxu0
        %v5475 = vadd.f32 %v5122, %v5474
        %v5476 = vpop.f32.mrb[0].mxu0
        %v5477 = vadd.f32 %v5124, %v5476
        %5478 = vmatprep.mubr.bf16.mxu0 %v1140
        %5479 = vmatmul.mubr.bf16.gmra.mrb[0].mxu0 %v1139
        %v5480 = vpop.f32.mrb[0].mxu0
        %v5481 = vadd.f32 %v5128, %v5480
        %v5482 = vpop.f32.mrb[0].mxu0
        %v5483 = vadd.f32 %v5130, %v5482
        %v5484 = vpop.f32.mrb[0].mxu0
        %v5485 = vadd.f32 %v5132, %v5484
        %v5486 = vpop.f32.mrb[0].mxu0
        %v5487 = vadd.f32 %v5134, %v5486
        %5488 = vmatprep.mubr.bf16.mxu0 %v1148
        %5489 = vmatmul.mubr.bf16.gmra.mrb[0].mxu0 %v1147
        %v5490 = vpop.f32.mrb[0].mxu0
        %v5491 = vadd.f32 %v5138, %v5490
        %v5492 = vpop.f32.mrb[0].mxu0
        %v5493 = vadd.f32 %v5140, %v5492
        %v5494 = vpop.f32.mrb[0].mxu0
        %v5495 = vadd.f32 %v5142, %v5494
        %v5496 = vpop.f32.mrb[0].mxu0
        %v5497 = vadd.f32 %v5144, %v5496
        %5498 = vmatprep.mubr.bf16.mxu0 %v1156
        %5499 = vmatmul.mubr.bf16.gmra.mrb[0].mxu0 %v1155
        %v5500 = vpop.f32.mrb[0].mxu0
        %v5501 = vadd.f32 %v5148, %v5500
        %v5502 = vpop.f32.mrb[0].mxu0
        %v5503 = vadd.f32 %v5150, %v5502
        %v5504 = vpop.f32.mrb[0].mxu0
        %v5505 = vadd.f32 %v5152, %v5504
        %v5506 = vpop.f32.mrb[0].mxu0
        %v5507 = vadd.f32 %v5154, %v5506
        %5508 = vmatprep.mubr.bf16.mxu0 %v1164
        %5509 = vmatmul.mubr.bf16.gmra.mrb[0].mxu0 %v1163
        %v5510 = vpop.f32.mrb[0].mxu0
        %v5511 = vadd.f32 %v5158, %v5510
        %v5512 = vpop.f32.mrb[0].mxu0
        %v5513 = vadd.f32 %v5160, %v5512
        %v5514 = vpop.f32.mrb[0].mxu0
        %v5515 = vadd.f32 %v5162, %v5514
        %v5516 = vpop.f32.mrb[0].mxu0
        %v5517 = vadd.f32 %v5164, %v5516
        %5518 = vmatprep.mubr.bf16.mxu0 %v1172
        %5519 = vmatmul.mubr.bf16.gmra.mrb[0].mxu0 %v1171
        %v5520 = vpop.f32.mrb[0].mxu0
        %v5521 = vadd.f32 %v5168, %v5520
        %v5522 = vpop.f32.mrb[0].mxu0
        %v5523 = vadd.f32 %v5170, %v5522
        %v5524 = vpop.f32.mrb[0].mxu0
        %v5525 = vadd.f32 %v5172, %v5524
        %v5526 = vpop.f32.mrb[0].mxu0
        %v5527 = vadd.f32 %v5174, %v5526
        %5528 = vmatprep.mubr.bf16.mxu0 %v1180
        %5529 = vmatmul.mubr.bf16.gmra.mrb[0].mxu0 %v1179
        %v5530 = vpop.f32.mrb[0].mxu0
        %v5531 = vadd.f32 %v5178, %v5530
        %v5532 = vpop.f32.mrb[0].mxu0
        %v5533 = vadd.f32 %v5180, %v5532
        %v5534 = vpop.f32.mrb[0].mxu0
        %v5535 = vadd.f32 %v5182, %v5534
        %v5536 = vpop.f32.mrb[0].mxu0
        %v5537 = vadd.f32 %v5184, %v5536
        %5538 = vmatprep.mubr.bf16.mxu0 %v1188
        %5539 = vmatmul.mubr.bf16.gmra.mrb[0].mxu0 %v1187
        %v5540 = vpop.f32.mrb[0].mxu0
        %v5541 = vadd.f32 %v5188, %v5540
        %v5542 = vpop.f32.mrb[0].mxu0
        %v5543 = vadd.f32 %v5190, %v5542
        %v5544 = vpop.f32.mrb[0].mxu0
        %v5545 = vadd.f32 %v5192, %v5544
        %v5546 = vpop.f32.mrb[0].mxu0
        %v5547 = vadd.f32 %v5194, %v5546
        %5548 = vmatprep.mubr.bf16.mxu0 %v1196
        %5549 = vmatmul.mubr.bf16.gmra.mrb[0].mxu0 %v1195
        %v5550 = vpop.f32.mrb[0].mxu0
        %v5551 = vadd.f32 %v5198, %v5550
        %v5552 = vpop.f32.mrb[0].mxu0
        %v5553 = vadd.f32 %v5200, %v5552
        %v5554 = vpop.f32.mrb[0].mxu0
        %v5555 = vadd.f32 %v5202, %v5554
        %v5556 = vpop.f32.mrb[0].mxu0
        %v5557 = vadd.f32 %v5204, %v5556
        %5558 = vmatprep.mubr.bf16.mxu0 %v1204
        %5559 = vmatmul.mubr.bf16.gmra.mrb[0].mxu0 %v1203
        %v5560 = vpop.f32.mrb[0].mxu0
        %v5561 = vadd.f32 %v5208, %v5560
        %v5562 = vpop.f32.mrb[0].mxu0
        %v5563 = vadd.f32 %v5210, %v5562
        %v5564 = vpop.f32.mrb[0].mxu0
        %v5565 = vadd.f32 %v5212, %v5564
        %v5566 = vpop.f32.mrb[0].mxu0
        %v5567 = vadd.f32 %v5214, %v5566
        %5568 = vmatprep.mubr.bf16.mxu0 %v1212
        %5569 = vmatmul.mubr.bf16.gmra.mrb[0].mxu0 %v1211
        %v5570 = vpop.f32.mrb[0].mxu0
        %v5571 = vadd.f32 %v5218, %v5570
        %v5572 = vpop.f32.mrb[0].mxu0
        %v5573 = vadd.f32 %v5220, %v5572
        %v5574 = vpop.f32.mrb[0].mxu0
        %v5575 = vadd.f32 %v5222, %v5574
        %v5576 = vpop.f32.mrb[0].mxu0
        %v5577 = vadd.f32 %v5224, %v5576
        %5578 = vmatprep.mubr.bf16.mxu0 %v1220
        %5579 = vmatmul.mubr.bf16.gmra.mrb[0].mxu0 %v1219
        %v5580 = vpop.f32.mrb[0].mxu0
        %v5581 = vadd.f32 %v5228, %v5580
        %v5582 = vpop.f32.mrb[0].mxu0
        %v5583 = vadd.f32 %v5230, %v5582
        %v5584 = vpop.f32.mrb[0].mxu0
        %v5585 = vadd.f32 %v5232, %v5584
        %v5586 = vpop.f32.mrb[0].mxu0
        %v5587 = vadd.f32 %v5234, %v5586
        %5588 = vmatprep.mubr.bf16.mxu0 %v1228
        %5589 = vmatmul.mubr.bf16.gmra.mrb[0].mxu0 %v1227
        %v5590 = vpop.f32.mrb[0].mxu0
        %v5591 = vadd.f32 %v5238, %v5590
        %v5592 = vpop.f32.mrb[0].mxu0
        %v5593 = vadd.f32 %v5240, %v5592
        %v5594 = vpop.f32.mrb[0].mxu0
        %v5595 = vadd.f32 %v5242, %v5594
        %v5596 = vpop.f32.mrb[0].mxu0
        %v5597 = vadd.f32 %v5244, %v5596
        %5598 = vmatprep.mubr.bf16.mxu0 %v1236
        %5599 = vmatmul.mubr.bf16.gmra.mrb[0].mxu0 %v1235
        %v5600 = vpop.f32.mrb[0].mxu0
        %v5601 = vadd.f32 %v5248, %v5600
        %v5602 = vpop.f32.mrb[0].mxu0
        %v5603 = vadd.f32 %v5250, %v5602
        %v5604 = vpop.f32.mrb[0].mxu0
        %v5605 = vadd.f32 %v5252, %v5604
        %v5606 = vpop.f32.mrb[0].mxu0
        %v5607 = vadd.f32 %v5254, %v5606
        %5608 = vmatprep.mubr.bf16.mxu0 %v1244
        %5609 = vmatmul.mubr.bf16.gmra.mrb[0].mxu0 %v1243
        %v5610 = vpop.f32.mrb[0].mxu0
        %v5611 = vadd.f32 %v5258, %v5610
        %v5612 = vpop.f32.mrb[0].mxu0
        %v5613 = vadd.f32 %v5260, %v5612
        %v5614 = vpop.f32.mrb[0].mxu0
        %v5615 = vadd.f32 %v5262, %v5614
        %v5616 = vpop.f32.mrb[0].mxu0
        %v5617 = vadd.f32 %v5264, %v5616
        %5618 = vmatprep.mubr.bf16.mxu0 %v1252
        %5619 = vmatmul.mubr.bf16.gmra.mrb[0].mxu0 %v1251
        %v5620 = vpop.f32.mrb[0].mxu0
        %v5621 = vadd.f32 %v5268, %v5620
        %v5622 = vpop.f32.mrb[0].mxu0
        %v5623 = vadd.f32 %v5270, %v5622
        %v5624 = vpop.f32.mrb[0].mxu0
        %v5625 = vadd.f32 %v5272, %v5624
        %v5626 = vpop.f32.mrb[0].mxu0
        %v5627 = vadd.f32 %v5274, %v5626
        %5628 = vmatprep.mubr.bf16.mxu0 %v1260
        %5629 = vmatmul.mubr.bf16.gmra.mrb[0].mxu0 %v1259
        %v5630 = vpop.f32.mrb[0].mxu0
        %v5631 = vadd.f32 %v5278, %v5630
        %v5632 = vpop.f32.mrb[0].mxu0
        %v5633 = vadd.f32 %v5280, %v5632
        %v5634 = vpop.f32.mrb[0].mxu0
        %v5635 = vadd.f32 %v5282, %v5634
        %v5636 = vpop.f32.mrb[0].mxu0
        %v5637 = vadd.f32 %v5284, %v5636
        %5638 = vmatprep.mubr.bf16.mxu0 %v1268
        %5639 = vmatmul.mubr.bf16.gmra.mrb[0].mxu0 %v1267
        %v5640 = vpop.f32.mrb[0].mxu0
        %v5641 = vadd.f32 %v5288, %v5640
        %v5642 = vpop.f32.mrb[0].mxu0
        %v5643 = vadd.f32 %v5290, %v5642
        %v5644 = vpop.f32.mrb[0].mxu0
        %v5645 = vadd.f32 %v5292, %v5644
        %v5646 = vpop.f32.mrb[0].mxu0
        %v5647 = vadd.f32 %v5294, %v5646
        %5648 = vmatprep.mubr.bf16.mxu0 %v1276
        %5649 = vmatmul.mubr.bf16.gmra.mrb[0].mxu0 %v1275
        %v5650 = vpop.f32.mrb[0].mxu0
        %v5651 = vadd.f32 %v5298, %v5650
        %v5652 = vpop.f32.mrb[0].mxu0
        %v5653 = vadd.f32 %v5300, %v5652
        %v5654 = vpop.f32.mrb[0].mxu0
        %v5655 = vadd.f32 %v5302, %v5654
        %v5656 = vpop.f32.mrb[0].mxu0
        %v5657 = vadd.f32 %v5304, %v5656
        %5658 = vdwg.mxu0
        %v5659 = vmax.f32 %v3929, 0.0
        %v5660 = vmax.f32 %v3931, 0.0
        %v5661 = vmax.f32 %v5341, 0.0
        %v5662 = vmax.f32 %v5343, 0.0
        %v5663 = vmax.f32 %v3933, 0.0
        %v5664 = vmax.f32 %v3935, 0.0
        %v5665 = vmax.f32 %v5345, 0.0
        %v5666 = vmax.f32 %v5347, 0.0
        %v5667 = vmax.f32 %v3939, 0.0
        %v5668 = vmax.f32 %v3941, 0.0
        %v5669 = vmax.f32 %v5351, 0.0
        %v5670 = vmax.f32 %v5353, 0.0
        %v5671 = vmax.f32 %v3943, 0.0
        %v5672 = vmax.f32 %v3945, 0.0
        %v5673 = vmax.f32 %v5355, 0.0
        %v5674 = vmax.f32 %v5357, 0.0
        %v5675 = vmax.f32 %v3949, 0.0
        %v5676 = vmax.f32 %v3951, 0.0
        %v5677 = vmax.f32 %v5361, 0.0
        %v5678 = vmax.f32 %v5363, 0.0
        %v5679 = vmax.f32 %v3953, 0.0
        %v5680 = vmax.f32 %v3955, 0.0
        %v5681 = vmax.f32 %v5365, 0.0
        %v5682 = vmax.f32 %v5367, 0.0
        %v5683 = vmax.f32 %v3959, 0.0
        %v5684 = vmax.f32 %v3961, 0.0
        %v5685 = vmax.f32 %v5371, 0.0
        %v5686 = vmax.f32 %v5373, 0.0
        %v5687 = vmax.f32 %v3963, 0.0
        %v5688 = vmax.f32 %v3965, 0.0
        %v5689 = vmax.f32 %v5375, 0.0
        %v5690 = vmax.f32 %v5377, 0.0
        %v5691 = vmax.f32 %v3969, 0.0
        %v5692 = vmax.f32 %v3971, 0.0
        %v5693 = vmax.f32 %v5381, 0.0
        %v5694 = vmax.f32 %v5383, 0.0
        %v5695 = vmax.f32 %v3973, 0.0
        %v5696 = vmax.f32 %v3975, 0.0
        %v5697 = vmax.f32 %v5385, 0.0
        %v5698 = vmax.f32 %v5387, 0.0
        %v5699 = vmax.f32 %v3979, 0.0
        %v5700 = vmax.f32 %v3981, 0.0
        %v5701 = vmax.f32 %v5391, 0.0
        %v5702 = vmax.f32 %v5393, 0.0
        %v5703 = vmax.f32 %v3983, 0.0
        %v5704 = vmax.f32 %v3985, 0.0
        %v5705 = vmax.f32 %v5395, 0.0
        %v5706 = vmax.f32 %v5397, 0.0
        %v5707 = vmax.f32 %v3989, 0.0
        %v5708 = vmax.f32 %v3991, 0.0
        %v5709 = vmax.f32 %v5401, 0.0
        %v5710 = vmax.f32 %v5403, 0.0
        %v5711 = vmax.f32 %v3993, 0.0
        %v5712 = vmax.f32 %v3995, 0.0
        %v5713 = vmax.f32 %v5405, 0.0
        %v5714 = vmax.f32 %v5407, 0.0
        %v5715 = vmax.f32 %v3999, 0.0
        %v5716 = vmax.f32 %v4001, 0.0
        %v5717 = vmax.f32 %v5411, 0.0
        %v5718 = vmax.f32 %v5413, 0.0
        %v5719 = vmax.f32 %v4003, 0.0
        %v5720 = vmax.f32 %v4005, 0.0
        %v5721 = vmax.f32 %v5415, 0.0
        %v5722 = vmax.f32 %v5417, 0.0
        %v5723 = vmax.f32 %v4009, 0.0
        %v5724 = vmax.f32 %v4011, 0.0
        %v5725 = vmax.f32 %v5421, 0.0
        %v5726 = vmax.f32 %v5423, 0.0
        %v5727 = vmax.f32 %v4013, 0.0
        %v5728 = vmax.f32 %v4015, 0.0
        %v5729 = vmax.f32 %v5425, 0.0
        %v5730 = vmax.f32 %v5427, 0.0
        %v5731 = vmax.f32 %v4019, 0.0
        %v5732 = vmax.f32 %v4021, 0.0
        %v5733 = vmax.f32 %v5431, 0.0
        %v5734 = vmax.f32 %v5433, 0.0
        %v5735 = vmax.f32 %v4023, 0.0
        %v5736 = vmax.f32 %v4025, 0.0
        %v5737 = vmax.f32 %v5435, 0.0
        %v5738 = vmax.f32 %v5437, 0.0
        %v5739 = vmax.f32 %v4029, 0.0
        %v5740 = vmax.f32 %v4031, 0.0
        %v5741 = vmax.f32 %v5441, 0.0
        %v5742 = vmax.f32 %v5443, 0.0
        %v5743 = vmax.f32 %v4033, 0.0
        %v5744 = vmax.f32 %v4035, 0.0
        %v5745 = vmax.f32 %v5445, 0.0
        %v5746 = vmax.f32 %v5447, 0.0
        %v5747 = vmax.f32 %v4039, 0.0
        %v5748 = vmax.f32 %v4041, 0.0
        %v5749 = vmax.f32 %v5451, 0.0
        %v5750 = vmax.f32 %v5453, 0.0
        %v5751 = vmax.f32 %v4043, 0.0
        %v5752 = vmax.f32 %v4045, 0.0
        %v5753 = vmax.f32 %v5455, 0.0
        %v5754 = vmax.f32 %v5457, 0.0
        %v5755 = vmax.f32 %v4049, 0.0
        %v5756 = vmax.f32 %v4051, 0.0
        %v5757 = vmax.f32 %v5461, 0.0
        %v5758 = vmax.f32 %v5463, 0.0
        %v5759 = vmax.f32 %v4053, 0.0
        %v5760 = vmax.f32 %v4055, 0.0
        %v5761 = vmax.f32 %v5465, 0.0
        %v5762 = vmax.f32 %v5467, 0.0
        %v5763 = vmax.f32 %v4059, 0.0
        %v5764 = vmax.f32 %v4061, 0.0
        %v5765 = vmax.f32 %v5471, 0.0
        %v5766 = vmax.f32 %v5473, 0.0
        %v5767 = vmax.f32 %v4063, 0.0
        %v5768 = vmax.f32 %v4065, 0.0
        %v5769 = vmax.f32 %v5475, 0.0
        %v5770 = vmax.f32 %v5477, 0.0
        %v5771 = vmax.f32 %v4069, 0.0
        %v5772 = vmax.f32 %v4071, 0.0
        %v5773 = vmax.f32 %v5481, 0.0
        %v5774 = vmax.f32 %v5483, 0.0
        %v5775 = vmax.f32 %v4073, 0.0
        %v5776 = vmax.f32 %v4075, 0.0
        %v5777 = vmax.f32 %v5485, 0.0
        %v5778 = vmax.f32 %v5487, 0.0
        %v5779 = vmax.f32 %v4079, 0.0
        %v5780 = vmax.f32 %v4081, 0.0
        %v5781 = vmax.f32 %v5491, 0.0
        %v5782 = vmax.f32 %v5493, 0.0
        %v5783 = vmax.f32 %v4083, 0.0
        %v5784 = vmax.f32 %v4085, 0.0
        %v5785 = vmax.f32 %v5495, 0.0
        %v5786 = vmax.f32 %v5497, 0.0
        %v5787 = vmax.f32 %v4089, 0.0
        %v5788 = vmax.f32 %v4091, 0.0
        %v5789 = vmax.f32 %v5501, 0.0
        %v5790 = vmax.f32 %v5503, 0.0
        %v5791 = vmax.f32 %v4093, 0.0
        %v5792 = vmax.f32 %v4095, 0.0
        %v5793 = vmax.f32 %v5505, 0.0
        %v5794 = vmax.f32 %v5507, 0.0
        %v5795 = vmax.f32 %v4099, 0.0
        %v5796 = vmax.f32 %v4101, 0.0
        %v5797 = vmax.f32 %v5511, 0.0
        %v5798 = vmax.f32 %v5513, 0.0
        %v5799 = vmax.f32 %v4103, 0.0
        %v5800 = vmax.f32 %v4105, 0.0
        %v5801 = vmax.f32 %v5515, 0.0
        %v5802 = vmax.f32 %v5517, 0.0
        %v5803 = vmax.f32 %v4109, 0.0
        %v5804 = vmax.f32 %v4111, 0.0
        %v5805 = vmax.f32 %v5521, 0.0
        %v5806 = vmax.f32 %v5523, 0.0
        %v5807 = vmax.f32 %v4113, 0.0
        %v5808 = vmax.f32 %v4115, 0.0
        %v5809 = vmax.f32 %v5525, 0.0
        %v5810 = vmax.f32 %v5527, 0.0
        %v5811 = vmax.f32 %v4119, 0.0
        %v5812 = vmax.f32 %v4121, 0.0
        %v5813 = vmax.f32 %v5531, 0.0
        %v5814 = vmax.f32 %v5533, 0.0
        %v5815 = vmax.f32 %v4123, 0.0
        %v5816 = vmax.f32 %v4125, 0.0
        %v5817 = vmax.f32 %v5535, 0.0
        %v5818 = vmax.f32 %v5537, 0.0
        %v5819 = vmax.f32 %v4129, 0.0
        %v5820 = vmax.f32 %v4131, 0.0
        %v5821 = vmax.f32 %v5541, 0.0
        %v5822 = vmax.f32 %v5543, 0.0
        %v5823 = vmax.f32 %v4133, 0.0
        %v5824 = vmax.f32 %v4135, 0.0
        %v5825 = vmax.f32 %v5545, 0.0
        %v5826 = vmax.f32 %v5547, 0.0
        %v5827 = vmax.f32 %v4139, 0.0
        %v5828 = vmax.f32 %v4141, 0.0
        %v5829 = vmax.f32 %v5551, 0.0
        %v5830 = vmax.f32 %v5553, 0.0
        %v5831 = vmax.f32 %v4143, 0.0
        %v5832 = vmax.f32 %v4145, 0.0
        %v5833 = vmax.f32 %v5555, 0.0
        %v5834 = vmax.f32 %v5557, 0.0
        %v5835 = vmax.f32 %v4149, 0.0
        %v5836 = vmax.f32 %v4151, 0.0
        %v5837 = vmax.f32 %v5561, 0.0
        %v5838 = vmax.f32 %v5563, 0.0
        %v5839 = vmax.f32 %v4153, 0.0
        %v5840 = vmax.f32 %v4155, 0.0
        %v5841 = vmax.f32 %v5565, 0.0
        %v5842 = vmax.f32 %v5567, 0.0
        %v5843 = vmax.f32 %v4159, 0.0
        %v5844 = vmax.f32 %v4161, 0.0
        %v5845 = vmax.f32 %v5571, 0.0
        %v5846 = vmax.f32 %v5573, 0.0
        %v5847 = vmax.f32 %v4163, 0.0
        %v5848 = vmax.f32 %v4165, 0.0
        %v5849 = vmax.f32 %v5575, 0.0
        %v5850 = vmax.f32 %v5577, 0.0
        %v5851 = vmax.f32 %v4169, 0.0
        %v5852 = vmax.f32 %v4171, 0.0
        %v5853 = vmax.f32 %v5581, 0.0
        %v5854 = vmax.f32 %v5583, 0.0
        %v5855 = vmax.f32 %v4173, 0.0
        %v5856 = vmax.f32 %v4175, 0.0
        %v5857 = vmax.f32 %v5585, 0.0
        %v5858 = vmax.f32 %v5587, 0.0
        %v5859 = vmax.f32 %v4179, 0.0
        %v5860 = vmax.f32 %v4181, 0.0
        %v5861 = vmax.f32 %v5591, 0.0
        %v5862 = vmax.f32 %v5593, 0.0
        %v5863 = vmax.f32 %v4183, 0.0
        %v5864 = vmax.f32 %v4185, 0.0
        %v5865 = vmax.f32 %v5595, 0.0
        %v5866 = vmax.f32 %v5597, 0.0
        %v5867 = vmax.f32 %v4189, 0.0
        %v5868 = vmax.f32 %v4191, 0.0
        %v5869 = vmax.f32 %v5601, 0.0
        %v5870 = vmax.f32 %v5603, 0.0
        %v5871 = vmax.f32 %v4193, 0.0
        %v5872 = vmax.f32 %v4195, 0.0
        %v5873 = vmax.f32 %v5605, 0.0
        %v5874 = vmax.f32 %v5607, 0.0
        %v5875 = vmax.f32 %v4199, 0.0
        %v5876 = vmax.f32 %v4201, 0.0
        %v5877 = vmax.f32 %v5611, 0.0
        %v5878 = vmax.f32 %v5613, 0.0
        %v5879 = vmax.f32 %v4203, 0.0
        %v5880 = vmax.f32 %v4205, 0.0
        %v5881 = vmax.f32 %v5615, 0.0
        %v5882 = vmax.f32 %v5617, 0.0
        %v5883 = vmax.f32 %v4209, 0.0
        %v5884 = vmax.f32 %v4211, 0.0
        %v5885 = vmax.f32 %v5621, 0.0
        %v5886 = vmax.f32 %v5623, 0.0
        %v5887 = vmax.f32 %v4213, 0.0
        %v5888 = vmax.f32 %v4215, 0.0
        %v5889 = vmax.f32 %v5625, 0.0
        %v5890 = vmax.f32 %v5627, 0.0
        %v5891 = vmax.f32 %v4219, 0.0
        %v5892 = vmax.f32 %v4221, 0.0
        %v5893 = vmax.f32 %v5631, 0.0
        %v5894 = vmax.f32 %v5633, 0.0
        %v5895 = vmax.f32 %v4223, 0.0
        %v5896 = vmax.f32 %v4225, 0.0
        %v5897 = vmax.f32 %v5635, 0.0
        %v5898 = vmax.f32 %v5637, 0.0
        %v5899 = vmax.f32 %v4229, 0.0
        %v5900 = vmax.f32 %v4231, 0.0
        %v5901 = vmax.f32 %v5641, 0.0
        %v5902 = vmax.f32 %v5643, 0.0
        %v5903 = vmax.f32 %v4233, 0.0
        %v5904 = vmax.f32 %v4235, 0.0
        %v5905 = vmax.f32 %v5645, 0.0
        %v5906 = vmax.f32 %v5647, 0.0
        %v5907 = vmax.f32 %v4239, 0.0
        %v5908 = vmax.f32 %v4241, 0.0
        %v5909 = vmax.f32 %v5651, 0.0
        %v5910 = vmax.f32 %v5653, 0.0
        %v5911 = vmax.f32 %v4243, 0.0
        %v5912 = vmax.f32 %v4245, 0.0
        %v5913 = vmax.f32 %v5655, 0.0
        %v5914 = vmax.f32 %v5657, 0.0
        %v5915 = vlaneseq
        %v5916 = vshrl.u32 %v5915, 7
        %v5917 = vadd.s32 %v5916, 8
        %v5918 = vadd.s32 %v5916, 16
        %v5919 = vadd.s32 %v5916, 24
        %v5920 = vadd.s32 %v5916, 32
        %v5921 = vadd.s32 %v5916, 40
        %v5922 = vadd.s32 %v5916, 48
        %v5923 = vadd.s32 %v5916, 56
        %v5924 = vadd.s32 %v5916, 64
        %v5925 = vadd.s32 %v5916, 72
        %v5926 = vadd.s32 %v5916, 80
        %v5927 = vadd.s32 %v5916, 88
        %v5928 = vadd.s32 %v5916, 96
        %v5929 = vadd.s32 %v5916, 104
        %v5930 = vadd.s32 %v5916, 112
        %v5931 = vadd.s32 %v5916, 120
        %v5932 = vadd.s32 %v5916, 128
        %v5933 = vadd.s32 %v5916, 136
        %v5934 = vadd.s32 %v5916, 144
        %v5935 = vadd.s32 %v5916, 152
        %v5936 = vadd.s32 %v5916, 160
        %v5937 = vadd.s32 %v5916, 168
        %v5938 = vadd.s32 %v5916, 176
        %v5939 = vadd.s32 %v5916, 184
        %v5940 = vadd.s32 %v5916, 192
        %v5941 = vadd.s32 %v5916, 200
        %v5942 = vadd.s32 %v5916, 208
        %v5943 = vadd.s32 %v5916, 216
        %v5944 = vadd.s32 %v5916, 224
        %v5945 = vadd.s32 %v5916, 232
        %v5946 = vadd.s32 %v5916, 240
        %v5947 = vadd.s32 %v5916, 248
        %v5948 = vadd.s32 %v5916, 256
        %v5949 = vadd.s32 %v5916, 264
        %v5950 = vadd.s32 %v5916, 272
        %v5951 = vadd.s32 %v5916, 280
        %v5952 = vadd.s32 %v5916, 288
        %v5953 = vadd.s32 %v5916, 296
        %v5954 = vadd.s32 %v5916, 304
        %v5955 = vadd.s32 %v5916, 312
        %v5956 = vadd.s32 %v5916, 320
        %v5957 = vadd.s32 %v5916, 328
        %v5958 = vadd.s32 %v5916, 336
        %v5959 = vadd.s32 %v5916, 344
        %v5960 = vadd.s32 %v5916, 352
        %v5961 = vadd.s32 %v5916, 360
        %v5962 = vadd.s32 %v5916, 368
        %v5963 = vadd.s32 %v5916, 376
        %v5964 = vadd.s32 %v5916, 384
        %v5965 = vadd.s32 %v5916, 392
        %v5966 = vadd.s32 %v5916, 400
        %v5967 = vadd.s32 %v5916, 408
        %v5968 = vadd.s32 %v5916, 416
        %v5969 = vadd.s32 %v5916, 424
        %v5970 = vadd.s32 %v5916, 432
        %v5971 = vadd.s32 %v5916, 440
        %v5972 = vadd.s32 %v5916, 448
        %v5973 = vadd.s32 %v5916, 456
        %v5974 = vadd.s32 %v5916, 464
        %v5975 = vadd.s32 %v5916, 472
        %v5976 = vadd.s32 %v5916, 480
        %v5977 = vadd.s32 %v5916, 488
        %v5978 = vadd.s32 %v5916, 496
        %v5979 = vadd.s32 %v5916, 504
        %s5980 = smul.u32 %s30, 512
        %v5981 = vstv %s5980
        %v5982 = vadd.s32 %v5981, %v5916
        %v5983 = vadd.s32 %v5981, %v5917
        %v5984 = vadd.s32 %v5981, %v5918
        %v5985 = vadd.s32 %v5981, %v5919
        %v5986 = vadd.s32 %v5981, %v5920
        %v5987 = vadd.s32 %v5981, %v5921
        %v5988 = vadd.s32 %v5981, %v5922
        %v5989 = vadd.s32 %v5981, %v5923
        %v5990 = vadd.s32 %v5981, %v5924
        %v5991 = vadd.s32 %v5981, %v5925
        %v5992 = vadd.s32 %v5981, %v5926
        %v5993 = vadd.s32 %v5981, %v5927
        %v5994 = vadd.s32 %v5981, %v5928
        %v5995 = vadd.s32 %v5981, %v5929
        %v5996 = vadd.s32 %v5981, %v5930
        %v5997 = vadd.s32 %v5981, %v5931
        %v5998 = vadd.s32 %v5981, %v5932
        %v5999 = vadd.s32 %v5981, %v5933
        %v6000 = vadd.s32 %v5981, %v5934
        %v6001 = vadd.s32 %v5981, %v5935
        %v6002 = vadd.s32 %v5981, %v5936
        %v6003 = vadd.s32 %v5981, %v5937
        %v6004 = vadd.s32 %v5981, %v5938
        %v6005 = vadd.s32 %v5981, %v5939
        %v6006 = vadd.s32 %v5981, %v5940
        %v6007 = vadd.s32 %v5981, %v5941
        %v6008 = vadd.s32 %v5981, %v5942
        %v6009 = vadd.s32 %v5981, %v5943
        %v6010 = vadd.s32 %v5981, %v5944
        %v6011 = vadd.s32 %v5981, %v5945
        %v6012 = vadd.s32 %v5981, %v5946
        %v6013 = vadd.s32 %v5981, %v5947
        %v6014 = vadd.s32 %v5981, %v5948
        %v6015 = vadd.s32 %v5981, %v5949
        %v6016 = vadd.s32 %v5981, %v5950
        %v6017 = vadd.s32 %v5981, %v5951
        %v6018 = vadd.s32 %v5981, %v5952
        %v6019 = vadd.s32 %v5981, %v5953
        %v6020 = vadd.s32 %v5981, %v5954
        %v6021 = vadd.s32 %v5981, %v5955
        %v6022 = vadd.s32 %v5981, %v5956
        %v6023 = vadd.s32 %v5981, %v5957
        %v6024 = vadd.s32 %v5981, %v5958
        %v6025 = vadd.s32 %v5981, %v5959
        %v6026 = vadd.s32 %v5981, %v5960
        %v6027 = vadd.s32 %v5981, %v5961
        %v6028 = vadd.s32 %v5981, %v5962
        %v6029 = vadd.s32 %v5981, %v5963
        %v6030 = vadd.s32 %v5981, %v5964
        %v6031 = vadd.s32 %v5981, %v5965
        %v6032 = vadd.s32 %v5981, %v5966
        %v6033 = vadd.s32 %v5981, %v5967
        %v6034 = vadd.s32 %v5981, %v5968
        %v6035 = vadd.s32 %v5981, %v5969
        %v6036 = vadd.s32 %v5981, %v5970
        %v6037 = vadd.s32 %v5981, %v5971
        %v6038 = vadd.s32 %v5981, %v5972
        %v6039 = vadd.s32 %v5981, %v5973
        %v6040 = vadd.s32 %v5981, %v5974
        %v6041 = vadd.s32 %v5981, %v5975
        %v6042 = vadd.s32 %v5981, %v5976
        %v6043 = vadd.s32 %v5981, %v5977
        %v6044 = vadd.s32 %v5981, %v5978
        %v6045 = vadd.s32 %v5981, %v5979
        %s6046 = sld [smem:[#allocation5]]
        %v6047 = vstv %s6046
        %vm6048 = vcmp.lt.s32.totalorder %v5982, %v6047
        %vm6049 = vcmp.lt.s32.totalorder %v5983, %v6047
        %vm6050 = vcmp.lt.s32.totalorder %v5984, %v6047
        %vm6051 = vcmp.lt.s32.totalorder %v5985, %v6047
        %vm6052 = vcmp.lt.s32.totalorder %v5986, %v6047
        %vm6053 = vcmp.lt.s32.totalorder %v5987, %v6047
        %vm6054 = vcmp.lt.s32.totalorder %v5988, %v6047
        %vm6055 = vcmp.lt.s32.totalorder %v5989, %v6047
        %vm6056 = vcmp.lt.s32.totalorder %v5990, %v6047
        %vm6057 = vcmp.lt.s32.totalorder %v5991, %v6047
        %vm6058 = vcmp.lt.s32.totalorder %v5992, %v6047
        %vm6059 = vcmp.lt.s32.totalorder %v5993, %v6047
        %vm6060 = vcmp.lt.s32.totalorder %v5994, %v6047
        %vm6061 = vcmp.lt.s32.totalorder %v5995, %v6047
        %vm6062 = vcmp.lt.s32.totalorder %v5996, %v6047
        %vm6063 = vcmp.lt.s32.totalorder %v5997, %v6047
        %vm6064 = vcmp.lt.s32.totalorder %v5998, %v6047
        %vm6065 = vcmp.lt.s32.totalorder %v5999, %v6047
        %vm6066 = vcmp.lt.s32.totalorder %v6000, %v6047
        %vm6067 = vcmp.lt.s32.totalorder %v6001, %v6047
        %vm6068 = vcmp.lt.s32.totalorder %v6002, %v6047
        %vm6069 = vcmp.lt.s32.totalorder %v6003, %v6047
        %vm6070 = vcmp.lt.s32.totalorder %v6004, %v6047
        %vm6071 = vcmp.lt.s32.totalorder %v6005, %v6047
        %vm6072 = vcmp.lt.s32.totalorder %v6006, %v6047
        %vm6073 = vcmp.lt.s32.totalorder %v6007, %v6047
        %vm6074 = vcmp.lt.s32.totalorder %v6008, %v6047
        %vm6075 = vcmp.lt.s32.totalorder %v6009, %v6047
        %vm6076 = vcmp.lt.s32.totalorder %v6010, %v6047
        %vm6077 = vcmp.lt.s32.totalorder %v6011, %v6047
        %vm6078 = vcmp.lt.s32.totalorder %v6012, %v6047
        %vm6079 = vcmp.lt.s32.totalorder %v6013, %v6047
        %vm6080 = vcmp.lt.s32.totalorder %v6014, %v6047
        %vm6081 = vcmp.lt.s32.totalorder %v6015, %v6047
        %vm6082 = vcmp.lt.s32.totalorder %v6016, %v6047
        %vm6083 = vcmp.lt.s32.totalorder %v6017, %v6047
        %vm6084 = vcmp.lt.s32.totalorder %v6018, %v6047
        %vm6085 = vcmp.lt.s32.totalorder %v6019, %v6047
        %vm6086 = vcmp.lt.s32.totalorder %v6020, %v6047
        %vm6087 = vcmp.lt.s32.totalorder %v6021, %v6047
        %vm6088 = vcmp.lt.s32.totalorder %v6022, %v6047
        %vm6089 = vcmp.lt.s32.totalorder %v6023, %v6047
        %vm6090 = vcmp.lt.s32.totalorder %v6024, %v6047
        %vm6091 = vcmp.lt.s32.totalorder %v6025, %v6047
        %vm6092 = vcmp.lt.s32.totalorder %v6026, %v6047
        %vm6093 = vcmp.lt.s32.totalorder %v6027, %v6047
        %vm6094 = vcmp.lt.s32.totalorder %v6028, %v6047
        %vm6095 = vcmp.lt.s32.totalorder %v6029, %v6047
        %vm6096 = vcmp.lt.s32.totalorder %v6030, %v6047
        %vm6097 = vcmp.lt.s32.totalorder %v6031, %v6047
        %vm6098 = vcmp.lt.s32.totalorder %v6032, %v6047
        %vm6099 = vcmp.lt.s32.totalorder %v6033, %v6047
        %vm6100 = vcmp.lt.s32.totalorder %v6034, %v6047
        %vm6101 = vcmp.lt.s32.totalorder %v6035, %v6047
        %vm6102 = vcmp.lt.s32.totalorder %v6036, %v6047
        %vm6103 = vcmp.lt.s32.totalorder %v6037, %v6047
        %vm6104 = vcmp.lt.s32.totalorder %v6038, %v6047
        %vm6105 = vcmp.lt.s32.totalorder %v6039, %v6047
        %vm6106 = vcmp.lt.s32.totalorder %v6040, %v6047
        %vm6107 = vcmp.lt.s32.totalorder %v6041, %v6047
        %vm6108 = vcmp.lt.s32.totalorder %v6042, %v6047
        %vm6109 = vcmp.lt.s32.totalorder %v6043, %v6047
        %vm6110 = vcmp.lt.s32.totalorder %v6044, %v6047
        %vm6111 = vcmp.lt.s32.totalorder %v6045, %v6047
        %v6112 = vsel %vm6048, 1, 0
        %v6113 = vsel %vm6049, 1, 0
        %v6114 = vsel %vm6050, 1, 0
        %v6115 = vsel %vm6051, 1, 0
        %v6116 = vsel %vm6052, 1, 0
        %v6117 = vsel %vm6053, 1, 0
        %v6118 = vsel %vm6054, 1, 0
        %v6119 = vsel %vm6055, 1, 0
        %v6120 = vsel %vm6056, 1, 0
        %v6121 = vsel %vm6057, 1, 0
        %v6122 = vsel %vm6058, 1, 0
        %v6123 = vsel %vm6059, 1, 0
        %v6124 = vsel %vm6060, 1, 0
        %v6125 = vsel %vm6061, 1, 0
        %v6126 = vsel %vm6062, 1, 0
        %v6127 = vsel %vm6063, 1, 0
        %v6128 = vsel %vm6064, 1, 0
        %v6129 = vsel %vm6065, 1, 0
        %v6130 = vsel %vm6066, 1, 0
        %v6131 = vsel %vm6067, 1, 0
        %v6132 = vsel %vm6068, 1, 0
        %v6133 = vsel %vm6069, 1, 0
        %v6134 = vsel %vm6070, 1, 0
        %v6135 = vsel %vm6071, 1, 0
        %v6136 = vsel %vm6072, 1, 0
        %v6137 = vsel %vm6073, 1, 0
        %v6138 = vsel %vm6074, 1, 0
        %v6139 = vsel %vm6075, 1, 0
        %v6140 = vsel %vm6076, 1, 0
        %v6141 = vsel %vm6077, 1, 0
        %v6142 = vsel %vm6078, 1, 0
        %v6143 = vsel %vm6079, 1, 0
        %v6144 = vsel %vm6080, 1, 0
        %v6145 = vsel %vm6081, 1, 0
        %v6146 = vsel %vm6082, 1, 0
        %v6147 = vsel %vm6083, 1, 0
        %v6148 = vsel %vm6084, 1, 0
        %v6149 = vsel %vm6085, 1, 0
        %v6150 = vsel %vm6086, 1, 0
        %v6151 = vsel %vm6087, 1, 0
        %v6152 = vsel %vm6088, 1, 0
        %v6153 = vsel %vm6089, 1, 0
        %v6154 = vsel %vm6090, 1, 0
        %v6155 = vsel %vm6091, 1, 0
        %v6156 = vsel %vm6092, 1, 0
        %v6157 = vsel %vm6093, 1, 0
        %v6158 = vsel %vm6094, 1, 0
        %v6159 = vsel %vm6095, 1, 0
        %v6160 = vsel %vm6096, 1, 0
        %v6161 = vsel %vm6097, 1, 0
        %v6162 = vsel %vm6098, 1, 0
        %v6163 = vsel %vm6099, 1, 0
        %v6164 = vsel %vm6100, 1, 0
        %v6165 = vsel %vm6101, 1, 0
        %v6166 = vsel %vm6102, 1, 0
        %v6167 = vsel %vm6103, 1, 0
        %v6168 = vsel %vm6104, 1, 0
        %v6169 = vsel %vm6105, 1, 0
        %v6170 = vsel %vm6106, 1, 0
        %v6171 = vsel %vm6107, 1, 0
        %v6172 = vsel %vm6108, 1, 0
        %v6173 = vsel %vm6109, 1, 0
        %v6174 = vsel %vm6110, 1, 0
        %v6175 = vsel %vm6111, 1, 0
        %vm6176 = vcmp.eq.s32.totalorder %v6112, 1
        %vm6177 = vcmp.eq.s32.totalorder %v6113, 1
        %vm6178 = vcmp.eq.s32.totalorder %v6114, 1
        %vm6179 = vcmp.eq.s32.totalorder %v6115, 1
        %vm6180 = vcmp.eq.s32.totalorder %v6116, 1
        %vm6181 = vcmp.eq.s32.totalorder %v6117, 1
        %vm6182 = vcmp.eq.s32.totalorder %v6118, 1
        %vm6183 = vcmp.eq.s32.totalorder %v6119, 1
        %vm6184 = vcmp.eq.s32.totalorder %v6120, 1
        %vm6185 = vcmp.eq.s32.totalorder %v6121, 1
        %vm6186 = vcmp.eq.s32.totalorder %v6122, 1
        %vm6187 = vcmp.eq.s32.totalorder %v6123, 1
        %vm6188 = vcmp.eq.s32.totalorder %v6124, 1
        %vm6189 = vcmp.eq.s32.totalorder %v6125, 1
        %vm6190 = vcmp.eq.s32.totalorder %v6126, 1
        %vm6191 = vcmp.eq.s32.totalorder %v6127, 1
        %vm6192 = vcmp.eq.s32.totalorder %v6128, 1
        %vm6193 = vcmp.eq.s32.totalorder %v6129, 1
        %vm6194 = vcmp.eq.s32.totalorder %v6130, 1
        %vm6195 = vcmp.eq.s32.totalorder %v6131, 1
        %vm6196 = vcmp.eq.s32.totalorder %v6132, 1
        %vm6197 = vcmp.eq.s32.totalorder %v6133, 1
        %vm6198 = vcmp.eq.s32.totalorder %v6134, 1
        %vm6199 = vcmp.eq.s32.totalorder %v6135, 1
        %vm6200 = vcmp.eq.s32.totalorder %v6136, 1
        %vm6201 = vcmp.eq.s32.totalorder %v6137, 1
        %vm6202 = vcmp.eq.s32.totalorder %v6138, 1
        %vm6203 = vcmp.eq.s32.totalorder %v6139, 1
        %vm6204 = vcmp.eq.s32.totalorder %v6140, 1
        %vm6205 = vcmp.eq.s32.totalorder %v6141, 1
        %vm6206 = vcmp.eq.s32.totalorder %v6142, 1
        %vm6207 = vcmp.eq.s32.totalorder %v6143, 1
        %vm6208 = vcmp.eq.s32.totalorder %v6144, 1
        %vm6209 = vcmp.eq.s32.totalorder %v6145, 1
        %vm6210 = vcmp.eq.s32.totalorder %v6146, 1
        %vm6211 = vcmp.eq.s32.totalorder %v6147, 1
        %vm6212 = vcmp.eq.s32.totalorder %v6148, 1
        %vm6213 = vcmp.eq.s32.totalorder %v6149, 1
        %vm6214 = vcmp.eq.s32.totalorder %v6150, 1
        %vm6215 = vcmp.eq.s32.totalorder %v6151, 1
        %vm6216 = vcmp.eq.s32.totalorder %v6152, 1
        %vm6217 = vcmp.eq.s32.totalorder %v6153, 1
        %vm6218 = vcmp.eq.s32.totalorder %v6154, 1
        %vm6219 = vcmp.eq.s32.totalorder %v6155, 1
        %vm6220 = vcmp.eq.s32.totalorder %v6156, 1
        %vm6221 = vcmp.eq.s32.totalorder %v6157, 1
        %vm6222 = vcmp.eq.s32.totalorder %v6158, 1
        %vm6223 = vcmp.eq.s32.totalorder %v6159, 1
        %vm6224 = vcmp.eq.s32.totalorder %v6160, 1
        %vm6225 = vcmp.eq.s32.totalorder %v6161, 1
        %vm6226 = vcmp.eq.s32.totalorder %v6162, 1
        %vm6227 = vcmp.eq.s32.totalorder %v6163, 1
        %vm6228 = vcmp.eq.s32.totalorder %v6164, 1
        %vm6229 = vcmp.eq.s32.totalorder %v6165, 1
        %vm6230 = vcmp.eq.s32.totalorder %v6166, 1
        %vm6231 = vcmp.eq.s32.totalorder %v6167, 1
        %vm6232 = vcmp.eq.s32.totalorder %v6168, 1
        %vm6233 = vcmp.eq.s32.totalorder %v6169, 1
        %vm6234 = vcmp.eq.s32.totalorder %v6170, 1
        %vm6235 = vcmp.eq.s32.totalorder %v6171, 1
        %vm6236 = vcmp.eq.s32.totalorder %v6172, 1
        %vm6237 = vcmp.eq.s32.totalorder %v6173, 1
        %vm6238 = vcmp.eq.s32.totalorder %v6174, 1
        %vm6239 = vcmp.eq.s32.totalorder %v6175, 1
        %v6240 = vsel %vm6176, %v5659, 0.0
        %v6241 = vsel %vm6176, %v5660, 0.0
        %v6242 = vsel %vm6176, %v5661, 0.0
        %v6243 = vsel %vm6176, %v5662, 0.0
        %v6244 = vsel %vm6177, %v5663, 0.0
        %v6245 = vsel %vm6177, %v5664, 0.0
        %v6246 = vsel %vm6177, %v5665, 0.0
        %v6247 = vsel %vm6177, %v5666, 0.0
        %v6248 = vsel %vm6178, %v5667, 0.0
        %v6249 = vsel %vm6178, %v5668, 0.0
        %v6250 = vsel %vm6178, %v5669, 0.0
        %v6251 = vsel %vm6178, %v5670, 0.0
        %v6252 = vsel %vm6179, %v5671, 0.0
        %v6253 = vsel %vm6179, %v5672, 0.0
        %v6254 = vsel %vm6179, %v5673, 0.0
        %v6255 = vsel %vm6179, %v5674, 0.0
        %v6256 = vsel %vm6180, %v5675, 0.0
        %v6257 = vsel %vm6180, %v5676, 0.0
        %v6258 = vsel %vm6180, %v5677, 0.0
        %v6259 = vsel %vm6180, %v5678, 0.0
        %v6260 = vsel %vm6181, %v5679, 0.0
        %v6261 = vsel %vm6181, %v5680, 0.0
        %v6262 = vsel %vm6181, %v5681, 0.0
        %v6263 = vsel %vm6181, %v5682, 0.0
        %v6264 = vsel %vm6182, %v5683, 0.0
        %v6265 = vsel %vm6182, %v5684, 0.0
        %v6266 = vsel %vm6182, %v5685, 0.0
        %v6267 = vsel %vm6182, %v5686, 0.0
        %v6268 = vsel %vm6183, %v5687, 0.0
        %v6269 = vsel %vm6183, %v5688, 0.0
        %v6270 = vsel %vm6183, %v5689, 0.0
        %v6271 = vsel %vm6183, %v5690, 0.0
        %v6272 = vsel %vm6184, %v5691, 0.0
        %v6273 = vsel %vm6184, %v5692, 0.0
        %v6274 = vsel %vm6184, %v5693, 0.0
        %v6275 = vsel %vm6184, %v5694, 0.0
        %v6276 = vsel %vm6185, %v5695, 0.0
        %v6277 = vsel %vm6185, %v5696, 0.0
        %v6278 = vsel %vm6185, %v5697, 0.0
        %v6279 = vsel %vm6185, %v5698, 0.0
        %v6280 = vsel %vm6186, %v5699, 0.0
        %v6281 = vsel %vm6186, %v5700, 0.0
        %v6282 = vsel %vm6186, %v5701, 0.0
        %v6283 = vsel %vm6186, %v5702, 0.0
        %v6284 = vsel %vm6187, %v5703, 0.0
        %v6285 = vsel %vm6187, %v5704, 0.0
        %v6286 = vsel %vm6187, %v5705, 0.0
        %v6287 = vsel %vm6187, %v5706, 0.0
        %v6288 = vsel %vm6188, %v5707, 0.0
        %v6289 = vsel %vm6188, %v5708, 0.0
        %v6290 = vsel %vm6188, %v5709, 0.0
        %v6291 = vsel %vm6188, %v5710, 0.0
        %v6292 = vsel %vm6189, %v5711, 0.0
        %v6293 = vsel %vm6189, %v5712, 0.0
        %v6294 = vsel %vm6189, %v5713, 0.0
        %v6295 = vsel %vm6189, %v5714, 0.0
        %v6296 = vsel %vm6190, %v5715, 0.0
        %v6297 = vsel %vm6190, %v5716, 0.0
        %v6298 = vsel %vm6190, %v5717, 0.0
        %v6299 = vsel %vm6190, %v5718, 0.0
        %v6300 = vsel %vm6191, %v5719, 0.0
        %v6301 = vsel %vm6191, %v5720, 0.0
        %v6302 = vsel %vm6191, %v5721, 0.0
        %v6303 = vsel %vm6191, %v5722, 0.0
        %v6304 = vsel %vm6192, %v5723, 0.0
        %v6305 = vsel %vm6192, %v5724, 0.0
        %v6306 = vsel %vm6192, %v5725, 0.0
        %v6307 = vsel %vm6192, %v5726, 0.0
        %v6308 = vsel %vm6193, %v5727, 0.0
        %v6309 = vsel %vm6193, %v5728, 0.0
        %v6310 = vsel %vm6193, %v5729, 0.0
        %v6311 = vsel %vm6193, %v5730, 0.0
        %v6312 = vsel %vm6194, %v5731, 0.0
        %v6313 = vsel %vm6194, %v5732, 0.0
        %v6314 = vsel %vm6194, %v5733, 0.0
        %v6315 = vsel %vm6194, %v5734, 0.0
        %v6316 = vsel %vm6195, %v5735, 0.0
        %v6317 = vsel %vm6195, %v5736, 0.0
        %v6318 = vsel %vm6195, %v5737, 0.0
        %v6319 = vsel %vm6195, %v5738, 0.0
        %v6320 = vsel %vm6196, %v5739, 0.0
        %v6321 = vsel %vm6196, %v5740, 0.0
        %v6322 = vsel %vm6196, %v5741, 0.0
        %v6323 = vsel %vm6196, %v5742, 0.0
        %v6324 = vsel %vm6197, %v5743, 0.0
        %v6325 = vsel %vm6197, %v5744, 0.0
        %v6326 = vsel %vm6197, %v5745, 0.0
        %v6327 = vsel %vm6197, %v5746, 0.0
        %v6328 = vsel %vm6198, %v5747, 0.0
        %v6329 = vsel %vm6198, %v5748, 0.0
        %v6330 = vsel %vm6198, %v5749, 0.0
        %v6331 = vsel %vm6198, %v5750, 0.0
        %v6332 = vsel %vm6199, %v5751, 0.0
        %v6333 = vsel %vm6199, %v5752, 0.0
        %v6334 = vsel %vm6199, %v5753, 0.0
        %v6335 = vsel %vm6199, %v5754, 0.0
        %v6336 = vsel %vm6200, %v5755, 0.0
        %v6337 = vsel %vm6200, %v5756, 0.0
        %v6338 = vsel %vm6200, %v5757, 0.0
        %v6339 = vsel %vm6200, %v5758, 0.0
        %v6340 = vsel %vm6201, %v5759, 0.0
        %v6341 = vsel %vm6201, %v5760, 0.0
        %v6342 = vsel %vm6201, %v5761, 0.0
        %v6343 = vsel %vm6201, %v5762, 0.0
        %v6344 = vsel %vm6202, %v5763, 0.0
        %v6345 = vsel %vm6202, %v5764, 0.0
        %v6346 = vsel %vm6202, %v5765, 0.0
        %v6347 = vsel %vm6202, %v5766, 0.0
        %v6348 = vsel %vm6203, %v5767, 0.0
        %v6349 = vsel %vm6203, %v5768, 0.0
        %v6350 = vsel %vm6203, %v5769, 0.0
        %v6351 = vsel %vm6203, %v5770, 0.0
        %v6352 = vsel %vm6204, %v5771, 0.0
        %v6353 = vsel %vm6204, %v5772, 0.0
        %v6354 = vsel %vm6204, %v5773, 0.0
        %v6355 = vsel %vm6204, %v5774, 0.0
        %v6356 = vsel %vm6205, %v5775, 0.0
        %v6357 = vsel %vm6205, %v5776, 0.0
        %v6358 = vsel %vm6205, %v5777, 0.0
        %v6359 = vsel %vm6205, %v5778, 0.0
        %v6360 = vsel %vm6206, %v5779, 0.0
        %v6361 = vsel %vm6206, %v5780, 0.0
        %v6362 = vsel %vm6206, %v5781, 0.0
        %v6363 = vsel %vm6206, %v5782, 0.0
        %v6364 = vsel %vm6207, %v5783, 0.0
        %v6365 = vsel %vm6207, %v5784, 0.0
        %v6366 = vsel %vm6207, %v5785, 0.0
        %v6367 = vsel %vm6207, %v5786, 0.0
        %v6368 = vsel %vm6208, %v5787, 0.0
        %v6369 = vsel %vm6208, %v5788, 0.0
        %v6370 = vsel %vm6208, %v5789, 0.0
        %v6371 = vsel %vm6208, %v5790, 0.0
        %v6372 = vsel %vm6209, %v5791, 0.0
        %v6373 = vsel %vm6209, %v5792, 0.0
        %v6374 = vsel %vm6209, %v5793, 0.0
        %v6375 = vsel %vm6209, %v5794, 0.0
        %v6376 = vsel %vm6210, %v5795, 0.0
        %v6377 = vsel %vm6210, %v5796, 0.0
        %v6378 = vsel %vm6210, %v5797, 0.0
        %v6379 = vsel %vm6210, %v5798, 0.0
        %v6380 = vsel %vm6211, %v5799, 0.0
        %v6381 = vsel %vm6211, %v5800, 0.0
        %v6382 = vsel %vm6211, %v5801, 0.0
        %v6383 = vsel %vm6211, %v5802, 0.0
        %v6384 = vsel %vm6212, %v5803, 0.0
        %v6385 = vsel %vm6212, %v5804, 0.0
        %v6386 = vsel %vm6212, %v5805, 0.0
        %v6387 = vsel %vm6212, %v5806, 0.0
        %v6388 = vsel %vm6213, %v5807, 0.0
        %v6389 = vsel %vm6213, %v5808, 0.0
        %v6390 = vsel %vm6213, %v5809, 0.0
        %v6391 = vsel %vm6213, %v5810, 0.0
        %v6392 = vsel %vm6214, %v5811, 0.0
        %v6393 = vsel %vm6214, %v5812, 0.0
        %v6394 = vsel %vm6214, %v5813, 0.0
        %v6395 = vsel %vm6214, %v5814, 0.0
        %v6396 = vsel %vm6215, %v5815, 0.0
        %v6397 = vsel %vm6215, %v5816, 0.0
        %v6398 = vsel %vm6215, %v5817, 0.0
        %v6399 = vsel %vm6215, %v5818, 0.0
        %v6400 = vsel %vm6216, %v5819, 0.0
        %v6401 = vsel %vm6216, %v5820, 0.0
        %v6402 = vsel %vm6216, %v5821, 0.0
        %v6403 = vsel %vm6216, %v5822, 0.0
        %v6404 = vsel %vm6217, %v5823, 0.0
        %v6405 = vsel %vm6217, %v5824, 0.0
        %v6406 = vsel %vm6217, %v5825, 0.0
        %v6407 = vsel %vm6217, %v5826, 0.0
        %v6408 = vsel %vm6218, %v5827, 0.0
        %v6409 = vsel %vm6218, %v5828, 0.0
        %v6410 = vsel %vm6218, %v5829, 0.0
        %v6411 = vsel %vm6218, %v5830, 0.0
        %v6412 = vsel %vm6219, %v5831, 0.0
        %v6413 = vsel %vm6219, %v5832, 0.0
        %v6414 = vsel %vm6219, %v5833, 0.0
        %v6415 = vsel %vm6219, %v5834, 0.0
        %v6416 = vsel %vm6220, %v5835, 0.0
        %v6417 = vsel %vm6220, %v5836, 0.0
        %v6418 = vsel %vm6220, %v5837, 0.0
        %v6419 = vsel %vm6220, %v5838, 0.0
        %v6420 = vsel %vm6221, %v5839, 0.0
        %v6421 = vsel %vm6221, %v5840, 0.0
        %v6422 = vsel %vm6221, %v5841, 0.0
        %v6423 = vsel %vm6221, %v5842, 0.0
        %v6424 = vsel %vm6222, %v5843, 0.0
        %v6425 = vsel %vm6222, %v5844, 0.0
        %v6426 = vsel %vm6222, %v5845, 0.0
        %v6427 = vsel %vm6222, %v5846, 0.0
        %v6428 = vsel %vm6223, %v5847, 0.0
        %v6429 = vsel %vm6223, %v5848, 0.0
        %v6430 = vsel %vm6223, %v5849, 0.0
        %v6431 = vsel %vm6223, %v5850, 0.0
        %v6432 = vsel %vm6224, %v5851, 0.0
        %v6433 = vsel %vm6224, %v5852, 0.0
        %v6434 = vsel %vm6224, %v5853, 0.0
        %v6435 = vsel %vm6224, %v5854, 0.0
        %v6436 = vsel %vm6225, %v5855, 0.0
        %v6437 = vsel %vm6225, %v5856, 0.0
        %v6438 = vsel %vm6225, %v5857, 0.0
        %v6439 = vsel %vm6225, %v5858, 0.0
        %v6440 = vsel %vm6226, %v5859, 0.0
        %v6441 = vsel %vm6226, %v5860, 0.0
        %v6442 = vsel %vm6226, %v5861, 0.0
        %v6443 = vsel %vm6226, %v5862, 0.0
        %v6444 = vsel %vm6227, %v5863, 0.0
        %v6445 = vsel %vm6227, %v5864, 0.0
        %v6446 = vsel %vm6227, %v5865, 0.0
        %v6447 = vsel %vm6227, %v5866, 0.0
        %v6448 = vsel %vm6228, %v5867, 0.0
        %v6449 = vsel %vm6228, %v5868, 0.0
        %v6450 = vsel %vm6228, %v5869, 0.0
        %v6451 = vsel %vm6228, %v5870, 0.0
        %v6452 = vsel %vm6229, %v5871, 0.0
        %v6453 = vsel %vm6229, %v5872, 0.0
        %v6454 = vsel %vm6229, %v5873, 0.0
        %v6455 = vsel %vm6229, %v5874, 0.0
        %v6456 = vsel %vm6230, %v5875, 0.0
        %v6457 = vsel %vm6230, %v5876, 0.0
        %v6458 = vsel %vm6230, %v5877, 0.0
        %v6459 = vsel %vm6230, %v5878, 0.0
        %v6460 = vsel %vm6231, %v5879, 0.0
        %v6461 = vsel %vm6231, %v5880, 0.0
        %v6462 = vsel %vm6231, %v5881, 0.0
        %v6463 = vsel %vm6231, %v5882, 0.0
        %v6464 = vsel %vm6232, %v5883, 0.0
        %v6465 = vsel %vm6232, %v5884, 0.0
        %v6466 = vsel %vm6232, %v5885, 0.0
        %v6467 = vsel %vm6232, %v5886, 0.0
        %v6468 = vsel %vm6233, %v5887, 0.0
        %v6469 = vsel %vm6233, %v5888, 0.0
        %v6470 = vsel %vm6233, %v5889, 0.0
        %v6471 = vsel %vm6233, %v5890, 0.0
        %v6472 = vsel %vm6234, %v5891, 0.0
        %v6473 = vsel %vm6234, %v5892, 0.0
        %v6474 = vsel %vm6234, %v5893, 0.0
        %v6475 = vsel %vm6234, %v5894, 0.0
        %v6476 = vsel %vm6235, %v5895, 0.0
        %v6477 = vsel %vm6235, %v5896, 0.0
        %v6478 = vsel %vm6235, %v5897, 0.0
        %v6479 = vsel %vm6235, %v5898, 0.0
        %v6480 = vsel %vm6236, %v5899, 0.0
        %v6481 = vsel %vm6236, %v5900, 0.0
        %v6482 = vsel %vm6236, %v5901, 0.0
        %v6483 = vsel %vm6236, %v5902, 0.0
        %v6484 = vsel %vm6237, %v5903, 0.0
        %v6485 = vsel %vm6237, %v5904, 0.0
        %v6486 = vsel %vm6237, %v5905, 0.0
        %v6487 = vsel %vm6237, %v5906, 0.0
        %v6488 = vsel %vm6238, %v5907, 0.0
        %v6489 = vsel %vm6238, %v5908, 0.0
        %v6490 = vsel %vm6238, %v5909, 0.0
        %v6491 = vsel %vm6238, %v5910, 0.0
        %v6492 = vsel %vm6239, %v5911, 0.0
        %v6493 = vsel %vm6239, %v5912, 0.0
        %v6494 = vsel %vm6239, %v5913, 0.0
        %v6495 = vsel %vm6239, %v5914, 0.0
        %v6496 = vpack.c.bf16 %v6244, %v6240
        %v6497 = vpack.c.bf16 %v6245, %v6241
        %v6498 = vpack.c.bf16 %v6246, %v6242
        %v6499 = vpack.c.bf16 %v6247, %v6243
        %v6500 = vpack.c.bf16 %v6252, %v6248
        %v6501 = vpack.c.bf16 %v6253, %v6249
        %v6502 = vpack.c.bf16 %v6254, %v6250
        %v6503 = vpack.c.bf16 %v6255, %v6251
        %v6504 = vpack.c.bf16 %v6260, %v6256
        %v6505 = vpack.c.bf16 %v6261, %v6257
        %v6506 = vpack.c.bf16 %v6262, %v6258
        %v6507 = vpack.c.bf16 %v6263, %v6259
        %v6508 = vpack.c.bf16 %v6268, %v6264
        %v6509 = vpack.c.bf16 %v6269, %v6265
        %v6510 = vpack.c.bf16 %v6270, %v6266
        %v6511 = vpack.c.bf16 %v6271, %v6267
        %v6512 = vpack.c.bf16 %v6276, %v6272
        %v6513 = vpack.c.bf16 %v6277, %v6273
        %v6514 = vpack.c.bf16 %v6278, %v6274
        %v6515 = vpack.c.bf16 %v6279, %v6275
        %v6516 = vpack.c.bf16 %v6284, %v6280
        %v6517 = vpack.c.bf16 %v6285, %v6281
        %v6518 = vpack.c.bf16 %v6286, %v6282
        %v6519 = vpack.c.bf16 %v6287, %v6283
        %v6520 = vpack.c.bf16 %v6292, %v6288
        %v6521 = vpack.c.bf16 %v6293, %v6289
        %v6522 = vpack.c.bf16 %v6294, %v6290
        %v6523 = vpack.c.bf16 %v6295, %v6291
        %v6524 = vpack.c.bf16 %v6300, %v6296
        %v6525 = vpack.c.bf16 %v6301, %v6297
        %v6526 = vpack.c.bf16 %v6302, %v6298
        %v6527 = vpack.c.bf16 %v6303, %v6299
        %v6528 = vpack.c.bf16 %v6308, %v6304
        %v6529 = vpack.c.bf16 %v6309, %v6305
        %v6530 = vpack.c.bf16 %v6310, %v6306
        %v6531 = vpack.c.bf16 %v6311, %v6307
        %v6532 = vpack.c.bf16 %v6316, %v6312
        %v6533 = vpack.c.bf16 %v6317, %v6313
        %v6534 = vpack.c.bf16 %v6318, %v6314
        %v6535 = vpack.c.bf16 %v6319, %v6315
        %v6536 = vpack.c.bf16 %v6324, %v6320
        %v6537 = vpack.c.bf16 %v6325, %v6321
        %v6538 = vpack.c.bf16 %v6326, %v6322
        %v6539 = vpack.c.bf16 %v6327, %v6323
        %v6540 = vpack.c.bf16 %v6332, %v6328
        %v6541 = vpack.c.bf16 %v6333, %v6329
        %v6542 = vpack.c.bf16 %v6334, %v6330
        %v6543 = vpack.c.bf16 %v6335, %v6331
        %v6544 = vpack.c.bf16 %v6340, %v6336
        %v6545 = vpack.c.bf16 %v6341, %v6337
        %v6546 = vpack.c.bf16 %v6342, %v6338
        %v6547 = vpack.c.bf16 %v6343, %v6339
        %v6548 = vpack.c.bf16 %v6348, %v6344
        %v6549 = vpack.c.bf16 %v6349, %v6345
        %v6550 = vpack.c.bf16 %v6350, %v6346
        %v6551 = vpack.c.bf16 %v6351, %v6347
        %v6552 = vpack.c.bf16 %v6356, %v6352
        %v6553 = vpack.c.bf16 %v6357, %v6353
        %v6554 = vpack.c.bf16 %v6358, %v6354
        %v6555 = vpack.c.bf16 %v6359, %v6355
        %v6556 = vpack.c.bf16 %v6364, %v6360
        %v6557 = vpack.c.bf16 %v6365, %v6361
        %v6558 = vpack.c.bf16 %v6366, %v6362
        %v6559 = vpack.c.bf16 %v6367, %v6363
        %v6560 = vpack.c.bf16 %v6372, %v6368
        %v6561 = vpack.c.bf16 %v6373, %v6369
        %v6562 = vpack.c.bf16 %v6374, %v6370
        %v6563 = vpack.c.bf16 %v6375, %v6371
        %v6564 = vpack.c.bf16 %v6380, %v6376
        %v6565 = vpack.c.bf16 %v6381, %v6377
        %v6566 = vpack.c.bf16 %v6382, %v6378
        %v6567 = vpack.c.bf16 %v6383, %v6379
        %v6568 = vpack.c.bf16 %v6388, %v6384
        %v6569 = vpack.c.bf16 %v6389, %v6385
        %v6570 = vpack.c.bf16 %v6390, %v6386
        %v6571 = vpack.c.bf16 %v6391, %v6387
        %v6572 = vpack.c.bf16 %v6396, %v6392
        %v6573 = vpack.c.bf16 %v6397, %v6393
        %v6574 = vpack.c.bf16 %v6398, %v6394
        %v6575 = vpack.c.bf16 %v6399, %v6395
        %v6576 = vpack.c.bf16 %v6404, %v6400
        %v6577 = vpack.c.bf16 %v6405, %v6401
        %v6578 = vpack.c.bf16 %v6406, %v6402
        %v6579 = vpack.c.bf16 %v6407, %v6403
        %v6580 = vpack.c.bf16 %v6412, %v6408
        %v6581 = vpack.c.bf16 %v6413, %v6409
        %v6582 = vpack.c.bf16 %v6414, %v6410
        %v6583 = vpack.c.bf16 %v6415, %v6411
        %v6584 = vpack.c.bf16 %v6420, %v6416
        %v6585 = vpack.c.bf16 %v6421, %v6417
        %v6586 = vpack.c.bf16 %v6422, %v6418
        %v6587 = vpack.c.bf16 %v6423, %v6419
        %v6588 = vpack.c.bf16 %v6428, %v6424
        %v6589 = vpack.c.bf16 %v6429, %v6425
        %v6590 = vpack.c.bf16 %v6430, %v6426
        %v6591 = vpack.c.bf16 %v6431, %v6427
        %v6592 = vpack.c.bf16 %v6436, %v6432
        %v6593 = vpack.c.bf16 %v6437, %v6433
        %v6594 = vpack.c.bf16 %v6438, %v6434
        %v6595 = vpack.c.bf16 %v6439, %v6435
        %v6596 = vpack.c.bf16 %v6444, %v6440
        %v6597 = vpack.c.bf16 %v6445, %v6441
        %v6598 = vpack.c.bf16 %v6446, %v6442
        %v6599 = vpack.c.bf16 %v6447, %v6443
        %v6600 = vpack.c.bf16 %v6452, %v6448
        %v6601 = vpack.c.bf16 %v6453, %v6449
        %v6602 = vpack.c.bf16 %v6454, %v6450
        %v6603 = vpack.c.bf16 %v6455, %v6451
        %v6604 = vpack.c.bf16 %v6460, %v6456
        %v6605 = vpack.c.bf16 %v6461, %v6457
        %v6606 = vpack.c.bf16 %v6462, %v6458
        %v6607 = vpack.c.bf16 %v6463, %v6459
        %v6608 = vpack.c.bf16 %v6468, %v6464
        %v6609 = vpack.c.bf16 %v6469, %v6465
        %v6610 = vpack.c.bf16 %v6470, %v6466
        %v6611 = vpack.c.bf16 %v6471, %v6467
        %v6612 = vpack.c.bf16 %v6476, %v6472
        %v6613 = vpack.c.bf16 %v6477, %v6473
        %v6614 = vpack.c.bf16 %v6478, %v6474
        %v6615 = vpack.c.bf16 %v6479, %v6475
        %v6616 = vpack.c.bf16 %v6484, %v6480
        %v6617 = vpack.c.bf16 %v6485, %v6481
        %v6618 = vpack.c.bf16 %v6486, %v6482
        %v6619 = vpack.c.bf16 %v6487, %v6483
        %v6620 = vpack.c.bf16 %v6492, %v6488
        %v6621 = vpack.c.bf16 %v6493, %v6489
        %v6622 = vpack.c.bf16 %v6494, %v6490
        %v6623 = vpack.c.bf16 %v6495, %v6491
        %v6624 = vld [vmem:[%s4] sm:$0xff]
        %v6625 = vld [vmem:[%s4 + $0x8] sm:$0xff]
        %v6626 = vld [vmem:[%s4 + $0x10] sm:$0xff]
        %v6627 = vld [vmem:[%s4 + $0x18] sm:$0xff]
        %v6628 = vld [vmem:[%s4 + $0x20] sm:$0xff]
        %v6629 = vld [vmem:[%s4 + $0x28] sm:$0xff]
        %v6630 = vld [vmem:[%s4 + $0x30] sm:$0xff]
        %v6631 = vld [vmem:[%s4 + $0x38] sm:$0xff]
        %v6632 = vld [vmem:[%s4 + $0x40] sm:$0xff]
        %v6633 = vld [vmem:[%s4 + $0x48] sm:$0xff]
        %v6634 = vld [vmem:[%s4 + $0x50] sm:$0xff]
        %v6635 = vld [vmem:[%s4 + $0x58] sm:$0xff]
        %v6636 = vld [vmem:[%s4 + $0x60] sm:$0xff]
        %v6637 = vld [vmem:[%s4 + $0x68] sm:$0xff]
        %v6638 = vld [vmem:[%s4 + $0x70] sm:$0xff]
        %v6639 = vld [vmem:[%s4 + $0x78] sm:$0xff]
        %v6640 = vld [vmem:[%s4 + $0x80] sm:$0xff]
        %v6641 = vld [vmem:[%s4 + $0x88] sm:$0xff]
        %v6642 = vld [vmem:[%s4 + $0x90] sm:$0xff]
        %v6643 = vld [vmem:[%s4 + $0x98] sm:$0xff]
        %v6644 = vld [vmem:[%s4 + $0xa0] sm:$0xff]
        %v6645 = vld [vmem:[%s4 + $0xa8] sm:$0xff]
        %v6646 = vld [vmem:[%s4 + $0xb0] sm:$0xff]
        %v6647 = vld [vmem:[%s4 + $0xb8] sm:$0xff]
        %v6648 = vld [vmem:[%s4 + $0xc0] sm:$0xff]
        %v6649 = vld [vmem:[%s4 + $0xc8] sm:$0xff]
        %v6650 = vld [vmem:[%s4 + $0xd0] sm:$0xff]
        %v6651 = vld [vmem:[%s4 + $0xd8] sm:$0xff]
        %v6652 = vld [vmem:[%s4 + $0xe0] sm:$0xff]
        %v6653 = vld [vmem:[%s4 + $0xe8] sm:$0xff]
        %v6654 = vld [vmem:[%s4 + $0xf0] sm:$0xff]
        %v6655 = vld [vmem:[%s4 + $0xf8] sm:$0xff]
        %v6656 = vld [vmem:[%s4 + $0x100] sm:$0xff]
        %v6657 = vld [vmem:[%s4 + $0x108] sm:$0xff]
        %v6658 = vld [vmem:[%s4 + $0x110] sm:$0xff]
        %v6659 = vld [vmem:[%s4 + $0x118] sm:$0xff]
        %v6660 = vld [vmem:[%s4 + $0x120] sm:$0xff]
        %v6661 = vld [vmem:[%s4 + $0x128] sm:$0xff]
        %v6662 = vld [vmem:[%s4 + $0x130] sm:$0xff]
        %v6663 = vld [vmem:[%s4 + $0x138] sm:$0xff]
        %v6664 = vld [vmem:[%s4 + $0x140] sm:$0xff]
        %v6665 = vld [vmem:[%s4 + $0x148] sm:$0xff]
        %v6666 = vld [vmem:[%s4 + $0x150] sm:$0xff]
        %v6667 = vld [vmem:[%s4 + $0x158] sm:$0xff]
        %v6668 = vld [vmem:[%s4 + $0x160] sm:$0xff]
        %v6669 = vld [vmem:[%s4 + $0x168] sm:$0xff]
        %v6670 = vld [vmem:[%s4 + $0x170] sm:$0xff]
        %v6671 = vld [vmem:[%s4 + $0x178] sm:$0xff]
        %v6672 = vld [vmem:[%s4 + $0x180] sm:$0xff]
        %v6673 = vld [vmem:[%s4 + $0x188] sm:$0xff]
        %v6674 = vld [vmem:[%s4 + $0x190] sm:$0xff]
        %v6675 = vld [vmem:[%s4 + $0x198] sm:$0xff]
        %v6676 = vld [vmem:[%s4 + $0x1a0] sm:$0xff]
        %v6677 = vld [vmem:[%s4 + $0x1a8] sm:$0xff]
        %v6678 = vld [vmem:[%s4 + $0x1b0] sm:$0xff]
        %v6679 = vld [vmem:[%s4 + $0x1b8] sm:$0xff]
        %v6680 = vld [vmem:[%s4 + $0x1c0] sm:$0xff]
        %v6681 = vld [vmem:[%s4 + $0x1c8] sm:$0xff]
        %v6682 = vld [vmem:[%s4 + $0x1d0] sm:$0xff]
        %v6683 = vld [vmem:[%s4 + $0x1d8] sm:$0xff]
        %v6684 = vld [vmem:[%s4 + $0x1e0] sm:$0xff]
        %v6685 = vld [vmem:[%s4 + $0x1e8] sm:$0xff]
        %v6686 = vld [vmem:[%s4 + $0x1f0] sm:$0xff]
        %v6687 = vld [vmem:[%s4 + $0x1f8] sm:$0xff]
        %v6688 = vld [vmem:[%s5] sm:$0x3]
        %v6690 = vlaneseq
        %v6691 = vshrl.u32 %v6690, 7
        %v6692 = vsub.s32 0, %v6691
        %v6693 = vrot.slane %v6688, %v6692
        %v6694 = vlaneseq
        %v6695 = vshrl.u32 %v6694, 7
        %v6696 = vsub.s32 1, %v6695
        %v6697 = vrot.slane %v6688, %v6696
        %v6764 = vunpack.c.l.b16 %v6624
        %v6765 = vunpack.c.h.b16 %v6624
        %v6766 = vunpack.c.l.b16 %v6625
        %v6767 = vunpack.c.h.b16 %v6625
        %v6768 = vunpack.c.l.b16 %v6626
        %v6769 = vunpack.c.h.b16 %v6626
        %v6770 = vunpack.c.l.b16 %v6627
        %v6771 = vunpack.c.h.b16 %v6627
        %v6772 = vunpack.c.l.b16 %v6628
        %v6773 = vunpack.c.h.b16 %v6628
        %v6774 = vunpack.c.l.b16 %v6629
        %v6775 = vunpack.c.h.b16 %v6629
        %v6776 = vunpack.c.l.b16 %v6630
        %v6777 = vunpack.c.h.b16 %v6630
        %v6778 = vunpack.c.l.b16 %v6631
        %v6779 = vunpack.c.h.b16 %v6631
        %v6780 = vunpack.c.l.b16 %v6632
        %v6781 = vunpack.c.h.b16 %v6632
        %v6782 = vunpack.c.l.b16 %v6633
        %v6783 = vunpack.c.h.b16 %v6633
        %v6784 = vunpack.c.l.b16 %v6634
        %v6785 = vunpack.c.h.b16 %v6634
        %v6786 = vunpack.c.l.b16 %v6635
        %v6787 = vunpack.c.h.b16 %v6635
        %v6788 = vunpack.c.l.b16 %v6636
        %v6789 = vunpack.c.h.b16 %v6636
        %v6790 = vunpack.c.l.b16 %v6637
        %v6791 = vunpack.c.h.b16 %v6637
        %v6792 = vunpack.c.l.b16 %v6638
        %v6793 = vunpack.c.h.b16 %v6638
        %v6794 = vunpack.c.l.b16 %v6639
        %v6795 = vunpack.c.h.b16 %v6639
        %v6796 = vunpack.c.l.b16 %v6640
        %v6797 = vunpack.c.h.b16 %v6640
        %v6798 = vunpack.c.l.b16 %v6641
        %v6799 = vunpack.c.h.b16 %v6641
        %v6800 = vunpack.c.l.b16 %v6642
        %v6801 = vunpack.c.h.b16 %v6642
        %v6802 = vunpack.c.l.b16 %v6643
        %v6803 = vunpack.c.h.b16 %v6643
        %v6804 = vunpack.c.l.b16 %v6644
        %v6805 = vunpack.c.h.b16 %v6644
        %v6806 = vunpack.c.l.b16 %v6645
        %v6807 = vunpack.c.h.b16 %v6645
        %v6808 = vunpack.c.l.b16 %v6646
        %v6809 = vunpack.c.h.b16 %v6646
        %v6810 = vunpack.c.l.b16 %v6647
        %v6811 = vunpack.c.h.b16 %v6647
        %v6812 = vunpack.c.l.b16 %v6648
        %v6813 = vunpack.c.h.b16 %v6648
        %v6814 = vunpack.c.l.b16 %v6649
        %v6815 = vunpack.c.h.b16 %v6649
        %v6816 = vunpack.c.l.b16 %v6650
        %v6817 = vunpack.c.h.b16 %v6650
        %v6818 = vunpack.c.l.b16 %v6651
        %v6819 = vunpack.c.h.b16 %v6651
        %v6820 = vunpack.c.l.b16 %v6652
        %v6821 = vunpack.c.h.b16 %v6652
        %v6822 = vunpack.c.l.b16 %v6653
        %v6823 = vunpack.c.h.b16 %v6653
        %v6824 = vunpack.c.l.b16 %v6654
        %v6825 = vunpack.c.h.b16 %v6654
        %v6826 = vunpack.c.l.b16 %v6655
        %v6827 = vunpack.c.h.b16 %v6655
        %v6828 = vunpack.c.l.b16 %v6656
        %v6829 = vunpack.c.h.b16 %v6656
        %v6830 = vunpack.c.l.b16 %v6657
        %v6831 = vunpack.c.h.b16 %v6657
        %v6832 = vunpack.c.l.b16 %v6658
        %v6833 = vunpack.c.h.b16 %v6658
        %v6834 = vunpack.c.l.b16 %v6659
        %v6835 = vunpack.c.h.b16 %v6659
        %v6836 = vunpack.c.l.b16 %v6660
        %v6837 = vunpack.c.h.b16 %v6660
        %v6838 = vunpack.c.l.b16 %v6661
        %v6839 = vunpack.c.h.b16 %v6661
        %v6840 = vunpack.c.l.b16 %v6662
        %v6841 = vunpack.c.h.b16 %v6662
        %v6842 = vunpack.c.l.b16 %v6663
        %v6843 = vunpack.c.h.b16 %v6663
        %v6844 = vunpack.c.l.b16 %v6664
        %v6845 = vunpack.c.h.b16 %v6664
        %v6846 = vunpack.c.l.b16 %v6665
        %v6847 = vunpack.c.h.b16 %v6665
        %v6848 = vunpack.c.l.b16 %v6666
        %v6849 = vunpack.c.h.b16 %v6666
        %v6850 = vunpack.c.l.b16 %v6667
        %v6851 = vunpack.c.h.b16 %v6667
        %v6852 = vunpack.c.l.b16 %v6668
        %v6853 = vunpack.c.h.b16 %v6668
        %v6854 = vunpack.c.l.b16 %v6669
        %v6855 = vunpack.c.h.b16 %v6669
        %v6856 = vunpack.c.l.b16 %v6670
        %v6857 = vunpack.c.h.b16 %v6670
        %v6858 = vunpack.c.l.b16 %v6671
        %v6859 = vunpack.c.h.b16 %v6671
        %v6860 = vunpack.c.l.b16 %v6672
        %v6861 = vunpack.c.h.b16 %v6672
        %v6862 = vunpack.c.l.b16 %v6673
        %v6863 = vunpack.c.h.b16 %v6673
        %v6864 = vunpack.c.l.b16 %v6674
        %v6865 = vunpack.c.h.b16 %v6674
        %v6866 = vunpack.c.l.b16 %v6675
        %v6867 = vunpack.c.h.b16 %v6675
        %v6868 = vunpack.c.l.b16 %v6676
        %v6869 = vunpack.c.h.b16 %v6676
        %v6870 = vunpack.c.l.b16 %v6677
        %v6871 = vunpack.c.h.b16 %v6677
        %v6872 = vunpack.c.l.b16 %v6678
        %v6873 = vunpack.c.h.b16 %v6678
        %v6874 = vunpack.c.l.b16 %v6679
        %v6875 = vunpack.c.h.b16 %v6679
        %v6876 = vunpack.c.l.b16 %v6680
        %v6877 = vunpack.c.h.b16 %v6680
        %v6878 = vunpack.c.l.b16 %v6681
        %v6879 = vunpack.c.h.b16 %v6681
        %v6880 = vunpack.c.l.b16 %v6682
        %v6881 = vunpack.c.h.b16 %v6682
        %v6882 = vunpack.c.l.b16 %v6683
        %v6883 = vunpack.c.h.b16 %v6683
        %v6884 = vunpack.c.l.b16 %v6684
        %v6885 = vunpack.c.h.b16 %v6684
        %v6886 = vunpack.c.l.b16 %v6685
        %v6887 = vunpack.c.h.b16 %v6685
        %v6888 = vunpack.c.l.b16 %v6686
        %v6889 = vunpack.c.h.b16 %v6686
        %v6890 = vunpack.c.l.b16 %v6687
        %v6891 = vunpack.c.h.b16 %v6687
        %v6892 = vpack.c.b16 %v6766, %v6764
        %v6893 = vpack.c.b16 %v6767, %v6765
        %v6894 = vpack.c.b16 %v6770, %v6768
        %v6895 = vpack.c.b16 %v6771, %v6769
        %v6896 = vpack.c.b16 %v6774, %v6772
        %v6897 = vpack.c.b16 %v6775, %v6773
        %v6898 = vpack.c.b16 %v6778, %v6776
        %v6899 = vpack.c.b16 %v6779, %v6777
        %v6900 = vpack.c.b16 %v6782, %v6780
        %v6901 = vpack.c.b16 %v6783, %v6781
        %v6902 = vpack.c.b16 %v6786, %v6784
        %v6903 = vpack.c.b16 %v6787, %v6785
        %v6904 = vpack.c.b16 %v6790, %v6788
        %v6905 = vpack.c.b16 %v6791, %v6789
        %v6906 = vpack.c.b16 %v6794, %v6792
        %v6907 = vpack.c.b16 %v6795, %v6793
        %v6908 = vpack.c.b16 %v6798, %v6796
        %v6909 = vpack.c.b16 %v6799, %v6797
        %v6910 = vpack.c.b16 %v6802, %v6800
        %v6911 = vpack.c.b16 %v6803, %v6801
        %v6912 = vpack.c.b16 %v6806, %v6804
        %v6913 = vpack.c.b16 %v6807, %v6805
        %v6914 = vpack.c.b16 %v6810, %v6808
        %v6915 = vpack.c.b16 %v6811, %v6809
        %v6916 = vpack.c.b16 %v6814, %v6812
        %v6917 = vpack.c.b16 %v6815, %v6813
        %v6918 = vpack.c.b16 %v6818, %v6816
        %v6919 = vpack.c.b16 %v6819, %v6817
        %v6920 = vpack.c.b16 %v6822, %v6820
        %v6921 = vpack.c.b16 %v6823, %v6821
        %v6922 = vpack.c.b16 %v6826, %v6824
        %v6923 = vpack.c.b16 %v6827, %v6825
        %v6924 = vpack.c.b16 %v6830, %v6828
        %v6925 = vpack.c.b16 %v6831, %v6829
        %v6926 = vpack.c.b16 %v6834, %v6832
        %v6927 = vpack.c.b16 %v6835, %v6833
        %v6928 = vpack.c.b16 %v6838, %v6836
        %v6929 = vpack.c.b16 %v6839, %v6837
        %v6930 = vpack.c.b16 %v6842, %v6840
        %v6931 = vpack.c.b16 %v6843, %v6841
        %v6932 = vpack.c.b16 %v6846, %v6844
        %v6933 = vpack.c.b16 %v6847, %v6845
        %v6934 = vpack.c.b16 %v6850, %v6848
        %v6935 = vpack.c.b16 %v6851, %v6849
        %v6936 = vpack.c.b16 %v6854, %v6852
        %v6937 = vpack.c.b16 %v6855, %v6853
        %v6938 = vpack.c.b16 %v6858, %v6856
        %v6939 = vpack.c.b16 %v6859, %v6857
        %v6940 = vpack.c.b16 %v6862, %v6860
        %v6941 = vpack.c.b16 %v6863, %v6861
        %v6942 = vpack.c.b16 %v6866, %v6864
        %v6943 = vpack.c.b16 %v6867, %v6865
        %v6944 = vpack.c.b16 %v6870, %v6868
        %v6945 = vpack.c.b16 %v6871, %v6869
        %v6946 = vpack.c.b16 %v6874, %v6872
        %v6947 = vpack.c.b16 %v6875, %v6873
        %v6948 = vpack.c.b16 %v6878, %v6876
        %v6949 = vpack.c.b16 %v6879, %v6877
        %v6950 = vpack.c.b16 %v6882, %v6880
        %v6951 = vpack.c.b16 %v6883, %v6881
        %v6952 = vpack.c.b16 %v6886, %v6884
        %v6953 = vpack.c.b16 %v6887, %v6885
        %v6954 = vpack.c.b16 %v6890, %v6888
        %v6955 = vpack.c.b16 %v6891, %v6889
        %7020 = vmatprep.subr.bf16.mxu0 %v6893
        %7021 = vmatpush1.bf16.msra.mxu0 %v6892
        %7022 = vmatprep.subr.bf16.mxu0 %v6895
        %7023 = vmatpush1.bf16.msra.mxu0 %v6894
        %7024 = vmatprep.subr.bf16.mxu0 %v6897
        %7025 = vmatpush1.bf16.msra.mxu0 %v6896
        %7026 = vmatprep.subr.bf16.mxu0 %v6899
        %7027 = vmatpush1.bf16.msra.mxu0 %v6898
        %7028 = vmatprep.subr.bf16.mxu0 %v6901
        %7029 = vmatpush1.bf16.msra.mxu0 %v6900
        %7030 = vmatprep.subr.bf16.mxu0 %v6903
        %7031 = vmatpush1.bf16.msra.mxu0 %v6902
        %7032 = vmatprep.subr.bf16.mxu0 %v6905
        %7033 = vmatpush1.bf16.msra.mxu0 %v6904
        %7034 = vmatprep.subr.bf16.mxu0 %v6907
        %7035 = vmatpush1.bf16.msra.mxu0 %v6906
        %7036 = vmatprep.subr.bf16.mxu0 %v6909
        %7037 = vmatpush1.bf16.msra.mxu0 %v6908
        %7038 = vmatprep.subr.bf16.mxu0 %v6911
        %7039 = vmatpush1.bf16.msra.mxu0 %v6910
        %7040 = vmatprep.subr.bf16.mxu0 %v6913
        %7041 = vmatpush1.bf16.msra.mxu0 %v6912
        %7042 = vmatprep.subr.bf16.mxu0 %v6915
        %7043 = vmatpush1.bf16.msra.mxu0 %v6914
        %7044 = vmatprep.subr.bf16.mxu0 %v6917
        %7045 = vmatpush1.bf16.msra.mxu0 %v6916
        %7046 = vmatprep.subr.bf16.mxu0 %v6919
        %7047 = vmatpush1.bf16.msra.mxu0 %v6918
        %7048 = vmatprep.subr.bf16.mxu0 %v6921
        %7049 = vmatpush1.bf16.msra.mxu0 %v6920
        %7050 = vmatprep.subr.bf16.mxu0 %v6923
        %7051 = vmatpush1.bf16.msra.mxu0 %v6922
        %7052 = vmatprep.mubr.bf16.mxu0 %v6497
        %7053 = vmatmul.mubr.bf16.gmra.mrb[0].mxu0 %v6496
        %v7054 = vpop.f32.mrb[0].mxu0
        %v7055 = vadd.f32 %v6693, %v7054
        %v7056 = vpop.f32.mrb[0].mxu0
        %v7057 = vadd.f32 %v6697, %v7056
        %v7058 = vpop.f32.mrb[0].mxu0
        %v7059 = vadd.f32 %v6693, %v7058
        %v7060 = vpop.f32.mrb[0].mxu0
        %v7061 = vadd.f32 %v6697, %v7060
        %7062 = vmatprep.mubr.bf16.mxu0 %v6501
        %7063 = vmatmul.mubr.bf16.gmra.mrb[0].mxu0 %v6500
        %v7064 = vpop.f32.mrb[0].mxu0
        %v7065 = vadd.f32 %v6693, %v7064
        %v7066 = vpop.f32.mrb[0].mxu0
        %v7067 = vadd.f32 %v6697, %v7066
        %v7068 = vpop.f32.mrb[0].mxu0
        %v7069 = vadd.f32 %v6693, %v7068
        %v7070 = vpop.f32.mrb[0].mxu0
        %v7071 = vadd.f32 %v6697, %v7070
        %7072 = vmatprep.mubr.bf16.mxu0 %v6505
        %7073 = vmatmul.mubr.bf16.gmra.mrb[0].mxu0 %v6504
        %v7074 = vpop.f32.mrb[0].mxu0
        %v7075 = vadd.f32 %v6693, %v7074
        %v7076 = vpop.f32.mrb[0].mxu0
        %v7077 = vadd.f32 %v6697, %v7076
        %v7078 = vpop.f32.mrb[0].mxu0
        %v7079 = vadd.f32 %v6693, %v7078
        %v7080 = vpop.f32.mrb[0].mxu0
        %v7081 = vadd.f32 %v6697, %v7080
        %7082 = vmatprep.mubr.bf16.mxu0 %v6509
        %7083 = vmatmul.mubr.bf16.gmra.mrb[0].mxu0 %v6508
        %v7084 = vpop.f32.mrb[0].mxu0
        %v7085 = vadd.f32 %v6693, %v7084
        %v7086 = vpop.f32.mrb[0].mxu0
        %v7087 = vadd.f32 %v6697, %v7086
        %v7088 = vpop.f32.mrb[0].mxu0
        %v7089 = vadd.f32 %v6693, %v7088
        %v7090 = vpop.f32.mrb[0].mxu0
        %v7091 = vadd.f32 %v6697, %v7090
        %7092 = vmatprep.mubr.bf16.mxu0 %v6513
        %7093 = vmatmul.mubr.bf16.gmra.mrb[0].mxu0 %v6512
        %v7094 = vpop.f32.mrb[0].mxu0
        %v7095 = vadd.f32 %v6693, %v7094
        %v7096 = vpop.f32.mrb[0].mxu0
        %v7097 = vadd.f32 %v6697, %v7096
        %v7098 = vpop.f32.mrb[0].mxu0
        %v7099 = vadd.f32 %v6693, %v7098
        %v7100 = vpop.f32.mrb[0].mxu0
        %v7101 = vadd.f32 %v6697, %v7100
        %7102 = vmatprep.mubr.bf16.mxu0 %v6517
        %7103 = vmatmul.mubr.bf16.gmra.mrb[0].mxu0 %v6516
        %v7104 = vpop.f32.mrb[0].mxu0
        %v7105 = vadd.f32 %v6693, %v7104
        %v7106 = vpop.f32.mrb[0].mxu0
        %v7107 = vadd.f32 %v6697, %v7106
        %v7108 = vpop.f32.mrb[0].mxu0
        %v7109 = vadd.f32 %v6693, %v7108
        %v7110 = vpop.f32.mrb[0].mxu0
        %v7111 = vadd.f32 %v6697, %v7110
        %7112 = vmatprep.mubr.bf16.mxu0 %v6521
        %7113 = vmatmul.mubr.bf16.gmra.mrb[0].mxu0 %v6520
        %v7114 = vpop.f32.mrb[0].mxu0
        %v7115 = vadd.f32 %v6693, %v7114
        %v7116 = vpop.f32.mrb[0].mxu0
        %v7117 = vadd.f32 %v6697, %v7116
        %v7118 = vpop.f32.mrb[0].mxu0
        %v7119 = vadd.f32 %v6693, %v7118
        %v7120 = vpop.f32.mrb[0].mxu0
        %v7121 = vadd.f32 %v6697, %v7120
        %7122 = vmatprep.mubr.bf16.mxu0 %v6525
        %7123 = vmatmul.mubr.bf16.gmra.mrb[0].mxu0 %v6524
        %v7124 = vpop.f32.mrb[0].mxu0
        %v7125 = vadd.f32 %v6693, %v7124
        %v7126 = vpop.f32.mrb[0].mxu0
        %v7127 = vadd.f32 %v6697, %v7126
        %v7128 = vpop.f32.mrb[0].mxu0
        %v7129 = vadd.f32 %v6693, %v7128
        %v7130 = vpop.f32.mrb[0].mxu0
        %v7131 = vadd.f32 %v6697, %v7130
        %7132 = vmatprep.mubr.bf16.mxu0 %v6529
        %7133 = vmatmul.mubr.bf16.gmra.mrb[0].mxu0 %v6528
        %v7134 = vpop.f32.mrb[0].mxu0
        %v7135 = vadd.f32 %v6693, %v7134
        %v7136 = vpop.f32.mrb[0].mxu0
        %v7137 = vadd.f32 %v6697, %v7136
        %v7138 = vpop.f32.mrb[0].mxu0
        %v7139 = vadd.f32 %v6693, %v7138
        %v7140 = vpop.f32.mrb[0].mxu0
        %v7141 = vadd.f32 %v6697, %v7140
        %7142 = vmatprep.mubr.bf16.mxu0 %v6533
        %7143 = vmatmul.mubr.bf16.gmra.mrb[0].mxu0 %v6532
        %v7144 = vpop.f32.mrb[0].mxu0
        %v7145 = vadd.f32 %v6693, %v7144
        %v7146 = vpop.f32.mrb[0].mxu0
        %v7147 = vadd.f32 %v6697, %v7146
        %v7148 = vpop.f32.mrb[0].mxu0
        %v7149 = vadd.f32 %v6693, %v7148
        %v7150 = vpop.f32.mrb[0].mxu0
        %v7151 = vadd.f32 %v6697, %v7150
        %7152 = vmatprep.mubr.bf16.mxu0 %v6537
        %7153 = vmatmul.mubr.bf16.gmra.mrb[0].mxu0 %v6536
        %v7154 = vpop.f32.mrb[0].mxu0
        %v7155 = vadd.f32 %v6693, %v7154
        %v7156 = vpop.f32.mrb[0].mxu0
        %v7157 = vadd.f32 %v6697, %v7156
        %v7158 = vpop.f32.mrb[0].mxu0
        %v7159 = vadd.f32 %v6693, %v7158
        %v7160 = vpop.f32.mrb[0].mxu0
        %v7161 = vadd.f32 %v6697, %v7160
        %7162 = vmatprep.mubr.bf16.mxu0 %v6541
        %7163 = vmatmul.mubr.bf16.gmra.mrb[0].mxu0 %v6540
        %v7164 = vpop.f32.mrb[0].mxu0
        %v7165 = vadd.f32 %v6693, %v7164
        %v7166 = vpop.f32.mrb[0].mxu0
        %v7167 = vadd.f32 %v6697, %v7166
        %v7168 = vpop.f32.mrb[0].mxu0
        %v7169 = vadd.f32 %v6693, %v7168
        %v7170 = vpop.f32.mrb[0].mxu0
        %v7171 = vadd.f32 %v6697, %v7170
        %7172 = vmatprep.mubr.bf16.mxu0 %v6545
        %7173 = vmatmul.mubr.bf16.gmra.mrb[0].mxu0 %v6544
        %v7174 = vpop.f32.mrb[0].mxu0
        %v7175 = vadd.f32 %v6693, %v7174
        %v7176 = vpop.f32.mrb[0].mxu0
        %v7177 = vadd.f32 %v6697, %v7176
        %v7178 = vpop.f32.mrb[0].mxu0
        %v7179 = vadd.f32 %v6693, %v7178
        %v7180 = vpop.f32.mrb[0].mxu0
        %v7181 = vadd.f32 %v6697, %v7180
        %7182 = vmatprep.mubr.bf16.mxu0 %v6549
        %7183 = vmatmul.mubr.bf16.gmra.mrb[0].mxu0 %v6548
        %v7184 = vpop.f32.mrb[0].mxu0
        %v7185 = vadd.f32 %v6693, %v7184
        %v7186 = vpop.f32.mrb[0].mxu0
        %v7187 = vadd.f32 %v6697, %v7186
        %v7188 = vpop.f32.mrb[0].mxu0
        %v7189 = vadd.f32 %v6693, %v7188
        %v7190 = vpop.f32.mrb[0].mxu0
        %v7191 = vadd.f32 %v6697, %v7190
        %7192 = vmatprep.mubr.bf16.mxu0 %v6553
        %7193 = vmatmul.mubr.bf16.gmra.mrb[0].mxu0 %v6552
        %v7194 = vpop.f32.mrb[0].mxu0
        %v7195 = vadd.f32 %v6693, %v7194
        %v7196 = vpop.f32.mrb[0].mxu0
        %v7197 = vadd.f32 %v6697, %v7196
        %v7198 = vpop.f32.mrb[0].mxu0
        %v7199 = vadd.f32 %v6693, %v7198
        %v7200 = vpop.f32.mrb[0].mxu0
        %v7201 = vadd.f32 %v6697, %v7200
        %7202 = vmatprep.mubr.bf16.mxu0 %v6557
        %7203 = vmatmul.mubr.bf16.gmra.mrb[0].mxu0 %v6556
        %v7204 = vpop.f32.mrb[0].mxu0
        %v7205 = vadd.f32 %v6693, %v7204
        %v7206 = vpop.f32.mrb[0].mxu0
        %v7207 = vadd.f32 %v6697, %v7206
        %v7208 = vpop.f32.mrb[0].mxu0
        %v7209 = vadd.f32 %v6693, %v7208
        %v7210 = vpop.f32.mrb[0].mxu0
        %v7211 = vadd.f32 %v6697, %v7210
        %7212 = vmatprep.mubr.bf16.mxu0 %v6561
        %7213 = vmatmul.mubr.bf16.gmra.mrb[0].mxu0 %v6560
        %v7214 = vpop.f32.mrb[0].mxu0
        %v7215 = vadd.f32 %v6693, %v7214
        %v7216 = vpop.f32.mrb[0].mxu0
        %v7217 = vadd.f32 %v6697, %v7216
        %v7218 = vpop.f32.mrb[0].mxu0
        %v7219 = vadd.f32 %v6693, %v7218
        %v7220 = vpop.f32.mrb[0].mxu0
        %v7221 = vadd.f32 %v6697, %v7220
        %7222 = vmatprep.mubr.bf16.mxu0 %v6565
        %7223 = vmatmul.mubr.bf16.gmra.mrb[0].mxu0 %v6564
        %v7224 = vpop.f32.mrb[0].mxu0
        %v7225 = vadd.f32 %v6693, %v7224
        %v7226 = vpop.f32.mrb[0].mxu0
        %v7227 = vadd.f32 %v6697, %v7226
        %v7228 = vpop.f32.mrb[0].mxu0
        %v7229 = vadd.f32 %v6693, %v7228
        %v7230 = vpop.f32.mrb[0].mxu0
        %v7231 = vadd.f32 %v6697, %v7230
        %7232 = vmatprep.mubr.bf16.mxu0 %v6569
        %7233 = vmatmul.mubr.bf16.gmra.mrb[0].mxu0 %v6568
        %v7234 = vpop.f32.mrb[0].mxu0
        %v7235 = vadd.f32 %v6693, %v7234
        %v7236 = vpop.f32.mrb[0].mxu0
        %v7237 = vadd.f32 %v6697, %v7236
        %v7238 = vpop.f32.mrb[0].mxu0
        %v7239 = vadd.f32 %v6693, %v7238
        %v7240 = vpop.f32.mrb[0].mxu0
        %v7241 = vadd.f32 %v6697, %v7240
        %7242 = vmatprep.mubr.bf16.mxu0 %v6573
        %7243 = vmatmul.mubr.bf16.gmra.mrb[0].mxu0 %v6572
        %v7244 = vpop.f32.mrb[0].mxu0
        %v7245 = vadd.f32 %v6693, %v7244
        %v7246 = vpop.f32.mrb[0].mxu0
        %v7247 = vadd.f32 %v6697, %v7246
        %v7248 = vpop.f32.mrb[0].mxu0
        %v7249 = vadd.f32 %v6693, %v7248
        %v7250 = vpop.f32.mrb[0].mxu0
        %v7251 = vadd.f32 %v6697, %v7250
        %7252 = vmatprep.mubr.bf16.mxu0 %v6577
        %7253 = vmatmul.mubr.bf16.gmra.mrb[0].mxu0 %v6576
        %v7254 = vpop.f32.mrb[0].mxu0
        %v7255 = vadd.f32 %v6693, %v7254
        %v7256 = vpop.f32.mrb[0].mxu0
        %v7257 = vadd.f32 %v6697, %v7256
        %v7258 = vpop.f32.mrb[0].mxu0
        %v7259 = vadd.f32 %v6693, %v7258
        %v7260 = vpop.f32.mrb[0].mxu0
        %v7261 = vadd.f32 %v6697, %v7260
        %7262 = vmatprep.mubr.bf16.mxu0 %v6581
        %7263 = vmatmul.mubr.bf16.gmra.mrb[0].mxu0 %v6580
        %v7264 = vpop.f32.mrb[0].mxu0
        %v7265 = vadd.f32 %v6693, %v7264
        %v7266 = vpop.f32.mrb[0].mxu0
        %v7267 = vadd.f32 %v6697, %v7266
        %v7268 = vpop.f32.mrb[0].mxu0
        %v7269 = vadd.f32 %v6693, %v7268
        %v7270 = vpop.f32.mrb[0].mxu0
        %v7271 = vadd.f32 %v6697, %v7270
        %7272 = vmatprep.mubr.bf16.mxu0 %v6585
        %7273 = vmatmul.mubr.bf16.gmra.mrb[0].mxu0 %v6584
        %v7274 = vpop.f32.mrb[0].mxu0
        %v7275 = vadd.f32 %v6693, %v7274
        %v7276 = vpop.f32.mrb[0].mxu0
        %v7277 = vadd.f32 %v6697, %v7276
        %v7278 = vpop.f32.mrb[0].mxu0
        %v7279 = vadd.f32 %v6693, %v7278
        %v7280 = vpop.f32.mrb[0].mxu0
        %v7281 = vadd.f32 %v6697, %v7280
        %7282 = vmatprep.mubr.bf16.mxu0 %v6589
        %7283 = vmatmul.mubr.bf16.gmra.mrb[0].mxu0 %v6588
        %v7284 = vpop.f32.mrb[0].mxu0
        %v7285 = vadd.f32 %v6693, %v7284
        %v7286 = vpop.f32.mrb[0].mxu0
        %v7287 = vadd.f32 %v6697, %v7286
        %v7288 = vpop.f32.mrb[0].mxu0
        %v7289 = vadd.f32 %v6693, %v7288
        %v7290 = vpop.f32.mrb[0].mxu0
        %v7291 = vadd.f32 %v6697, %v7290
        %7292 = vmatprep.mubr.bf16.mxu0 %v6593
        %7293 = vmatmul.mubr.bf16.gmra.mrb[0].mxu0 %v6592
        %v7294 = vpop.f32.mrb[0].mxu0
        %v7295 = vadd.f32 %v6693, %v7294
        %v7296 = vpop.f32.mrb[0].mxu0
        %v7297 = vadd.f32 %v6697, %v7296
        %v7298 = vpop.f32.mrb[0].mxu0
        %v7299 = vadd.f32 %v6693, %v7298
        %v7300 = vpop.f32.mrb[0].mxu0
        %v7301 = vadd.f32 %v6697, %v7300
        %7302 = vmatprep.mubr.bf16.mxu0 %v6597
        %7303 = vmatmul.mubr.bf16.gmra.mrb[0].mxu0 %v6596
        %v7304 = vpop.f32.mrb[0].mxu0
        %v7305 = vadd.f32 %v6693, %v7304
        %v7306 = vpop.f32.mrb[0].mxu0
        %v7307 = vadd.f32 %v6697, %v7306
        %v7308 = vpop.f32.mrb[0].mxu0
        %v7309 = vadd.f32 %v6693, %v7308
        %v7310 = vpop.f32.mrb[0].mxu0
        %v7311 = vadd.f32 %v6697, %v7310
        %7312 = vmatprep.mubr.bf16.mxu0 %v6601
        %7313 = vmatmul.mubr.bf16.gmra.mrb[0].mxu0 %v6600
        %v7314 = vpop.f32.mrb[0].mxu0
        %v7315 = vadd.f32 %v6693, %v7314
        %v7316 = vpop.f32.mrb[0].mxu0
        %v7317 = vadd.f32 %v6697, %v7316
        %v7318 = vpop.f32.mrb[0].mxu0
        %v7319 = vadd.f32 %v6693, %v7318
        %v7320 = vpop.f32.mrb[0].mxu0
        %v7321 = vadd.f32 %v6697, %v7320
        %7322 = vmatprep.mubr.bf16.mxu0 %v6605
        %7323 = vmatmul.mubr.bf16.gmra.mrb[0].mxu0 %v6604
        %v7324 = vpop.f32.mrb[0].mxu0
        %v7325 = vadd.f32 %v6693, %v7324
        %v7326 = vpop.f32.mrb[0].mxu0
        %v7327 = vadd.f32 %v6697, %v7326
        %v7328 = vpop.f32.mrb[0].mxu0
        %v7329 = vadd.f32 %v6693, %v7328
        %v7330 = vpop.f32.mrb[0].mxu0
        %v7331 = vadd.f32 %v6697, %v7330
        %7332 = vmatprep.mubr.bf16.mxu0 %v6609
        %7333 = vmatmul.mubr.bf16.gmra.mrb[0].mxu0 %v6608
        %v7334 = vpop.f32.mrb[0].mxu0
        %v7335 = vadd.f32 %v6693, %v7334
        %v7336 = vpop.f32.mrb[0].mxu0
        %v7337 = vadd.f32 %v6697, %v7336
        %v7338 = vpop.f32.mrb[0].mxu0
        %v7339 = vadd.f32 %v6693, %v7338
        %v7340 = vpop.f32.mrb[0].mxu0
        %v7341 = vadd.f32 %v6697, %v7340
        %7342 = vmatprep.mubr.bf16.mxu0 %v6613
        %7343 = vmatmul.mubr.bf16.gmra.mrb[0].mxu0 %v6612
        %v7344 = vpop.f32.mrb[0].mxu0
        %v7345 = vadd.f32 %v6693, %v7344
        %v7346 = vpop.f32.mrb[0].mxu0
        %v7347 = vadd.f32 %v6697, %v7346
        %v7348 = vpop.f32.mrb[0].mxu0
        %v7349 = vadd.f32 %v6693, %v7348
        %v7350 = vpop.f32.mrb[0].mxu0
        %v7351 = vadd.f32 %v6697, %v7350
        %7352 = vmatprep.mubr.bf16.mxu0 %v6617
        %7353 = vmatmul.mubr.bf16.gmra.mrb[0].mxu0 %v6616
        %v7354 = vpop.f32.mrb[0].mxu0
        %v7355 = vadd.f32 %v6693, %v7354
        %v7356 = vpop.f32.mrb[0].mxu0
        %v7357 = vadd.f32 %v6697, %v7356
        %v7358 = vpop.f32.mrb[0].mxu0
        %v7359 = vadd.f32 %v6693, %v7358
        %v7360 = vpop.f32.mrb[0].mxu0
        %v7361 = vadd.f32 %v6697, %v7360
        %7362 = vmatprep.mubr.bf16.mxu0 %v6621
        %7363 = vmatmul.mubr.bf16.gmra.mrb[0].mxu0 %v6620
        %v7364 = vpop.f32.mrb[0].mxu0
        %v7365 = vadd.f32 %v6693, %v7364
        %v7366 = vpop.f32.mrb[0].mxu0
        %v7367 = vadd.f32 %v6697, %v7366
        %v7368 = vpop.f32.mrb[0].mxu0
        %v7369 = vadd.f32 %v6693, %v7368
        %v7370 = vpop.f32.mrb[0].mxu0
        %v7371 = vadd.f32 %v6697, %v7370
        %7372 = vdwg.mxu0
        %7373 = vmatprep.subr.bf16.mxu0 %v6925
        %7374 = vmatpush1.bf16.msra.mxu0 %v6924
        %7375 = vmatprep.subr.bf16.mxu0 %v6927
        %7376 = vmatpush1.bf16.msra.mxu0 %v6926
        %7377 = vmatprep.subr.bf16.mxu0 %v6929
        %7378 = vmatpush1.bf16.msra.mxu0 %v6928
        %7379 = vmatprep.subr.bf16.mxu0 %v6931
        %7380 = vmatpush1.bf16.msra.mxu0 %v6930
        %7381 = vmatprep.subr.bf16.mxu0 %v6933
        %7382 = vmatpush1.bf16.msra.mxu0 %v6932
        %7383 = vmatprep.subr.bf16.mxu0 %v6935
        %7384 = vmatpush1.bf16.msra.mxu0 %v6934
        %7385 = vmatprep.subr.bf16.mxu0 %v6937
        %7386 = vmatpush1.bf16.msra.mxu0 %v6936
        %7387 = vmatprep.subr.bf16.mxu0 %v6939
        %7388 = vmatpush1.bf16.msra.mxu0 %v6938
        %7389 = vmatprep.subr.bf16.mxu0 %v6941
        %7390 = vmatpush1.bf16.msra.mxu0 %v6940
        %7391 = vmatprep.subr.bf16.mxu0 %v6943
        %7392 = vmatpush1.bf16.msra.mxu0 %v6942
        %7393 = vmatprep.subr.bf16.mxu0 %v6945
        %7394 = vmatpush1.bf16.msra.mxu0 %v6944
        %7395 = vmatprep.subr.bf16.mxu0 %v6947
        %7396 = vmatpush1.bf16.msra.mxu0 %v6946
        %7397 = vmatprep.subr.bf16.mxu0 %v6949
        %7398 = vmatpush1.bf16.msra.mxu0 %v6948
        %7399 = vmatprep.subr.bf16.mxu0 %v6951
        %7400 = vmatpush1.bf16.msra.mxu0 %v6950
        %7401 = vmatprep.subr.bf16.mxu0 %v6953
        %7402 = vmatpush1.bf16.msra.mxu0 %v6952
        %7403 = vmatprep.subr.bf16.mxu0 %v6955
        %7404 = vmatpush1.bf16.msra.mxu0 %v6954
        %7405 = vmatprep.mubr.bf16.mxu0 %v6499
        %7406 = vmatmul.mubr.bf16.gmra.mrb[0].mxu0 %v6498
        %v7407 = vpop.f32.mrb[0].mxu0
        %v7408 = vadd.f32 %v7055, %v7407
        %v7409 = vpop.f32.mrb[0].mxu0
        %v7410 = vadd.f32 %v7057, %v7409
        %v7411 = vpop.f32.mrb[0].mxu0
        %v7412 = vadd.f32 %v7059, %v7411
        %v7413 = vpop.f32.mrb[0].mxu0
        %v7414 = vadd.f32 %v7061, %v7413
        %7415 = vmatprep.mubr.bf16.mxu0 %v6503
        %7416 = vmatmul.mubr.bf16.gmra.mrb[0].mxu0 %v6502
        %v7417 = vpop.f32.mrb[0].mxu0
        %v7418 = vadd.f32 %v7065, %v7417
        %v7419 = vpop.f32.mrb[0].mxu0
        %v7420 = vadd.f32 %v7067, %v7419
        %v7421 = vpop.f32.mrb[0].mxu0
        %v7422 = vadd.f32 %v7069, %v7421
        %v7423 = vpop.f32.mrb[0].mxu0
        %v7424 = vadd.f32 %v7071, %v7423
        %7425 = vmatprep.mubr.bf16.mxu0 %v6507
        %7426 = vmatmul.mubr.bf16.gmra.mrb[0].mxu0 %v6506
        %v7427 = vpop.f32.mrb[0].mxu0
        %v7428 = vadd.f32 %v7075, %v7427
        %v7429 = vpop.f32.mrb[0].mxu0
        %v7430 = vadd.f32 %v7077, %v7429
        %v7431 = vpop.f32.mrb[0].mxu0
        %v7432 = vadd.f32 %v7079, %v7431
        %v7433 = vpop.f32.mrb[0].mxu0
        %v7434 = vadd.f32 %v7081, %v7433
        %7435 = vmatprep.mubr.bf16.mxu0 %v6511
        %7436 = vmatmul.mubr.bf16.gmra.mrb[0].mxu0 %v6510
        %v7437 = vpop.f32.mrb[0].mxu0
        %v7438 = vadd.f32 %v7085, %v7437
        %v7439 = vpop.f32.mrb[0].mxu0
        %v7440 = vadd.f32 %v7087, %v7439
        %v7441 = vpop.f32.mrb[0].mxu0
        %v7442 = vadd.f32 %v7089, %v7441
        %v7443 = vpop.f32.mrb[0].mxu0
        %v7444 = vadd.f32 %v7091, %v7443
        %7445 = vmatprep.mubr.bf16.mxu0 %v6515
        %7446 = vmatmul.mubr.bf16.gmra.mrb[0].mxu0 %v6514
        %v7447 = vpop.f32.mrb[0].mxu0
        %v7448 = vadd.f32 %v7095, %v7447
        %v7449 = vpop.f32.mrb[0].mxu0
        %v7450 = vadd.f32 %v7097, %v7449
        %v7451 = vpop.f32.mrb[0].mxu0
        %v7452 = vadd.f32 %v7099, %v7451
        %v7453 = vpop.f32.mrb[0].mxu0
        %v7454 = vadd.f32 %v7101, %v7453
        %7455 = vmatprep.mubr.bf16.mxu0 %v6519
        %7456 = vmatmul.mubr.bf16.gmra.mrb[0].mxu0 %v6518
        %v7457 = vpop.f32.mrb[0].mxu0
        %v7458 = vadd.f32 %v7105, %v7457
        %v7459 = vpop.f32.mrb[0].mxu0
        %v7460 = vadd.f32 %v7107, %v7459
        %v7461 = vpop.f32.mrb[0].mxu0
        %v7462 = vadd.f32 %v7109, %v7461
        %v7463 = vpop.f32.mrb[0].mxu0
        %v7464 = vadd.f32 %v7111, %v7463
        %7465 = vmatprep.mubr.bf16.mxu0 %v6523
        %7466 = vmatmul.mubr.bf16.gmra.mrb[0].mxu0 %v6522
        %v7467 = vpop.f32.mrb[0].mxu0
        %v7468 = vadd.f32 %v7115, %v7467
        %v7469 = vpop.f32.mrb[0].mxu0
        %v7470 = vadd.f32 %v7117, %v7469
        %v7471 = vpop.f32.mrb[0].mxu0
        %v7472 = vadd.f32 %v7119, %v7471
        %v7473 = vpop.f32.mrb[0].mxu0
        %v7474 = vadd.f32 %v7121, %v7473
        %7475 = vmatprep.mubr.bf16.mxu0 %v6527
        %7476 = vmatmul.mubr.bf16.gmra.mrb[0].mxu0 %v6526
        %v7477 = vpop.f32.mrb[0].mxu0
        %v7478 = vadd.f32 %v7125, %v7477
        %v7479 = vpop.f32.mrb[0].mxu0
        %v7480 = vadd.f32 %v7127, %v7479
        %v7481 = vpop.f32.mrb[0].mxu0
        %v7482 = vadd.f32 %v7129, %v7481
        %v7483 = vpop.f32.mrb[0].mxu0
        %v7484 = vadd.f32 %v7131, %v7483
        %7485 = vmatprep.mubr.bf16.mxu0 %v6531
        %7486 = vmatmul.mubr.bf16.gmra.mrb[0].mxu0 %v6530
        %v7487 = vpop.f32.mrb[0].mxu0
        %v7488 = vadd.f32 %v7135, %v7487
        %v7489 = vpop.f32.mrb[0].mxu0
        %v7490 = vadd.f32 %v7137, %v7489
        %v7491 = vpop.f32.mrb[0].mxu0
        %v7492 = vadd.f32 %v7139, %v7491
        %v7493 = vpop.f32.mrb[0].mxu0
        %v7494 = vadd.f32 %v7141, %v7493
        %7495 = vmatprep.mubr.bf16.mxu0 %v6535
        %7496 = vmatmul.mubr.bf16.gmra.mrb[0].mxu0 %v6534
        %v7497 = vpop.f32.mrb[0].mxu0
        %v7498 = vadd.f32 %v7145, %v7497
        %v7499 = vpop.f32.mrb[0].mxu0
        %v7500 = vadd.f32 %v7147, %v7499
        %v7501 = vpop.f32.mrb[0].mxu0
        %v7502 = vadd.f32 %v7149, %v7501
        %v7503 = vpop.f32.mrb[0].mxu0
        %v7504 = vadd.f32 %v7151, %v7503
        %7505 = vmatprep.mubr.bf16.mxu0 %v6539
        %7506 = vmatmul.mubr.bf16.gmra.mrb[0].mxu0 %v6538
        %v7507 = vpop.f32.mrb[0].mxu0
        %v7508 = vadd.f32 %v7155, %v7507
        %v7509 = vpop.f32.mrb[0].mxu0
        %v7510 = vadd.f32 %v7157, %v7509
        %v7511 = vpop.f32.mrb[0].mxu0
        %v7512 = vadd.f32 %v7159, %v7511
        %v7513 = vpop.f32.mrb[0].mxu0
        %v7514 = vadd.f32 %v7161, %v7513
        %7515 = vmatprep.mubr.bf16.mxu0 %v6543
        %7516 = vmatmul.mubr.bf16.gmra.mrb[0].mxu0 %v6542
        %v7517 = vpop.f32.mrb[0].mxu0
        %v7518 = vadd.f32 %v7165, %v7517
        %v7519 = vpop.f32.mrb[0].mxu0
        %v7520 = vadd.f32 %v7167, %v7519
        %v7521 = vpop.f32.mrb[0].mxu0
        %v7522 = vadd.f32 %v7169, %v7521
        %v7523 = vpop.f32.mrb[0].mxu0
        %v7524 = vadd.f32 %v7171, %v7523
        %7525 = vmatprep.mubr.bf16.mxu0 %v6547
        %7526 = vmatmul.mubr.bf16.gmra.mrb[0].mxu0 %v6546
        %v7527 = vpop.f32.mrb[0].mxu0
        %v7528 = vadd.f32 %v7175, %v7527
        %v7529 = vpop.f32.mrb[0].mxu0
        %v7530 = vadd.f32 %v7177, %v7529
        %v7531 = vpop.f32.mrb[0].mxu0
        %v7532 = vadd.f32 %v7179, %v7531
        %v7533 = vpop.f32.mrb[0].mxu0
        %v7534 = vadd.f32 %v7181, %v7533
        %7535 = vmatprep.mubr.bf16.mxu0 %v6551
        %7536 = vmatmul.mubr.bf16.gmra.mrb[0].mxu0 %v6550
        %v7537 = vpop.f32.mrb[0].mxu0
        %v7538 = vadd.f32 %v7185, %v7537
        %v7539 = vpop.f32.mrb[0].mxu0
        %v7540 = vadd.f32 %v7187, %v7539
        %v7541 = vpop.f32.mrb[0].mxu0
        %v7542 = vadd.f32 %v7189, %v7541
        %v7543 = vpop.f32.mrb[0].mxu0
        %v7544 = vadd.f32 %v7191, %v7543
        %7545 = vmatprep.mubr.bf16.mxu0 %v6555
        %7546 = vmatmul.mubr.bf16.gmra.mrb[0].mxu0 %v6554
        %v7547 = vpop.f32.mrb[0].mxu0
        %v7548 = vadd.f32 %v7195, %v7547
        %v7549 = vpop.f32.mrb[0].mxu0
        %v7550 = vadd.f32 %v7197, %v7549
        %v7551 = vpop.f32.mrb[0].mxu0
        %v7552 = vadd.f32 %v7199, %v7551
        %v7553 = vpop.f32.mrb[0].mxu0
        %v7554 = vadd.f32 %v7201, %v7553
        %7555 = vmatprep.mubr.bf16.mxu0 %v6559
        %7556 = vmatmul.mubr.bf16.gmra.mrb[0].mxu0 %v6558
        %v7557 = vpop.f32.mrb[0].mxu0
        %v7558 = vadd.f32 %v7205, %v7557
        %v7559 = vpop.f32.mrb[0].mxu0
        %v7560 = vadd.f32 %v7207, %v7559
        %v7561 = vpop.f32.mrb[0].mxu0
        %v7562 = vadd.f32 %v7209, %v7561
        %v7563 = vpop.f32.mrb[0].mxu0
        %v7564 = vadd.f32 %v7211, %v7563
        %7565 = vmatprep.mubr.bf16.mxu0 %v6563
        %7566 = vmatmul.mubr.bf16.gmra.mrb[0].mxu0 %v6562
        %v7567 = vpop.f32.mrb[0].mxu0
        %v7568 = vadd.f32 %v7215, %v7567
        %v7569 = vpop.f32.mrb[0].mxu0
        %v7570 = vadd.f32 %v7217, %v7569
        %v7571 = vpop.f32.mrb[0].mxu0
        %v7572 = vadd.f32 %v7219, %v7571
        %v7573 = vpop.f32.mrb[0].mxu0
        %v7574 = vadd.f32 %v7221, %v7573
        %7575 = vmatprep.mubr.bf16.mxu0 %v6567
        %7576 = vmatmul.mubr.bf16.gmra.mrb[0].mxu0 %v6566
        %v7577 = vpop.f32.mrb[0].mxu0
        %v7578 = vadd.f32 %v7225, %v7577
        %v7579 = vpop.f32.mrb[0].mxu0
        %v7580 = vadd.f32 %v7227, %v7579
        %v7581 = vpop.f32.mrb[0].mxu0
        %v7582 = vadd.f32 %v7229, %v7581
        %v7583 = vpop.f32.mrb[0].mxu0
        %v7584 = vadd.f32 %v7231, %v7583
        %7585 = vmatprep.mubr.bf16.mxu0 %v6571
        %7586 = vmatmul.mubr.bf16.gmra.mrb[0].mxu0 %v6570
        %v7587 = vpop.f32.mrb[0].mxu0
        %v7588 = vadd.f32 %v7235, %v7587
        %v7589 = vpop.f32.mrb[0].mxu0
        %v7590 = vadd.f32 %v7237, %v7589
        %v7591 = vpop.f32.mrb[0].mxu0
        %v7592 = vadd.f32 %v7239, %v7591
        %v7593 = vpop.f32.mrb[0].mxu0
        %v7594 = vadd.f32 %v7241, %v7593
        %7595 = vmatprep.mubr.bf16.mxu0 %v6575
        %7596 = vmatmul.mubr.bf16.gmra.mrb[0].mxu0 %v6574
        %v7597 = vpop.f32.mrb[0].mxu0
        %v7598 = vadd.f32 %v7245, %v7597
        %v7599 = vpop.f32.mrb[0].mxu0
        %v7600 = vadd.f32 %v7247, %v7599
        %v7601 = vpop.f32.mrb[0].mxu0
        %v7602 = vadd.f32 %v7249, %v7601
        %v7603 = vpop.f32.mrb[0].mxu0
        %v7604 = vadd.f32 %v7251, %v7603
        %7605 = vmatprep.mubr.bf16.mxu0 %v6579
        %7606 = vmatmul.mubr.bf16.gmra.mrb[0].mxu0 %v6578
        %v7607 = vpop.f32.mrb[0].mxu0
        %v7608 = vadd.f32 %v7255, %v7607
        %v7609 = vpop.f32.mrb[0].mxu0
        %v7610 = vadd.f32 %v7257, %v7609
        %v7611 = vpop.f32.mrb[0].mxu0
        %v7612 = vadd.f32 %v7259, %v7611
        %v7613 = vpop.f32.mrb[0].mxu0
        %v7614 = vadd.f32 %v7261, %v7613
        %7615 = vmatprep.mubr.bf16.mxu0 %v6583
        %7616 = vmatmul.mubr.bf16.gmra.mrb[0].mxu0 %v6582
        %v7617 = vpop.f32.mrb[0].mxu0
        %v7618 = vadd.f32 %v7265, %v7617
        %v7619 = vpop.f32.mrb[0].mxu0
        %v7620 = vadd.f32 %v7267, %v7619
        %v7621 = vpop.f32.mrb[0].mxu0
        %v7622 = vadd.f32 %v7269, %v7621
        %v7623 = vpop.f32.mrb[0].mxu0
        %v7624 = vadd.f32 %v7271, %v7623
        %7625 = vmatprep.mubr.bf16.mxu0 %v6587
        %7626 = vmatmul.mubr.bf16.gmra.mrb[0].mxu0 %v6586
        %v7627 = vpop.f32.mrb[0].mxu0
        %v7628 = vadd.f32 %v7275, %v7627
        %v7629 = vpop.f32.mrb[0].mxu0
        %v7630 = vadd.f32 %v7277, %v7629
        %v7631 = vpop.f32.mrb[0].mxu0
        %v7632 = vadd.f32 %v7279, %v7631
        %v7633 = vpop.f32.mrb[0].mxu0
        %v7634 = vadd.f32 %v7281, %v7633
        %7635 = vmatprep.mubr.bf16.mxu0 %v6591
        %7636 = vmatmul.mubr.bf16.gmra.mrb[0].mxu0 %v6590
        %v7637 = vpop.f32.mrb[0].mxu0
        %v7638 = vadd.f32 %v7285, %v7637
        %v7639 = vpop.f32.mrb[0].mxu0
        %v7640 = vadd.f32 %v7287, %v7639
        %v7641 = vpop.f32.mrb[0].mxu0
        %v7642 = vadd.f32 %v7289, %v7641
        %v7643 = vpop.f32.mrb[0].mxu0
        %v7644 = vadd.f32 %v7291, %v7643
        %7645 = vmatprep.mubr.bf16.mxu0 %v6595
        %7646 = vmatmul.mubr.bf16.gmra.mrb[0].mxu0 %v6594
        %v7647 = vpop.f32.mrb[0].mxu0
        %v7648 = vadd.f32 %v7295, %v7647
        %v7649 = vpop.f32.mrb[0].mxu0
        %v7650 = vadd.f32 %v7297, %v7649
        %v7651 = vpop.f32.mrb[0].mxu0
        %v7652 = vadd.f32 %v7299, %v7651
        %v7653 = vpop.f32.mrb[0].mxu0
        %v7654 = vadd.f32 %v7301, %v7653
        %7655 = vmatprep.mubr.bf16.mxu0 %v6599
        %7656 = vmatmul.mubr.bf16.gmra.mrb[0].mxu0 %v6598
        %v7657 = vpop.f32.mrb[0].mxu0
        %v7658 = vadd.f32 %v7305, %v7657
        %v7659 = vpop.f32.mrb[0].mxu0
        %v7660 = vadd.f32 %v7307, %v7659
        %v7661 = vpop.f32.mrb[0].mxu0
        %v7662 = vadd.f32 %v7309, %v7661
        %v7663 = vpop.f32.mrb[0].mxu0
        %v7664 = vadd.f32 %v7311, %v7663
        %7665 = vmatprep.mubr.bf16.mxu0 %v6603
        %7666 = vmatmul.mubr.bf16.gmra.mrb[0].mxu0 %v6602
        %v7667 = vpop.f32.mrb[0].mxu0
        %v7668 = vadd.f32 %v7315, %v7667
        %v7669 = vpop.f32.mrb[0].mxu0
        %v7670 = vadd.f32 %v7317, %v7669
        %v7671 = vpop.f32.mrb[0].mxu0
        %v7672 = vadd.f32 %v7319, %v7671
        %v7673 = vpop.f32.mrb[0].mxu0
        %v7674 = vadd.f32 %v7321, %v7673
        %7675 = vmatprep.mubr.bf16.mxu0 %v6607
        %7676 = vmatmul.mubr.bf16.gmra.mrb[0].mxu0 %v6606
        %v7677 = vpop.f32.mrb[0].mxu0
        %v7678 = vadd.f32 %v7325, %v7677
        %v7679 = vpop.f32.mrb[0].mxu0
        %v7680 = vadd.f32 %v7327, %v7679
        %v7681 = vpop.f32.mrb[0].mxu0
        %v7682 = vadd.f32 %v7329, %v7681
        %v7683 = vpop.f32.mrb[0].mxu0
        %v7684 = vadd.f32 %v7331, %v7683
        %7685 = vmatprep.mubr.bf16.mxu0 %v6611
        %7686 = vmatmul.mubr.bf16.gmra.mrb[0].mxu0 %v6610
        %v7687 = vpop.f32.mrb[0].mxu0
        %v7688 = vadd.f32 %v7335, %v7687
        %v7689 = vpop.f32.mrb[0].mxu0
        %v7690 = vadd.f32 %v7337, %v7689
        %v7691 = vpop.f32.mrb[0].mxu0
        %v7692 = vadd.f32 %v7339, %v7691
        %v7693 = vpop.f32.mrb[0].mxu0
        %v7694 = vadd.f32 %v7341, %v7693
        %7695 = vmatprep.mubr.bf16.mxu0 %v6615
        %7696 = vmatmul.mubr.bf16.gmra.mrb[0].mxu0 %v6614
        %v7697 = vpop.f32.mrb[0].mxu0
        %v7698 = vadd.f32 %v7345, %v7697
        %v7699 = vpop.f32.mrb[0].mxu0
        %v7700 = vadd.f32 %v7347, %v7699
        %v7701 = vpop.f32.mrb[0].mxu0
        %v7702 = vadd.f32 %v7349, %v7701
        %v7703 = vpop.f32.mrb[0].mxu0
        %v7704 = vadd.f32 %v7351, %v7703
        %7705 = vmatprep.mubr.bf16.mxu0 %v6619
        %7706 = vmatmul.mubr.bf16.gmra.mrb[0].mxu0 %v6618
        %v7707 = vpop.f32.mrb[0].mxu0
        %v7708 = vadd.f32 %v7355, %v7707
        %v7709 = vpop.f32.mrb[0].mxu0
        %v7710 = vadd.f32 %v7357, %v7709
        %v7711 = vpop.f32.mrb[0].mxu0
        %v7712 = vadd.f32 %v7359, %v7711
        %v7713 = vpop.f32.mrb[0].mxu0
        %v7714 = vadd.f32 %v7361, %v7713
        %7715 = vmatprep.mubr.bf16.mxu0 %v6623
        %7716 = vmatmul.mubr.bf16.gmra.mrb[0].mxu0 %v6622
        %v7717 = vpop.f32.mrb[0].mxu0
        %v7718 = vadd.f32 %v7365, %v7717
        %v7719 = vpop.f32.mrb[0].mxu0
        %v7720 = vadd.f32 %v7367, %v7719
        %v7721 = vpop.f32.mrb[0].mxu0
        %v7722 = vadd.f32 %v7369, %v7721
        %v7723 = vpop.f32.mrb[0].mxu0
        %v7724 = vadd.f32 %v7371, %v7723
        %7725 = vdwg.mxu0
        %v7726 = vtanh.pop %v7408
        %v7727 = vtanh.pop %v7410
        %v7728 = vtanh.pop %v7412
        %v7729 = vtanh.pop %v7414
        %v7730 = vtanh.pop %v7418
        %v7731 = vtanh.pop %v7420
        %v7732 = vtanh.pop %v7422
        %v7733 = vtanh.pop %v7424
        %v7734 = vtanh.pop %v7428
        %v7735 = vtanh.pop %v7430
        %v7736 = vtanh.pop %v7432
        %v7737 = vtanh.pop %v7434
        %v7738 = vtanh.pop %v7438
        %v7739 = vtanh.pop %v7440
        %v7740 = vtanh.pop %v7442
        %v7741 = vtanh.pop %v7444
        %v7742 = vtanh.pop %v7448
        %v7743 = vtanh.pop %v7450
        %v7744 = vtanh.pop %v7452
        %v7745 = vtanh.pop %v7454
        %v7746 = vtanh.pop %v7458
        %v7747 = vtanh.pop %v7460
        %v7748 = vtanh.pop %v7462
        %v7749 = vtanh.pop %v7464
        %v7750 = vtanh.pop %v7468
        %v7751 = vtanh.pop %v7470
        %v7752 = vtanh.pop %v7472
        %v7753 = vtanh.pop %v7474
        %v7754 = vtanh.pop %v7478
        %v7755 = vtanh.pop %v7480
        %v7756 = vtanh.pop %v7482
        %v7757 = vtanh.pop %v7484
        %v7758 = vtanh.pop %v7488
        %v7759 = vtanh.pop %v7490
        %v7760 = vtanh.pop %v7492
        %v7761 = vtanh.pop %v7494
        %v7762 = vtanh.pop %v7498
        %v7763 = vtanh.pop %v7500
        %v7764 = vtanh.pop %v7502
        %v7765 = vtanh.pop %v7504
        %v7766 = vtanh.pop %v7508
        %v7767 = vtanh.pop %v7510
        %v7768 = vtanh.pop %v7512
        %v7769 = vtanh.pop %v7514
        %v7770 = vtanh.pop %v7518
        %v7771 = vtanh.pop %v7520
        %v7772 = vtanh.pop %v7522
        %v7773 = vtanh.pop %v7524
        %v7774 = vtanh.pop %v7528
        %v7775 = vtanh.pop %v7530
        %v7776 = vtanh.pop %v7532
        %v7777 = vtanh.pop %v7534
        %v7778 = vtanh.pop %v7538
        %v7779 = vtanh.pop %v7540
        %v7780 = vtanh.pop %v7542
        %v7781 = vtanh.pop %v7544
        %v7782 = vtanh.pop %v7548
        %v7783 = vtanh.pop %v7550
        %v7784 = vtanh.pop %v7552
        %v7785 = vtanh.pop %v7554
        %v7786 = vtanh.pop %v7558
        %v7787 = vtanh.pop %v7560
        %v7788 = vtanh.pop %v7562
        %v7789 = vtanh.pop %v7564
        %v7790 = vtanh.pop %v7568
        %v7791 = vtanh.pop %v7570
        %v7792 = vtanh.pop %v7572
        %v7793 = vtanh.pop %v7574
        %v7794 = vtanh.pop %v7578
        %v7795 = vtanh.pop %v7580
        %v7796 = vtanh.pop %v7582
        %v7797 = vtanh.pop %v7584
        %v7798 = vtanh.pop %v7588
        %v7799 = vtanh.pop %v7590
        %v7800 = vtanh.pop %v7592
        %v7801 = vtanh.pop %v7594
        %v7802 = vtanh.pop %v7598
        %v7803 = vtanh.pop %v7600
        %v7804 = vtanh.pop %v7602
        %v7805 = vtanh.pop %v7604
        %v7806 = vtanh.pop %v7608
        %v7807 = vtanh.pop %v7610
        %v7808 = vtanh.pop %v7612
        %v7809 = vtanh.pop %v7614
        %v7810 = vtanh.pop %v7618
        %v7811 = vtanh.pop %v7620
        %v7812 = vtanh.pop %v7622
        %v7813 = vtanh.pop %v7624
        %v7814 = vtanh.pop %v7628
        %v7815 = vtanh.pop %v7630
        %v7816 = vtanh.pop %v7632
        %v7817 = vtanh.pop %v7634
        %v7818 = vtanh.pop %v7638
        %v7819 = vtanh.pop %v7640
        %v7820 = vtanh.pop %v7642
        %v7821 = vtanh.pop %v7644
        %v7822 = vtanh.pop %v7648
        %v7823 = vtanh.pop %v7650
        %v7824 = vtanh.pop %v7652
        %v7825 = vtanh.pop %v7654
        %v7826 = vtanh.pop %v7658
        %v7827 = vtanh.pop %v7660
        %v7828 = vtanh.pop %v7662
        %v7829 = vtanh.pop %v7664
        %v7830 = vtanh.pop %v7668
        %v7831 = vtanh.pop %v7670
        %v7832 = vtanh.pop %v7672
        %v7833 = vtanh.pop %v7674
        %v7834 = vtanh.pop %v7678
        %v7835 = vtanh.pop %v7680
        %v7836 = vtanh.pop %v7682
        %v7837 = vtanh.pop %v7684
        %v7838 = vtanh.pop %v7688
        %v7839 = vtanh.pop %v7690
        %v7840 = vtanh.pop %v7692
        %v7841 = vtanh.pop %v7694
        %v7842 = vtanh.pop %v7698
        %v7843 = vtanh.pop %v7700
        %v7844 = vtanh.pop %v7702
        %v7845 = vtanh.pop %v7704
        %v7846 = vtanh.pop %v7708
        %v7847 = vtanh.pop %v7710
        %v7848 = vtanh.pop %v7712
        %v7849 = vtanh.pop %v7714
        %v7850 = vtanh.pop %v7718
        %v7851 = vtanh.pop %v7720
        %v7852 = vtanh.pop %v7722
        %v7853 = vtanh.pop %v7724
        %v7854 = vld [vmem:[%s6] sm:$0xff]
        %v7855 = vld [vmem:[%s6 + $0x8] sm:$0xff]
        %v7856 = vld [vmem:[%s6 + $0x10] sm:$0xff]
        %v7857 = vld [vmem:[%s6 + $0x18] sm:$0xff]
        %v7858 = vld [vmem:[%s6 + $0x20] sm:$0xff]
        %v7859 = vld [vmem:[%s6 + $0x28] sm:$0xff]
        %v7860 = vld [vmem:[%s6 + $0x30] sm:$0xff]
        %v7861 = vld [vmem:[%s6 + $0x38] sm:$0xff]
        %v7862 = vld [vmem:[%s6 + $0x40] sm:$0xff]
        %v7863 = vld [vmem:[%s6 + $0x48] sm:$0xff]
        %v7864 = vld [vmem:[%s6 + $0x50] sm:$0xff]
        %v7865 = vld [vmem:[%s6 + $0x58] sm:$0xff]
        %v7866 = vld [vmem:[%s6 + $0x60] sm:$0xff]
        %v7867 = vld [vmem:[%s6 + $0x68] sm:$0xff]
        %v7868 = vld [vmem:[%s6 + $0x70] sm:$0xff]
        %v7869 = vld [vmem:[%s6 + $0x78] sm:$0xff]
        %v7870 = vld [vmem:[%s6 + $0x80] sm:$0xff]
        %v7871 = vld [vmem:[%s6 + $0x88] sm:$0xff]
        %v7872 = vld [vmem:[%s6 + $0x90] sm:$0xff]
        %v7873 = vld [vmem:[%s6 + $0x98] sm:$0xff]
        %v7874 = vld [vmem:[%s6 + $0xa0] sm:$0xff]
        %v7875 = vld [vmem:[%s6 + $0xa8] sm:$0xff]
        %v7876 = vld [vmem:[%s6 + $0xb0] sm:$0xff]
        %v7877 = vld [vmem:[%s6 + $0xb8] sm:$0xff]
        %v7878 = vld [vmem:[%s6 + $0xc0] sm:$0xff]
        %v7879 = vld [vmem:[%s6 + $0xc8] sm:$0xff]
        %v7880 = vld [vmem:[%s6 + $0xd0] sm:$0xff]
        %v7881 = vld [vmem:[%s6 + $0xd8] sm:$0xff]
        %v7882 = vld [vmem:[%s6 + $0xe0] sm:$0xff]
        %v7883 = vld [vmem:[%s6 + $0xe8] sm:$0xff]
        %v7884 = vld [vmem:[%s6 + $0xf0] sm:$0xff]
        %v7885 = vld [vmem:[%s6 + $0xf8] sm:$0xff]
        %v7886 = vld [vmem:[%s6 + $0x100] sm:$0xff]
        %v7887 = vld [vmem:[%s6 + $0x108] sm:$0xff]
        %v7888 = vld [vmem:[%s6 + $0x110] sm:$0xff]
        %v7889 = vld [vmem:[%s6 + $0x118] sm:$0xff]
        %v7890 = vld [vmem:[%s6 + $0x120] sm:$0xff]
        %v7891 = vld [vmem:[%s6 + $0x128] sm:$0xff]
        %v7892 = vld [vmem:[%s6 + $0x130] sm:$0xff]
        %v7893 = vld [vmem:[%s6 + $0x138] sm:$0xff]
        %v7894 = vld [vmem:[%s6 + $0x140] sm:$0xff]
        %v7895 = vld [vmem:[%s6 + $0x148] sm:$0xff]
        %v7896 = vld [vmem:[%s6 + $0x150] sm:$0xff]
        %v7897 = vld [vmem:[%s6 + $0x158] sm:$0xff]
        %v7898 = vld [vmem:[%s6 + $0x160] sm:$0xff]
        %v7899 = vld [vmem:[%s6 + $0x168] sm:$0xff]
        %v7900 = vld [vmem:[%s6 + $0x170] sm:$0xff]
        %v7901 = vld [vmem:[%s6 + $0x178] sm:$0xff]
        %v7902 = vld [vmem:[%s6 + $0x180] sm:$0xff]
        %v7903 = vld [vmem:[%s6 + $0x188] sm:$0xff]
        %v7904 = vld [vmem:[%s6 + $0x190] sm:$0xff]
        %v7905 = vld [vmem:[%s6 + $0x198] sm:$0xff]
        %v7906 = vld [vmem:[%s6 + $0x1a0] sm:$0xff]
        %v7907 = vld [vmem:[%s6 + $0x1a8] sm:$0xff]
        %v7908 = vld [vmem:[%s6 + $0x1b0] sm:$0xff]
        %v7909 = vld [vmem:[%s6 + $0x1b8] sm:$0xff]
        %v7910 = vld [vmem:[%s6 + $0x1c0] sm:$0xff]
        %v7911 = vld [vmem:[%s6 + $0x1c8] sm:$0xff]
        %v7912 = vld [vmem:[%s6 + $0x1d0] sm:$0xff]
        %v7913 = vld [vmem:[%s6 + $0x1d8] sm:$0xff]
        %v7914 = vld [vmem:[%s6 + $0x1e0] sm:$0xff]
        %v7915 = vld [vmem:[%s6 + $0x1e8] sm:$0xff]
        %v7916 = vld [vmem:[%s6 + $0x1f0] sm:$0xff]
        %v7917 = vld [vmem:[%s6 + $0x1f8] sm:$0xff]
        %v7918 = vld [vmem:[%s7] sm:$0x3]
        %v7920 = vlaneseq
        %v7921 = vshrl.u32 %v7920, 7
        %v7922 = vsub.s32 0, %v7921
        %v7923 = vrot.slane %v7918, %v7922
        %v7924 = vlaneseq
        %v7925 = vshrl.u32 %v7924, 7
        %v7926 = vsub.s32 1, %v7925
        %v7927 = vrot.slane %v7918, %v7926
        %v7994 = vunpack.c.l.b16 %v7854
        %v7995 = vunpack.c.h.b16 %v7854
        %v7996 = vunpack.c.l.b16 %v7855
        %v7997 = vunpack.c.h.b16 %v7855
        %v7998 = vunpack.c.l.b16 %v7856
        %v7999 = vunpack.c.h.b16 %v7856
        %v8000 = vunpack.c.l.b16 %v7857
        %v8001 = vunpack.c.h.b16 %v7857
        %v8002 = vunpack.c.l.b16 %v7858
        %v8003 = vunpack.c.h.b16 %v7858
        %v8004 = vunpack.c.l.b16 %v7859
        %v8005 = vunpack.c.h.b16 %v7859
        %v8006 = vunpack.c.l.b16 %v7860
        %v8007 = vunpack.c.h.b16 %v7860
        %v8008 = vunpack.c.l.b16 %v7861
        %v8009 = vunpack.c.h.b16 %v7861
        %v8010 = vunpack.c.l.b16 %v7862
        %v8011 = vunpack.c.h.b16 %v7862
        %v8012 = vunpack.c.l.b16 %v7863
        %v8013 = vunpack.c.h.b16 %v7863
        %v8014 = vunpack.c.l.b16 %v7864
        %v8015 = vunpack.c.h.b16 %v7864
        %v8016 = vunpack.c.l.b16 %v7865
        %v8017 = vunpack.c.h.b16 %v7865
        %v8018 = vunpack.c.l.b16 %v7866
        %v8019 = vunpack.c.h.b16 %v7866
        %v8020 = vunpack.c.l.b16 %v7867
        %v8021 = vunpack.c.h.b16 %v7867
        %v8022 = vunpack.c.l.b16 %v7868
        %v8023 = vunpack.c.h.b16 %v7868
        %v8024 = vunpack.c.l.b16 %v7869
        %v8025 = vunpack.c.h.b16 %v7869
        %v8026 = vunpack.c.l.b16 %v7870
        %v8027 = vunpack.c.h.b16 %v7870
        %v8028 = vunpack.c.l.b16 %v7871
        %v8029 = vunpack.c.h.b16 %v7871
        %v8030 = vunpack.c.l.b16 %v7872
        %v8031 = vunpack.c.h.b16 %v7872
        %v8032 = vunpack.c.l.b16 %v7873
        %v8033 = vunpack.c.h.b16 %v7873
        %v8034 = vunpack.c.l.b16 %v7874
        %v8035 = vunpack.c.h.b16 %v7874
        %v8036 = vunpack.c.l.b16 %v7875
        %v8037 = vunpack.c.h.b16 %v7875
        %v8038 = vunpack.c.l.b16 %v7876
        %v8039 = vunpack.c.h.b16 %v7876
        %v8040 = vunpack.c.l.b16 %v7877
        %v8041 = vunpack.c.h.b16 %v7877
        %v8042 = vunpack.c.l.b16 %v7878
        %v8043 = vunpack.c.h.b16 %v7878
        %v8044 = vunpack.c.l.b16 %v7879
        %v8045 = vunpack.c.h.b16 %v7879
        %v8046 = vunpack.c.l.b16 %v7880
        %v8047 = vunpack.c.h.b16 %v7880
        %v8048 = vunpack.c.l.b16 %v7881
        %v8049 = vunpack.c.h.b16 %v7881
        %v8050 = vunpack.c.l.b16 %v7882
        %v8051 = vunpack.c.h.b16 %v7882
        %v8052 = vunpack.c.l.b16 %v7883
        %v8053 = vunpack.c.h.b16 %v7883
        %v8054 = vunpack.c.l.b16 %v7884
        %v8055 = vunpack.c.h.b16 %v7884
        %v8056 = vunpack.c.l.b16 %v7885
        %v8057 = vunpack.c.h.b16 %v7885
        %v8058 = vunpack.c.l.b16 %v7886
        %v8059 = vunpack.c.h.b16 %v7886
        %v8060 = vunpack.c.l.b16 %v7887
        %v8061 = vunpack.c.h.b16 %v7887
        %v8062 = vunpack.c.l.b16 %v7888
        %v8063 = vunpack.c.h.b16 %v7888
        %v8064 = vunpack.c.l.b16 %v7889
        %v8065 = vunpack.c.h.b16 %v7889
        %v8066 = vunpack.c.l.b16 %v7890
        %v8067 = vunpack.c.h.b16 %v7890
        %v8068 = vunpack.c.l.b16 %v7891
        %v8069 = vunpack.c.h.b16 %v7891
        %v8070 = vunpack.c.l.b16 %v7892
        %v8071 = vunpack.c.h.b16 %v7892
        %v8072 = vunpack.c.l.b16 %v7893
        %v8073 = vunpack.c.h.b16 %v7893
        %v8074 = vunpack.c.l.b16 %v7894
        %v8075 = vunpack.c.h.b16 %v7894
        %v8076 = vunpack.c.l.b16 %v7895
        %v8077 = vunpack.c.h.b16 %v7895
        %v8078 = vunpack.c.l.b16 %v7896
        %v8079 = vunpack.c.h.b16 %v7896
        %v8080 = vunpack.c.l.b16 %v7897
        %v8081 = vunpack.c.h.b16 %v7897
        %v8082 = vunpack.c.l.b16 %v7898
        %v8083 = vunpack.c.h.b16 %v7898
        %v8084 = vunpack.c.l.b16 %v7899
        %v8085 = vunpack.c.h.b16 %v7899
        %v8086 = vunpack.c.l.b16 %v7900
        %v8087 = vunpack.c.h.b16 %v7900
        %v8088 = vunpack.c.l.b16 %v7901
        %v8089 = vunpack.c.h.b16 %v7901
        %v8090 = vunpack.c.l.b16 %v7902
        %v8091 = vunpack.c.h.b16 %v7902
        %v8092 = vunpack.c.l.b16 %v7903
        %v8093 = vunpack.c.h.b16 %v7903
        %v8094 = vunpack.c.l.b16 %v7904
        %v8095 = vunpack.c.h.b16 %v7904
        %v8096 = vunpack.c.l.b16 %v7905
        %v8097 = vunpack.c.h.b16 %v7905
        %v8098 = vunpack.c.l.b16 %v7906
        %v8099 = vunpack.c.h.b16 %v7906
        %v8100 = vunpack.c.l.b16 %v7907
        %v8101 = vunpack.c.h.b16 %v7907
        %v8102 = vunpack.c.l.b16 %v7908
        %v8103 = vunpack.c.h.b16 %v7908
        %v8104 = vunpack.c.l.b16 %v7909
        %v8105 = vunpack.c.h.b16 %v7909
        %v8106 = vunpack.c.l.b16 %v7910
        %v8107 = vunpack.c.h.b16 %v7910
        %v8108 = vunpack.c.l.b16 %v7911
        %v8109 = vunpack.c.h.b16 %v7911
        %v8110 = vunpack.c.l.b16 %v7912
        %v8111 = vunpack.c.h.b16 %v7912
        %v8112 = vunpack.c.l.b16 %v7913
        %v8113 = vunpack.c.h.b16 %v7913
        %v8114 = vunpack.c.l.b16 %v7914
        %v8115 = vunpack.c.h.b16 %v7914
        %v8116 = vunpack.c.l.b16 %v7915
        %v8117 = vunpack.c.h.b16 %v7915
        %v8118 = vunpack.c.l.b16 %v7916
        %v8119 = vunpack.c.h.b16 %v7916
        %v8120 = vunpack.c.l.b16 %v7917
        %v8121 = vunpack.c.h.b16 %v7917
        %v8122 = vpack.c.b16 %v7996, %v7994
        %v8123 = vpack.c.b16 %v7997, %v7995
        %v8124 = vpack.c.b16 %v8000, %v7998
        %v8125 = vpack.c.b16 %v8001, %v7999
        %v8126 = vpack.c.b16 %v8004, %v8002
        %v8127 = vpack.c.b16 %v8005, %v8003
        %v8128 = vpack.c.b16 %v8008, %v8006
        %v8129 = vpack.c.b16 %v8009, %v8007
        %v8130 = vpack.c.b16 %v8012, %v8010
        %v8131 = vpack.c.b16 %v8013, %v8011
        %v8132 = vpack.c.b16 %v8016, %v8014
        %v8133 = vpack.c.b16 %v8017, %v8015
        %v8134 = vpack.c.b16 %v8020, %v8018
        %v8135 = vpack.c.b16 %v8021, %v8019
        %v8136 = vpack.c.b16 %v8024, %v8022
        %v8137 = vpack.c.b16 %v8025, %v8023
        %v8138 = vpack.c.b16 %v8028, %v8026
        %v8139 = vpack.c.b16 %v8029, %v8027
        %v8140 = vpack.c.b16 %v8032, %v8030
        %v8141 = vpack.c.b16 %v8033, %v8031
        %v8142 = vpack.c.b16 %v8036, %v8034
        %v8143 = vpack.c.b16 %v8037, %v8035
        %v8144 = vpack.c.b16 %v8040, %v8038
        %v8145 = vpack.c.b16 %v8041, %v8039
        %v8146 = vpack.c.b16 %v8044, %v8042
        %v8147 = vpack.c.b16 %v8045, %v8043
        %v8148 = vpack.c.b16 %v8048, %v8046
        %v8149 = vpack.c.b16 %v8049, %v8047
        %v8150 = vpack.c.b16 %v8052, %v8050
        %v8151 = vpack.c.b16 %v8053, %v8051
        %v8152 = vpack.c.b16 %v8056, %v8054
        %v8153 = vpack.c.b16 %v8057, %v8055
        %v8154 = vpack.c.b16 %v8060, %v8058
        %v8155 = vpack.c.b16 %v8061, %v8059
        %v8156 = vpack.c.b16 %v8064, %v8062
        %v8157 = vpack.c.b16 %v8065, %v8063
        %v8158 = vpack.c.b16 %v8068, %v8066
        %v8159 = vpack.c.b16 %v8069, %v8067
        %v8160 = vpack.c.b16 %v8072, %v8070
        %v8161 = vpack.c.b16 %v8073, %v8071
        %v8162 = vpack.c.b16 %v8076, %v8074
        %v8163 = vpack.c.b16 %v8077, %v8075
        %v8164 = vpack.c.b16 %v8080, %v8078
        %v8165 = vpack.c.b16 %v8081, %v8079
        %v8166 = vpack.c.b16 %v8084, %v8082
        %v8167 = vpack.c.b16 %v8085, %v8083
        %v8168 = vpack.c.b16 %v8088, %v8086
        %v8169 = vpack.c.b16 %v8089, %v8087
        %v8170 = vpack.c.b16 %v8092, %v8090
        %v8171 = vpack.c.b16 %v8093, %v8091
        %v8172 = vpack.c.b16 %v8096, %v8094
        %v8173 = vpack.c.b16 %v8097, %v8095
        %v8174 = vpack.c.b16 %v8100, %v8098
        %v8175 = vpack.c.b16 %v8101, %v8099
        %v8176 = vpack.c.b16 %v8104, %v8102
        %v8177 = vpack.c.b16 %v8105, %v8103
        %v8178 = vpack.c.b16 %v8108, %v8106
        %v8179 = vpack.c.b16 %v8109, %v8107
        %v8180 = vpack.c.b16 %v8112, %v8110
        %v8181 = vpack.c.b16 %v8113, %v8111
        %v8182 = vpack.c.b16 %v8116, %v8114
        %v8183 = vpack.c.b16 %v8117, %v8115
        %v8184 = vpack.c.b16 %v8120, %v8118
        %v8185 = vpack.c.b16 %v8121, %v8119
        %8250 = vmatprep.subr.bf16.mxu0 %v8123
        %8251 = vmatpush1.bf16.msra.mxu0 %v8122
        %8252 = vmatprep.subr.bf16.mxu0 %v8125
        %8253 = vmatpush1.bf16.msra.mxu0 %v8124
        %8254 = vmatprep.subr.bf16.mxu0 %v8127
        %8255 = vmatpush1.bf16.msra.mxu0 %v8126
        %8256 = vmatprep.subr.bf16.mxu0 %v8129
        %8257 = vmatpush1.bf16.msra.mxu0 %v8128
        %8258 = vmatprep.subr.bf16.mxu0 %v8131
        %8259 = vmatpush1.bf16.msra.mxu0 %v8130
        %8260 = vmatprep.subr.bf16.mxu0 %v8133
        %8261 = vmatpush1.bf16.msra.mxu0 %v8132
        %8262 = vmatprep.subr.bf16.mxu0 %v8135
        %8263 = vmatpush1.bf16.msra.mxu0 %v8134
        %8264 = vmatprep.subr.bf16.mxu0 %v8137
        %8265 = vmatpush1.bf16.msra.mxu0 %v8136
        %8266 = vmatprep.subr.bf16.mxu0 %v8139
        %8267 = vmatpush1.bf16.msra.mxu0 %v8138
        %8268 = vmatprep.subr.bf16.mxu0 %v8141
        %8269 = vmatpush1.bf16.msra.mxu0 %v8140
        %8270 = vmatprep.subr.bf16.mxu0 %v8143
        %8271 = vmatpush1.bf16.msra.mxu0 %v8142
        %8272 = vmatprep.subr.bf16.mxu0 %v8145
        %8273 = vmatpush1.bf16.msra.mxu0 %v8144
        %8274 = vmatprep.subr.bf16.mxu0 %v8147
        %8275 = vmatpush1.bf16.msra.mxu0 %v8146
        %8276 = vmatprep.subr.bf16.mxu0 %v8149
        %8277 = vmatpush1.bf16.msra.mxu0 %v8148
        %8278 = vmatprep.subr.bf16.mxu0 %v8151
        %8279 = vmatpush1.bf16.msra.mxu0 %v8150
        %8280 = vmatprep.subr.bf16.mxu0 %v8153
        %8281 = vmatpush1.bf16.msra.mxu0 %v8152
        %8282 = vmatprep.mubr.bf16.mxu0 %v6497
        %8283 = vmatmul.mubr.bf16.gmra.mrb[0].mxu0 %v6496
        %v8284 = vpop.f32.mrb[0].mxu0
        %v8285 = vadd.f32 %v7923, %v8284
        %v8286 = vpop.f32.mrb[0].mxu0
        %v8287 = vadd.f32 %v7927, %v8286
        %v8288 = vpop.f32.mrb[0].mxu0
        %v8289 = vadd.f32 %v7923, %v8288
        %v8290 = vpop.f32.mrb[0].mxu0
        %v8291 = vadd.f32 %v7927, %v8290
        %8292 = vmatprep.mubr.bf16.mxu0 %v6501
        %8293 = vmatmul.mubr.bf16.gmra.mrb[0].mxu0 %v6500
        %v8294 = vpop.f32.mrb[0].mxu0
        %v8295 = vadd.f32 %v7923, %v8294
        %v8296 = vpop.f32.mrb[0].mxu0
        %v8297 = vadd.f32 %v7927, %v8296
        %v8298 = vpop.f32.mrb[0].mxu0
        %v8299 = vadd.f32 %v7923, %v8298
        %v8300 = vpop.f32.mrb[0].mxu0
        %v8301 = vadd.f32 %v7927, %v8300
        %8302 = vmatprep.mubr.bf16.mxu0 %v6505
        %8303 = vmatmul.mubr.bf16.gmra.mrb[0].mxu0 %v6504
        %v8304 = vpop.f32.mrb[0].mxu0
        %v8305 = vadd.f32 %v7923, %v8304
        %v8306 = vpop.f32.mrb[0].mxu0
        %v8307 = vadd.f32 %v7927, %v8306
        %v8308 = vpop.f32.mrb[0].mxu0
        %v8309 = vadd.f32 %v7923, %v8308
        %v8310 = vpop.f32.mrb[0].mxu0
        %v8311 = vadd.f32 %v7927, %v8310
        %8312 = vmatprep.mubr.bf16.mxu0 %v6509
        %8313 = vmatmul.mubr.bf16.gmra.mrb[0].mxu0 %v6508
        %v8314 = vpop.f32.mrb[0].mxu0
        %v8315 = vadd.f32 %v7923, %v8314
        %v8316 = vpop.f32.mrb[0].mxu0
        %v8317 = vadd.f32 %v7927, %v8316
        %v8318 = vpop.f32.mrb[0].mxu0
        %v8319 = vadd.f32 %v7923, %v8318
        %v8320 = vpop.f32.mrb[0].mxu0
        %v8321 = vadd.f32 %v7927, %v8320
        %8322 = vmatprep.mubr.bf16.mxu0 %v6513
        %8323 = vmatmul.mubr.bf16.gmra.mrb[0].mxu0 %v6512
        %v8324 = vpop.f32.mrb[0].mxu0
        %v8325 = vadd.f32 %v7923, %v8324
        %v8326 = vpop.f32.mrb[0].mxu0
        %v8327 = vadd.f32 %v7927, %v8326
        %v8328 = vpop.f32.mrb[0].mxu0
        %v8329 = vadd.f32 %v7923, %v8328
        %v8330 = vpop.f32.mrb[0].mxu0
        %v8331 = vadd.f32 %v7927, %v8330
        %8332 = vmatprep.mubr.bf16.mxu0 %v6517
        %8333 = vmatmul.mubr.bf16.gmra.mrb[0].mxu0 %v6516
        %v8334 = vpop.f32.mrb[0].mxu0
        %v8335 = vadd.f32 %v7923, %v8334
        %v8336 = vpop.f32.mrb[0].mxu0
        %v8337 = vadd.f32 %v7927, %v8336
        %v8338 = vpop.f32.mrb[0].mxu0
        %v8339 = vadd.f32 %v7923, %v8338
        %v8340 = vpop.f32.mrb[0].mxu0
        %v8341 = vadd.f32 %v7927, %v8340
        %8342 = vmatprep.mubr.bf16.mxu0 %v6521
        %8343 = vmatmul.mubr.bf16.gmra.mrb[0].mxu0 %v6520
        %v8344 = vpop.f32.mrb[0].mxu0
        %v8345 = vadd.f32 %v7923, %v8344
        %v8346 = vpop.f32.mrb[0].mxu0
        %v8347 = vadd.f32 %v7927, %v8346
        %v8348 = vpop.f32.mrb[0].mxu0
        %v8349 = vadd.f32 %v7923, %v8348
        %v8350 = vpop.f32.mrb[0].mxu0
        %v8351 = vadd.f32 %v7927, %v8350
        %8352 = vmatprep.mubr.bf16.mxu0 %v6525
        %8353 = vmatmul.mubr.bf16.gmra.mrb[0].mxu0 %v6524
        %v8354 = vpop.f32.mrb[0].mxu0
        %v8355 = vadd.f32 %v7923, %v8354
        %v8356 = vpop.f32.mrb[0].mxu0
        %v8357 = vadd.f32 %v7927, %v8356
        %v8358 = vpop.f32.mrb[0].mxu0
        %v8359 = vadd.f32 %v7923, %v8358
        %v8360 = vpop.f32.mrb[0].mxu0
        %v8361 = vadd.f32 %v7927, %v8360
        %8362 = vmatprep.mubr.bf16.mxu0 %v6529
        %8363 = vmatmul.mubr.bf16.gmra.mrb[0].mxu0 %v6528
        %v8364 = vpop.f32.mrb[0].mxu0
        %v8365 = vadd.f32 %v7923, %v8364
        %v8366 = vpop.f32.mrb[0].mxu0
        %v8367 = vadd.f32 %v7927, %v8366
        %v8368 = vpop.f32.mrb[0].mxu0
        %v8369 = vadd.f32 %v7923, %v8368
        %v8370 = vpop.f32.mrb[0].mxu0
        %v8371 = vadd.f32 %v7927, %v8370
        %8372 = vmatprep.mubr.bf16.mxu0 %v6533
        %8373 = vmatmul.mubr.bf16.gmra.mrb[0].mxu0 %v6532
        %v8374 = vpop.f32.mrb[0].mxu0
        %v8375 = vadd.f32 %v7923, %v8374
        %v8376 = vpop.f32.mrb[0].mxu0
        %v8377 = vadd.f32 %v7927, %v8376
        %v8378 = vpop.f32.mrb[0].mxu0
        %v8379 = vadd.f32 %v7923, %v8378
        %v8380 = vpop.f32.mrb[0].mxu0
        %v8381 = vadd.f32 %v7927, %v8380
        %8382 = vmatprep.mubr.bf16.mxu0 %v6537
        %8383 = vmatmul.mubr.bf16.gmra.mrb[0].mxu0 %v6536
        %v8384 = vpop.f32.mrb[0].mxu0
        %v8385 = vadd.f32 %v7923, %v8384
        %v8386 = vpop.f32.mrb[0].mxu0
        %v8387 = vadd.f32 %v7927, %v8386
        %v8388 = vpop.f32.mrb[0].mxu0
        %v8389 = vadd.f32 %v7923, %v8388
        %v8390 = vpop.f32.mrb[0].mxu0
        %v8391 = vadd.f32 %v7927, %v8390
        %8392 = vmatprep.mubr.bf16.mxu0 %v6541
        %8393 = vmatmul.mubr.bf16.gmra.mrb[0].mxu0 %v6540
        %v8394 = vpop.f32.mrb[0].mxu0
        %v8395 = vadd.f32 %v7923, %v8394
        %v8396 = vpop.f32.mrb[0].mxu0
        %v8397 = vadd.f32 %v7927, %v8396
        %v8398 = vpop.f32.mrb[0].mxu0
        %v8399 = vadd.f32 %v7923, %v8398
        %v8400 = vpop.f32.mrb[0].mxu0
        %v8401 = vadd.f32 %v7927, %v8400
        %8402 = vmatprep.mubr.bf16.mxu0 %v6545
        %8403 = vmatmul.mubr.bf16.gmra.mrb[0].mxu0 %v6544
        %v8404 = vpop.f32.mrb[0].mxu0
        %v8405 = vadd.f32 %v7923, %v8404
        %v8406 = vpop.f32.mrb[0].mxu0
        %v8407 = vadd.f32 %v7927, %v8406
        %v8408 = vpop.f32.mrb[0].mxu0
        %v8409 = vadd.f32 %v7923, %v8408
        %v8410 = vpop.f32.mrb[0].mxu0
        %v8411 = vadd.f32 %v7927, %v8410
        %8412 = vmatprep.mubr.bf16.mxu0 %v6549
        %8413 = vmatmul.mubr.bf16.gmra.mrb[0].mxu0 %v6548
        %v8414 = vpop.f32.mrb[0].mxu0
        %v8415 = vadd.f32 %v7923, %v8414
        %v8416 = vpop.f32.mrb[0].mxu0
        %v8417 = vadd.f32 %v7927, %v8416
        %v8418 = vpop.f32.mrb[0].mxu0
        %v8419 = vadd.f32 %v7923, %v8418
        %v8420 = vpop.f32.mrb[0].mxu0
        %v8421 = vadd.f32 %v7927, %v8420
        %8422 = vmatprep.mubr.bf16.mxu0 %v6553
        %8423 = vmatmul.mubr.bf16.gmra.mrb[0].mxu0 %v6552
        %v8424 = vpop.f32.mrb[0].mxu0
        %v8425 = vadd.f32 %v7923, %v8424
        %v8426 = vpop.f32.mrb[0].mxu0
        %v8427 = vadd.f32 %v7927, %v8426
        %v8428 = vpop.f32.mrb[0].mxu0
        %v8429 = vadd.f32 %v7923, %v8428
        %v8430 = vpop.f32.mrb[0].mxu0
        %v8431 = vadd.f32 %v7927, %v8430
        %8432 = vmatprep.mubr.bf16.mxu0 %v6557
        %8433 = vmatmul.mubr.bf16.gmra.mrb[0].mxu0 %v6556
        %v8434 = vpop.f32.mrb[0].mxu0
        %v8435 = vadd.f32 %v7923, %v8434
        %v8436 = vpop.f32.mrb[0].mxu0
        %v8437 = vadd.f32 %v7927, %v8436
        %v8438 = vpop.f32.mrb[0].mxu0
        %v8439 = vadd.f32 %v7923, %v8438
        %v8440 = vpop.f32.mrb[0].mxu0
        %v8441 = vadd.f32 %v7927, %v8440
        %8442 = vmatprep.mubr.bf16.mxu0 %v6561
        %8443 = vmatmul.mubr.bf16.gmra.mrb[0].mxu0 %v6560
        %v8444 = vpop.f32.mrb[0].mxu0
        %v8445 = vadd.f32 %v7923, %v8444
        %v8446 = vpop.f32.mrb[0].mxu0
        %v8447 = vadd.f32 %v7927, %v8446
        %v8448 = vpop.f32.mrb[0].mxu0
        %v8449 = vadd.f32 %v7923, %v8448
        %v8450 = vpop.f32.mrb[0].mxu0
        %v8451 = vadd.f32 %v7927, %v8450
        %8452 = vmatprep.mubr.bf16.mxu0 %v6565
        %8453 = vmatmul.mubr.bf16.gmra.mrb[0].mxu0 %v6564
        %v8454 = vpop.f32.mrb[0].mxu0
        %v8455 = vadd.f32 %v7923, %v8454
        %v8456 = vpop.f32.mrb[0].mxu0
        %v8457 = vadd.f32 %v7927, %v8456
        %v8458 = vpop.f32.mrb[0].mxu0
        %v8459 = vadd.f32 %v7923, %v8458
        %v8460 = vpop.f32.mrb[0].mxu0
        %v8461 = vadd.f32 %v7927, %v8460
        %8462 = vmatprep.mubr.bf16.mxu0 %v6569
        %8463 = vmatmul.mubr.bf16.gmra.mrb[0].mxu0 %v6568
        %v8464 = vpop.f32.mrb[0].mxu0
        %v8465 = vadd.f32 %v7923, %v8464
        %v8466 = vpop.f32.mrb[0].mxu0
        %v8467 = vadd.f32 %v7927, %v8466
        %v8468 = vpop.f32.mrb[0].mxu0
        %v8469 = vadd.f32 %v7923, %v8468
        %v8470 = vpop.f32.mrb[0].mxu0
        %v8471 = vadd.f32 %v7927, %v8470
        %8472 = vmatprep.mubr.bf16.mxu0 %v6573
        %8473 = vmatmul.mubr.bf16.gmra.mrb[0].mxu0 %v6572
        %v8474 = vpop.f32.mrb[0].mxu0
        %v8475 = vadd.f32 %v7923, %v8474
        %v8476 = vpop.f32.mrb[0].mxu0
        %v8477 = vadd.f32 %v7927, %v8476
        %v8478 = vpop.f32.mrb[0].mxu0
        %v8479 = vadd.f32 %v7923, %v8478
        %v8480 = vpop.f32.mrb[0].mxu0
        %v8481 = vadd.f32 %v7927, %v8480
        %8482 = vmatprep.mubr.bf16.mxu0 %v6577
        %8483 = vmatmul.mubr.bf16.gmra.mrb[0].mxu0 %v6576
        %v8484 = vpop.f32.mrb[0].mxu0
        %v8485 = vadd.f32 %v7923, %v8484
        %v8486 = vpop.f32.mrb[0].mxu0
        %v8487 = vadd.f32 %v7927, %v8486
        %v8488 = vpop.f32.mrb[0].mxu0
        %v8489 = vadd.f32 %v7923, %v8488
        %v8490 = vpop.f32.mrb[0].mxu0
        %v8491 = vadd.f32 %v7927, %v8490
        %8492 = vmatprep.mubr.bf16.mxu0 %v6581
        %8493 = vmatmul.mubr.bf16.gmra.mrb[0].mxu0 %v6580
        %v8494 = vpop.f32.mrb[0].mxu0
        %v8495 = vadd.f32 %v7923, %v8494
        %v8496 = vpop.f32.mrb[0].mxu0
        %v8497 = vadd.f32 %v7927, %v8496
        %v8498 = vpop.f32.mrb[0].mxu0
        %v8499 = vadd.f32 %v7923, %v8498
        %v8500 = vpop.f32.mrb[0].mxu0
        %v8501 = vadd.f32 %v7927, %v8500
        %8502 = vmatprep.mubr.bf16.mxu0 %v6585
        %8503 = vmatmul.mubr.bf16.gmra.mrb[0].mxu0 %v6584
        %v8504 = vpop.f32.mrb[0].mxu0
        %v8505 = vadd.f32 %v7923, %v8504
        %v8506 = vpop.f32.mrb[0].mxu0
        %v8507 = vadd.f32 %v7927, %v8506
        %v8508 = vpop.f32.mrb[0].mxu0
        %v8509 = vadd.f32 %v7923, %v8508
        %v8510 = vpop.f32.mrb[0].mxu0
        %v8511 = vadd.f32 %v7927, %v8510
        %8512 = vmatprep.mubr.bf16.mxu0 %v6589
        %8513 = vmatmul.mubr.bf16.gmra.mrb[0].mxu0 %v6588
        %v8514 = vpop.f32.mrb[0].mxu0
        %v8515 = vadd.f32 %v7923, %v8514
        %v8516 = vpop.f32.mrb[0].mxu0
        %v8517 = vadd.f32 %v7927, %v8516
        %v8518 = vpop.f32.mrb[0].mxu0
        %v8519 = vadd.f32 %v7923, %v8518
        %v8520 = vpop.f32.mrb[0].mxu0
        %v8521 = vadd.f32 %v7927, %v8520
        %8522 = vmatprep.mubr.bf16.mxu0 %v6593
        %8523 = vmatmul.mubr.bf16.gmra.mrb[0].mxu0 %v6592
        %v8524 = vpop.f32.mrb[0].mxu0
        %v8525 = vadd.f32 %v7923, %v8524
        %v8526 = vpop.f32.mrb[0].mxu0
        %v8527 = vadd.f32 %v7927, %v8526
        %v8528 = vpop.f32.mrb[0].mxu0
        %v8529 = vadd.f32 %v7923, %v8528
        %v8530 = vpop.f32.mrb[0].mxu0
        %v8531 = vadd.f32 %v7927, %v8530
        %8532 = vmatprep.mubr.bf16.mxu0 %v6597
        %8533 = vmatmul.mubr.bf16.gmra.mrb[0].mxu0 %v6596
        %v8534 = vpop.f32.mrb[0].mxu0
        %v8535 = vadd.f32 %v7923, %v8534
        %v8536 = vpop.f32.mrb[0].mxu0
        %v8537 = vadd.f32 %v7927, %v8536
        %v8538 = vpop.f32.mrb[0].mxu0
        %v8539 = vadd.f32 %v7923, %v8538
        %v8540 = vpop.f32.mrb[0].mxu0
        %v8541 = vadd.f32 %v7927, %v8540
        %8542 = vmatprep.mubr.bf16.mxu0 %v6601
        %8543 = vmatmul.mubr.bf16.gmra.mrb[0].mxu0 %v6600
        %v8544 = vpop.f32.mrb[0].mxu0
        %v8545 = vadd.f32 %v7923, %v8544
        %v8546 = vpop.f32.mrb[0].mxu0
        %v8547 = vadd.f32 %v7927, %v8546
        %v8548 = vpop.f32.mrb[0].mxu0
        %v8549 = vadd.f32 %v7923, %v8548
        %v8550 = vpop.f32.mrb[0].mxu0
        %v8551 = vadd.f32 %v7927, %v8550
        %8552 = vmatprep.mubr.bf16.mxu0 %v6605
        %8553 = vmatmul.mubr.bf16.gmra.mrb[0].mxu0 %v6604
        %v8554 = vpop.f32.mrb[0].mxu0
        %v8555 = vadd.f32 %v7923, %v8554
        %v8556 = vpop.f32.mrb[0].mxu0
        %v8557 = vadd.f32 %v7927, %v8556
        %v8558 = vpop.f32.mrb[0].mxu0
        %v8559 = vadd.f32 %v7923, %v8558
        %v8560 = vpop.f32.mrb[0].mxu0
        %v8561 = vadd.f32 %v7927, %v8560
        %8562 = vmatprep.mubr.bf16.mxu0 %v6609
        %8563 = vmatmul.mubr.bf16.gmra.mrb[0].mxu0 %v6608
        %v8564 = vpop.f32.mrb[0].mxu0
        %v8565 = vadd.f32 %v7923, %v8564
        %v8566 = vpop.f32.mrb[0].mxu0
        %v8567 = vadd.f32 %v7927, %v8566
        %v8568 = vpop.f32.mrb[0].mxu0
        %v8569 = vadd.f32 %v7923, %v8568
        %v8570 = vpop.f32.mrb[0].mxu0
        %v8571 = vadd.f32 %v7927, %v8570
        %8572 = vmatprep.mubr.bf16.mxu0 %v6613
        %8573 = vmatmul.mubr.bf16.gmra.mrb[0].mxu0 %v6612
        %v8574 = vpop.f32.mrb[0].mxu0
        %v8575 = vadd.f32 %v7923, %v8574
        %v8576 = vpop.f32.mrb[0].mxu0
        %v8577 = vadd.f32 %v7927, %v8576
        %v8578 = vpop.f32.mrb[0].mxu0
        %v8579 = vadd.f32 %v7923, %v8578
        %v8580 = vpop.f32.mrb[0].mxu0
        %v8581 = vadd.f32 %v7927, %v8580
        %8582 = vmatprep.mubr.bf16.mxu0 %v6617
        %8583 = vmatmul.mubr.bf16.gmra.mrb[0].mxu0 %v6616
        %v8584 = vpop.f32.mrb[0].mxu0
        %v8585 = vadd.f32 %v7923, %v8584
        %v8586 = vpop.f32.mrb[0].mxu0
        %v8587 = vadd.f32 %v7927, %v8586
        %v8588 = vpop.f32.mrb[0].mxu0
        %v8589 = vadd.f32 %v7923, %v8588
        %v8590 = vpop.f32.mrb[0].mxu0
        %v8591 = vadd.f32 %v7927, %v8590
        %8592 = vmatprep.mubr.bf16.mxu0 %v6621
        %8593 = vmatmul.mubr.bf16.gmra.mrb[0].mxu0 %v6620
        %v8594 = vpop.f32.mrb[0].mxu0
        %v8595 = vadd.f32 %v7923, %v8594
        %v8596 = vpop.f32.mrb[0].mxu0
        %v8597 = vadd.f32 %v7927, %v8596
        %v8598 = vpop.f32.mrb[0].mxu0
        %v8599 = vadd.f32 %v7923, %v8598
        %v8600 = vpop.f32.mrb[0].mxu0
        %v8601 = vadd.f32 %v7927, %v8600
        %8602 = vdwg.mxu0
        %8603 = vmatprep.subr.bf16.mxu0 %v8155
        %8604 = vmatpush1.bf16.msra.mxu0 %v8154
        %8605 = vmatprep.subr.bf16.mxu0 %v8157
        %8606 = vmatpush1.bf16.msra.mxu0 %v8156
        %8607 = vmatprep.subr.bf16.mxu0 %v8159
        %8608 = vmatpush1.bf16.msra.mxu0 %v8158
        %8609 = vmatprep.subr.bf16.mxu0 %v8161
        %8610 = vmatpush1.bf16.msra.mxu0 %v8160
        %8611 = vmatprep.subr.bf16.mxu0 %v8163
        %8612 = vmatpush1.bf16.msra.mxu0 %v8162
        %8613 = vmatprep.subr.bf16.mxu0 %v8165
        %8614 = vmatpush1.bf16.msra.mxu0 %v8164
        %8615 = vmatprep.subr.bf16.mxu0 %v8167
        %8616 = vmatpush1.bf16.msra.mxu0 %v8166
        %8617 = vmatprep.subr.bf16.mxu0 %v8169
        %8618 = vmatpush1.bf16.msra.mxu0 %v8168
        %8619 = vmatprep.subr.bf16.mxu0 %v8171
        %8620 = vmatpush1.bf16.msra.mxu0 %v8170
        %8621 = vmatprep.subr.bf16.mxu0 %v8173
        %8622 = vmatpush1.bf16.msra.mxu0 %v8172
        %8623 = vmatprep.subr.bf16.mxu0 %v8175
        %8624 = vmatpush1.bf16.msra.mxu0 %v8174
        %8625 = vmatprep.subr.bf16.mxu0 %v8177
        %8626 = vmatpush1.bf16.msra.mxu0 %v8176
        %8627 = vmatprep.subr.bf16.mxu0 %v8179
        %8628 = vmatpush1.bf16.msra.mxu0 %v8178
        %8629 = vmatprep.subr.bf16.mxu0 %v8181
        %8630 = vmatpush1.bf16.msra.mxu0 %v8180
        %8631 = vmatprep.subr.bf16.mxu0 %v8183
        %8632 = vmatpush1.bf16.msra.mxu0 %v8182
        %8633 = vmatprep.subr.bf16.mxu0 %v8185
        %8634 = vmatpush1.bf16.msra.mxu0 %v8184
        %8635 = vmatprep.mubr.bf16.mxu0 %v6499
        %8636 = vmatmul.mubr.bf16.gmra.mrb[0].mxu0 %v6498
        %v8637 = vpop.f32.mrb[0].mxu0
        %v8638 = vadd.f32 %v8285, %v8637
        %v8639 = vpop.f32.mrb[0].mxu0
        %v8640 = vadd.f32 %v8287, %v8639
        %v8641 = vpop.f32.mrb[0].mxu0
        %v8642 = vadd.f32 %v8289, %v8641
        %v8643 = vpop.f32.mrb[0].mxu0
        %v8644 = vadd.f32 %v8291, %v8643
        %8645 = vmatprep.mubr.bf16.mxu0 %v6503
        %8646 = vmatmul.mubr.bf16.gmra.mrb[0].mxu0 %v6502
        %v8647 = vpop.f32.mrb[0].mxu0
        %v8648 = vadd.f32 %v8295, %v8647
        %v8649 = vpop.f32.mrb[0].mxu0
        %v8650 = vadd.f32 %v8297, %v8649
        %v8651 = vpop.f32.mrb[0].mxu0
        %v8652 = vadd.f32 %v8299, %v8651
        %v8653 = vpop.f32.mrb[0].mxu0
        %v8654 = vadd.f32 %v8301, %v8653
        %8655 = vmatprep.mubr.bf16.mxu0 %v6507
        %8656 = vmatmul.mubr.bf16.gmra.mrb[0].mxu0 %v6506
        %v8657 = vpop.f32.mrb[0].mxu0
        %v8658 = vadd.f32 %v8305, %v8657
        %v8659 = vpop.f32.mrb[0].mxu0
        %v8660 = vadd.f32 %v8307, %v8659
        %v8661 = vpop.f32.mrb[0].mxu0
        %v8662 = vadd.f32 %v8309, %v8661
        %v8663 = vpop.f32.mrb[0].mxu0
        %v8664 = vadd.f32 %v8311, %v8663
        %8665 = vmatprep.mubr.bf16.mxu0 %v6511
        %8666 = vmatmul.mubr.bf16.gmra.mrb[0].mxu0 %v6510
        %v8667 = vpop.f32.mrb[0].mxu0
        %v8668 = vadd.f32 %v8315, %v8667
        %v8669 = vpop.f32.mrb[0].mxu0
        %v8670 = vadd.f32 %v8317, %v8669
        %v8671 = vpop.f32.mrb[0].mxu0
        %v8672 = vadd.f32 %v8319, %v8671
        %v8673 = vpop.f32.mrb[0].mxu0
        %v8674 = vadd.f32 %v8321, %v8673
        %8675 = vmatprep.mubr.bf16.mxu0 %v6515
        %8676 = vmatmul.mubr.bf16.gmra.mrb[0].mxu0 %v6514
        %v8677 = vpop.f32.mrb[0].mxu0
        %v8678 = vadd.f32 %v8325, %v8677
        %v8679 = vpop.f32.mrb[0].mxu0
        %v8680 = vadd.f32 %v8327, %v8679
        %v8681 = vpop.f32.mrb[0].mxu0
        %v8682 = vadd.f32 %v8329, %v8681
        %v8683 = vpop.f32.mrb[0].mxu0
        %v8684 = vadd.f32 %v8331, %v8683
        %8685 = vmatprep.mubr.bf16.mxu0 %v6519
        %8686 = vmatmul.mubr.bf16.gmra.mrb[0].mxu0 %v6518
        %v8687 = vpop.f32.mrb[0].mxu0
        %v8688 = vadd.f32 %v8335, %v8687
        %v8689 = vpop.f32.mrb[0].mxu0
        %v8690 = vadd.f32 %v8337, %v8689
        %v8691 = vpop.f32.mrb[0].mxu0
        %v8692 = vadd.f32 %v8339, %v8691
        %v8693 = vpop.f32.mrb[0].mxu0
        %v8694 = vadd.f32 %v8341, %v8693
        %8695 = vmatprep.mubr.bf16.mxu0 %v6523
        %8696 = vmatmul.mubr.bf16.gmra.mrb[0].mxu0 %v6522
        %v8697 = vpop.f32.mrb[0].mxu0
        %v8698 = vadd.f32 %v8345, %v8697
        %v8699 = vpop.f32.mrb[0].mxu0
        %v8700 = vadd.f32 %v8347, %v8699
        %v8701 = vpop.f32.mrb[0].mxu0
        %v8702 = vadd.f32 %v8349, %v8701
        %v8703 = vpop.f32.mrb[0].mxu0
        %v8704 = vadd.f32 %v8351, %v8703
        %8705 = vmatprep.mubr.bf16.mxu0 %v6527
        %8706 = vmatmul.mubr.bf16.gmra.mrb[0].mxu0 %v6526
        %v8707 = vpop.f32.mrb[0].mxu0
        %v8708 = vadd.f32 %v8355, %v8707
        %v8709 = vpop.f32.mrb[0].mxu0
        %v8710 = vadd.f32 %v8357, %v8709
        %v8711 = vpop.f32.mrb[0].mxu0
        %v8712 = vadd.f32 %v8359, %v8711
        %v8713 = vpop.f32.mrb[0].mxu0
        %v8714 = vadd.f32 %v8361, %v8713
        %8715 = vmatprep.mubr.bf16.mxu0 %v6531
        %8716 = vmatmul.mubr.bf16.gmra.mrb[0].mxu0 %v6530
        %v8717 = vpop.f32.mrb[0].mxu0
        %v8718 = vadd.f32 %v8365, %v8717
        %v8719 = vpop.f32.mrb[0].mxu0
        %v8720 = vadd.f32 %v8367, %v8719
        %v8721 = vpop.f32.mrb[0].mxu0
        %v8722 = vadd.f32 %v8369, %v8721
        %v8723 = vpop.f32.mrb[0].mxu0
        %v8724 = vadd.f32 %v8371, %v8723
        %8725 = vmatprep.mubr.bf16.mxu0 %v6535
        %8726 = vmatmul.mubr.bf16.gmra.mrb[0].mxu0 %v6534
        %v8727 = vpop.f32.mrb[0].mxu0
        %v8728 = vadd.f32 %v8375, %v8727
        %v8729 = vpop.f32.mrb[0].mxu0
        %v8730 = vadd.f32 %v8377, %v8729
        %v8731 = vpop.f32.mrb[0].mxu0
        %v8732 = vadd.f32 %v8379, %v8731
        %v8733 = vpop.f32.mrb[0].mxu0
        %v8734 = vadd.f32 %v8381, %v8733
        %8735 = vmatprep.mubr.bf16.mxu0 %v6539
        %8736 = vmatmul.mubr.bf16.gmra.mrb[0].mxu0 %v6538
        %v8737 = vpop.f32.mrb[0].mxu0
        %v8738 = vadd.f32 %v8385, %v8737
        %v8739 = vpop.f32.mrb[0].mxu0
        %v8740 = vadd.f32 %v8387, %v8739
        %v8741 = vpop.f32.mrb[0].mxu0
        %v8742 = vadd.f32 %v8389, %v8741
        %v8743 = vpop.f32.mrb[0].mxu0
        %v8744 = vadd.f32 %v8391, %v8743
        %8745 = vmatprep.mubr.bf16.mxu0 %v6543
        %8746 = vmatmul.mubr.bf16.gmra.mrb[0].mxu0 %v6542
        %v8747 = vpop.f32.mrb[0].mxu0
        %v8748 = vadd.f32 %v8395, %v8747
        %v8749 = vpop.f32.mrb[0].mxu0
        %v8750 = vadd.f32 %v8397, %v8749
        %v8751 = vpop.f32.mrb[0].mxu0
        %v8752 = vadd.f32 %v8399, %v8751
        %v8753 = vpop.f32.mrb[0].mxu0
        %v8754 = vadd.f32 %v8401, %v8753
        %8755 = vmatprep.mubr.bf16.mxu0 %v6547
        %8756 = vmatmul.mubr.bf16.gmra.mrb[0].mxu0 %v6546
        %v8757 = vpop.f32.mrb[0].mxu0
        %v8758 = vadd.f32 %v8405, %v8757
        %v8759 = vpop.f32.mrb[0].mxu0
        %v8760 = vadd.f32 %v8407, %v8759
        %v8761 = vpop.f32.mrb[0].mxu0
        %v8762 = vadd.f32 %v8409, %v8761
        %v8763 = vpop.f32.mrb[0].mxu0
        %v8764 = vadd.f32 %v8411, %v8763
        %8765 = vmatprep.mubr.bf16.mxu0 %v6551
        %8766 = vmatmul.mubr.bf16.gmra.mrb[0].mxu0 %v6550
        %v8767 = vpop.f32.mrb[0].mxu0
        %v8768 = vadd.f32 %v8415, %v8767
        %v8769 = vpop.f32.mrb[0].mxu0
        %v8770 = vadd.f32 %v8417, %v8769
        %v8771 = vpop.f32.mrb[0].mxu0
        %v8772 = vadd.f32 %v8419, %v8771
        %v8773 = vpop.f32.mrb[0].mxu0
        %v8774 = vadd.f32 %v8421, %v8773
        %8775 = vmatprep.mubr.bf16.mxu0 %v6555
        %8776 = vmatmul.mubr.bf16.gmra.mrb[0].mxu0 %v6554
        %v8777 = vpop.f32.mrb[0].mxu0
        %v8778 = vadd.f32 %v8425, %v8777
        %v8779 = vpop.f32.mrb[0].mxu0
        %v8780 = vadd.f32 %v8427, %v8779
        %v8781 = vpop.f32.mrb[0].mxu0
        %v8782 = vadd.f32 %v8429, %v8781
        %v8783 = vpop.f32.mrb[0].mxu0
        %v8784 = vadd.f32 %v8431, %v8783
        %8785 = vmatprep.mubr.bf16.mxu0 %v6559
        %8786 = vmatmul.mubr.bf16.gmra.mrb[0].mxu0 %v6558
        %v8787 = vpop.f32.mrb[0].mxu0
        %v8788 = vadd.f32 %v8435, %v8787
        %v8789 = vpop.f32.mrb[0].mxu0
        %v8790 = vadd.f32 %v8437, %v8789
        %v8791 = vpop.f32.mrb[0].mxu0
        %v8792 = vadd.f32 %v8439, %v8791
        %v8793 = vpop.f32.mrb[0].mxu0
        %v8794 = vadd.f32 %v8441, %v8793
        %8795 = vmatprep.mubr.bf16.mxu0 %v6563
        %8796 = vmatmul.mubr.bf16.gmra.mrb[0].mxu0 %v6562
        %v8797 = vpop.f32.mrb[0].mxu0
        %v8798 = vadd.f32 %v8445, %v8797
        %v8799 = vpop.f32.mrb[0].mxu0
        %v8800 = vadd.f32 %v8447, %v8799
        %v8801 = vpop.f32.mrb[0].mxu0
        %v8802 = vadd.f32 %v8449, %v8801
        %v8803 = vpop.f32.mrb[0].mxu0
        %v8804 = vadd.f32 %v8451, %v8803
        %8805 = vmatprep.mubr.bf16.mxu0 %v6567
        %8806 = vmatmul.mubr.bf16.gmra.mrb[0].mxu0 %v6566
        %v8807 = vpop.f32.mrb[0].mxu0
        %v8808 = vadd.f32 %v8455, %v8807
        %v8809 = vpop.f32.mrb[0].mxu0
        %v8810 = vadd.f32 %v8457, %v8809
        %v8811 = vpop.f32.mrb[0].mxu0
        %v8812 = vadd.f32 %v8459, %v8811
        %v8813 = vpop.f32.mrb[0].mxu0
        %v8814 = vadd.f32 %v8461, %v8813
        %8815 = vmatprep.mubr.bf16.mxu0 %v6571
        %8816 = vmatmul.mubr.bf16.gmra.mrb[0].mxu0 %v6570
        %v8817 = vpop.f32.mrb[0].mxu0
        %v8818 = vadd.f32 %v8465, %v8817
        %v8819 = vpop.f32.mrb[0].mxu0
        %v8820 = vadd.f32 %v8467, %v8819
        %v8821 = vpop.f32.mrb[0].mxu0
        %v8822 = vadd.f32 %v8469, %v8821
        %v8823 = vpop.f32.mrb[0].mxu0
        %v8824 = vadd.f32 %v8471, %v8823
        %8825 = vmatprep.mubr.bf16.mxu0 %v6575
        %8826 = vmatmul.mubr.bf16.gmra.mrb[0].mxu0 %v6574
        %v8827 = vpop.f32.mrb[0].mxu0
        %v8828 = vadd.f32 %v8475, %v8827
        %v8829 = vpop.f32.mrb[0].mxu0
        %v8830 = vadd.f32 %v8477, %v8829
        %v8831 = vpop.f32.mrb[0].mxu0
        %v8832 = vadd.f32 %v8479, %v8831
        %v8833 = vpop.f32.mrb[0].mxu0
        %v8834 = vadd.f32 %v8481, %v8833
        %8835 = vmatprep.mubr.bf16.mxu0 %v6579
        %8836 = vmatmul.mubr.bf16.gmra.mrb[0].mxu0 %v6578
        %v8837 = vpop.f32.mrb[0].mxu0
        %v8838 = vadd.f32 %v8485, %v8837
        %v8839 = vpop.f32.mrb[0].mxu0
        %v8840 = vadd.f32 %v8487, %v8839
        %v8841 = vpop.f32.mrb[0].mxu0
        %v8842 = vadd.f32 %v8489, %v8841
        %v8843 = vpop.f32.mrb[0].mxu0
        %v8844 = vadd.f32 %v8491, %v8843
        %8845 = vmatprep.mubr.bf16.mxu0 %v6583
        %8846 = vmatmul.mubr.bf16.gmra.mrb[0].mxu0 %v6582
        %v8847 = vpop.f32.mrb[0].mxu0
        %v8848 = vadd.f32 %v8495, %v8847
        %v8849 = vpop.f32.mrb[0].mxu0
        %v8850 = vadd.f32 %v8497, %v8849
        %v8851 = vpop.f32.mrb[0].mxu0
        %v8852 = vadd.f32 %v8499, %v8851
        %v8853 = vpop.f32.mrb[0].mxu0
        %v8854 = vadd.f32 %v8501, %v8853
        %8855 = vmatprep.mubr.bf16.mxu0 %v6587
        %8856 = vmatmul.mubr.bf16.gmra.mrb[0].mxu0 %v6586
        %v8857 = vpop.f32.mrb[0].mxu0
        %v8858 = vadd.f32 %v8505, %v8857
        %v8859 = vpop.f32.mrb[0].mxu0
        %v8860 = vadd.f32 %v8507, %v8859
        %v8861 = vpop.f32.mrb[0].mxu0
        %v8862 = vadd.f32 %v8509, %v8861
        %v8863 = vpop.f32.mrb[0].mxu0
        %v8864 = vadd.f32 %v8511, %v8863
        %8865 = vmatprep.mubr.bf16.mxu0 %v6591
        %8866 = vmatmul.mubr.bf16.gmra.mrb[0].mxu0 %v6590
        %v8867 = vpop.f32.mrb[0].mxu0
        %v8868 = vadd.f32 %v8515, %v8867
        %v8869 = vpop.f32.mrb[0].mxu0
        %v8870 = vadd.f32 %v8517, %v8869
        %v8871 = vpop.f32.mrb[0].mxu0
        %v8872 = vadd.f32 %v8519, %v8871
        %v8873 = vpop.f32.mrb[0].mxu0
        %v8874 = vadd.f32 %v8521, %v8873
        %8875 = vmatprep.mubr.bf16.mxu0 %v6595
        %8876 = vmatmul.mubr.bf16.gmra.mrb[0].mxu0 %v6594
        %v8877 = vpop.f32.mrb[0].mxu0
        %v8878 = vadd.f32 %v8525, %v8877
        %v8879 = vpop.f32.mrb[0].mxu0
        %v8880 = vadd.f32 %v8527, %v8879
        %v8881 = vpop.f32.mrb[0].mxu0
        %v8882 = vadd.f32 %v8529, %v8881
        %v8883 = vpop.f32.mrb[0].mxu0
        %v8884 = vadd.f32 %v8531, %v8883
        %8885 = vmatprep.mubr.bf16.mxu0 %v6599
        %8886 = vmatmul.mubr.bf16.gmra.mrb[0].mxu0 %v6598
        %v8887 = vpop.f32.mrb[0].mxu0
        %v8888 = vadd.f32 %v8535, %v8887
        %v8889 = vpop.f32.mrb[0].mxu0
        %v8890 = vadd.f32 %v8537, %v8889
        %v8891 = vpop.f32.mrb[0].mxu0
        %v8892 = vadd.f32 %v8539, %v8891
        %v8893 = vpop.f32.mrb[0].mxu0
        %v8894 = vadd.f32 %v8541, %v8893
        %8895 = vmatprep.mubr.bf16.mxu0 %v6603
        %8896 = vmatmul.mubr.bf16.gmra.mrb[0].mxu0 %v6602
        %v8897 = vpop.f32.mrb[0].mxu0
        %v8898 = vadd.f32 %v8545, %v8897
        %v8899 = vpop.f32.mrb[0].mxu0
        %v8900 = vadd.f32 %v8547, %v8899
        %v8901 = vpop.f32.mrb[0].mxu0
        %v8902 = vadd.f32 %v8549, %v8901
        %v8903 = vpop.f32.mrb[0].mxu0
        %v8904 = vadd.f32 %v8551, %v8903
        %8905 = vmatprep.mubr.bf16.mxu0 %v6607
        %8906 = vmatmul.mubr.bf16.gmra.mrb[0].mxu0 %v6606
        %v8907 = vpop.f32.mrb[0].mxu0
        %v8908 = vadd.f32 %v8555, %v8907
        %v8909 = vpop.f32.mrb[0].mxu0
        %v8910 = vadd.f32 %v8557, %v8909
        %v8911 = vpop.f32.mrb[0].mxu0
        %v8912 = vadd.f32 %v8559, %v8911
        %v8913 = vpop.f32.mrb[0].mxu0
        %v8914 = vadd.f32 %v8561, %v8913
        %8915 = vmatprep.mubr.bf16.mxu0 %v6611
        %8916 = vmatmul.mubr.bf16.gmra.mrb[0].mxu0 %v6610
        %v8917 = vpop.f32.mrb[0].mxu0
        %v8918 = vadd.f32 %v8565, %v8917
        %v8919 = vpop.f32.mrb[0].mxu0
        %v8920 = vadd.f32 %v8567, %v8919
        %v8921 = vpop.f32.mrb[0].mxu0
        %v8922 = vadd.f32 %v8569, %v8921
        %v8923 = vpop.f32.mrb[0].mxu0
        %v8924 = vadd.f32 %v8571, %v8923
        %8925 = vmatprep.mubr.bf16.mxu0 %v6615
        %8926 = vmatmul.mubr.bf16.gmra.mrb[0].mxu0 %v6614
        %v8927 = vpop.f32.mrb[0].mxu0
        %v8928 = vadd.f32 %v8575, %v8927
        %v8929 = vpop.f32.mrb[0].mxu0
        %v8930 = vadd.f32 %v8577, %v8929
        %v8931 = vpop.f32.mrb[0].mxu0
        %v8932 = vadd.f32 %v8579, %v8931
        %v8933 = vpop.f32.mrb[0].mxu0
        %v8934 = vadd.f32 %v8581, %v8933
        %8935 = vmatprep.mubr.bf16.mxu0 %v6619
        %8936 = vmatmul.mubr.bf16.gmra.mrb[0].mxu0 %v6618
        %v8937 = vpop.f32.mrb[0].mxu0
        %v8938 = vadd.f32 %v8585, %v8937
        %v8939 = vpop.f32.mrb[0].mxu0
        %v8940 = vadd.f32 %v8587, %v8939
        %v8941 = vpop.f32.mrb[0].mxu0
        %v8942 = vadd.f32 %v8589, %v8941
        %v8943 = vpop.f32.mrb[0].mxu0
        %v8944 = vadd.f32 %v8591, %v8943
        %8945 = vmatprep.mubr.bf16.mxu0 %v6623
        %8946 = vmatmul.mubr.bf16.gmra.mrb[0].mxu0 %v6622
        %v8947 = vpop.f32.mrb[0].mxu0
        %v8948 = vadd.f32 %v8595, %v8947
        %v8949 = vpop.f32.mrb[0].mxu0
        %v8950 = vadd.f32 %v8597, %v8949
        %v8951 = vpop.f32.mrb[0].mxu0
        %v8952 = vadd.f32 %v8599, %v8951
        %v8953 = vpop.f32.mrb[0].mxu0
        %v8954 = vadd.f32 %v8601, %v8953
        %8955 = vdwg.mxu0
        %v8956 = vxor.u32 %v8638, 2147483648
        %v8957 = vxor.u32 %v8640, 2147483648
        %v8958 = vxor.u32 %v8642, 2147483648
        %v8959 = vxor.u32 %v8644, 2147483648
        %v8960 = vxor.u32 %v8648, 2147483648
        %v8961 = vxor.u32 %v8650, 2147483648
        %v8962 = vxor.u32 %v8652, 2147483648
        %v8963 = vxor.u32 %v8654, 2147483648
        %v8964 = vxor.u32 %v8658, 2147483648
        %v8965 = vxor.u32 %v8660, 2147483648
        %v8966 = vxor.u32 %v8662, 2147483648
        %v8967 = vxor.u32 %v8664, 2147483648
        %v8968 = vxor.u32 %v8668, 2147483648
        %v8969 = vxor.u32 %v8670, 2147483648
        %v8970 = vxor.u32 %v8672, 2147483648
        %v8971 = vxor.u32 %v8674, 2147483648
        %v8972 = vxor.u32 %v8678, 2147483648
        %v8973 = vxor.u32 %v8680, 2147483648
        %v8974 = vxor.u32 %v8682, 2147483648
        %v8975 = vxor.u32 %v8684, 2147483648
        %v8976 = vxor.u32 %v8688, 2147483648
        %v8977 = vxor.u32 %v8690, 2147483648
        %v8978 = vxor.u32 %v8692, 2147483648
        %v8979 = vxor.u32 %v8694, 2147483648
        %v8980 = vxor.u32 %v8698, 2147483648
        %v8981 = vxor.u32 %v8700, 2147483648
        %v8982 = vxor.u32 %v8702, 2147483648
        %v8983 = vxor.u32 %v8704, 2147483648
        %v8984 = vxor.u32 %v8708, 2147483648
        %v8985 = vxor.u32 %v8710, 2147483648
        %v8986 = vxor.u32 %v8712, 2147483648
        %v8987 = vxor.u32 %v8714, 2147483648
        %v8988 = vxor.u32 %v8718, 2147483648
        %v8989 = vxor.u32 %v8720, 2147483648
        %v8990 = vxor.u32 %v8722, 2147483648
        %v8991 = vxor.u32 %v8724, 2147483648
        %v8992 = vxor.u32 %v8728, 2147483648
        %v8993 = vxor.u32 %v8730, 2147483648
        %v8994 = vxor.u32 %v8732, 2147483648
        %v8995 = vxor.u32 %v8734, 2147483648
        %v8996 = vxor.u32 %v8738, 2147483648
        %v8997 = vxor.u32 %v8740, 2147483648
        %v8998 = vxor.u32 %v8742, 2147483648
        %v8999 = vxor.u32 %v8744, 2147483648
        %v9000 = vxor.u32 %v8748, 2147483648
        %v9001 = vxor.u32 %v8750, 2147483648
        %v9002 = vxor.u32 %v8752, 2147483648
        %v9003 = vxor.u32 %v8754, 2147483648
        %v9004 = vxor.u32 %v8758, 2147483648
        %v9005 = vxor.u32 %v8760, 2147483648
        %v9006 = vxor.u32 %v8762, 2147483648
        %v9007 = vxor.u32 %v8764, 2147483648
        %v9008 = vxor.u32 %v8768, 2147483648
        %v9009 = vxor.u32 %v8770, 2147483648
        %v9010 = vxor.u32 %v8772, 2147483648
        %v9011 = vxor.u32 %v8774, 2147483648
        %v9012 = vxor.u32 %v8778, 2147483648
        %v9013 = vxor.u32 %v8780, 2147483648
        %v9014 = vxor.u32 %v8782, 2147483648
        %v9015 = vxor.u32 %v8784, 2147483648
        %v9016 = vxor.u32 %v8788, 2147483648
        %v9017 = vxor.u32 %v8790, 2147483648
        %v9018 = vxor.u32 %v8792, 2147483648
        %v9019 = vxor.u32 %v8794, 2147483648
        %v9020 = vxor.u32 %v8798, 2147483648
        %v9021 = vxor.u32 %v8800, 2147483648
        %v9022 = vxor.u32 %v8802, 2147483648
        %v9023 = vxor.u32 %v8804, 2147483648
        %v9024 = vxor.u32 %v8808, 2147483648
        %v9025 = vxor.u32 %v8810, 2147483648
        %v9026 = vxor.u32 %v8812, 2147483648
        %v9027 = vxor.u32 %v8814, 2147483648
        %v9028 = vxor.u32 %v8818, 2147483648
        %v9029 = vxor.u32 %v8820, 2147483648
        %v9030 = vxor.u32 %v8822, 2147483648
        %v9031 = vxor.u32 %v8824, 2147483648
        %v9032 = vxor.u32 %v8828, 2147483648
        %v9033 = vxor.u32 %v8830, 2147483648
        %v9034 = vxor.u32 %v8832, 2147483648
        %v9035 = vxor.u32 %v8834, 2147483648
        %v9036 = vxor.u32 %v8838, 2147483648
        %v9037 = vxor.u32 %v8840, 2147483648
        %v9038 = vxor.u32 %v8842, 2147483648
        %v9039 = vxor.u32 %v8844, 2147483648
        %v9040 = vxor.u32 %v8848, 2147483648
        %v9041 = vxor.u32 %v8850, 2147483648
        %v9042 = vxor.u32 %v8852, 2147483648
        %v9043 = vxor.u32 %v8854, 2147483648
        %v9044 = vxor.u32 %v8858, 2147483648
        %v9045 = vxor.u32 %v8860, 2147483648
        %v9046 = vxor.u32 %v8862, 2147483648
        %v9047 = vxor.u32 %v8864, 2147483648
        %v9048 = vxor.u32 %v8868, 2147483648
        %v9049 = vxor.u32 %v8870, 2147483648
        %v9050 = vxor.u32 %v8872, 2147483648
        %v9051 = vxor.u32 %v8874, 2147483648
        %v9052 = vxor.u32 %v8878, 2147483648
        %v9053 = vxor.u32 %v8880, 2147483648
        %v9054 = vxor.u32 %v8882, 2147483648
        %v9055 = vxor.u32 %v8884, 2147483648
        %v9056 = vxor.u32 %v8888, 2147483648
        %v9057 = vxor.u32 %v8890, 2147483648
        %v9058 = vxor.u32 %v8892, 2147483648
        %v9059 = vxor.u32 %v8894, 2147483648
        %v9060 = vxor.u32 %v8898, 2147483648
        %v9061 = vxor.u32 %v8900, 2147483648
        %v9062 = vxor.u32 %v8902, 2147483648
        %v9063 = vxor.u32 %v8904, 2147483648
        %v9064 = vxor.u32 %v8908, 2147483648
        %v9065 = vxor.u32 %v8910, 2147483648
        %v9066 = vxor.u32 %v8912, 2147483648
        %v9067 = vxor.u32 %v8914, 2147483648
        %v9068 = vxor.u32 %v8918, 2147483648
        %v9069 = vxor.u32 %v8920, 2147483648
        %v9070 = vxor.u32 %v8922, 2147483648
        %v9071 = vxor.u32 %v8924, 2147483648
        %v9072 = vxor.u32 %v8928, 2147483648
        %v9073 = vxor.u32 %v8930, 2147483648
        %v9074 = vxor.u32 %v8932, 2147483648
        %v9075 = vxor.u32 %v8934, 2147483648
        %v9076 = vxor.u32 %v8938, 2147483648
        %v9077 = vxor.u32 %v8940, 2147483648
        %v9078 = vxor.u32 %v8942, 2147483648
        %v9079 = vxor.u32 %v8944, 2147483648
        %v9080 = vxor.u32 %v8948, 2147483648
        %v9081 = vxor.u32 %v8950, 2147483648
        %v9082 = vxor.u32 %v8952, 2147483648
        %v9083 = vxor.u32 %v8954, 2147483648
        %v9084 = vmul.f32 %v8956, 1.442695
        %v9085 = vpow.pop %v9084
        %v9086 = vmul.f32 %v8957, 1.442695
        %v9087 = vpow.pop %v9086
        %v9088 = vmul.f32 %v8958, 1.442695
        %v9089 = vpow.pop %v9088
        %v9090 = vmul.f32 %v8959, 1.442695
        %v9091 = vpow.pop %v9090
        %v9092 = vmul.f32 %v8960, 1.442695
        %v9093 = vpow.pop %v9092
        %v9094 = vmul.f32 %v8961, 1.442695
        %v9095 = vpow.pop %v9094
        %v9096 = vmul.f32 %v8962, 1.442695
        %v9097 = vpow.pop %v9096
        %v9098 = vmul.f32 %v8963, 1.442695
        %v9099 = vpow.pop %v9098
        %v9100 = vmul.f32 %v8964, 1.442695
        %v9101 = vpow.pop %v9100
        %v9102 = vmul.f32 %v8965, 1.442695
        %v9103 = vpow.pop %v9102
        %v9104 = vmul.f32 %v8966, 1.442695
        %v9105 = vpow.pop %v9104
        %v9106 = vmul.f32 %v8967, 1.442695
        %v9107 = vpow.pop %v9106
        %v9108 = vmul.f32 %v8968, 1.442695
        %v9109 = vpow.pop %v9108
        %v9110 = vmul.f32 %v8969, 1.442695
        %v9111 = vpow.pop %v9110
        %v9112 = vmul.f32 %v8970, 1.442695
        %v9113 = vpow.pop %v9112
        %v9114 = vmul.f32 %v8971, 1.442695
        %v9115 = vpow.pop %v9114
        %v9116 = vmul.f32 %v8972, 1.442695
        %v9117 = vpow.pop %v9116
        %v9118 = vmul.f32 %v8973, 1.442695
        %v9119 = vpow.pop %v9118
        %v9120 = vmul.f32 %v8974, 1.442695
        %v9121 = vpow.pop %v9120
        %v9122 = vmul.f32 %v8975, 1.442695
        %v9123 = vpow.pop %v9122
        %v9124 = vmul.f32 %v8976, 1.442695
        %v9125 = vpow.pop %v9124
        %v9126 = vmul.f32 %v8977, 1.442695
        %v9127 = vpow.pop %v9126
        %v9128 = vmul.f32 %v8978, 1.442695
        %v9129 = vpow.pop %v9128
        %v9130 = vmul.f32 %v8979, 1.442695
        %v9131 = vpow.pop %v9130
        %v9132 = vmul.f32 %v8980, 1.442695
        %v9133 = vpow.pop %v9132
        %v9134 = vmul.f32 %v8981, 1.442695
        %v9135 = vpow.pop %v9134
        %v9136 = vmul.f32 %v8982, 1.442695
        %v9137 = vpow.pop %v9136
        %v9138 = vmul.f32 %v8983, 1.442695
        %v9139 = vpow.pop %v9138
        %v9140 = vmul.f32 %v8984, 1.442695
        %v9141 = vpow.pop %v9140
        %v9142 = vmul.f32 %v8985, 1.442695
        %v9143 = vpow.pop %v9142
        %v9144 = vmul.f32 %v8986, 1.442695
        %v9145 = vpow.pop %v9144
        %v9146 = vmul.f32 %v8987, 1.442695
        %v9147 = vpow.pop %v9146
        %v9148 = vmul.f32 %v8988, 1.442695
        %v9149 = vpow.pop %v9148
        %v9150 = vmul.f32 %v8989, 1.442695
        %v9151 = vpow.pop %v9150
        %v9152 = vmul.f32 %v8990, 1.442695
        %v9153 = vpow.pop %v9152
        %v9154 = vmul.f32 %v8991, 1.442695
        %v9155 = vpow.pop %v9154
        %v9156 = vmul.f32 %v8992, 1.442695
        %v9157 = vpow.pop %v9156
        %v9158 = vmul.f32 %v8993, 1.442695
        %v9159 = vpow.pop %v9158
        %v9160 = vmul.f32 %v8994, 1.442695
        %v9161 = vpow.pop %v9160
        %v9162 = vmul.f32 %v8995, 1.442695
        %v9163 = vpow.pop %v9162
        %v9164 = vmul.f32 %v8996, 1.442695
        %v9165 = vpow.pop %v9164
        %v9166 = vmul.f32 %v8997, 1.442695
        %v9167 = vpow.pop %v9166
        %v9168 = vmul.f32 %v8998, 1.442695
        %v9169 = vpow.pop %v9168
        %v9170 = vmul.f32 %v8999, 1.442695
        %v9171 = vpow.pop %v9170
        %v9172 = vmul.f32 %v9000, 1.442695
        %v9173 = vpow.pop %v9172
        %v9174 = vmul.f32 %v9001, 1.442695
        %v9175 = vpow.pop %v9174
        %v9176 = vmul.f32 %v9002, 1.442695
        %v9177 = vpow.pop %v9176
        %v9178 = vmul.f32 %v9003, 1.442695
        %v9179 = vpow.pop %v9178
        %v9180 = vmul.f32 %v9004, 1.442695
        %v9181 = vpow.pop %v9180
        %v9182 = vmul.f32 %v9005, 1.442695
        %v9183 = vpow.pop %v9182
        %v9184 = vmul.f32 %v9006, 1.442695
        %v9185 = vpow.pop %v9184
        %v9186 = vmul.f32 %v9007, 1.442695
        %v9187 = vpow.pop %v9186
        %v9188 = vmul.f32 %v9008, 1.442695
        %v9189 = vpow.pop %v9188
        %v9190 = vmul.f32 %v9009, 1.442695
        %v9191 = vpow.pop %v9190
        %v9192 = vmul.f32 %v9010, 1.442695
        %v9193 = vpow.pop %v9192
        %v9194 = vmul.f32 %v9011, 1.442695
        %v9195 = vpow.pop %v9194
        %v9196 = vmul.f32 %v9012, 1.442695
        %v9197 = vpow.pop %v9196
        %v9198 = vmul.f32 %v9013, 1.442695
        %v9199 = vpow.pop %v9198
        %v9200 = vmul.f32 %v9014, 1.442695
        %v9201 = vpow.pop %v9200
        %v9202 = vmul.f32 %v9015, 1.442695
        %v9203 = vpow.pop %v9202
        %v9204 = vmul.f32 %v9016, 1.442695
        %v9205 = vpow.pop %v9204
        %v9206 = vmul.f32 %v9017, 1.442695
        %v9207 = vpow.pop %v9206
        %v9208 = vmul.f32 %v9018, 1.442695
        %v9209 = vpow.pop %v9208
        %v9210 = vmul.f32 %v9019, 1.442695
        %v9211 = vpow.pop %v9210
        %v9212 = vmul.f32 %v9020, 1.442695
        %v9213 = vpow.pop %v9212
        %v9214 = vmul.f32 %v9021, 1.442695
        %v9215 = vpow.pop %v9214
        %v9216 = vmul.f32 %v9022, 1.442695
        %v9217 = vpow.pop %v9216
        %v9218 = vmul.f32 %v9023, 1.442695
        %v9219 = vpow.pop %v9218
        %v9220 = vmul.f32 %v9024, 1.442695
        %v9221 = vpow.pop %v9220
        %v9222 = vmul.f32 %v9025, 1.442695
        %v9223 = vpow.pop %v9222
        %v9224 = vmul.f32 %v9026, 1.442695
        %v9225 = vpow.pop %v9224
        %v9226 = vmul.f32 %v9027, 1.442695
        %v9227 = vpow.pop %v9226
        %v9228 = vmul.f32 %v9028, 1.442695
        %v9229 = vpow.pop %v9228
        %v9230 = vmul.f32 %v9029, 1.442695
        %v9231 = vpow.pop %v9230
        %v9232 = vmul.f32 %v9030, 1.442695
        %v9233 = vpow.pop %v9232
        %v9234 = vmul.f32 %v9031, 1.442695
        %v9235 = vpow.pop %v9234
        %v9236 = vmul.f32 %v9032, 1.442695
        %v9237 = vpow.pop %v9236
        %v9238 = vmul.f32 %v9033, 1.442695
        %v9239 = vpow.pop %v9238
        %v9240 = vmul.f32 %v9034, 1.442695
        %v9241 = vpow.pop %v9240
        %v9242 = vmul.f32 %v9035, 1.442695
        %v9243 = vpow.pop %v9242
        %v9244 = vmul.f32 %v9036, 1.442695
        %v9245 = vpow.pop %v9244
        %v9246 = vmul.f32 %v9037, 1.442695
        %v9247 = vpow.pop %v9246
        %v9248 = vmul.f32 %v9038, 1.442695
        %v9249 = vpow.pop %v9248
        %v9250 = vmul.f32 %v9039, 1.442695
        %v9251 = vpow.pop %v9250
        %v9252 = vmul.f32 %v9040, 1.442695
        %v9253 = vpow.pop %v9252
        %v9254 = vmul.f32 %v9041, 1.442695
        %v9255 = vpow.pop %v9254
        %v9256 = vmul.f32 %v9042, 1.442695
        %v9257 = vpow.pop %v9256
        %v9258 = vmul.f32 %v9043, 1.442695
        %v9259 = vpow.pop %v9258
        %v9260 = vmul.f32 %v9044, 1.442695
        %v9261 = vpow.pop %v9260
        %v9262 = vmul.f32 %v9045, 1.442695
        %v9263 = vpow.pop %v9262
        %v9264 = vmul.f32 %v9046, 1.442695
        %v9265 = vpow.pop %v9264
        %v9266 = vmul.f32 %v9047, 1.442695
        %v9267 = vpow.pop %v9266
        %v9268 = vmul.f32 %v9048, 1.442695
        %v9269 = vpow.pop %v9268
        %v9270 = vmul.f32 %v9049, 1.442695
        %v9271 = vpow.pop %v9270
        %v9272 = vmul.f32 %v9050, 1.442695
        %v9273 = vpow.pop %v9272
        %v9274 = vmul.f32 %v9051, 1.442695
        %v9275 = vpow.pop %v9274
        %v9276 = vmul.f32 %v9052, 1.442695
        %v9277 = vpow.pop %v9276
        %v9278 = vmul.f32 %v9053, 1.442695
        %v9279 = vpow.pop %v9278
        %v9280 = vmul.f32 %v9054, 1.442695
        %v9281 = vpow.pop %v9280
        %v9282 = vmul.f32 %v9055, 1.442695
        %v9283 = vpow.pop %v9282
        %v9284 = vmul.f32 %v9056, 1.442695
        %v9285 = vpow.pop %v9284
        %v9286 = vmul.f32 %v9057, 1.442695
        %v9287 = vpow.pop %v9286
        %v9288 = vmul.f32 %v9058, 1.442695
        %v9289 = vpow.pop %v9288
        %v9290 = vmul.f32 %v9059, 1.442695
        %v9291 = vpow.pop %v9290
        %v9292 = vmul.f32 %v9060, 1.442695
        %v9293 = vpow.pop %v9292
        %v9294 = vmul.f32 %v9061, 1.442695
        %v9295 = vpow.pop %v9294
        %v9296 = vmul.f32 %v9062, 1.442695
        %v9297 = vpow.pop %v9296
        %v9298 = vmul.f32 %v9063, 1.442695
        %v9299 = vpow.pop %v9298
        %v9300 = vmul.f32 %v9064, 1.442695
        %v9301 = vpow.pop %v9300
        %v9302 = vmul.f32 %v9065, 1.442695
        %v9303 = vpow.pop %v9302
        %v9304 = vmul.f32 %v9066, 1.442695
        %v9305 = vpow.pop %v9304
        %v9306 = vmul.f32 %v9067, 1.442695
        %v9307 = vpow.pop %v9306
        %v9308 = vmul.f32 %v9068, 1.442695
        %v9309 = vpow.pop %v9308
        %v9310 = vmul.f32 %v9069, 1.442695
        %v9311 = vpow.pop %v9310
        %v9312 = vmul.f32 %v9070, 1.442695
        %v9313 = vpow.pop %v9312
        %v9314 = vmul.f32 %v9071, 1.442695
        %v9315 = vpow.pop %v9314
        %v9316 = vmul.f32 %v9072, 1.442695
        %v9317 = vpow.pop %v9316
        %v9318 = vmul.f32 %v9073, 1.442695
        %v9319 = vpow.pop %v9318
        %v9320 = vmul.f32 %v9074, 1.442695
        %v9321 = vpow.pop %v9320
        %v9322 = vmul.f32 %v9075, 1.442695
        %v9323 = vpow.pop %v9322
        %v9324 = vmul.f32 %v9076, 1.442695
        %v9325 = vpow.pop %v9324
        %v9326 = vmul.f32 %v9077, 1.442695
        %v9327 = vpow.pop %v9326
        %v9328 = vmul.f32 %v9078, 1.442695
        %v9329 = vpow.pop %v9328
        %v9330 = vmul.f32 %v9079, 1.442695
        %v9331 = vpow.pop %v9330
        %v9332 = vmul.f32 %v9080, 1.442695
        %v9333 = vpow.pop %v9332
        %v9334 = vmul.f32 %v9081, 1.442695
        %v9335 = vpow.pop %v9334
        %v9336 = vmul.f32 %v9082, 1.442695
        %v9337 = vpow.pop %v9336
        %v9338 = vmul.f32 %v9083, 1.442695
        %v9339 = vpow.pop %v9338
        %v9340 = vadd.f32 %v9085, 1.0
        %v9341 = vadd.f32 %v9087, 1.0
        %v9342 = vadd.f32 %v9089, 1.0
        %v9343 = vadd.f32 %v9091, 1.0
        %v9344 = vadd.f32 %v9093, 1.0
        %v9345 = vadd.f32 %v9095, 1.0
        %v9346 = vadd.f32 %v9097, 1.0
        %v9347 = vadd.f32 %v9099, 1.0
        %v9348 = vadd.f32 %v9101, 1.0
        %v9349 = vadd.f32 %v9103, 1.0
        %v9350 = vadd.f32 %v9105, 1.0
        %v9351 = vadd.f32 %v9107, 1.0
        %v9352 = vadd.f32 %v9109, 1.0
        %v9353 = vadd.f32 %v9111, 1.0
        %v9354 = vadd.f32 %v9113, 1.0
        %v9355 = vadd.f32 %v9115, 1.0
        %v9356 = vadd.f32 %v9117, 1.0
        %v9357 = vadd.f32 %v9119, 1.0
        %v9358 = vadd.f32 %v9121, 1.0
        %v9359 = vadd.f32 %v9123, 1.0
        %v9360 = vadd.f32 %v9125, 1.0
        %v9361 = vadd.f32 %v9127, 1.0
        %v9362 = vadd.f32 %v9129, 1.0
        %v9363 = vadd.f32 %v9131, 1.0
        %v9364 = vadd.f32 %v9133, 1.0
        %v9365 = vadd.f32 %v9135, 1.0
        %v9366 = vadd.f32 %v9137, 1.0
        %v9367 = vadd.f32 %v9139, 1.0
        %v9368 = vadd.f32 %v9141, 1.0
        %v9369 = vadd.f32 %v9143, 1.0
        %v9370 = vadd.f32 %v9145, 1.0
        %v9371 = vadd.f32 %v9147, 1.0
        %v9372 = vadd.f32 %v9149, 1.0
        %v9373 = vadd.f32 %v9151, 1.0
        %v9374 = vadd.f32 %v9153, 1.0
        %v9375 = vadd.f32 %v9155, 1.0
        %v9376 = vadd.f32 %v9157, 1.0
        %v9377 = vadd.f32 %v9159, 1.0
        %v9378 = vadd.f32 %v9161, 1.0
        %v9379 = vadd.f32 %v9163, 1.0
        %v9380 = vadd.f32 %v9165, 1.0
        %v9381 = vadd.f32 %v9167, 1.0
        %v9382 = vadd.f32 %v9169, 1.0
        %v9383 = vadd.f32 %v9171, 1.0
        %v9384 = vadd.f32 %v9173, 1.0
        %v9385 = vadd.f32 %v9175, 1.0
        %v9386 = vadd.f32 %v9177, 1.0
        %v9387 = vadd.f32 %v9179, 1.0
        %v9388 = vadd.f32 %v9181, 1.0
        %v9389 = vadd.f32 %v9183, 1.0
        %v9390 = vadd.f32 %v9185, 1.0
        %v9391 = vadd.f32 %v9187, 1.0
        %v9392 = vadd.f32 %v9189, 1.0
        %v9393 = vadd.f32 %v9191, 1.0
        %v9394 = vadd.f32 %v9193, 1.0
        %v9395 = vadd.f32 %v9195, 1.0
        %v9396 = vadd.f32 %v9197, 1.0
        %v9397 = vadd.f32 %v9199, 1.0
        %v9398 = vadd.f32 %v9201, 1.0
        %v9399 = vadd.f32 %v9203, 1.0
        %v9400 = vadd.f32 %v9205, 1.0
        %v9401 = vadd.f32 %v9207, 1.0
        %v9402 = vadd.f32 %v9209, 1.0
        %v9403 = vadd.f32 %v9211, 1.0
        %v9404 = vadd.f32 %v9213, 1.0
        %v9405 = vadd.f32 %v9215, 1.0
        %v9406 = vadd.f32 %v9217, 1.0
        %v9407 = vadd.f32 %v9219, 1.0
        %v9408 = vadd.f32 %v9221, 1.0
        %v9409 = vadd.f32 %v9223, 1.0
        %v9410 = vadd.f32 %v9225, 1.0
        %v9411 = vadd.f32 %v9227, 1.0
        %v9412 = vadd.f32 %v9229, 1.0
        %v9413 = vadd.f32 %v9231, 1.0
        %v9414 = vadd.f32 %v9233, 1.0
        %v9415 = vadd.f32 %v9235, 1.0
        %v9416 = vadd.f32 %v9237, 1.0
        %v9417 = vadd.f32 %v9239, 1.0
        %v9418 = vadd.f32 %v9241, 1.0
        %v9419 = vadd.f32 %v9243, 1.0
        %v9420 = vadd.f32 %v9245, 1.0
        %v9421 = vadd.f32 %v9247, 1.0
        %v9422 = vadd.f32 %v9249, 1.0
        %v9423 = vadd.f32 %v9251, 1.0
        %v9424 = vadd.f32 %v9253, 1.0
        %v9425 = vadd.f32 %v9255, 1.0
        %v9426 = vadd.f32 %v9257, 1.0
        %v9427 = vadd.f32 %v9259, 1.0
        %v9428 = vadd.f32 %v9261, 1.0
        %v9429 = vadd.f32 %v9263, 1.0
        %v9430 = vadd.f32 %v9265, 1.0
        %v9431 = vadd.f32 %v9267, 1.0
        %v9432 = vadd.f32 %v9269, 1.0
        %v9433 = vadd.f32 %v9271, 1.0
        %v9434 = vadd.f32 %v9273, 1.0
        %v9435 = vadd.f32 %v9275, 1.0
        %v9436 = vadd.f32 %v9277, 1.0
        %v9437 = vadd.f32 %v9279, 1.0
        %v9438 = vadd.f32 %v9281, 1.0
        %v9439 = vadd.f32 %v9283, 1.0
        %v9440 = vadd.f32 %v9285, 1.0
        %v9441 = vadd.f32 %v9287, 1.0
        %v9442 = vadd.f32 %v9289, 1.0
        %v9443 = vadd.f32 %v9291, 1.0
        %v9444 = vadd.f32 %v9293, 1.0
        %v9445 = vadd.f32 %v9295, 1.0
        %v9446 = vadd.f32 %v9297, 1.0
        %v9447 = vadd.f32 %v9299, 1.0
        %v9448 = vadd.f32 %v9301, 1.0
        %v9449 = vadd.f32 %v9303, 1.0
        %v9450 = vadd.f32 %v9305, 1.0
        %v9451 = vadd.f32 %v9307, 1.0
        %v9452 = vadd.f32 %v9309, 1.0
        %v9453 = vadd.f32 %v9311, 1.0
        %v9454 = vadd.f32 %v9313, 1.0
        %v9455 = vadd.f32 %v9315, 1.0
        %v9456 = vadd.f32 %v9317, 1.0
        %v9457 = vadd.f32 %v9319, 1.0
        %v9458 = vadd.f32 %v9321, 1.0
        %v9459 = vadd.f32 %v9323, 1.0
        %v9460 = vadd.f32 %v9325, 1.0
        %v9461 = vadd.f32 %v9327, 1.0
        %v9462 = vadd.f32 %v9329, 1.0
        %v9463 = vadd.f32 %v9331, 1.0
        %v9464 = vadd.f32 %v9333, 1.0
        %v9465 = vadd.f32 %v9335, 1.0
        %v9466 = vadd.f32 %v9337, 1.0
        %v9467 = vadd.f32 %v9339, 1.0
        %v9468 = vrcp.pop %v9340
        %v9469 = vmul.f32 1.0, %v9468
        %v9470 = vrcp.pop %v9341
        %v9471 = vmul.f32 1.0, %v9470
        %v9472 = vrcp.pop %v9342
        %v9473 = vmul.f32 1.0, %v9472
        %v9474 = vrcp.pop %v9343
        %v9475 = vmul.f32 1.0, %v9474
        %v9476 = vrcp.pop %v9344
        %v9477 = vmul.f32 1.0, %v9476
        %v9478 = vrcp.pop %v9345
        %v9479 = vmul.f32 1.0, %v9478
        %v9480 = vrcp.pop %v9346
        %v9481 = vmul.f32 1.0, %v9480
        %v9482 = vrcp.pop %v9347
        %v9483 = vmul.f32 1.0, %v9482
        %v9484 = vrcp.pop %v9348
        %v9485 = vmul.f32 1.0, %v9484
        %v9486 = vrcp.pop %v9349
        %v9487 = vmul.f32 1.0, %v9486
        %v9488 = vrcp.pop %v9350
        %v9489 = vmul.f32 1.0, %v9488
        %v9490 = vrcp.pop %v9351
        %v9491 = vmul.f32 1.0, %v9490
        %v9492 = vrcp.pop %v9352
        %v9493 = vmul.f32 1.0, %v9492
        %v9494 = vrcp.pop %v9353
        %v9495 = vmul.f32 1.0, %v9494
        %v9496 = vrcp.pop %v9354
        %v9497 = vmul.f32 1.0, %v9496
        %v9498 = vrcp.pop %v9355
        %v9499 = vmul.f32 1.0, %v9498
        %v9500 = vrcp.pop %v9356
        %v9501 = vmul.f32 1.0, %v9500
        %v9502 = vrcp.pop %v9357
        %v9503 = vmul.f32 1.0, %v9502
        %v9504 = vrcp.pop %v9358
        %v9505 = vmul.f32 1.0, %v9504
        %v9506 = vrcp.pop %v9359
        %v9507 = vmul.f32 1.0, %v9506
        %v9508 = vrcp.pop %v9360
        %v9509 = vmul.f32 1.0, %v9508
        %v9510 = vrcp.pop %v9361
        %v9511 = vmul.f32 1.0, %v9510
        %v9512 = vrcp.pop %v9362
        %v9513 = vmul.f32 1.0, %v9512
        %v9514 = vrcp.pop %v9363
        %v9515 = vmul.f32 1.0, %v9514
        %v9516 = vrcp.pop %v9364
        %v9517 = vmul.f32 1.0, %v9516
        %v9518 = vrcp.pop %v9365
        %v9519 = vmul.f32 1.0, %v9518
        %v9520 = vrcp.pop %v9366
        %v9521 = vmul.f32 1.0, %v9520
        %v9522 = vrcp.pop %v9367
        %v9523 = vmul.f32 1.0, %v9522
        %v9524 = vrcp.pop %v9368
        %v9525 = vmul.f32 1.0, %v9524
        %v9526 = vrcp.pop %v9369
        %v9527 = vmul.f32 1.0, %v9526
        %v9528 = vrcp.pop %v9370
        %v9529 = vmul.f32 1.0, %v9528
        %v9530 = vrcp.pop %v9371
        %v9531 = vmul.f32 1.0, %v9530
        %v9532 = vrcp.pop %v9372
        %v9533 = vmul.f32 1.0, %v9532
        %v9534 = vrcp.pop %v9373
        %v9535 = vmul.f32 1.0, %v9534
        %v9536 = vrcp.pop %v9374
        %v9537 = vmul.f32 1.0, %v9536
        %v9538 = vrcp.pop %v9375
        %v9539 = vmul.f32 1.0, %v9538
        %v9540 = vrcp.pop %v9376
        %v9541 = vmul.f32 1.0, %v9540
        %v9542 = vrcp.pop %v9377
        %v9543 = vmul.f32 1.0, %v9542
        %v9544 = vrcp.pop %v9378
        %v9545 = vmul.f32 1.0, %v9544
        %v9546 = vrcp.pop %v9379
        %v9547 = vmul.f32 1.0, %v9546
        %v9548 = vrcp.pop %v9380
        %v9549 = vmul.f32 1.0, %v9548
        %v9550 = vrcp.pop %v9381
        %v9551 = vmul.f32 1.0, %v9550
        %v9552 = vrcp.pop %v9382
        %v9553 = vmul.f32 1.0, %v9552
        %v9554 = vrcp.pop %v9383
        %v9555 = vmul.f32 1.0, %v9554
        %v9556 = vrcp.pop %v9384
        %v9557 = vmul.f32 1.0, %v9556
        %v9558 = vrcp.pop %v9385
        %v9559 = vmul.f32 1.0, %v9558
        %v9560 = vrcp.pop %v9386
        %v9561 = vmul.f32 1.0, %v9560
        %v9562 = vrcp.pop %v9387
        %v9563 = vmul.f32 1.0, %v9562
        %v9564 = vrcp.pop %v9388
        %v9565 = vmul.f32 1.0, %v9564
        %v9566 = vrcp.pop %v9389
        %v9567 = vmul.f32 1.0, %v9566
        %v9568 = vrcp.pop %v9390
        %v9569 = vmul.f32 1.0, %v9568
        %v9570 = vrcp.pop %v9391
        %v9571 = vmul.f32 1.0, %v9570
        %v9572 = vrcp.pop %v9392
        %v9573 = vmul.f32 1.0, %v9572
        %v9574 = vrcp.pop %v9393
        %v9575 = vmul.f32 1.0, %v9574
        %v9576 = vrcp.pop %v9394
        %v9577 = vmul.f32 1.0, %v9576
        %v9578 = vrcp.pop %v9395
        %v9579 = vmul.f32 1.0, %v9578
        %v9580 = vrcp.pop %v9396
        %v9581 = vmul.f32 1.0, %v9580
        %v9582 = vrcp.pop %v9397
        %v9583 = vmul.f32 1.0, %v9582
        %v9584 = vrcp.pop %v9398
        %v9585 = vmul.f32 1.0, %v9584
        %v9586 = vrcp.pop %v9399
        %v9587 = vmul.f32 1.0, %v9586
        %v9588 = vrcp.pop %v9400
        %v9589 = vmul.f32 1.0, %v9588
        %v9590 = vrcp.pop %v9401
        %v9591 = vmul.f32 1.0, %v9590
        %v9592 = vrcp.pop %v9402
        %v9593 = vmul.f32 1.0, %v9592
        %v9594 = vrcp.pop %v9403
        %v9595 = vmul.f32 1.0, %v9594
        %v9596 = vrcp.pop %v9404
        %v9597 = vmul.f32 1.0, %v9596
        %v9598 = vrcp.pop %v9405
        %v9599 = vmul.f32 1.0, %v9598
        %v9600 = vrcp.pop %v9406
        %v9601 = vmul.f32 1.0, %v9600
        %v9602 = vrcp.pop %v9407
        %v9603 = vmul.f32 1.0, %v9602
        %v9604 = vrcp.pop %v9408
        %v9605 = vmul.f32 1.0, %v9604
        %v9606 = vrcp.pop %v9409
        %v9607 = vmul.f32 1.0, %v9606
        %v9608 = vrcp.pop %v9410
        %v9609 = vmul.f32 1.0, %v9608
        %v9610 = vrcp.pop %v9411
        %v9611 = vmul.f32 1.0, %v9610
        %v9612 = vrcp.pop %v9412
        %v9613 = vmul.f32 1.0, %v9612
        %v9614 = vrcp.pop %v9413
        %v9615 = vmul.f32 1.0, %v9614
        %v9616 = vrcp.pop %v9414
        %v9617 = vmul.f32 1.0, %v9616
        %v9618 = vrcp.pop %v9415
        %v9619 = vmul.f32 1.0, %v9618
        %v9620 = vrcp.pop %v9416
        %v9621 = vmul.f32 1.0, %v9620
        %v9622 = vrcp.pop %v9417
        %v9623 = vmul.f32 1.0, %v9622
        %v9624 = vrcp.pop %v9418
        %v9625 = vmul.f32 1.0, %v9624
        %v9626 = vrcp.pop %v9419
        %v9627 = vmul.f32 1.0, %v9626
        %v9628 = vrcp.pop %v9420
        %v9629 = vmul.f32 1.0, %v9628
        %v9630 = vrcp.pop %v9421
        %v9631 = vmul.f32 1.0, %v9630
        %v9632 = vrcp.pop %v9422
        %v9633 = vmul.f32 1.0, %v9632
        %v9634 = vrcp.pop %v9423
        %v9635 = vmul.f32 1.0, %v9634
        %v9636 = vrcp.pop %v9424
        %v9637 = vmul.f32 1.0, %v9636
        %v9638 = vrcp.pop %v9425
        %v9639 = vmul.f32 1.0, %v9638
        %v9640 = vrcp.pop %v9426
        %v9641 = vmul.f32 1.0, %v9640
        %v9642 = vrcp.pop %v9427
        %v9643 = vmul.f32 1.0, %v9642
        %v9644 = vrcp.pop %v9428
        %v9645 = vmul.f32 1.0, %v9644
        %v9646 = vrcp.pop %v9429
        %v9647 = vmul.f32 1.0, %v9646
        %v9648 = vrcp.pop %v9430
        %v9649 = vmul.f32 1.0, %v9648
        %v9650 = vrcp.pop %v9431
        %v9651 = vmul.f32 1.0, %v9650
        %v9652 = vrcp.pop %v9432
        %v9653 = vmul.f32 1.0, %v9652
        %v9654 = vrcp.pop %v9433
        %v9655 = vmul.f32 1.0, %v9654
        %v9656 = vrcp.pop %v9434
        %v9657 = vmul.f32 1.0, %v9656
        %v9658 = vrcp.pop %v9435
        %v9659 = vmul.f32 1.0, %v9658
        %v9660 = vrcp.pop %v9436
        %v9661 = vmul.f32 1.0, %v9660
        %v9662 = vrcp.pop %v9437
        %v9663 = vmul.f32 1.0, %v9662
        %v9664 = vrcp.pop %v9438
        %v9665 = vmul.f32 1.0, %v9664
        %v9666 = vrcp.pop %v9439
        %v9667 = vmul.f32 1.0, %v9666
        %v9668 = vrcp.pop %v9440
        %v9669 = vmul.f32 1.0, %v9668
        %v9670 = vrcp.pop %v9441
        %v9671 = vmul.f32 1.0, %v9670
        %v9672 = vrcp.pop %v9442
        %v9673 = vmul.f32 1.0, %v9672
        %v9674 = vrcp.pop %v9443
        %v9675 = vmul.f32 1.0, %v9674
        %v9676 = vrcp.pop %v9444
        %v9677 = vmul.f32 1.0, %v9676
        %v9678 = vrcp.pop %v9445
        %v9679 = vmul.f32 1.0, %v9678
        %v9680 = vrcp.pop %v9446
        %v9681 = vmul.f32 1.0, %v9680
        %v9682 = vrcp.pop %v9447
        %v9683 = vmul.f32 1.0, %v9682
        %v9684 = vrcp.pop %v9448
        %v9685 = vmul.f32 1.0, %v9684
        %v9686 = vrcp.pop %v9449
        %v9687 = vmul.f32 1.0, %v9686
        %v9688 = vrcp.pop %v9450
        %v9689 = vmul.f32 1.0, %v9688
        %v9690 = vrcp.pop %v9451
        %v9691 = vmul.f32 1.0, %v9690
        %v9692 = vrcp.pop %v9452
        %v9693 = vmul.f32 1.0, %v9692
        %v9694 = vrcp.pop %v9453
        %v9695 = vmul.f32 1.0, %v9694
        %v9696 = vrcp.pop %v9454
        %v9697 = vmul.f32 1.0, %v9696
        %v9698 = vrcp.pop %v9455
        %v9699 = vmul.f32 1.0, %v9698
        %v9700 = vrcp.pop %v9456
        %v9701 = vmul.f32 1.0, %v9700
        %v9702 = vrcp.pop %v9457
        %v9703 = vmul.f32 1.0, %v9702
        %v9704 = vrcp.pop %v9458
        %v9705 = vmul.f32 1.0, %v9704
        %v9706 = vrcp.pop %v9459
        %v9707 = vmul.f32 1.0, %v9706
        %v9708 = vrcp.pop %v9460
        %v9709 = vmul.f32 1.0, %v9708
        %v9710 = vrcp.pop %v9461
        %v9711 = vmul.f32 1.0, %v9710
        %v9712 = vrcp.pop %v9462
        %v9713 = vmul.f32 1.0, %v9712
        %v9714 = vrcp.pop %v9463
        %v9715 = vmul.f32 1.0, %v9714
        %v9716 = vrcp.pop %v9464
        %v9717 = vmul.f32 1.0, %v9716
        %v9718 = vrcp.pop %v9465
        %v9719 = vmul.f32 1.0, %v9718
        %v9720 = vrcp.pop %v9466
        %v9721 = vmul.f32 1.0, %v9720
        %v9722 = vrcp.pop %v9467
        %v9723 = vmul.f32 1.0, %v9722
        %v9724 = vmul.f32 %v7726, %v9469
        %v9725 = vmul.f32 %v7727, %v9471
        %v9726 = vmul.f32 %v7728, %v9473
        %v9727 = vmul.f32 %v7729, %v9475
        %v9728 = vmul.f32 %v7730, %v9477
        %v9729 = vmul.f32 %v7731, %v9479
        %v9730 = vmul.f32 %v7732, %v9481
        %v9731 = vmul.f32 %v7733, %v9483
        %v9732 = vmul.f32 %v7734, %v9485
        %v9733 = vmul.f32 %v7735, %v9487
        %v9734 = vmul.f32 %v7736, %v9489
        %v9735 = vmul.f32 %v7737, %v9491
        %v9736 = vmul.f32 %v7738, %v9493
        %v9737 = vmul.f32 %v7739, %v9495
        %v9738 = vmul.f32 %v7740, %v9497
        %v9739 = vmul.f32 %v7741, %v9499
        %v9740 = vmul.f32 %v7742, %v9501
        %v9741 = vmul.f32 %v7743, %v9503
        %v9742 = vmul.f32 %v7744, %v9505
        %v9743 = vmul.f32 %v7745, %v9507
        %v9744 = vmul.f32 %v7746, %v9509
        %v9745 = vmul.f32 %v7747, %v9511
        %v9746 = vmul.f32 %v7748, %v9513
        %v9747 = vmul.f32 %v7749, %v9515
        %v9748 = vmul.f32 %v7750, %v9517
        %v9749 = vmul.f32 %v7751, %v9519
        %v9750 = vmul.f32 %v7752, %v9521
        %v9751 = vmul.f32 %v7753, %v9523
        %v9752 = vmul.f32 %v7754, %v9525
        %v9753 = vmul.f32 %v7755, %v9527
        %v9754 = vmul.f32 %v7756, %v9529
        %v9755 = vmul.f32 %v7757, %v9531
        %v9756 = vmul.f32 %v7758, %v9533
        %v9757 = vmul.f32 %v7759, %v9535
        %v9758 = vmul.f32 %v7760, %v9537
        %v9759 = vmul.f32 %v7761, %v9539
        %v9760 = vmul.f32 %v7762, %v9541
        %v9761 = vmul.f32 %v7763, %v9543
        %v9762 = vmul.f32 %v7764, %v9545
        %v9763 = vmul.f32 %v7765, %v9547
        %v9764 = vmul.f32 %v7766, %v9549
        %v9765 = vmul.f32 %v7767, %v9551
        %v9766 = vmul.f32 %v7768, %v9553
        %v9767 = vmul.f32 %v7769, %v9555
        %v9768 = vmul.f32 %v7770, %v9557
        %v9769 = vmul.f32 %v7771, %v9559
        %v9770 = vmul.f32 %v7772, %v9561
        %v9771 = vmul.f32 %v7773, %v9563
        %v9772 = vmul.f32 %v7774, %v9565
        %v9773 = vmul.f32 %v7775, %v9567
        %v9774 = vmul.f32 %v7776, %v9569
        %v9775 = vmul.f32 %v7777, %v9571
        %v9776 = vmul.f32 %v7778, %v9573
        %v9777 = vmul.f32 %v7779, %v9575
        %v9778 = vmul.f32 %v7780, %v9577
        %v9779 = vmul.f32 %v7781, %v9579
        %v9780 = vmul.f32 %v7782, %v9581
        %v9781 = vmul.f32 %v7783, %v9583
        %v9782 = vmul.f32 %v7784, %v9585
        %v9783 = vmul.f32 %v7785, %v9587
        %v9784 = vmul.f32 %v7786, %v9589
        %v9785 = vmul.f32 %v7787, %v9591
        %v9786 = vmul.f32 %v7788, %v9593
        %v9787 = vmul.f32 %v7789, %v9595
        %v9788 = vmul.f32 %v7790, %v9597
        %v9789 = vmul.f32 %v7791, %v9599
        %v9790 = vmul.f32 %v7792, %v9601
        %v9791 = vmul.f32 %v7793, %v9603
        %v9792 = vmul.f32 %v7794, %v9605
        %v9793 = vmul.f32 %v7795, %v9607
        %v9794 = vmul.f32 %v7796, %v9609
        %v9795 = vmul.f32 %v7797, %v9611
        %v9796 = vmul.f32 %v7798, %v9613
        %v9797 = vmul.f32 %v7799, %v9615
        %v9798 = vmul.f32 %v7800, %v9617
        %v9799 = vmul.f32 %v7801, %v9619
        %v9800 = vmul.f32 %v7802, %v9621
        %v9801 = vmul.f32 %v7803, %v9623
        %v9802 = vmul.f32 %v7804, %v9625
        %v9803 = vmul.f32 %v7805, %v9627
        %v9804 = vmul.f32 %v7806, %v9629
        %v9805 = vmul.f32 %v7807, %v9631
        %v9806 = vmul.f32 %v7808, %v9633
        %v9807 = vmul.f32 %v7809, %v9635
        %v9808 = vmul.f32 %v7810, %v9637
        %v9809 = vmul.f32 %v7811, %v9639
        %v9810 = vmul.f32 %v7812, %v9641
        %v9811 = vmul.f32 %v7813, %v9643
        %v9812 = vmul.f32 %v7814, %v9645
        %v9813 = vmul.f32 %v7815, %v9647
        %v9814 = vmul.f32 %v7816, %v9649
        %v9815 = vmul.f32 %v7817, %v9651
        %v9816 = vmul.f32 %v7818, %v9653
        %v9817 = vmul.f32 %v7819, %v9655
        %v9818 = vmul.f32 %v7820, %v9657
        %v9819 = vmul.f32 %v7821, %v9659
        %v9820 = vmul.f32 %v7822, %v9661
        %v9821 = vmul.f32 %v7823, %v9663
        %v9822 = vmul.f32 %v7824, %v9665
        %v9823 = vmul.f32 %v7825, %v9667
        %v9824 = vmul.f32 %v7826, %v9669
        %v9825 = vmul.f32 %v7827, %v9671
        %v9826 = vmul.f32 %v7828, %v9673
        %v9827 = vmul.f32 %v7829, %v9675
        %v9828 = vmul.f32 %v7830, %v9677
        %v9829 = vmul.f32 %v7831, %v9679
        %v9830 = vmul.f32 %v7832, %v9681
        %v9831 = vmul.f32 %v7833, %v9683
        %v9832 = vmul.f32 %v7834, %v9685
        %v9833 = vmul.f32 %v7835, %v9687
        %v9834 = vmul.f32 %v7836, %v9689
        %v9835 = vmul.f32 %v7837, %v9691
        %v9836 = vmul.f32 %v7838, %v9693
        %v9837 = vmul.f32 %v7839, %v9695
        %v9838 = vmul.f32 %v7840, %v9697
        %v9839 = vmul.f32 %v7841, %v9699
        %v9840 = vmul.f32 %v7842, %v9701
        %v9841 = vmul.f32 %v7843, %v9703
        %v9842 = vmul.f32 %v7844, %v9705
        %v9843 = vmul.f32 %v7845, %v9707
        %v9844 = vmul.f32 %v7846, %v9709
        %v9845 = vmul.f32 %v7847, %v9711
        %v9846 = vmul.f32 %v7848, %v9713
        %v9847 = vmul.f32 %v7849, %v9715
        %v9848 = vmul.f32 %v7850, %v9717
        %v9849 = vmul.f32 %v7851, %v9719
        %v9850 = vmul.f32 %v7852, %v9721
        %v9851 = vmul.f32 %v7853, %v9723
        %v9852 = vpack.c.bf16 %v9726, %v9724
        %v9853 = vpack.c.bf16 %v9727, %v9725
        %v9854 = vpack.c.bf16 %v9730, %v9728
        %v9855 = vpack.c.bf16 %v9731, %v9729
        %v9856 = vpack.c.bf16 %v9734, %v9732
        %v9857 = vpack.c.bf16 %v9735, %v9733
        %v9858 = vpack.c.bf16 %v9738, %v9736
        %v9859 = vpack.c.bf16 %v9739, %v9737
        %v9860 = vpack.c.bf16 %v9742, %v9740
        %v9861 = vpack.c.bf16 %v9743, %v9741
        %v9862 = vpack.c.bf16 %v9746, %v9744
        %v9863 = vpack.c.bf16 %v9747, %v9745
        %v9864 = vpack.c.bf16 %v9750, %v9748
        %v9865 = vpack.c.bf16 %v9751, %v9749
        %v9866 = vpack.c.bf16 %v9754, %v9752
        %v9867 = vpack.c.bf16 %v9755, %v9753
        %v9868 = vpack.c.bf16 %v9758, %v9756
        %v9869 = vpack.c.bf16 %v9759, %v9757
        %v9870 = vpack.c.bf16 %v9762, %v9760
        %v9871 = vpack.c.bf16 %v9763, %v9761
        %v9872 = vpack.c.bf16 %v9766, %v9764
        %v9873 = vpack.c.bf16 %v9767, %v9765
        %v9874 = vpack.c.bf16 %v9770, %v9768
        %v9875 = vpack.c.bf16 %v9771, %v9769
        %v9876 = vpack.c.bf16 %v9774, %v9772
        %v9877 = vpack.c.bf16 %v9775, %v9773
        %v9878 = vpack.c.bf16 %v9778, %v9776
        %v9879 = vpack.c.bf16 %v9779, %v9777
        %v9880 = vpack.c.bf16 %v9782, %v9780
        %v9881 = vpack.c.bf16 %v9783, %v9781
        %v9882 = vpack.c.bf16 %v9786, %v9784
        %v9883 = vpack.c.bf16 %v9787, %v9785
        %v9884 = vpack.c.bf16 %v9790, %v9788
        %v9885 = vpack.c.bf16 %v9791, %v9789
        %v9886 = vpack.c.bf16 %v9794, %v9792
        %v9887 = vpack.c.bf16 %v9795, %v9793
        %v9888 = vpack.c.bf16 %v9798, %v9796
        %v9889 = vpack.c.bf16 %v9799, %v9797
        %v9890 = vpack.c.bf16 %v9802, %v9800
        %v9891 = vpack.c.bf16 %v9803, %v9801
        %v9892 = vpack.c.bf16 %v9806, %v9804
        %v9893 = vpack.c.bf16 %v9807, %v9805
        %v9894 = vpack.c.bf16 %v9810, %v9808
        %v9895 = vpack.c.bf16 %v9811, %v9809
        %v9896 = vpack.c.bf16 %v9814, %v9812
        %v9897 = vpack.c.bf16 %v9815, %v9813
        %v9898 = vpack.c.bf16 %v9818, %v9816
        %v9899 = vpack.c.bf16 %v9819, %v9817
        %v9900 = vpack.c.bf16 %v9822, %v9820
        %v9901 = vpack.c.bf16 %v9823, %v9821
        %v9902 = vpack.c.bf16 %v9826, %v9824
        %v9903 = vpack.c.bf16 %v9827, %v9825
        %v9904 = vpack.c.bf16 %v9830, %v9828
        %v9905 = vpack.c.bf16 %v9831, %v9829
        %v9906 = vpack.c.bf16 %v9834, %v9832
        %v9907 = vpack.c.bf16 %v9835, %v9833
        %v9908 = vpack.c.bf16 %v9838, %v9836
        %v9909 = vpack.c.bf16 %v9839, %v9837
        %v9910 = vpack.c.bf16 %v9842, %v9840
        %v9911 = vpack.c.bf16 %v9843, %v9841
        %v9912 = vpack.c.bf16 %v9846, %v9844
        %v9913 = vpack.c.bf16 %v9847, %v9845
        %v9914 = vpack.c.bf16 %v9850, %v9848
        %v9915 = vpack.c.bf16 %v9851, %v9849
        %v9916 = vld [vmem:[%s8] sm:$0x3]
        %v9917 = vld [vmem:[#allocation6] sm:$0x1]
        %9919 = vset.pattern.permute.xlu0 0
        %9920 = vperm.xlu0 %9919, %v9917
        %v9921 = vpop.permute.xlu0 %9920
        %v9923 = vlaneseq
        %v9924 = vshrl.u32 %v9923, 7
        %v9925 = vsub.s32 0, %v9924
        %v9926 = vrot.slane %v9921, %v9925
        %v9929 = vunpack.c.l.s4 1966171168
        %v9930 = vunpack.c.0.s8 %v9929
        %v9931 = vlaneseq
        %v9932 = vshrl.u32 %v9931, 7
        %v9933 = vsub.s32 %v9930, %v9932
        %v9934 = vrot.slane %v9916, %v9933
        %v9935 = vcombine.high %v9934, %v9934
        %v9937 = vunpack.c.l.s4 1966171168
        %v9938 = vunpack.c.0.s8 %v9937
        %v9939 = vlaneseq
        %v9940 = vshrl.u32 %v9939, 7
        %v9941 = vsub.s32 %v9938, %v9940
        %v9942 = vrot.slane %v9934, %v9941
        %v9944 = vunpack.c.l.s4 1966171168
        %v9945 = vunpack.c.0.s8 %v9944
        %v9946 = vlaneseq
        %v9947 = vshrl.u32 %v9946, 7
        %v9948 = vsub.s32 %v9945, %v9947
        %v9949 = vrot.slane %v9935, %v9948
        %9952 = vmatprep.subr.bf16.mxu0 %v9853
        %9953 = vmatpush1.bf16.xpose.msra.mxu0 %v9852
        %9954 = vmatprep.subr.bf16.mxu0 %v9855
        %9955 = vmatpush1.bf16.xpose.msra.mxu0 %v9854
        %9956 = vmatprep.subr.bf16.mxu0 %v9857
        %9957 = vmatpush1.bf16.xpose.msra.mxu0 %v9856
        %9958 = vmatprep.subr.bf16.mxu0 %v9859
        %9959 = vmatpush1.bf16.xpose.msra.mxu0 %v9858
        %9960 = vmatprep.subr.bf16.mxu0 %v9861
        %9961 = vmatpush1.bf16.xpose.msra.mxu0 %v9860
        %9962 = vmatprep.subr.bf16.mxu0 %v9863
        %9963 = vmatpush1.bf16.xpose.msra.mxu0 %v9862
        %9964 = vmatprep.subr.bf16.mxu0 %v9865
        %9965 = vmatpush1.bf16.xpose.msra.mxu0 %v9864
        %9966 = vmatprep.subr.bf16.mxu0 %v9867
        %9967 = vmatpush1.bf16.xpose.msra.mxu0 %v9866
        %9968 = vmatprep.subr.bf16.mxu0 %v9869
        %9969 = vmatpush1.bf16.xpose.msra.mxu0 %v9868
        %9970 = vmatprep.subr.bf16.mxu0 %v9871
        %9971 = vmatpush1.bf16.xpose.msra.mxu0 %v9870
        %9972 = vmatprep.subr.bf16.mxu0 %v9873
        %9973 = vmatpush1.bf16.xpose.msra.mxu0 %v9872
        %9974 = vmatprep.subr.bf16.mxu0 %v9875
        %9975 = vmatpush1.bf16.xpose.msra.mxu0 %v9874
        %9976 = vmatprep.subr.bf16.mxu0 %v9877
        %9977 = vmatpush1.bf16.xpose.msra.mxu0 %v9876
        %9978 = vmatprep.subr.bf16.mxu0 %v9879
        %9979 = vmatpush1.bf16.xpose.msra.mxu0 %v9878
        %9980 = vmatprep.subr.bf16.mxu0 %v9881
        %9981 = vmatpush1.bf16.xpose.msra.mxu0 %v9880
        %9982 = vmatprep.subr.bf16.mxu0 %v9883
        %9983 = vmatpush1.bf16.xpose.msra.mxu0 %v9882
        %9984 = vmatprep.mubr.bf16.mxu0 %v9949
        %9985 = vmatmul.mubr.bf16.gmra.mrb[0].mxu0 %v9942
        %v9986 = vpop.f32.mrb[0].mxu0
        %v9987 = vadd.f32 %v9926, %v9986
        %v9988 = vpop.f32.mrb[0].mxu0
        %v9989 = vadd.f32 %v9926, %v9988
        %v9990 = vpop.f32.mrb[0].mxu0
        %v9991 = vpop.f32.mrb[0].mxu0
        %9992 = vdwg.mxu0
        %9993 = vmatprep.subr.bf16.mxu0 %v9885
        %9994 = vmatpush1.bf16.xpose.msra.mxu0 %v9884
        %9995 = vmatprep.subr.bf16.mxu0 %v9887
        %9996 = vmatpush1.bf16.xpose.msra.mxu0 %v9886
        %9997 = vmatprep.subr.bf16.mxu0 %v9889
        %9998 = vmatpush1.bf16.xpose.msra.mxu0 %v9888
        %9999 = vmatprep.subr.bf16.mxu0 %v9891
        %10000 = vmatpush1.bf16.xpose.msra.mxu0 %v9890
        %10001 = vmatprep.subr.bf16.mxu0 %v9893
        %10002 = vmatpush1.bf16.xpose.msra.mxu0 %v9892
        %10003 = vmatprep.subr.bf16.mxu0 %v9895
        %10004 = vmatpush1.bf16.xpose.msra.mxu0 %v9894
        %10005 = vmatprep.subr.bf16.mxu0 %v9897
        %10006 = vmatpush1.bf16.xpose.msra.mxu0 %v9896
        %10007 = vmatprep.subr.bf16.mxu0 %v9899
        %10008 = vmatpush1.bf16.xpose.msra.mxu0 %v9898
        %10009 = vmatprep.subr.bf16.mxu0 %v9901
        %10010 = vmatpush1.bf16.xpose.msra.mxu0 %v9900
        %10011 = vmatprep.subr.bf16.mxu0 %v9903
        %10012 = vmatpush1.bf16.xpose.msra.mxu0 %v9902
        %10013 = vmatprep.subr.bf16.mxu0 %v9905
        %10014 = vmatpush1.bf16.xpose.msra.mxu0 %v9904
        %10015 = vmatprep.subr.bf16.mxu0 %v9907
        %10016 = vmatpush1.bf16.xpose.msra.mxu0 %v9906
        %10017 = vmatprep.subr.bf16.mxu0 %v9909
        %10018 = vmatpush1.bf16.xpose.msra.mxu0 %v9908
        %10019 = vmatprep.subr.bf16.mxu0 %v9911
        %10020 = vmatpush1.bf16.xpose.msra.mxu0 %v9910
        %10021 = vmatprep.subr.bf16.mxu0 %v9913
        %10022 = vmatpush1.bf16.xpose.msra.mxu0 %v9912
        %10023 = vmatprep.subr.bf16.mxu0 %v9915
        %10024 = vmatpush1.bf16.xpose.msra.mxu0 %v9914
        %10025 = vmatprep.mubr.bf16.mxu0 %v9949
        %10026 = vmatmul.mubr.bf16.gmra.mrb[0].mxu0 %v9942
        %v10027 = vpop.f32.mrb[0].mxu0
        %v10028 = vadd.f32 %v9926, %v10027
        %v10029 = vpop.f32.mrb[0].mxu0
        %v10030 = vadd.f32 %v9926, %v10029
        %v10031 = vpop.f32.mrb[0].mxu0
        %v10032 = vpop.f32.mrb[0].mxu0
        %10033 = vdwg.mxu0
        %v10038 = vcombine.low %v9987, %v9989
        %v10039 = vcombine.low %v10028, %v10030
        %v10041 = vunpack.c.l.s4 1966171168
        %v10042 = vunpack.c.0.s8 %v10041
        %v10043 = vlaneseq
        %v10044 = vshrl.u32 %v10043, 7
        %v10045 = vsub.s32 %v10042, %v10044
        %v10046 = vrot.slane %v10038, %v10045
        %v10048 = vunpack.c.l.s4 1966171168
        %v10049 = vunpack.c.0.s8 %v10048
        %v10050 = vlaneseq
        %v10051 = vshrl.u32 %v10050, 7
        %v10052 = vsub.s32 %v10049, %v10051
        %v10053 = vrot.slane %v10039, %v10052
        %v10054 = vcombine.low %v10046, %v10053
        %v10056 = vunpack.c.l.s4 1966171168
        %v10057 = vunpack.c.0.s8 %v10056
        %v10058 = vlaneseq
        %v10059 = vshrl.u32 %v10058, 7
        %v10060 = vsub.s32 %v10057, %v10059
        %v10061 = vrot.slane %v10054, %v10060
        %v10063 = vlaneseq
        %vm10064 = vcmp.ge.s32.totalorder %v10063, 0
        %vm10065 = vcmp.lt.s32.totalorder %v10063, 512
        %vm10066 = vmand %vm10064, %vm10065
        %10067 = vst.msk [vmem:[%s494] sm:$0xf] %vm10066, %v10061
        %v10068 = vlaneseq
        %v10069 = vand.u32 %v10068, 127
        %v10070 = vadd.s32 %v10069, 128
        %v10071 = vadd.s32 %v10069, 256
        %v10072 = vadd.s32 %v10069, 384
        %v10073 = vadd.s32 %v5981, %v10069
        %v10074 = vadd.s32 %v5981, %v10070
        %v10075 = vadd.s32 %v5981, %v10071
        %v10076 = vadd.s32 %v5981, %v10072
        %s10077 = sld [smem:[#allocation5]]
        %v10078 = vstv %s10077
        %vm10079 = vcmp.lt.s32.totalorder %v10073, %v10078
        %vm10080 = vcmp.lt.s32.totalorder %v10074, %v10078
        %vm10081 = vcmp.lt.s32.totalorder %v10075, %v10078
        %vm10082 = vcmp.lt.s32.totalorder %v10076, %v10078
        %v10083 = vsel %vm10079, %v9987, -inf
        %v10084 = vsel %vm10080, %v9989, -inf
        %v10085 = vsel %vm10081, %v10028, -inf
        %v10086 = vsel %vm10082, %v10030, -inf
        %vm10087 = vcmask 1040384
        %v10088 = vsel %vm10087, %v10083, -inf
        %v10089 = vsel %vm10087, %v10084, -inf
        %v10090 = vsel %vm10087, %v10085, -inf
        %v10091 = vsel %vm10087, %v10086, -inf
        %v10092 = vmax.f32 %v10088, %v10089
        %v10093 = vmax.f32 %v10090, %v10091
        %v10094 = vmax.f32 %v10092, %v10093
        %10095 = vmax.xlane.f32.xlu0 %v10094
        %v10096 = vpop.xlane.xlu0 %10095
        %v10097 = vld [vmem:[#allocation2] sm:$0x1]
        %v10098 = vmax.f32 %v10097, %v10096
        %v10099 = vsub.f32 %v10097, %v10098
        %v10100 = vmul.f32 %v10099, 1.442695
        %v10101 = vpow.pop %v10100
        %10103 = vset.pattern.permute.xlu0 0
        %10104 = vperm.xlu0 %10103, %v10098
        %v10105 = vpop.permute.xlu0 %10104
        %v10107 = vlaneseq
        %v10108 = vshrl.u32 %v10107, 7
        %v10109 = vsub.s32 0, %v10108
        %v10110 = vrot.slane %v10105, %v10109
        %v10111 = vsub.f32 %v10083, %v10110
        %v10112 = vsub.f32 %v10084, %v10110
        %v10113 = vsub.f32 %v10085, %v10110
        %v10114 = vsub.f32 %v10086, %v10110
        %v10115 = vmul.f32 %v10111, 1.442695
        %v10116 = vpow.pop %v10115
        %v10117 = vmul.f32 %v10112, 1.442695
        %v10118 = vpow.pop %v10117
        %v10119 = vmul.f32 %v10113, 1.442695
        %v10120 = vpow.pop %v10119
        %v10121 = vmul.f32 %v10114, 1.442695
        %v10122 = vpow.pop %v10121
        %v10123 = vld [vmem:[#allocation3] sm:$0x1]
        %v10124 = vmul.f32 %v10101, %v10123
        %v10125 = vsel %vm10087, %v10116, 0.0
        %v10126 = vsel %vm10087, %v10118, 0.0
        %v10127 = vadd.f32 %v10125, %v10126
        %v10128 = vsel %vm10087, %v10120, 0.0
        %v10129 = vadd.f32 %v10127, %v10128
        %v10130 = vsel %vm10087, %v10122, 0.0
        %v10131 = vadd.f32 %v10129, %v10130
        %10132 = vadd.xlane.f32.xlu0 %v10131
        %v10133 = vpop.xlane.xlu0 %10132
        %v10134 = vadd.f32 %v10124, %v10133
        %vm10135 = vcmask 0
        %10136 = vst.msk [vmem:[#allocation3] sm:$0x1] %vm10135, %v10134
        %v10137 = vld [vmem:[#allocation4] sm:$0xf]
        %10139 = vset.pattern.permute.xlu0 0
        %10140 = vperm.xlu0 %10139, %v10101
        %v10141 = vpop.permute.xlu0 %10140
        %v10143 = vlaneseq
        %v10144 = vshrl.u32 %v10143, 7
        %v10145 = vsub.s32 0, %v10144
        %v10146 = vrot.slane %v10141, %v10145
        %v10147 = vmul.f32 %v10146, %v10137
        %v10148 = vpack.c.bf16 %v10116, %v10116
        %v10149 = vpack.c.bf16 %v10118, %v10118
        %v10150 = vpack.c.bf16 %v10120, %v10120
        %v10151 = vpack.c.bf16 %v10122, %v10122
        %10152 = vmatprep.subr.bf16.mxu0 %v6497
        %10153 = vmatpush1.bf16.msra.mxu0 %v6496
        %10154 = vmatprep.subr.bf16.mxu0 %v6501
        %10155 = vmatpush1.bf16.msra.mxu0 %v6500
        %10156 = vmatprep.subr.bf16.mxu0 %v6505
        %10157 = vmatpush1.bf16.msra.mxu0 %v6504
        %10158 = vmatprep.subr.bf16.mxu0 %v6509
        %10159 = vmatpush1.bf16.msra.mxu0 %v6508
        %10160 = vmatprep.subr.bf16.mxu0 %v6513
        %10161 = vmatpush1.bf16.msra.mxu0 %v6512
        %10162 = vmatprep.subr.bf16.mxu0 %v6517
        %10163 = vmatpush1.bf16.msra.mxu0 %v6516
        %10164 = vmatprep.subr.bf16.mxu0 %v6521
        %10165 = vmatpush1.bf16.msra.mxu0 %v6520
        %10166 = vmatprep.subr.bf16.mxu0 %v6525
        %10167 = vmatpush1.bf16.msra.mxu0 %v6524
        %10168 = vmatprep.subr.bf16.mxu0 %v6529
        %10169 = vmatpush1.bf16.msra.mxu0 %v6528
        %10170 = vmatprep.subr.bf16.mxu0 %v6533
        %10171 = vmatpush1.bf16.msra.mxu0 %v6532
        %10172 = vmatprep.subr.bf16.mxu0 %v6537
        %10173 = vmatpush1.bf16.msra.mxu0 %v6536
        %10174 = vmatprep.subr.bf16.mxu0 %v6541
        %10175 = vmatpush1.bf16.msra.mxu0 %v6540
        %10176 = vmatprep.subr.bf16.mxu0 %v6545
        %10177 = vmatpush1.bf16.msra.mxu0 %v6544
        %10178 = vmatprep.subr.bf16.mxu0 %v6549
        %10179 = vmatpush1.bf16.msra.mxu0 %v6548
        %10180 = vmatprep.subr.bf16.mxu0 %v6553
        %10181 = vmatpush1.bf16.msra.mxu0 %v6552
        %10182 = vmatprep.subr.bf16.mxu0 %v6557
        %10183 = vmatpush1.bf16.msra.mxu0 %v6556
        %10184 = vmatprep.mubr.bf16.mxu0 %v10149
        %10185 = vmatmul.mubr.bf16.gmra.mrb[0].mxu0 %v10148
        %v10186 = vpop.f32.mrb[0].mxu0
        %v10187 = vadd.f32 0.0, %v10186
        %v10188 = vpop.f32.mrb[0].mxu0
        %v10189 = vadd.f32 0.0, %v10188
        %v10190 = vpop.f32.mrb[0].mxu0
        %v10191 = vpop.f32.mrb[0].mxu0
        %10192 = vdwg.mxu0
        %10193 = vmatprep.subr.bf16.mxu0 %v6561
        %10194 = vmatpush1.bf16.msra.mxu0 %v6560
        %10195 = vmatprep.subr.bf16.mxu0 %v6565
        %10196 = vmatpush1.bf16.msra.mxu0 %v6564
        %10197 = vmatprep.subr.bf16.mxu0 %v6569
        %10198 = vmatpush1.bf16.msra.mxu0 %v6568
        %10199 = vmatprep.subr.bf16.mxu0 %v6573
        %10200 = vmatpush1.bf16.msra.mxu0 %v6572
        %10201 = vmatprep.subr.bf16.mxu0 %v6577
        %10202 = vmatpush1.bf16.msra.mxu0 %v6576
        %10203 = vmatprep.subr.bf16.mxu0 %v6581
        %10204 = vmatpush1.bf16.msra.mxu0 %v6580
        %10205 = vmatprep.subr.bf16.mxu0 %v6585
        %10206 = vmatpush1.bf16.msra.mxu0 %v6584
        %10207 = vmatprep.subr.bf16.mxu0 %v6589
        %10208 = vmatpush1.bf16.msra.mxu0 %v6588
        %10209 = vmatprep.subr.bf16.mxu0 %v6593
        %10210 = vmatpush1.bf16.msra.mxu0 %v6592
        %10211 = vmatprep.subr.bf16.mxu0 %v6597
        %10212 = vmatpush1.bf16.msra.mxu0 %v6596
        %10213 = vmatprep.subr.bf16.mxu0 %v6601
        %10214 = vmatpush1.bf16.msra.mxu0 %v6600
        %10215 = vmatprep.subr.bf16.mxu0 %v6605
        %10216 = vmatpush1.bf16.msra.mxu0 %v6604
        %10217 = vmatprep.subr.bf16.mxu0 %v6609
        %10218 = vmatpush1.bf16.msra.mxu0 %v6608
        %10219 = vmatprep.subr.bf16.mxu0 %v6613
        %10220 = vmatpush1.bf16.msra.mxu0 %v6612
        %10221 = vmatprep.subr.bf16.mxu0 %v6617
        %10222 = vmatpush1.bf16.msra.mxu0 %v6616
        %10223 = vmatprep.subr.bf16.mxu0 %v6621
        %10224 = vmatpush1.bf16.msra.mxu0 %v6620
        %10225 = vmatprep.mubr.bf16.mxu0 %v10151
        %10226 = vmatmul.mubr.bf16.gmra.mrb[0].mxu0 %v10150
        %v10227 = vpop.f32.mrb[0].mxu0
        %v10228 = vadd.f32 %v10187, %v10227
        %v10229 = vpop.f32.mrb[0].mxu0
        %v10230 = vadd.f32 %v10189, %v10229
        %v10231 = vpop.f32.mrb[0].mxu0
        %v10232 = vpop.f32.mrb[0].mxu0
        %10233 = vdwg.mxu0
        %10234 = vmatprep.subr.bf16.mxu0 %v6499
        %10235 = vmatpush1.bf16.msra.mxu0 %v6498
        %10236 = vmatprep.subr.bf16.mxu0 %v6503
        %10237 = vmatpush1.bf16.msra.mxu0 %v6502
        %10238 = vmatprep.subr.bf16.mxu0 %v6507
        %10239 = vmatpush1.bf16.msra.mxu0 %v6506
        %10240 = vmatprep.subr.bf16.mxu0 %v6511
        %10241 = vmatpush1.bf16.msra.mxu0 %v6510
        %10242 = vmatprep.subr.bf16.mxu0 %v6515
        %10243 = vmatpush1.bf16.msra.mxu0 %v6514
        %10244 = vmatprep.subr.bf16.mxu0 %v6519
        %10245 = vmatpush1.bf16.msra.mxu0 %v6518
        %10246 = vmatprep.subr.bf16.mxu0 %v6523
        %10247 = vmatpush1.bf16.msra.mxu0 %v6522
        %10248 = vmatprep.subr.bf16.mxu0 %v6527
        %10249 = vmatpush1.bf16.msra.mxu0 %v6526
        %10250 = vmatprep.subr.bf16.mxu0 %v6531
        %10251 = vmatpush1.bf16.msra.mxu0 %v6530
        %10252 = vmatprep.subr.bf16.mxu0 %v6535
        %10253 = vmatpush1.bf16.msra.mxu0 %v6534
        %10254 = vmatprep.subr.bf16.mxu0 %v6539
        %10255 = vmatpush1.bf16.msra.mxu0 %v6538
        %10256 = vmatprep.subr.bf16.mxu0 %v6543
        %10257 = vmatpush1.bf16.msra.mxu0 %v6542
        %10258 = vmatprep.subr.bf16.mxu0 %v6547
        %10259 = vmatpush1.bf16.msra.mxu0 %v6546
        %10260 = vmatprep.subr.bf16.mxu0 %v6551
        %10261 = vmatpush1.bf16.msra.mxu0 %v6550
        %10262 = vmatprep.subr.bf16.mxu0 %v6555
        %10263 = vmatpush1.bf16.msra.mxu0 %v6554
        %10264 = vmatprep.subr.bf16.mxu0 %v6559
        %10265 = vmatpush1.bf16.msra.mxu0 %v6558
        %10266 = vmatprep.mubr.bf16.mxu0 %v10149
        %10267 = vmatmul.mubr.bf16.gmra.mrb[0].mxu0 %v10148
        %v10268 = vpop.f32.mrb[0].mxu0
        %v10269 = vadd.f32 0.0, %v10268
        %v10270 = vpop.f32.mrb[0].mxu0
        %v10271 = vadd.f32 0.0, %v10270
        %v10272 = vpop.f32.mrb[0].mxu0
        %v10273 = vpop.f32.mrb[0].mxu0
        %10274 = vdwg.mxu0
        %10275 = vmatprep.subr.bf16.mxu0 %v6563
        %10276 = vmatpush1.bf16.msra.mxu0 %v6562
        %10277 = vmatprep.subr.bf16.mxu0 %v6567
        %10278 = vmatpush1.bf16.msra.mxu0 %v6566
        %10279 = vmatprep.subr.bf16.mxu0 %v6571
        %10280 = vmatpush1.bf16.msra.mxu0 %v6570
        %10281 = vmatprep.subr.bf16.mxu0 %v6575
        %10282 = vmatpush1.bf16.msra.mxu0 %v6574
        %10283 = vmatprep.subr.bf16.mxu0 %v6579
        %10284 = vmatpush1.bf16.msra.mxu0 %v6578
        %10285 = vmatprep.subr.bf16.mxu0 %v6583
        %10286 = vmatpush1.bf16.msra.mxu0 %v6582
        %10287 = vmatprep.subr.bf16.mxu0 %v6587
        %10288 = vmatpush1.bf16.msra.mxu0 %v6586
        %10289 = vmatprep.subr.bf16.mxu0 %v6591
        %10290 = vmatpush1.bf16.msra.mxu0 %v6590
        %10291 = vmatprep.subr.bf16.mxu0 %v6595
        %10292 = vmatpush1.bf16.msra.mxu0 %v6594
        %10293 = vmatprep.subr.bf16.mxu0 %v6599
        %10294 = vmatpush1.bf16.msra.mxu0 %v6598
        %10295 = vmatprep.subr.bf16.mxu0 %v6603
        %10296 = vmatpush1.bf16.msra.mxu0 %v6602
        %10297 = vmatprep.subr.bf16.mxu0 %v6607
        %10298 = vmatpush1.bf16.msra.mxu0 %v6606
        %10299 = vmatprep.subr.bf16.mxu0 %v6611
        %10300 = vmatpush1.bf16.msra.mxu0 %v6610
        %10301 = vmatprep.subr.bf16.mxu0 %v6615
        %10302 = vmatpush1.bf16.msra.mxu0 %v6614
        %10303 = vmatprep.subr.bf16.mxu0 %v6619
        %10304 = vmatpush1.bf16.msra.mxu0 %v6618
        %10305 = vmatprep.subr.bf16.mxu0 %v6623
        %10306 = vmatpush1.bf16.msra.mxu0 %v6622
        %10307 = vmatprep.mubr.bf16.mxu0 %v10151
        %10308 = vmatmul.mubr.bf16.gmra.mrb[0].mxu0 %v10150
        %v10309 = vpop.f32.mrb[0].mxu0
        %v10310 = vadd.f32 %v10269, %v10309
        %v10311 = vpop.f32.mrb[0].mxu0
        %v10312 = vadd.f32 %v10271, %v10311
        %v10313 = vpop.f32.mrb[0].mxu0
        %v10314 = vpop.f32.mrb[0].mxu0
        %10315 = vdwg.mxu0
        %v10320 = vcombine.low %v10228, %v10230
        %v10321 = vcombine.low %v10310, %v10312
        %v10323 = vunpack.c.l.s4 1966171168
        %v10324 = vunpack.c.0.s8 %v10323
        %v10325 = vlaneseq
        %v10326 = vshrl.u32 %v10325, 7
        %v10327 = vsub.s32 %v10324, %v10326
        %v10328 = vrot.slane %v10320, %v10327
        %v10330 = vunpack.c.l.s4 1966171168
        %v10331 = vunpack.c.0.s8 %v10330
        %v10332 = vlaneseq
        %v10333 = vshrl.u32 %v10332, 7
        %v10334 = vsub.s32 %v10331, %v10333
        %v10335 = vrot.slane %v10321, %v10334
        %v10336 = vcombine.low %v10328, %v10335
        %v10338 = vunpack.c.l.s4 1966171168
        %v10339 = vunpack.c.0.s8 %v10338
        %v10340 = vlaneseq
        %v10341 = vshrl.u32 %v10340, 7
        %v10342 = vsub.s32 %v10339, %v10341
        %v10343 = vrot.slane %v10336, %v10342
        %v10345 = vadd.f32 %v10147, %v10343
        %10346 = vst.msk [vmem:[#allocation4] sm:$0xf] %vm10066, %v10345
        %10347 = vst.msk [vmem:[#allocation2] sm:$0x1] %vm10135, %v10098
        %p10348 = scmp.eq.s32.totalorder %s30, 1
        // Predicated region
        $region73: #{clam_sb_forward.1} parent=67 // pred_check
          %p10349 = pneg %p10348
        $region74: #{clam_sb_forward.1} parent=67 // pred_check_branch
          %10351 = sbr.rel (%p10349) target = $region76
        $region75: #{clam_sb_forward.1} parent=67 // pred_region
          %v10352 = vld [vmem:[#allocation3] sm:$0x1]
          %v10353 = vrcp.pop %v10352
          %v10354 = vmul.f32 1.0, %v10353
          %v10355 = vld [vmem:[#allocation4] sm:$0xf]
          %10357 = vset.pattern.permute.xlu0 0
          %10358 = vperm.xlu0 %10357, %v10354
          %v10359 = vpop.permute.xlu0 %10358
          %v10361 = vlaneseq
          %v10362 = vshrl.u32 %v10361, 7
          %v10363 = vsub.s32 0, %v10362
          %v10364 = vrot.slane %v10359, %v10363
          %v10365 = vmul.f32 %v10355, %v10364
          %10366 = vst.msk [vmem:[#allocation7] sm:$0xf] %vm10066, %v10365
          %v10368 = vlaneseq
          %v10369 = vshrl.u32 %v10368, 7
          %v10370 = vsub.s32 0, %v10369
          %v10371 = vrot.slane %v10365, %v10370
          %v10372 = vlaneseq
          %v10373 = vshrl.u32 %v10372, 7
          %v10374 = vsub.s32 1, %v10373
          %v10375 = vrot.slane %v10365, %v10374
          %v10376 = vlaneseq
          %v10377 = vshrl.u32 %v10376, 7
          %v10378 = vsub.s32 2, %v10377
          %v10379 = vrot.slane %v10365, %v10378
          %v10380 = vlaneseq
          %v10381 = vshrl.u32 %v10380, 7
          %v10382 = vsub.s32 3, %v10381
          %v10383 = vrot.slane %v10365, %v10382
          %v10388 = vpack.c.bf16 %v10371, %v10371
          %v10389 = vpack.c.bf16 %v10375, %v10375
          %v10390 = vpack.c.bf16 %v10379, %v10379
          %v10391 = vpack.c.bf16 %v10383, %v10383
          %v10392 = vld [vmem:[%s10] sm:$0xf]
          %v10393 = vld [vmem:[%s10 + $0x4] sm:$0xf]
          %v10394 = vld [vmem:[%s10 + $0x8] sm:$0xf]
          %v10395 = vld [vmem:[%s10 + $0xc] sm:$0xf]
          %v10396 = vld [vmem:[%s10 + $0x10] sm:$0xf]
          %v10397 = vld [vmem:[%s10 + $0x14] sm:$0xf]
          %v10398 = vld [vmem:[%s10 + $0x18] sm:$0xf]
          %v10399 = vld [vmem:[%s10 + $0x1c] sm:$0xf]
          %v10400 = vld [vmem:[%s10 + $0x20] sm:$0xf]
          %v10401 = vld [vmem:[%s10 + $0x24] sm:$0xf]
          %v10402 = vld [vmem:[%s10 + $0x28] sm:$0xf]
          %v10403 = vld [vmem:[%s10 + $0x2c] sm:$0xf]
          %v10404 = vld [vmem:[%s10 + $0x30] sm:$0xf]
          %v10405 = vld [vmem:[%s10 + $0x34] sm:$0xf]
          %v10406 = vld [vmem:[%s10 + $0x38] sm:$0xf]
          %v10407 = vld [vmem:[%s10 + $0x3c] sm:$0xf]
          %v10408 = vld [vmem:[%s10 + $0x40] sm:$0xf]
          %v10409 = vld [vmem:[%s10 + $0x44] sm:$0xf]
          %v10410 = vld [vmem:[%s10 + $0x48] sm:$0xf]
          %v10411 = vld [vmem:[%s10 + $0x4c] sm:$0xf]
          %v10412 = vld [vmem:[%s10 + $0x50] sm:$0xf]
          %v10413 = vld [vmem:[%s10 + $0x54] sm:$0xf]
          %v10414 = vld [vmem:[%s10 + $0x58] sm:$0xf]
          %v10415 = vld [vmem:[%s10 + $0x5c] sm:$0xf]
          %v10416 = vld [vmem:[%s10 + $0x60] sm:$0xf]
          %v10417 = vld [vmem:[%s10 + $0x64] sm:$0xf]
          %v10418 = vld [vmem:[%s10 + $0x68] sm:$0xf]
          %v10419 = vld [vmem:[%s10 + $0x6c] sm:$0xf]
          %v10420 = vld [vmem:[%s10 + $0x70] sm:$0xf]
          %v10421 = vld [vmem:[%s10 + $0x74] sm:$0xf]
          %v10422 = vld [vmem:[%s10 + $0x78] sm:$0xf]
          %v10423 = vld [vmem:[%s10 + $0x7c] sm:$0xf]
          %v10424 = vld [vmem:[%s10 + $0x80] sm:$0xf]
          %v10425 = vld [vmem:[%s10 + $0x84] sm:$0xf]
          %v10426 = vld [vmem:[%s10 + $0x88] sm:$0xf]
          %v10427 = vld [vmem:[%s10 + $0x8c] sm:$0xf]
          %v10428 = vld [vmem:[%s10 + $0x90] sm:$0xf]
          %v10429 = vld [vmem:[%s10 + $0x94] sm:$0xf]
          %v10430 = vld [vmem:[%s10 + $0x98] sm:$0xf]
          %v10431 = vld [vmem:[%s10 + $0x9c] sm:$0xf]
          %v10432 = vld [vmem:[%s10 + $0xa0] sm:$0xf]
          %v10433 = vld [vmem:[%s10 + $0xa4] sm:$0xf]
          %v10434 = vld [vmem:[%s10 + $0xa8] sm:$0xf]
          %v10435 = vld [vmem:[%s10 + $0xac] sm:$0xf]
          %v10436 = vld [vmem:[%s10 + $0xb0] sm:$0xf]
          %v10437 = vld [vmem:[%s10 + $0xb4] sm:$0xf]
          %v10438 = vld [vmem:[%s10 + $0xb8] sm:$0xf]
          %v10439 = vld [vmem:[%s10 + $0xbc] sm:$0xf]
          %v10440 = vld [vmem:[%s10 + $0xc0] sm:$0xf]
          %v10441 = vld [vmem:[%s10 + $0xc4] sm:$0xf]
          %v10442 = vld [vmem:[%s10 + $0xc8] sm:$0xf]
          %v10443 = vld [vmem:[%s10 + $0xcc] sm:$0xf]
          %v10444 = vld [vmem:[%s10 + $0xd0] sm:$0xf]
          %v10445 = vld [vmem:[%s10 + $0xd4] sm:$0xf]
          %v10446 = vld [vmem:[%s10 + $0xd8] sm:$0xf]
          %v10447 = vld [vmem:[%s10 + $0xdc] sm:$0xf]
          %v10448 = vld [vmem:[%s10 + $0xe0] sm:$0xf]
          %v10449 = vld [vmem:[%s10 + $0xe4] sm:$0xf]
          %v10450 = vld [vmem:[%s10 + $0xe8] sm:$0xf]
          %v10451 = vld [vmem:[%s10 + $0xec] sm:$0xf]
          %v10452 = vld [vmem:[%s10 + $0xf0] sm:$0xf]
          %v10453 = vld [vmem:[%s10 + $0xf4] sm:$0xf]
          %v10454 = vld [vmem:[%s10 + $0xf8] sm:$0xf]
          %v10455 = vld [vmem:[%s10 + $0xfc] sm:$0xf]
          %v10456 = vld [vmem:[%s11] sm:$0x1]
          %v10521 = vunpack.c.l.b16 %v10392
          %v10522 = vunpack.c.l.b16 %v10393
          %v10523 = vunpack.c.l.b16 %v10394
          %v10524 = vunpack.c.l.b16 %v10395
          %v10525 = vunpack.c.l.b16 %v10396
          %v10526 = vunpack.c.l.b16 %v10397
          %v10527 = vunpack.c.l.b16 %v10398
          %v10528 = vunpack.c.l.b16 %v10399
          %v10529 = vunpack.c.l.b16 %v10400
          %v10530 = vunpack.c.l.b16 %v10401
          %v10531 = vunpack.c.l.b16 %v10402
          %v10532 = vunpack.c.l.b16 %v10403
          %v10533 = vunpack.c.l.b16 %v10404
          %v10534 = vunpack.c.l.b16 %v10405
          %v10535 = vunpack.c.l.b16 %v10406
          %v10536 = vunpack.c.l.b16 %v10407
          %v10537 = vunpack.c.l.b16 %v10408
          %v10538 = vunpack.c.l.b16 %v10409
          %v10539 = vunpack.c.l.b16 %v10410
          %v10540 = vunpack.c.l.b16 %v10411
          %v10541 = vunpack.c.l.b16 %v10412
          %v10542 = vunpack.c.l.b16 %v10413
          %v10543 = vunpack.c.l.b16 %v10414
          %v10544 = vunpack.c.l.b16 %v10415
          %v10545 = vunpack.c.l.b16 %v10416
          %v10546 = vunpack.c.l.b16 %v10417
          %v10547 = vunpack.c.l.b16 %v10418
          %v10548 = vunpack.c.l.b16 %v10419
          %v10549 = vunpack.c.l.b16 %v10420
          %v10550 = vunpack.c.l.b16 %v10421
          %v10551 = vunpack.c.l.b16 %v10422
          %v10552 = vunpack.c.l.b16 %v10423
          %v10553 = vunpack.c.l.b16 %v10424
          %v10554 = vunpack.c.l.b16 %v10425
          %v10555 = vunpack.c.l.b16 %v10426
          %v10556 = vunpack.c.l.b16 %v10427
          %v10557 = vunpack.c.l.b16 %v10428
          %v10558 = vunpack.c.l.b16 %v10429
          %v10559 = vunpack.c.l.b16 %v10430
          %v10560 = vunpack.c.l.b16 %v10431
          %v10561 = vunpack.c.l.b16 %v10432
          %v10562 = vunpack.c.l.b16 %v10433
          %v10563 = vunpack.c.l.b16 %v10434
          %v10564 = vunpack.c.l.b16 %v10435
          %v10565 = vunpack.c.l.b16 %v10436
          %v10566 = vunpack.c.l.b16 %v10437
          %v10567 = vunpack.c.l.b16 %v10438
          %v10568 = vunpack.c.l.b16 %v10439
          %v10569 = vunpack.c.l.b16 %v10440
          %v10570 = vunpack.c.l.b16 %v10441
          %v10571 = vunpack.c.l.b16 %v10442
          %v10572 = vunpack.c.l.b16 %v10443
          %v10573 = vunpack.c.l.b16 %v10444
          %v10574 = vunpack.c.l.b16 %v10445
          %v10575 = vunpack.c.l.b16 %v10446
          %v10576 = vunpack.c.l.b16 %v10447
          %v10577 = vunpack.c.l.b16 %v10448
          %v10578 = vunpack.c.l.b16 %v10449
          %v10579 = vunpack.c.l.b16 %v10450
          %v10580 = vunpack.c.l.b16 %v10451
          %v10581 = vunpack.c.l.b16 %v10452
          %v10582 = vunpack.c.l.b16 %v10453
          %v10583 = vunpack.c.l.b16 %v10454
          %v10584 = vunpack.c.l.b16 %v10455
          %v10585 = vpack.c.b16 %v10522, %v10521
          %v10586 = vpack.c.b16 %v10524, %v10523
          %v10587 = vpack.c.b16 %v10526, %v10525
          %v10588 = vpack.c.b16 %v10528, %v10527
          %v10589 = vpack.c.b16 %v10530, %v10529
          %v10590 = vpack.c.b16 %v10532, %v10531
          %v10591 = vpack.c.b16 %v10534, %v10533
          %v10592 = vpack.c.b16 %v10536, %v10535
          %v10593 = vpack.c.b16 %v10538, %v10537
          %v10594 = vpack.c.b16 %v10540, %v10539
          %v10595 = vpack.c.b16 %v10542, %v10541
          %v10596 = vpack.c.b16 %v10544, %v10543
          %v10597 = vpack.c.b16 %v10546, %v10545
          %v10598 = vpack.c.b16 %v10548, %v10547
          %v10599 = vpack.c.b16 %v10550, %v10549
          %v10600 = vpack.c.b16 %v10552, %v10551
          %v10601 = vpack.c.b16 %v10554, %v10553
          %v10602 = vpack.c.b16 %v10556, %v10555
          %v10603 = vpack.c.b16 %v10558, %v10557
          %v10604 = vpack.c.b16 %v10560, %v10559
          %v10605 = vpack.c.b16 %v10562, %v10561
          %v10606 = vpack.c.b16 %v10564, %v10563
          %v10607 = vpack.c.b16 %v10566, %v10565
          %v10608 = vpack.c.b16 %v10568, %v10567
          %v10609 = vpack.c.b16 %v10570, %v10569
          %v10610 = vpack.c.b16 %v10572, %v10571
          %v10611 = vpack.c.b16 %v10574, %v10573
          %v10612 = vpack.c.b16 %v10576, %v10575
          %v10613 = vpack.c.b16 %v10578, %v10577
          %v10614 = vpack.c.b16 %v10580, %v10579
          %v10615 = vpack.c.b16 %v10582, %v10581
          %v10616 = vpack.c.b16 %v10584, %v10583
          %10649 = vmatprep.subr.bf16.mxu0 0
          %10650 = vmatpush1.bf16.msra.mxu0 %v10585
          %10651 = vmatprep.subr.bf16.mxu0 0
          %10652 = vmatpush1.bf16.msra.mxu0 %v10586
          %10653 = vmatprep.subr.bf16.mxu0 0
          %10654 = vmatpush1.bf16.msra.mxu0 %v10587
          %10655 = vmatprep.subr.bf16.mxu0 0
          %10656 = vmatpush1.bf16.msra.mxu0 %v10588
          %10657 = vmatprep.subr.bf16.mxu0 0
          %10658 = vmatpush1.bf16.msra.mxu0 %v10589
          %10659 = vmatprep.subr.bf16.mxu0 0
          %10660 = vmatpush1.bf16.msra.mxu0 %v10590
          %10661 = vmatprep.subr.bf16.mxu0 0
          %10662 = vmatpush1.bf16.msra.mxu0 %v10591
          %10663 = vmatprep.subr.bf16.mxu0 0
          %10664 = vmatpush1.bf16.msra.mxu0 %v10592
          %10665 = vmatprep.subr.bf16.mxu0 0
          %10666 = vmatpush1.bf16.msra.mxu0 %v10593
          %10667 = vmatprep.subr.bf16.mxu0 0
          %10668 = vmatpush1.bf16.msra.mxu0 %v10594
          %10669 = vmatprep.subr.bf16.mxu0 0
          %10670 = vmatpush1.bf16.msra.mxu0 %v10595
          %10671 = vmatprep.subr.bf16.mxu0 0
          %10672 = vmatpush1.bf16.msra.mxu0 %v10596
          %10673 = vmatprep.subr.bf16.mxu0 0
          %10674 = vmatpush1.bf16.msra.mxu0 %v10597
          %10675 = vmatprep.subr.bf16.mxu0 0
          %10676 = vmatpush1.bf16.msra.mxu0 %v10598
          %10677 = vmatprep.subr.bf16.mxu0 0
          %10678 = vmatpush1.bf16.msra.mxu0 %v10599
          %10679 = vmatprep.subr.bf16.mxu0 0
          %10680 = vmatpush1.bf16.msra.mxu0 %v10600
          %10681 = vmatprep.mubr.bf16.mxu0 %v10389
          %10682 = vmatmul.mubr.bf16.gmra.mrb[0].mxu0 %v10388
          %v10683 = vpop.f32.mrb[0].mxu0
          %v10684 = vadd.f32 %v10456, %v10683
          %v10685 = vpop.f32.mrb[0].mxu0
          %v10686 = vpop.f32.mrb[0].mxu0
          %v10687 = vpop.f32.mrb[0].mxu0
          %10688 = vdwg.mxu0
          %10689 = vmatprep.subr.bf16.mxu0 0
          %10690 = vmatpush1.bf16.msra.mxu0 %v10601
          %10691 = vmatprep.subr.bf16.mxu0 0
          %10692 = vmatpush1.bf16.msra.mxu0 %v10602
          %10693 = vmatprep.subr.bf16.mxu0 0
          %10694 = vmatpush1.bf16.msra.mxu0 %v10603
          %10695 = vmatprep.subr.bf16.mxu0 0
          %10696 = vmatpush1.bf16.msra.mxu0 %v10604
          %10697 = vmatprep.subr.bf16.mxu0 0
          %10698 = vmatpush1.bf16.msra.mxu0 %v10605
          %10699 = vmatprep.subr.bf16.mxu0 0
          %10700 = vmatpush1.bf16.msra.mxu0 %v10606
          %10701 = vmatprep.subr.bf16.mxu0 0
          %10702 = vmatpush1.bf16.msra.mxu0 %v10607
          %10703 = vmatprep.subr.bf16.mxu0 0
          %10704 = vmatpush1.bf16.msra.mxu0 %v10608
          %10705 = vmatprep.subr.bf16.mxu0 0
          %10706 = vmatpush1.bf16.msra.mxu0 %v10609
          %10707 = vmatprep.subr.bf16.mxu0 0
          %10708 = vmatpush1.bf16.msra.mxu0 %v10610
          %10709 = vmatprep.subr.bf16.mxu0 0
          %10710 = vmatpush1.bf16.msra.mxu0 %v10611
          %10711 = vmatprep.subr.bf16.mxu0 0
          %10712 = vmatpush1.bf16.msra.mxu0 %v10612
          %10713 = vmatprep.subr.bf16.mxu0 0
          %10714 = vmatpush1.bf16.msra.mxu0 %v10613
          %10715 = vmatprep.subr.bf16.mxu0 0
          %10716 = vmatpush1.bf16.msra.mxu0 %v10614
          %10717 = vmatprep.subr.bf16.mxu0 0
          %10718 = vmatpush1.bf16.msra.mxu0 %v10615
          %10719 = vmatprep.subr.bf16.mxu0 0
          %10720 = vmatpush1.bf16.msra.mxu0 %v10616
          %10721 = vmatprep.mubr.bf16.mxu0 %v10391
          %10722 = vmatmul.mubr.bf16.gmra.mrb[0].mxu0 %v10390
          %v10723 = vpop.f32.mrb[0].mxu0
          %v10724 = vadd.f32 %v10684, %v10723
          %v10725 = vpop.f32.mrb[0].mxu0
          %v10726 = vpop.f32.mrb[0].mxu0
          %v10727 = vpop.f32.mrb[0].mxu0
          %10728 = vdwg.mxu0
          %vm10729 = vcmask 8192
          %10730 = vst.msk [vmem:[%s13] sm:$0x1] %vm10729, %v10724
        $region76: #{clam_sb_forward.1} parent=67 // pred_fallthru
          _
        %s10731 = smul.u32 4, %s30
        %p10732 = scmp.lt.s32.totalorder %s10731, 7
        %s10733 = scalar_select %p10732, %s10731, 7
        %s10734 = scalar_lea.vmem %s12, %s10733
        // Predicated region
        $region77: #{clam_sb_forward.1} parent=67 // pred_check
          %p10735 = pneg %p305
        $region78: #{clam_sb_forward.1} parent=67 // pred_check_branch
          %10737 = sbr.rel (%p10735) target = $region80
        $region79: #{clam_sb_forward.1} parent=67 // pred_region
          %s10738 = smul.u32 4, %s30
        $region80: #{clam_sb_forward.1} parent=67 // pred_fallthru
          _
        // Predicated region
        $region81: #{clam_sb_forward.1} parent=67 // pred_check
          %p10739 = pneg %p326
        $region82: #{clam_sb_forward.1} parent=67 // pred_check_branch
          %10741 = sbr.rel (%p10739) target = $region84
        $region83: #{clam_sb_forward.1} parent=67 // pred_region
          _
        $region84: #{clam_sb_forward.1} parent=67 // pred_fallthru
          _
        // Predicated region
        $region85: #{clam_sb_forward.1} parent=67 // pred_check
          %p10742 = pneg %p347
        $region86: #{clam_sb_forward.1} parent=67 // pred_check_branch
          %10744 = sbr.rel (%p10742) target = $region88
        $region87: #{clam_sb_forward.1} parent=67 // pred_region
          %s10746 = ssub.s32 64, 64
          %10747 = vsyncadd [#allocation8], %s10746
          %s10749 = sshll.u32 [#allocation7], 4
          %s10750 = int_to_ptr.vmem [resolvable:$true] %s10749
          %10752 = dma.vmem_to_hbm [thread:$0]  %s10750, 64, %s14, [#allocation8]
        $region88: #{clam_sb_forward.1} parent=67 // pred_fallthru
          _
        // Predicated region
        $region89: #{clam_sb_forward.1} parent=67 // pred_check
          %p10753 = pneg %p326
        $region90: #{clam_sb_forward.1} parent=67 // pred_check_branch
          %10755 = sbr.rel (%p10753) target = $region92
        $region91: #{clam_sb_forward.1} parent=67 // pred_region
          _
        $region92: #{clam_sb_forward.1} parent=67 // pred_fallthru
          _
        // Predicated region
        $region93: #{clam_sb_forward.1} parent=67 // pred_check
          %p10756 = pneg %p347
        $region94: #{clam_sb_forward.1} parent=67 // pred_check_branch
          %10758 = sbr.rel (%p10756) target = $region96
        $region95: #{clam_sb_forward.1} parent=67 // pred_region
          %10759 = dma.done [#allocation8], 64
        $region96: #{clam_sb_forward.1} parent=67 // pred_fallthru
          _
      $region68: #{clam_sb_forward.1} parent=5 // pred_fallthru
        _
      %p10760 = scmp.le.s32.totalorder 2, %s25
      // Predicated region
      $region97: #{clam_sb_forward.1} parent=5 // pred_check
        %p10761 = pneg %p10760
      $region98: #{clam_sb_forward.1} parent=5 // pred_check_branch
        %10763 = sbr.rel (%p10761) target = $region100
      $region99: #{clam_sb_forward.1} parent=5 // pred_region
        %s10764 = ssub.s32 %s25, 2
        // Predicated region
        $region101: #{clam_sb_forward.1} parent=99 // pred_check
          %p10765 = pneg %p311
        $region102: #{clam_sb_forward.1} parent=99 // pred_check_branch
          %10767 = sbr.rel (%p10765) target = $region104
        $region103: #{clam_sb_forward.1} parent=99 // pred_region
          %s10768 = smul.u32 4, %s31
          %p10769 = scmp.lt.s32.totalorder %s10768, 7
          %s10770 = scalar_select %p10769, %s10768, 7
          %s10771 = scalar_lea.vmem %s12, %s10770
        $region104: #{clam_sb_forward.1} parent=99 // pred_fallthru
          _
      $region100: #{clam_sb_forward.1} parent=5 // pred_fallthru
        _
    $region6: #{clam_sb_forward.1} parent=1 // loop_footer
      %s29 = sadd.s32 1, %s25
    $region7: #{clam_sb_forward.1} parent=1 // loop_footer_branch
      %24 = sbr.rel target = $region3
    $region8: #{clam_sb_forward.1} parent=1 // loop_exit
      _
    %10772 = vsyncpa [#allocation8], 1
    %s10773 = scalar_lea.sflag [#allocation8], 1
    %10774 = vsyncpa %s10773, 1

</llo_original>
